<compile_context>
chip_gen: v6e
topology: v6e:2x2x1
jax: 0.10.0
libtpu: 0.0.40
codegen_flags: <defaults>
</compile_context>

<pallas_src>
import functools

import jax
import jax.numpy as jnp
from jax.experimental import pallas as pl
from jax.experimental.pallas import tpu as pltpu


def _round_up(x, m):
    return ((x + m - 1) // m) * m


# ----------------------------------------------------------------------------
# Pallas conv3d (kernel_size=3, padding=1, stride=1) with fused LeakyReLU
# ----------------------------------------------------------------------------
def _conv3d_kernel(w_ref, b_ref, x_hbm, o_ref, buf, sem, *,
                   S, D, chunks, wext, negative_slope):
    """One (batch, output-depth-plane) grid step.

    w_ref : (27, Cout_mx, Cin) bf16   per-tap weight matrices
    b_ref : (Cout_mx, 1)       f32    bias
    x_hbm : (B, D+2, Cin, Pext) bf16  depth/HW padded input (HBM, pl.ANY)
    o_ref : (1, 1, Cout, P_pad)       output over the padded H/W plane
    buf   : (4, Cin, Pext)     bf16   rolling ring of depth planes (VMEM)
    sem   : (4,)                      DMA semaphores, one per ring slot
    """
    bi = pl.program_id(0)
    di = pl.program_id(1)
    cout = o_ref.shape[2]
    cout_mx = w_ref.shape[1]

    def dma(plane, slot):
        return pltpu.make_async_copy(x_hbm.at[bi, plane], buf.at[slot],
                                     sem.at[slot])

    # --- rolling-window DMA management: plane p always lives in slot p % 4 --
    @pl.when(di == 0)
    def _():
        # new batch: fetch planes 0..2 (needed now) and prefetch plane 3.
        for p in range(min(4, D + 2)):
            dma(p, p).start()
        for p in range(3):
            dma(p, p).wait()

    @pl.when(di > 0)
    def _():
        # prefetch the plane needed at step di+1 ...
        @pl.when(di + 3 <= D + 1)
        def _():
            dma(di + 3, (di + 3) & 3).start()

        # ... then wait for plane di+2 (prefetched on the previous step),
        # constructing the descriptor with the true plane index.
        dma(di + 2, (di + 2) & 3).wait()

    # hoisted bias broadcast, one per distinct chunk width.
    bias = b_ref[...]                                      # (Cout_mx, 1) f32
    bias_b = {t: jnp.broadcast_to(bias, (cout_mx, t))
              for t in sorted({t for _, t in chunks})}

    # --- per-tap accumulating matmuls over aligned lane-chunk windows -------
    for c0, tpc in chunks:                                 # static unroll
        tpw = tpc + wext
        # one aligned (Cin, tpw) window load per depth plane; the 9 in-plane
        # taps are static shifted views of this value (lowered to lane
        # shifts/rotates, no slab materialization).
        wins = [buf[(di + kd) & 3, :, c0:c0 + tpw] for kd in range(3)]
        acc = bias_b[tpc]                                  # (Cout_mx, tpc) f32
        for kd in range(3):
            win = wins[kd]
            for kh in range(3):
                for kw in range(3):
                    off = (kh + 1) * S + kw - 1            # static in-window
                    tap = win[:, off:off + tpc]            # (Cin, tpc) bf16
                    wt = w_ref[kd * 9 + kh * 3 + kw]       # (Cout_mx, Cin)
                    acc = acc + jnp.dot(wt, tap,
                                        preferred_element_type=jnp.float32)
        if negative_slope is not None:
            acc = jnp.where(acc >= 0, acc, negative_slope * acc)
        o_ref[0, 0, :, c0:c0 + tpc] = acc[:cout].astype(o_ref.dtype)


def conv3d_pallas(x, w, b, negative_slope=None, out_dtype=jnp.bfloat16,
                  tp_max=512):
    """x: (B, D, Cin, H, W); w: (Cout, Cin, 3, 3, 3); b: (Cout,)
       -> (B, D, Cout, H, W) in `out_dtype`."""
    B, D, Cin, H, W = x.shape
    Cout = w.shape[0]
    S = W + 2
    P = (H + 2) * S
    P_pad = _round_up(P, 128)          # lane-dense output, unmasked stores
    wext = _round_up(3 * S + 1, 128)   # in-window halo covering the 9 taps

    # ONE pad pass builds: depth pad (1,1), the flat-plane halo (2 zero rows
    # in front), the conv H/W padding, and enough trailing zero rows to cover
    # the rounded-up plane + window extension.  Cast to bf16 first (no-op for
    # activations coming from previous bf16 layers).
    hb = 3
    ha = max(1, -(-(P_pad + wext) // S) - (hb + H))
    Pext = (hb + H + ha) * S
    xb = x.astype(jnp.bfloat16)
    xp = jnp.pad(xb, ((0, 0), (1, 1), (0, 0), (hb, ha), (1, 1)))
    xp = xp.reshape(B, D + 2, Cin, Pext)

    # per-tap weight matrices (27, Cout_mx, Cin); Cout padded to a multiple of
    # 16 for clean bf16 sublane packing (padded rows are never written back).
    Cout_mx = max(16, _round_up(Cout, 16))
    wt = jnp.transpose(w, (2, 3, 4, 0, 1)).reshape(27, Cout, Cin)
    bt = b
    if Cout_mx != Cout:
        wt = jnp.pad(wt, ((0, 0), (0, Cout_mx - Cout), (0, 0)))
        bt = jnp.pad(bt, ((0, Cout_mx - Cout),))
    wt = wt.astype(jnp.bfloat16)
    bt = bt.reshape(Cout_mx, 1).astype(jnp.float32)

    # lane chunking: multiples of 128 so stores are unmasked and the f32
    # accumulator (Cout_mx x tp) stays comfortably in vregs.
    tp = tp_max
    while tp > 128 and Cout_mx * tp * 4 > 64 * 1024:
        tp //= 2
    tp = min(tp, P_pad)
    chunks = tuple((c0, min(tp, P_pad - c0)) for c0 in range(0, P_pad, tp))

    kernel = functools.partial(_conv3d_kernel, S=S, D=D, chunks=chunks,
                               wext=wext, negative_slope=negative_slope)

    out = pl.pallas_call(
        kernel,
        out_shape=jax.ShapeDtypeStruct((B, D, Cout, P_pad), out_dtype),
        grid_spec=pltpu.PrefetchScalarGridSpec(
            num_scalar_prefetch=0,
            grid=(B, D),
            in_specs=[
                pl.BlockSpec((27, Cout_mx, Cin), lambda bi, di: (0, 0, 0)),
                pl.BlockSpec((Cout_mx, 1), lambda bi, di: (0, 0)),
                pl.BlockSpec(memory_space=pl.ANY),     # raw HBM, manual DMA
            ],
            out_specs=pl.BlockSpec((1, 1, Cout, P_pad),
                                   lambda bi, di: (bi, di, 0, 0)),
            scratch_shapes=[
                pltpu.VMEM((4, Cin, Pext), jnp.bfloat16),
                pltpu.SemaphoreType.DMA((4,)),
            ],
        ),
        compiler_params=pltpu.CompilerParams(
            dimension_semantics=("parallel", "arbitrary"),
            vmem_limit_bytes=32 * 1024 * 1024,
        ),
    )(wt, bt, xp)

    # drop the rounded/padded plane; stay in (B, D, Cout, H, W) layout.
    out = out[..., :P].reshape(B, D, Cout, H + 2, S)[:, :, :, 1:H + 1, 1:W + 1]
    return out


# ----------------------------------------------------------------------------
# JAX glue: trilinear upsample (align_corners=False) and BatchNorm3d (training)
# Activation layout is (B, D, C, H, W), bf16, throughout the glue.
# ----------------------------------------------------------------------------
def _upsample_linear_axis(x, axis, out_size):
    in_size = x.shape[axis]
    scale = in_size / out_size
    i = jnp.arange(out_size, dtype=jnp.float32)
    src = jnp.maximum((i + 0.5) * scale - 0.5, 0.0)        # PyTorch clamp at 0
    i0 = jnp.minimum(jnp.floor(src).astype(jnp.int32), in_size - 1)
    i1 = jnp.minimum(i0 + 1, in_size - 1)
    w1 = src - i0.astype(jnp.float32)
    w0 = 1.0 - w1
    x0 = jnp.take(x, i0, axis=axis).astype(jnp.float32)
    x1 = jnp.take(x, i1, axis=axis).astype(jnp.float32)
    bshape = [1] * x.ndim
    bshape[axis] = out_size
    y = x0 * w0.reshape(bshape) + x1 * w1.reshape(bshape)
    return y.astype(x.dtype)


def upsample_trilinear(x, size):
    # separable linear interpolation over D (axis 1), H (axis 3), W (axis 4)
    for ax, s in zip((1, 3, 4), size):
        x = _upsample_linear_axis(x, ax, s)
    return x


def batchnorm3d(x, gamma, beta, eps=1e-5):
    # training-mode BN: batch statistics over (N, D, H, W), biased variance.
    # One fused stats pass (E[x], E[x^2] in f32) + one fused affine pass.
    xf = x.astype(jnp.float32)
    mean = jnp.mean(xf, axis=(0, 1, 3, 4))
    var = jnp.maximum(jnp.mean(jnp.square(xf), axis=(0, 1, 3, 4))
                      - jnp.square(mean), 0.0)
    inv = gamma / jnp.sqrt(var + eps)
    scale = inv.reshape(1, 1, -1, 1, 1)
    shift = (beta - mean * inv).reshape(1, 1, -1, 1, 1)
    return (xf * scale + shift).astype(x.dtype)


# ----------------------------------------------------------------------------
# Generator
# ----------------------------------------------------------------------------
_SIZES = [(3, 4, 3), (7, 8, 7), (14, 17, 14), (29, 35, 29), (58, 70, 58)]


def init_params(key, hidden_dim):
    params = {}
    keys = jax.random.split(key, 12)
    for i in range(5):
        params[f"conv{i}_w"] = 0.05 * jax.random.normal(
            keys[2 * i], (hidden_dim, hidden_dim, 3, 3, 3), jnp.float32)
        params[f"conv{i}_b"] = 0.05 * jax.random.normal(
            keys[2 * i + 1], (hidden_dim,), jnp.float32)
        params[f"bn{i}_gamma"] = jnp.ones((hidden_dim,), jnp.float32)
        params[f"bn{i}_beta"] = jnp.zeros((hidden_dim,), jnp.float32)
    params["conv_out_w"] = 0.05 * jax.random.normal(
        keys[10], (1, hidden_dim, 3, 3, 3), jnp.float32)
    params["conv_out_b"] = 0.05 * jax.random.normal(
        keys[11], (1,), jnp.float32)
    return params


def generator_forward(x, params, hidden_dim):
    B = x.shape[0]
    # Unflatten -> (B, D=1, C, 1, 1); activations bf16 through the stack.
    h = x.reshape(B, 1, hidden_dim, 1, 1).astype(jnp.bfloat16)
    for i, sz in enumerate(_SIZES):
        h = upsample_trilinear(h, sz)                       # nn.Upsample(trilinear)
        h = conv3d_pallas(h, params[f"conv{i}_w"], params[f"conv{i}_b"],
                          negative_slope=0.2,
                          out_dtype=jnp.bfloat16)           # Conv3d + LeakyReLU
        h = batchnorm3d(h, params[f"bn{i}_gamma"], params[f"bn{i}_beta"])
    h = conv3d_pallas(h, params["conv_out_w"], params["conv_out_b"],
                      negative_slope=None,
                      out_dtype=jnp.float32)                # final Conv3d
    return jnp.transpose(h, (0, 2, 1, 3, 4))                # back to NCDHW


# ----------------------------------------------------------------------------
# Plain-JAX conv reference (for the in-script self-check only)
# ----------------------------------------------------------------------------
def conv3d_ref(x, w, b):
    B, D, C, H, W = x.shape
    xp = jnp.pad(x, ((0, 0), (1, 1), (0, 0), (1, 1), (1, 1)))
    out = jnp.zeros((B, D, w.shape[0], H, W), jnp.float32)
    for kd in range(3):
        for kh in range(3):
            for kw in range(3):
                patch = xp[:, kd:kd + D, :, kh:kh + H, kw:kw + W]
                out = out + jnp.einsum("bdchw,oc->bdohw",
                                       patch, w[:, :, kd, kh, kw])
    return out + b.reshape(1, 1, -1, 1, 1)


if __name__ == "__main__":
    hidden_dim = 16   # small but MXU / bf16-tile friendly (nn default is 128)
    batch = 2
    key = jax.random.PRNGKey(0)
    kx, kp, kc = jax.random.split(key, 3)

    # --- conv kernel self-check (exercises ring DMA + lane chunking) --------
    xc = jax.random.normal(kc, (2, 5, hidden_dim, 20, 30), jnp.float32)
    wc = 0.05 * jax.random.normal(kp, (hidden_dim, hidden_dim, 3, 3, 3),
                                  jnp.float32)
    bc = 0.05 * jax.random.normal(kx, (hidden_dim,), jnp.float32)
    # pre-round to bf16 so the only difference vs the f32 reference is
    # accumulation order.
    xcq = xc.astype(jnp.bfloat16).astype(jnp.float32)
    wcq = wc.astype(jnp.bfloat16).astype(jnp.float32)
    got = jax.block_until_ready(
        conv3d_pallas(xcq, wcq, bc, out_dtype=jnp.float32))
    want = conv3d_ref(xcq, wcq, bc)
    err = float(jnp.max(jnp.abs(got - want)))
    assert err < 5e-3, f"conv3d mismatch: {err}"

    # --- full Generator forward ---------------------------------------------
    x = jax.random.normal(kx, (batch, hidden_dim), jnp.float32)
    params = init_params(kp, hidden_dim)

    fwd = jax.jit(lambda xx: generator_forward(xx, params, hidden_dim))
    out = jax.block_until_ready(fwd(x))

    assert out.shape == (batch, 1, 58, 70, 58), out.shape
    assert out.dtype == jnp.float32
    assert bool(jnp.all(jnp.isfinite(out)))
    print("KERNEL_OK")
</pallas_src>

<mosaic_0001>
module attributes {stable_mosaic.version = 11 : i64} {
  func.func @_conv3d_kernel(%arg0: i32, %arg1: i32, %arg2: memref<27x16x16xbf16, #tpu.memory_space<vmem>>, %arg3: memref<16x1xf32, #tpu.memory_space<vmem>>, %arg4: memref<2x7x16x896xbf16, #tpu.memory_space<any>>, %arg5: memref<1x1x16x768xf32, #tpu.memory_space<vmem>>, %arg6: memref<4x16x896xbf16, #tpu.memory_space<vmem>>, %arg7: memref<4x!tpu.dma_semaphore, #tpu.memory_space<semaphore_mem>>) attributes {dimension_semantics = [#tpu.dimension_semantics<parallel>, #tpu.dimension_semantics<arbitrary>], iteration_bounds = array<i64: 2, 5>, scalar_prefetch = 0 : i64, scratch_operands = 2 : i64, tpu.core_type = #tpu.core_type<tc>, window_params = [{pipeline_mode = #tpu.pipeline_mode<synchronous>, transform_indices = @transform_0, window_bounds = array<i64: 27, 16, 16>}, {pipeline_mode = #tpu.pipeline_mode<synchronous>, transform_indices = @transform_1, window_bounds = array<i64: 16, 1>}, {}, {transform_indices = @transform_3, window_bounds = array<i64: 1, 1, 16, 768>}]} {
    %c0_i32 = arith.constant 0 : i32
    %0 = arith.cmpi eq, %arg1, %c0_i32 : i32
    %1 = arith.extui %0 : i1 to i32
    %c0_i32_0 = arith.constant 0 : i32
    %2 = arith.cmpi ne, %1, %c0_i32_0 : i32
    scf.if %2 {
      %c0_i32_221 = arith.constant 0 : i32
      %c0_i32_222 = arith.constant 0 : i32
      %c0_i32_223 = arith.constant 0 : i32
      %c0_i32_224 = arith.constant 0 : i32
      %c0_i32_225 = arith.constant 0 : i32
      %317 = tpu.memref_slice %arg4[%arg0, %c0_i32_221, %c0_i32_224, %c0_i32_225] : memref<2x7x16x896xbf16, #tpu.memory_space<any>> -> memref<1x1x16x896xbf16, #tpu.memory_space<any>>
      %318 = tpu.memref_squeeze %317 : memref<1x1x16x896xbf16, #tpu.memory_space<any>> -> memref<16x896xbf16, #tpu.memory_space<any>>
      %c0_i32_226 = arith.constant 0 : i32
      %c0_i32_227 = arith.constant 0 : i32
      %319 = tpu.memref_slice %arg6[%c0_i32_222, %c0_i32_226, %c0_i32_227] : memref<4x16x896xbf16, #tpu.memory_space<vmem>> -> memref<1x16x896xbf16, #tpu.memory_space<vmem>>
      %320 = tpu.memref_squeeze %319 : memref<1x16x896xbf16, #tpu.memory_space<vmem>> -> memref<16x896xbf16, #tpu.memory_space<vmem>>
      %321 = tpu.memref_slice %arg7[%c0_i32_223] : memref<4x!tpu.dma_semaphore, #tpu.memory_space<semaphore_mem>> -> memref<1x!tpu.dma_semaphore, #tpu.memory_space<semaphore_mem>>
      %322 = tpu.memref_squeeze %321 : memref<1x!tpu.dma_semaphore, #tpu.memory_space<semaphore_mem>> -> memref<!tpu.dma_semaphore, #tpu.memory_space<semaphore_mem>>
      tpu.enqueue_dma source(%318 : memref<16x896xbf16, #tpu.memory_space<any>>) target(%320 : memref<16x896xbf16, #tpu.memory_space<vmem>>) target_semaphore(%322 : memref<!tpu.dma_semaphore, #tpu.memory_space<semaphore_mem>>)
      %c1_i32_228 = arith.constant 1 : i32
      %c1_i32_229 = arith.constant 1 : i32
      %c1_i32_230 = arith.constant 1 : i32
      %c0_i32_231 = arith.constant 0 : i32
      %c0_i32_232 = arith.constant 0 : i32
      %323 = tpu.memref_slice %arg4[%arg0, %c1_i32_228, %c0_i32_231, %c0_i32_232] : memref<2x7x16x896xbf16, #tpu.memory_space<any>> -> memref<1x1x16x896xbf16, #tpu.memory_space<any>>
      %324 = tpu.memref_squeeze %323 : memref<1x1x16x896xbf16, #tpu.memory_space<any>> -> memref<16x896xbf16, #tpu.memory_space<any>>
      %c0_i32_233 = arith.constant 0 : i32
      %c0_i32_234 = arith.constant 0 : i32
      %325 = tpu.memref_slice %arg6[%c1_i32_229, %c0_i32_233, %c0_i32_234] : memref<4x16x896xbf16, #tpu.memory_space<vmem>> -> memref<1x16x896xbf16, #tpu.memory_space<vmem>>
      %326 = tpu.memref_squeeze %325 : memref<1x16x896xbf16, #tpu.memory_space<vmem>> -> memref<16x896xbf16, #tpu.memory_space<vmem>>
      %327 = tpu.memref_slice %arg7[%c1_i32_230] : memref<4x!tpu.dma_semaphore, #tpu.memory_space<semaphore_mem>> -> memref<1x!tpu.dma_semaphore, #tpu.memory_space<semaphore_mem>>
      %328 = tpu.memref_squeeze %327 : memref<1x!tpu.dma_semaphore, #tpu.memory_space<semaphore_mem>> -> memref<!tpu.dma_semaphore, #tpu.memory_space<semaphore_mem>>
      tpu.enqueue_dma source(%324 : memref<16x896xbf16, #tpu.memory_space<any>>) target(%326 : memref<16x896xbf16, #tpu.memory_space<vmem>>) target_semaphore(%328 : memref<!tpu.dma_semaphore, #tpu.memory_space<semaphore_mem>>)
      %c2_i32_235 = arith.constant 2 : i32
      %c2_i32_236 = arith.constant 2 : i32
      %c2_i32_237 = arith.constant 2 : i32
      %c0_i32_238 = arith.constant 0 : i32
      %c0_i32_239 = arith.constant 0 : i32
      %329 = tpu.memref_slice %arg4[%arg0, %c2_i32_235, %c0_i32_238, %c0_i32_239] : memref<2x7x16x896xbf16, #tpu.memory_space<any>> -> memref<1x1x16x896xbf16, #tpu.memory_space<any>>
      %330 = tpu.memref_squeeze %329 : memref<1x1x16x896xbf16, #tpu.memory_space<any>> -> memref<16x896xbf16, #tpu.memory_space<any>>
      %c0_i32_240 = arith.constant 0 : i32
      %c0_i32_241 = arith.constant 0 : i32
      %331 = tpu.memref_slice %arg6[%c2_i32_236, %c0_i32_240, %c0_i32_241] : memref<4x16x896xbf16, #tpu.memory_space<vmem>> -> memref<1x16x896xbf16, #tpu.memory_space<vmem>>
      %332 = tpu.memref_squeeze %331 : memref<1x16x896xbf16, #tpu.memory_space<vmem>> -> memref<16x896xbf16, #tpu.memory_space<vmem>>
      %333 = tpu.memref_slice %arg7[%c2_i32_237] : memref<4x!tpu.dma_semaphore, #tpu.memory_space<semaphore_mem>> -> memref<1x!tpu.dma_semaphore, #tpu.memory_space<semaphore_mem>>
      %334 = tpu.memref_squeeze %333 : memref<1x!tpu.dma_semaphore, #tpu.memory_space<semaphore_mem>> -> memref<!tpu.dma_semaphore, #tpu.memory_space<semaphore_mem>>
      tpu.enqueue_dma source(%330 : memref<16x896xbf16, #tpu.memory_space<any>>) target(%332 : memref<16x896xbf16, #tpu.memory_space<vmem>>) target_semaphore(%334 : memref<!tpu.dma_semaphore, #tpu.memory_space<semaphore_mem>>)
      %c3_i32_242 = arith.constant 3 : i32
      %c3_i32_243 = arith.constant 3 : i32
      %c3_i32_244 = arith.constant 3 : i32
      %c0_i32_245 = arith.constant 0 : i32
      %c0_i32_246 = arith.constant 0 : i32
      %335 = tpu.memref_slice %arg4[%arg0, %c3_i32_242, %c0_i32_245, %c0_i32_246] : memref<2x7x16x896xbf16, #tpu.memory_space<any>> -> memref<1x1x16x896xbf16, #tpu.memory_space<any>>
      %336 = tpu.memref_squeeze %335 : memref<1x1x16x896xbf16, #tpu.memory_space<any>> -> memref<16x896xbf16, #tpu.memory_space<any>>
      %c0_i32_247 = arith.constant 0 : i32
      %c0_i32_248 = arith.constant 0 : i32
      %337 = tpu.memref_slice %arg6[%c3_i32_243, %c0_i32_247, %c0_i32_248] : memref<4x16x896xbf16, #tpu.memory_space<vmem>> -> memref<1x16x896xbf16, #tpu.memory_space<vmem>>
      %338 = tpu.memref_squeeze %337 : memref<1x16x896xbf16, #tpu.memory_space<vmem>> -> memref<16x896xbf16, #tpu.memory_space<vmem>>
      %339 = tpu.memref_slice %arg7[%c3_i32_244] : memref<4x!tpu.dma_semaphore, #tpu.memory_space<semaphore_mem>> -> memref<1x!tpu.dma_semaphore, #tpu.memory_space<semaphore_mem>>
      %340 = tpu.memref_squeeze %339 : memref<1x!tpu.dma_semaphore, #tpu.memory_space<semaphore_mem>> -> memref<!tpu.dma_semaphore, #tpu.memory_space<semaphore_mem>>
      tpu.enqueue_dma source(%336 : memref<16x896xbf16, #tpu.memory_space<any>>) target(%338 : memref<16x896xbf16, #tpu.memory_space<vmem>>) target_semaphore(%340 : memref<!tpu.dma_semaphore, #tpu.memory_space<semaphore_mem>>)
      %c0_i32_249 = arith.constant 0 : i32
      %c0_i32_250 = arith.constant 0 : i32
      %c0_i32_251 = arith.constant 0 : i32
      %c0_i32_252 = arith.constant 0 : i32
      %c0_i32_253 = arith.constant 0 : i32
      %341 = tpu.memref_slice %arg4[%arg0, %c0_i32_249, %c0_i32_252, %c0_i32_253] : memref<2x7x16x896xbf16, #tpu.memory_space<any>> -> memref<1x1x16x896xbf16, #tpu.memory_space<any>>
      %342 = tpu.memref_squeeze %341 : memref<1x1x16x896xbf16, #tpu.memory_space<any>> -> memref<16x896xbf16, #tpu.memory_space<any>>
      %c0_i32_254 = arith.constant 0 : i32
      %c0_i32_255 = arith.constant 0 : i32
      %343 = tpu.memref_slice %arg6[%c0_i32_250, %c0_i32_254, %c0_i32_255] : memref<4x16x896xbf16, #tpu.memory_space<vmem>> -> memref<1x16x896xbf16, #tpu.memory_space<vmem>>
      %344 = tpu.memref_squeeze %343 : memref<1x16x896xbf16, #tpu.memory_space<vmem>> -> memref<16x896xbf16, #tpu.memory_space<vmem>>
      %345 = tpu.memref_slice %arg7[%c0_i32_251] : memref<4x!tpu.dma_semaphore, #tpu.memory_space<semaphore_mem>> -> memref<1x!tpu.dma_semaphore, #tpu.memory_space<semaphore_mem>>
      %346 = tpu.memref_squeeze %345 : memref<1x!tpu.dma_semaphore, #tpu.memory_space<semaphore_mem>> -> memref<!tpu.dma_semaphore, #tpu.memory_space<semaphore_mem>>
      tpu.wait_dma2 semaphore(%346 : memref<!tpu.dma_semaphore, #tpu.memory_space<semaphore_mem>>) src(%342 : memref<16x896xbf16, #tpu.memory_space<any>>) dst(%344 : memref<16x896xbf16, #tpu.memory_space<vmem>>)
      %c1_i32_256 = arith.constant 1 : i32
      %c1_i32_257 = arith.constant 1 : i32
      %c1_i32_258 = arith.constant 1 : i32
      %c0_i32_259 = arith.constant 0 : i32
      %c0_i32_260 = arith.constant 0 : i32
      %347 = tpu.memref_slice %arg4[%arg0, %c1_i32_256, %c0_i32_259, %c0_i32_260] : memref<2x7x16x896xbf16, #tpu.memory_space<any>> -> memref<1x1x16x896xbf16, #tpu.memory_space<any>>
      %348 = tpu.memref_squeeze %347 : memref<1x1x16x896xbf16, #tpu.memory_space<any>> -> memref<16x896xbf16, #tpu.memory_space<any>>
      %c0_i32_261 = arith.constant 0 : i32
      %c0_i32_262 = arith.constant 0 : i32
      %349 = tpu.memref_slice %arg6[%c1_i32_257, %c0_i32_261, %c0_i32_262] : memref<4x16x896xbf16, #tpu.memory_space<vmem>> -> memref<1x16x896xbf16, #tpu.memory_space<vmem>>
      %350 = tpu.memref_squeeze %349 : memref<1x16x896xbf16, #tpu.memory_space<vmem>> -> memref<16x896xbf16, #tpu.memory_space<vmem>>
      %351 = tpu.memref_slice %arg7[%c1_i32_258] : memref<4x!tpu.dma_semaphore, #tpu.memory_space<semaphore_mem>> -> memref<1x!tpu.dma_semaphore, #tpu.memory_space<semaphore_mem>>
      %352 = tpu.memref_squeeze %351 : memref<1x!tpu.dma_semaphore, #tpu.memory_space<semaphore_mem>> -> memref<!tpu.dma_semaphore, #tpu.memory_space<semaphore_mem>>
      tpu.wait_dma2 semaphore(%352 : memref<!tpu.dma_semaphore, #tpu.memory_space<semaphore_mem>>) src(%348 : memref<16x896xbf16, #tpu.memory_space<any>>) dst(%350 : memref<16x896xbf16, #tpu.memory_space<vmem>>)
      %c2_i32_263 = arith.constant 2 : i32
      %c2_i32_264 = arith.constant 2 : i32
      %c2_i32_265 = arith.constant 2 : i32
      %c0_i32_266 = arith.constant 0 : i32
      %c0_i32_267 = arith.constant 0 : i32
      %353 = tpu.memref_slice %arg4[%arg0, %c2_i32_263, %c0_i32_266, %c0_i32_267] : memref<2x7x16x896xbf16, #tpu.memory_space<any>> -> memref<1x1x16x896xbf16, #tpu.memory_space<any>>
      %354 = tpu.memref_squeeze %353 : memref<1x1x16x896xbf16, #tpu.memory_space<any>> -> memref<16x896xbf16, #tpu.memory_space<any>>
      %c0_i32_268 = arith.constant 0 : i32
      %c0_i32_269 = arith.constant 0 : i32
      %355 = tpu.memref_slice %arg6[%c2_i32_264, %c0_i32_268, %c0_i32_269] : memref<4x16x896xbf16, #tpu.memory_space<vmem>> -> memref<1x16x896xbf16, #tpu.memory_space<vmem>>
      %356 = tpu.memref_squeeze %355 : memref<1x16x896xbf16, #tpu.memory_space<vmem>> -> memref<16x896xbf16, #tpu.memory_space<vmem>>
      %357 = tpu.memref_slice %arg7[%c2_i32_265] : memref<4x!tpu.dma_semaphore, #tpu.memory_space<semaphore_mem>> -> memref<1x!tpu.dma_semaphore, #tpu.memory_space<semaphore_mem>>
      %358 = tpu.memref_squeeze %357 : memref<1x!tpu.dma_semaphore, #tpu.memory_space<semaphore_mem>> -> memref<!tpu.dma_semaphore, #tpu.memory_space<semaphore_mem>>
      tpu.wait_dma2 semaphore(%358 : memref<!tpu.dma_semaphore, #tpu.memory_space<semaphore_mem>>) src(%354 : memref<16x896xbf16, #tpu.memory_space<any>>) dst(%356 : memref<16x896xbf16, #tpu.memory_space<vmem>>)
    } else {
    }
    %c0_i32_1 = arith.constant 0 : i32
    %3 = arith.cmpi sgt, %arg1, %c0_i32_1 : i32
    %4 = arith.extui %3 : i1 to i32
    %c0_i32_2 = arith.constant 0 : i32
    %5 = arith.cmpi ne, %4, %c0_i32_2 : i32
    scf.if %5 {
      %c3_i32_221 = arith.constant 3 : i32
      %317 = arith.addi %arg1, %c3_i32_221 : i32
      %c6_i32 = arith.constant 6 : i32
      %318 = arith.cmpi sle, %317, %c6_i32 : i32
      %319 = arith.extui %318 : i1 to i32
      %c0_i32_222 = arith.constant 0 : i32
      %320 = arith.cmpi ne, %319, %c0_i32_222 : i32
      scf.if %320 {
        %c3_i32_230 = arith.constant 3 : i32
        %330 = arith.addi %arg1, %c3_i32_230 : i32
        %c3_i32_231 = arith.constant 3 : i32
        %331 = arith.addi %arg1, %c3_i32_231 : i32
        %c3_i32_232 = arith.constant 3 : i32
        %332 = arith.andi %331, %c3_i32_232 : i32
        %c0_i32_233 = arith.constant 0 : i32
        %c0_i32_234 = arith.constant 0 : i32
        %333 = tpu.memref_slice %arg4[%arg0, %330, %c0_i32_233, %c0_i32_234] : memref<2x7x16x896xbf16, #tpu.memory_space<any>> -> memref<1x1x16x896xbf16, #tpu.memory_space<any>>
        %334 = tpu.memref_squeeze %333 : memref<1x1x16x896xbf16, #tpu.memory_space<any>> -> memref<16x896xbf16, #tpu.memory_space<any>>
        %c0_i32_235 = arith.constant 0 : i32
        %c0_i32_236 = arith.constant 0 : i32
        %335 = tpu.memref_slice %arg6[%332, %c0_i32_235, %c0_i32_236] : memref<4x16x896xbf16, #tpu.memory_space<vmem>> -> memref<1x16x896xbf16, #tpu.memory_space<vmem>>
        %336 = tpu.memref_squeeze %335 : memref<1x16x896xbf16, #tpu.memory_space<vmem>> -> memref<16x896xbf16, #tpu.memory_space<vmem>>
        %337 = tpu.memref_slice %arg7[%332] : memref<4x!tpu.dma_semaphore, #tpu.memory_space<semaphore_mem>> -> memref<1x!tpu.dma_semaphore, #tpu.memory_space<semaphore_mem>>
        %338 = tpu.memref_squeeze %337 : memref<1x!tpu.dma_semaphore, #tpu.memory_space<semaphore_mem>> -> memref<!tpu.dma_semaphore, #tpu.memory_space<semaphore_mem>>
        tpu.enqueue_dma source(%334 : memref<16x896xbf16, #tpu.memory_space<any>>) target(%336 : memref<16x896xbf16, #tpu.memory_space<vmem>>) target_semaphore(%338 : memref<!tpu.dma_semaphore, #tpu.memory_space<semaphore_mem>>)
      } else {
      }
      %c2_i32_223 = arith.constant 2 : i32
      %321 = arith.addi %arg1, %c2_i32_223 : i32
      %c2_i32_224 = arith.constant 2 : i32
      %322 = arith.addi %arg1, %c2_i32_224 : i32
      %c3_i32_225 = arith.constant 3 : i32
      %323 = arith.andi %322, %c3_i32_225 : i32
      %c0_i32_226 = arith.constant 0 : i32
      %c0_i32_227 = arith.constant 0 : i32
      %324 = tpu.memref_slice %arg4[%arg0, %321, %c0_i32_226, %c0_i32_227] : memref<2x7x16x896xbf16, #tpu.memory_space<any>> -> memref<1x1x16x896xbf16, #tpu.memory_space<any>>
      %325 = tpu.memref_squeeze %324 : memref<1x1x16x896xbf16, #tpu.memory_space<any>> -> memref<16x896xbf16, #tpu.memory_space<any>>
      %c0_i32_228 = arith.constant 0 : i32
      %c0_i32_229 = arith.constant 0 : i32
      %326 = tpu.memref_slice %arg6[%323, %c0_i32_228, %c0_i32_229] : memref<4x16x896xbf16, #tpu.memory_space<vmem>> -> memref<1x16x896xbf16, #tpu.memory_space<vmem>>
      %327 = tpu.memref_squeeze %326 : memref<1x16x896xbf16, #tpu.memory_space<vmem>> -> memref<16x896xbf16, #tpu.memory_space<vmem>>
      %328 = tpu.memref_slice %arg7[%323] : memref<4x!tpu.dma_semaphore, #tpu.memory_space<semaphore_mem>> -> memref<1x!tpu.dma_semaphore, #tpu.memory_space<semaphore_mem>>
      %329 = tpu.memref_squeeze %328 : memref<1x!tpu.dma_semaphore, #tpu.memory_space<semaphore_mem>> -> memref<!tpu.dma_semaphore, #tpu.memory_space<semaphore_mem>>
      tpu.wait_dma2 semaphore(%329 : memref<!tpu.dma_semaphore, #tpu.memory_space<semaphore_mem>>) src(%325 : memref<16x896xbf16, #tpu.memory_space<any>>) dst(%327 : memref<16x896xbf16, #tpu.memory_space<vmem>>)
    } else {
    }
    %c0 = arith.constant 0 : index
    %c0_3 = arith.constant 0 : index
    %6 = vector.load %arg3[%c0, %c0_3] : memref<16x1xf32, #tpu.memory_space<vmem>>, vector<16x1xf32>
    %7 = vector.shape_cast %6 : vector<16x1xf32> to vector<16x1xf32>
    %8 = vector.broadcast %7 : vector<16x1xf32> to vector<16x256xf32>
    %9 = vector.shape_cast %6 : vector<16x1xf32> to vector<16x1xf32>
    %10 = vector.broadcast %9 : vector<16x1xf32> to vector<16x512xf32>
    %c0_i32_4 = arith.constant 0 : i32
    %11 = arith.addi %arg1, %c0_i32_4 : i32
    %c3_i32 = arith.constant 3 : i32
    %12 = arith.andi %11, %c3_i32 : i32
    %13 = arith.index_cast %12 : i32 to index
    %c0_5 = arith.constant 0 : index
    %c0_6 = arith.constant 0 : index
    %14 = vector.load %arg6[%13, %c0_5, %c0_6] : memref<4x16x896xbf16, #tpu.memory_space<vmem>>, vector<1x16x640xbf16>
    %15 = vector.shape_cast %14 : vector<1x16x640xbf16> to vector<16x640xbf16>
    %c1_i32 = arith.constant 1 : i32
    %16 = arith.addi %arg1, %c1_i32 : i32
    %c3_i32_7 = arith.constant 3 : i32
    %17 = arith.andi %16, %c3_i32_7 : i32
    %18 = arith.index_cast %17 : i32 to index
    %c0_8 = arith.constant 0 : index
    %c0_9 = arith.constant 0 : index
    %19 = vector.load %arg6[%18, %c0_8, %c0_9] : memref<4x16x896xbf16, #tpu.memory_space<vmem>>, vector<1x16x640xbf16>
    %20 = vector.shape_cast %19 : vector<1x16x640xbf16> to vector<16x640xbf16>
    %c2_i32 = arith.constant 2 : i32
    %21 = arith.addi %arg1, %c2_i32 : i32
    %c3_i32_10 = arith.constant 3 : i32
    %22 = arith.andi %21, %c3_i32_10 : i32
    %23 = arith.index_cast %22 : i32 to index
    %c0_11 = arith.constant 0 : index
    %c0_12 = arith.constant 0 : index
    %24 = vector.load %arg6[%23, %c0_11, %c0_12] : memref<4x16x896xbf16, #tpu.memory_space<vmem>>, vector<1x16x640xbf16>
    %25 = vector.shape_cast %24 : vector<1x16x640xbf16> to vector<16x640xbf16>
    %26 = vector.extract_strided_slice %15 {offsets = [0, 31], sizes = [16, 512], strides = [1, 1]} : vector<16x640xbf16> to vector<16x512xbf16>
    %c0_13 = arith.constant 0 : index
    %c0_14 = arith.constant 0 : index
    %c0_15 = arith.constant 0 : index
    %27 = vector.load %arg2[%c0_13, %c0_14, %c0_15] : memref<27x16x16xbf16, #tpu.memory_space<vmem>>, vector<1x16x16xbf16>
    %28 = vector.shape_cast %27 : vector<1x16x16xbf16> to vector<16x16xbf16>
    %cst = arith.constant dense<0.000000e+00> : vector<16x512xf32>
    %29 = tpu.matmul %28, %26, %cst {dimension_numbers = #tpu.dot_dimension_numbers<[1], [0], [0], [1], [0, 0, 1, 1], [], []>} : vector<16x16xbf16>, vector<16x512xbf16>, vector<16x512xf32> -> vector<16x512xf32>
    %30 = arith.addf %10, %29 : vector<16x512xf32>
    %31 = vector.extract_strided_slice %15 {offsets = [0, 32], sizes = [16, 512], strides = [1, 1]} : vector<16x640xbf16> to vector<16x512xbf16>
    %c1 = arith.constant 1 : index
    %c0_16 = arith.constant 0 : index
    %c0_17 = arith.constant 0 : index
    %32 = vector.load %arg2[%c1, %c0_16, %c0_17] : memref<27x16x16xbf16, #tpu.memory_space<vmem>>, vector<1x16x16xbf16>
    %33 = vector.shape_cast %32 : vector<1x16x16xbf16> to vector<16x16xbf16>
    %cst_18 = arith.constant dense<0.000000e+00> : vector<16x512xf32>
    %34 = tpu.matmul %33, %31, %cst_18 {dimension_numbers = #tpu.dot_dimension_numbers<[1], [0], [0], [1], [0, 0, 1, 1], [], []>} : vector<16x16xbf16>, vector<16x512xbf16>, vector<16x512xf32> -> vector<16x512xf32>
    %35 = arith.addf %30, %34 : vector<16x512xf32>
    %36 = vector.extract_strided_slice %15 {offsets = [0, 33], sizes = [16, 512], strides = [1, 1]} : vector<16x640xbf16> to vector<16x512xbf16>
    %c2 = arith.constant 2 : index
    %c0_19 = arith.constant 0 : index
    %c0_20 = arith.constant 0 : index
    %37 = vector.load %arg2[%c2, %c0_19, %c0_20] : memref<27x16x16xbf16, #tpu.memory_space<vmem>>, vector<1x16x16xbf16>
    %38 = vector.shape_cast %37 : vector<1x16x16xbf16> to vector<16x16xbf16>
    %cst_21 = arith.constant dense<0.000000e+00> : vector<16x512xf32>
    %39 = tpu.matmul %38, %36, %cst_21 {dimension_numbers = #tpu.dot_dimension_numbers<[1], [0], [0], [1], [0, 0, 1, 1], [], []>} : vector<16x16xbf16>, vector<16x512xbf16>, vector<16x512xf32> -> vector<16x512xf32>
    %40 = arith.addf %35, %39 : vector<16x512xf32>
    %41 = vector.extract_strided_slice %15 {offsets = [0, 63], sizes = [16, 512], strides = [1, 1]} : vector<16x640xbf16> to vector<16x512xbf16>
    %c3 = arith.constant 3 : index
    %c0_22 = arith.constant 0 : index
    %c0_23 = arith.constant 0 : index
    %42 = vector.load %arg2[%c3, %c0_22, %c0_23] : memref<27x16x16xbf16, #tpu.memory_space<vmem>>, vector<1x16x16xbf16>
    %43 = vector.shape_cast %42 : vector<1x16x16xbf16> to vector<16x16xbf16>
    %cst_24 = arith.constant dense<0.000000e+00> : vector<16x512xf32>
    %44 = tpu.matmul %43, %41, %cst_24 {dimension_numbers = #tpu.dot_dimension_numbers<[1], [0], [0], [1], [0, 0, 1, 1], [], []>} : vector<16x16xbf16>, vector<16x512xbf16>, vector<16x512xf32> -> vector<16x512xf32>
    %45 = arith.addf %40, %44 : vector<16x512xf32>
    %46 = vector.extract_strided_slice %15 {offsets = [0, 64], sizes = [16, 512], strides = [1, 1]} : vector<16x640xbf16> to vector<16x512xbf16>
    %c4 = arith.constant 4 : index
    %c0_25 = arith.constant 0 : index
    %c0_26 = arith.constant 0 : index
    %47 = vector.load %arg2[%c4, %c0_25, %c0_26] : memref<27x16x16xbf16, #tpu.memory_space<vmem>>, vector<1x16x16xbf16>
    %48 = vector.shape_cast %47 : vector<1x16x16xbf16> to vector<16x16xbf16>
    %cst_27 = arith.constant dense<0.000000e+00> : vector<16x512xf32>
    %49 = tpu.matmul %48, %46, %cst_27 {dimension_numbers = #tpu.dot_dimension_numbers<[1], [0], [0], [1], [0, 0, 1, 1], [], []>} : vector<16x16xbf16>, vector<16x512xbf16>, vector<16x512xf32> -> vector<16x512xf32>
    %50 = arith.addf %45, %49 : vector<16x512xf32>
    %51 = vector.extract_strided_slice %15 {offsets = [0, 65], sizes = [16, 512], strides = [1, 1]} : vector<16x640xbf16> to vector<16x512xbf16>
    %c5 = arith.constant 5 : index
    %c0_28 = arith.constant 0 : index
    %c0_29 = arith.constant 0 : index
    %52 = vector.load %arg2[%c5, %c0_28, %c0_29] : memref<27x16x16xbf16, #tpu.memory_space<vmem>>, vector<1x16x16xbf16>
    %53 = vector.shape_cast %52 : vector<1x16x16xbf16> to vector<16x16xbf16>
    %cst_30 = arith.constant dense<0.000000e+00> : vector<16x512xf32>
    %54 = tpu.matmul %53, %51, %cst_30 {dimension_numbers = #tpu.dot_dimension_numbers<[1], [0], [0], [1], [0, 0, 1, 1], [], []>} : vector<16x16xbf16>, vector<16x512xbf16>, vector<16x512xf32> -> vector<16x512xf32>
    %55 = arith.addf %50, %54 : vector<16x512xf32>
    %56 = vector.extract_strided_slice %15 {offsets = [0, 95], sizes = [16, 512], strides = [1, 1]} : vector<16x640xbf16> to vector<16x512xbf16>
    %c6 = arith.constant 6 : index
    %c0_31 = arith.constant 0 : index
    %c0_32 = arith.constant 0 : index
    %57 = vector.load %arg2[%c6, %c0_31, %c0_32] : memref<27x16x16xbf16, #tpu.memory_space<vmem>>, vector<1x16x16xbf16>
    %58 = vector.shape_cast %57 : vector<1x16x16xbf16> to vector<16x16xbf16>
    %cst_33 = arith.constant dense<0.000000e+00> : vector<16x512xf32>
    %59 = tpu.matmul %58, %56, %cst_33 {dimension_numbers = #tpu.dot_dimension_numbers<[1], [0], [0], [1], [0, 0, 1, 1], [], []>} : vector<16x16xbf16>, vector<16x512xbf16>, vector<16x512xf32> -> vector<16x512xf32>
    %60 = arith.addf %55, %59 : vector<16x512xf32>
    %61 = vector.extract_strided_slice %15 {offsets = [0, 96], sizes = [16, 512], strides = [1, 1]} : vector<16x640xbf16> to vector<16x512xbf16>
    %c7 = arith.constant 7 : index
    %c0_34 = arith.constant 0 : index
    %c0_35 = arith.constant 0 : index
    %62 = vector.load %arg2[%c7, %c0_34, %c0_35] : memref<27x16x16xbf16, #tpu.memory_space<vmem>>, vector<1x16x16xbf16>
    %63 = vector.shape_cast %62 : vector<1x16x16xbf16> to vector<16x16xbf16>
    %cst_36 = arith.constant dense<0.000000e+00> : vector<16x512xf32>
    %64 = tpu.matmul %63, %61, %cst_36 {dimension_numbers = #tpu.dot_dimension_numbers<[1], [0], [0], [1], [0, 0, 1, 1], [], []>} : vector<16x16xbf16>, vector<16x512xbf16>, vector<16x512xf32> -> vector<16x512xf32>
    %65 = arith.addf %60, %64 : vector<16x512xf32>
    %66 = vector.extract_strided_slice %15 {offsets = [0, 97], sizes = [16, 512], strides = [1, 1]} : vector<16x640xbf16> to vector<16x512xbf16>
    %c8 = arith.constant 8 : index
    %c0_37 = arith.constant 0 : index
    %c0_38 = arith.constant 0 : index
    %67 = vector.load %arg2[%c8, %c0_37, %c0_38] : memref<27x16x16xbf16, #tpu.memory_space<vmem>>, vector<1x16x16xbf16>
    %68 = vector.shape_cast %67 : vector<1x16x16xbf16> to vector<16x16xbf16>
    %cst_39 = arith.constant dense<0.000000e+00> : vector<16x512xf32>
    %69 = tpu.matmul %68, %66, %cst_39 {dimension_numbers = #tpu.dot_dimension_numbers<[1], [0], [0], [1], [0, 0, 1, 1], [], []>} : vector<16x16xbf16>, vector<16x512xbf16>, vector<16x512xf32> -> vector<16x512xf32>
    %70 = arith.addf %65, %69 : vector<16x512xf32>
    %71 = vector.extract_strided_slice %20 {offsets = [0, 31], sizes = [16, 512], strides = [1, 1]} : vector<16x640xbf16> to vector<16x512xbf16>
    %c9 = arith.constant 9 : index
    %c0_40 = arith.constant 0 : index
    %c0_41 = arith.constant 0 : index
    %72 = vector.load %arg2[%c9, %c0_40, %c0_41] : memref<27x16x16xbf16, #tpu.memory_space<vmem>>, vector<1x16x16xbf16>
    %73 = vector.shape_cast %72 : vector<1x16x16xbf16> to vector<16x16xbf16>
    %cst_42 = arith.constant dense<0.000000e+00> : vector<16x512xf32>
    %74 = tpu.matmul %73, %71, %cst_42 {dimension_numbers = #tpu.dot_dimension_numbers<[1], [0], [0], [1], [0, 0, 1, 1], [], []>} : vector<16x16xbf16>, vector<16x512xbf16>, vector<16x512xf32> -> vector<16x512xf32>
    %75 = arith.addf %70, %74 : vector<16x512xf32>
    %76 = vector.extract_strided_slice %20 {offsets = [0, 32], sizes = [16, 512], strides = [1, 1]} : vector<16x640xbf16> to vector<16x512xbf16>
    %c10 = arith.constant 10 : index
    %c0_43 = arith.constant 0 : index
    %c0_44 = arith.constant 0 : index
    %77 = vector.load %arg2[%c10, %c0_43, %c0_44] : memref<27x16x16xbf16, #tpu.memory_space<vmem>>, vector<1x16x16xbf16>
    %78 = vector.shape_cast %77 : vector<1x16x16xbf16> to vector<16x16xbf16>
    %cst_45 = arith.constant dense<0.000000e+00> : vector<16x512xf32>
    %79 = tpu.matmul %78, %76, %cst_45 {dimension_numbers = #tpu.dot_dimension_numbers<[1], [0], [0], [1], [0, 0, 1, 1], [], []>} : vector<16x16xbf16>, vector<16x512xbf16>, vector<16x512xf32> -> vector<16x512xf32>
    %80 = arith.addf %75, %79 : vector<16x512xf32>
    %81 = vector.extract_strided_slice %20 {offsets = [0, 33], sizes = [16, 512], strides = [1, 1]} : vector<16x640xbf16> to vector<16x512xbf16>
    %c11 = arith.constant 11 : index
    %c0_46 = arith.constant 0 : index
    %c0_47 = arith.constant 0 : index
    %82 = vector.load %arg2[%c11, %c0_46, %c0_47] : memref<27x16x16xbf16, #tpu.memory_space<vmem>>, vector<1x16x16xbf16>
    %83 = vector.shape_cast %82 : vector<1x16x16xbf16> to vector<16x16xbf16>
    %cst_48 = arith.constant dense<0.000000e+00> : vector<16x512xf32>
    %84 = tpu.matmul %83, %81, %cst_48 {dimension_numbers = #tpu.dot_dimension_numbers<[1], [0], [0], [1], [0, 0, 1, 1], [], []>} : vector<16x16xbf16>, vector<16x512xbf16>, vector<16x512xf32> -> vector<16x512xf32>
    %85 = arith.addf %80, %84 : vector<16x512xf32>
    %86 = vector.extract_strided_slice %20 {offsets = [0, 63], sizes = [16, 512], strides = [1, 1]} : vector<16x640xbf16> to vector<16x512xbf16>
    %c12 = arith.constant 12 : index
    %c0_49 = arith.constant 0 : index
    %c0_50 = arith.constant 0 : index
    %87 = vector.load %arg2[%c12, %c0_49, %c0_50] : memref<27x16x16xbf16, #tpu.memory_space<vmem>>, vector<1x16x16xbf16>
    %88 = vector.shape_cast %87 : vector<1x16x16xbf16> to vector<16x16xbf16>
    %cst_51 = arith.constant dense<0.000000e+00> : vector<16x512xf32>
    %89 = tpu.matmul %88, %86, %cst_51 {dimension_numbers = #tpu.dot_dimension_numbers<[1], [0], [0], [1], [0, 0, 1, 1], [], []>} : vector<16x16xbf16>, vector<16x512xbf16>, vector<16x512xf32> -> vector<16x512xf32>
    %90 = arith.addf %85, %89 : vector<16x512xf32>
    %91 = vector.extract_strided_slice %20 {offsets = [0, 64], sizes = [16, 512], strides = [1, 1]} : vector<16x640xbf16> to vector<16x512xbf16>
    %c13 = arith.constant 13 : index
    %c0_52 = arith.constant 0 : index
    %c0_53 = arith.constant 0 : index
    %92 = vector.load %arg2[%c13, %c0_52, %c0_53] : memref<27x16x16xbf16, #tpu.memory_space<vmem>>, vector<1x16x16xbf16>
    %93 = vector.shape_cast %92 : vector<1x16x16xbf16> to vector<16x16xbf16>
    %cst_54 = arith.constant dense<0.000000e+00> : vector<16x512xf32>
    %94 = tpu.matmul %93, %91, %cst_54 {dimension_numbers = #tpu.dot_dimension_numbers<[1], [0], [0], [1], [0, 0, 1, 1], [], []>} : vector<16x16xbf16>, vector<16x512xbf16>, vector<16x512xf32> -> vector<16x512xf32>
    %95 = arith.addf %90, %94 : vector<16x512xf32>
    %96 = vector.extract_strided_slice %20 {offsets = [0, 65], sizes = [16, 512], strides = [1, 1]} : vector<16x640xbf16> to vector<16x512xbf16>
    %c14 = arith.constant 14 : index
    %c0_55 = arith.constant 0 : index
    %c0_56 = arith.constant 0 : index
    %97 = vector.load %arg2[%c14, %c0_55, %c0_56] : memref<27x16x16xbf16, #tpu.memory_space<vmem>>, vector<1x16x16xbf16>
    %98 = vector.shape_cast %97 : vector<1x16x16xbf16> to vector<16x16xbf16>
    %cst_57 = arith.constant dense<0.000000e+00> : vector<16x512xf32>
    %99 = tpu.matmul %98, %96, %cst_57 {dimension_numbers = #tpu.dot_dimension_numbers<[1], [0], [0], [1], [0, 0, 1, 1], [], []>} : vector<16x16xbf16>, vector<16x512xbf16>, vector<16x512xf32> -> vector<16x512xf32>
    %100 = arith.addf %95, %99 : vector<16x512xf32>
    %101 = vector.extract_strided_slice %20 {offsets = [0, 95], sizes = [16, 512], strides = [1, 1]} : vector<16x640xbf16> to vector<16x512xbf16>
    %c15 = arith.constant 15 : index
    %c0_58 = arith.constant 0 : index
    %c0_59 = arith.constant 0 : index
    %102 = vector.load %arg2[%c15, %c0_58, %c0_59] : memref<27x16x16xbf16, #tpu.memory_space<vmem>>, vector<1x16x16xbf16>
    %103 = vector.shape_cast %102 : vector<1x16x16xbf16> to vector<16x16xbf16>
    %cst_60 = arith.constant dense<0.000000e+00> : vector<16x512xf32>
    %104 = tpu.matmul %103, %101, %cst_60 {dimension_numbers = #tpu.dot_dimension_numbers<[1], [0], [0], [1], [0, 0, 1, 1], [], []>} : vector<16x16xbf16>, vector<16x512xbf16>, vector<16x512xf32> -> vector<16x512xf32>
    %105 = arith.addf %100, %104 : vector<16x512xf32>
    %106 = vector.extract_strided_slice %20 {offsets = [0, 96], sizes = [16, 512], strides = [1, 1]} : vector<16x640xbf16> to vector<16x512xbf16>
    %c16 = arith.constant 16 : index
    %c0_61 = arith.constant 0 : index
    %c0_62 = arith.constant 0 : index
    %107 = vector.load %arg2[%c16, %c0_61, %c0_62] : memref<27x16x16xbf16, #tpu.memory_space<vmem>>, vector<1x16x16xbf16>
    %108 = vector.shape_cast %107 : vector<1x16x16xbf16> to vector<16x16xbf16>
    %cst_63 = arith.constant dense<0.000000e+00> : vector<16x512xf32>
    %109 = tpu.matmul %108, %106, %cst_63 {dimension_numbers = #tpu.dot_dimension_numbers<[1], [0], [0], [1], [0, 0, 1, 1], [], []>} : vector<16x16xbf16>, vector<16x512xbf16>, vector<16x512xf32> -> vector<16x512xf32>
    %110 = arith.addf %105, %109 : vector<16x512xf32>
    %111 = vector.extract_strided_slice %20 {offsets = [0, 97], sizes = [16, 512], strides = [1, 1]} : vector<16x640xbf16> to vector<16x512xbf16>
    %c17 = arith.constant 17 : index
    %c0_64 = arith.constant 0 : index
    %c0_65 = arith.constant 0 : index
    %112 = vector.load %arg2[%c17, %c0_64, %c0_65] : memref<27x16x16xbf16, #tpu.memory_space<vmem>>, vector<1x16x16xbf16>
    %113 = vector.shape_cast %112 : vector<1x16x16xbf16> to vector<16x16xbf16>
    %cst_66 = arith.constant dense<0.000000e+00> : vector<16x512xf32>
    %114 = tpu.matmul %113, %111, %cst_66 {dimension_numbers = #tpu.dot_dimension_numbers<[1], [0], [0], [1], [0, 0, 1, 1], [], []>} : vector<16x16xbf16>, vector<16x512xbf16>, vector<16x512xf32> -> vector<16x512xf32>
    %115 = arith.addf %110, %114 : vector<16x512xf32>
    %116 = vector.extract_strided_slice %25 {offsets = [0, 31], sizes = [16, 512], strides = [1, 1]} : vector<16x640xbf16> to vector<16x512xbf16>
    %c18 = arith.constant 18 : index
    %c0_67 = arith.constant 0 : index
    %c0_68 = arith.constant 0 : index
    %117 = vector.load %arg2[%c18, %c0_67, %c0_68] : memref<27x16x16xbf16, #tpu.memory_space<vmem>>, vector<1x16x16xbf16>
    %118 = vector.shape_cast %117 : vector<1x16x16xbf16> to vector<16x16xbf16>
    %cst_69 = arith.constant dense<0.000000e+00> : vector<16x512xf32>
    %119 = tpu.matmul %118, %116, %cst_69 {dimension_numbers = #tpu.dot_dimension_numbers<[1], [0], [0], [1], [0, 0, 1, 1], [], []>} : vector<16x16xbf16>, vector<16x512xbf16>, vector<16x512xf32> -> vector<16x512xf32>
    %120 = arith.addf %115, %119 : vector<16x512xf32>
    %121 = vector.extract_strided_slice %25 {offsets = [0, 32], sizes = [16, 512], strides = [1, 1]} : vector<16x640xbf16> to vector<16x512xbf16>
    %c19 = arith.constant 19 : index
    %c0_70 = arith.constant 0 : index
    %c0_71 = arith.constant 0 : index
    %122 = vector.load %arg2[%c19, %c0_70, %c0_71] : memref<27x16x16xbf16, #tpu.memory_space<vmem>>, vector<1x16x16xbf16>
    %123 = vector.shape_cast %122 : vector<1x16x16xbf16> to vector<16x16xbf16>
    %cst_72 = arith.constant dense<0.000000e+00> : vector<16x512xf32>
    %124 = tpu.matmul %123, %121, %cst_72 {dimension_numbers = #tpu.dot_dimension_numbers<[1], [0], [0], [1], [0, 0, 1, 1], [], []>} : vector<16x16xbf16>, vector<16x512xbf16>, vector<16x512xf32> -> vector<16x512xf32>
    %125 = arith.addf %120, %124 : vector<16x512xf32>
    %126 = vector.extract_strided_slice %25 {offsets = [0, 33], sizes = [16, 512], strides = [1, 1]} : vector<16x640xbf16> to vector<16x512xbf16>
    %c20 = arith.constant 20 : index
    %c0_73 = arith.constant 0 : index
    %c0_74 = arith.constant 0 : index
    %127 = vector.load %arg2[%c20, %c0_73, %c0_74] : memref<27x16x16xbf16, #tpu.memory_space<vmem>>, vector<1x16x16xbf16>
    %128 = vector.shape_cast %127 : vector<1x16x16xbf16> to vector<16x16xbf16>
    %cst_75 = arith.constant dense<0.000000e+00> : vector<16x512xf32>
    %129 = tpu.matmul %128, %126, %cst_75 {dimension_numbers = #tpu.dot_dimension_numbers<[1], [0], [0], [1], [0, 0, 1, 1], [], []>} : vector<16x16xbf16>, vector<16x512xbf16>, vector<16x512xf32> -> vector<16x512xf32>
    %130 = arith.addf %125, %129 : vector<16x512xf32>
    %131 = vector.extract_strided_slice %25 {offsets = [0, 63], sizes = [16, 512], strides = [1, 1]} : vector<16x640xbf16> to vector<16x512xbf16>
    %c21 = arith.constant 21 : index
    %c0_76 = arith.constant 0 : index
    %c0_77 = arith.constant 0 : index
    %132 = vector.load %arg2[%c21, %c0_76, %c0_77] : memref<27x16x16xbf16, #tpu.memory_space<vmem>>, vector<1x16x16xbf16>
    %133 = vector.shape_cast %132 : vector<1x16x16xbf16> to vector<16x16xbf16>
    %cst_78 = arith.constant dense<0.000000e+00> : vector<16x512xf32>
    %134 = tpu.matmul %133, %131, %cst_78 {dimension_numbers = #tpu.dot_dimension_numbers<[1], [0], [0], [1], [0, 0, 1, 1], [], []>} : vector<16x16xbf16>, vector<16x512xbf16>, vector<16x512xf32> -> vector<16x512xf32>
    %135 = arith.addf %130, %134 : vector<16x512xf32>
    %136 = vector.extract_strided_slice %25 {offsets = [0, 64], sizes = [16, 512], strides = [1, 1]} : vector<16x640xbf16> to vector<16x512xbf16>
    %c22 = arith.constant 22 : index
    %c0_79 = arith.constant 0 : index
    %c0_80 = arith.constant 0 : index
    %137 = vector.load %arg2[%c22, %c0_79, %c0_80] : memref<27x16x16xbf16, #tpu.memory_space<vmem>>, vector<1x16x16xbf16>
    %138 = vector.shape_cast %137 : vector<1x16x16xbf16> to vector<16x16xbf16>
    %cst_81 = arith.constant dense<0.000000e+00> : vector<16x512xf32>
    %139 = tpu.matmul %138, %136, %cst_81 {dimension_numbers = #tpu.dot_dimension_numbers<[1], [0], [0], [1], [0, 0, 1, 1], [], []>} : vector<16x16xbf16>, vector<16x512xbf16>, vector<16x512xf32> -> vector<16x512xf32>
    %140 = arith.addf %135, %139 : vector<16x512xf32>
    %141 = vector.extract_strided_slice %25 {offsets = [0, 65], sizes = [16, 512], strides = [1, 1]} : vector<16x640xbf16> to vector<16x512xbf16>
    %c23 = arith.constant 23 : index
    %c0_82 = arith.constant 0 : index
    %c0_83 = arith.constant 0 : index
    %142 = vector.load %arg2[%c23, %c0_82, %c0_83] : memref<27x16x16xbf16, #tpu.memory_space<vmem>>, vector<1x16x16xbf16>
    %143 = vector.shape_cast %142 : vector<1x16x16xbf16> to vector<16x16xbf16>
    %cst_84 = arith.constant dense<0.000000e+00> : vector<16x512xf32>
    %144 = tpu.matmul %143, %141, %cst_84 {dimension_numbers = #tpu.dot_dimension_numbers<[1], [0], [0], [1], [0, 0, 1, 1], [], []>} : vector<16x16xbf16>, vector<16x512xbf16>, vector<16x512xf32> -> vector<16x512xf32>
    %145 = arith.addf %140, %144 : vector<16x512xf32>
    %146 = vector.extract_strided_slice %25 {offsets = [0, 95], sizes = [16, 512], strides = [1, 1]} : vector<16x640xbf16> to vector<16x512xbf16>
    %c24 = arith.constant 24 : index
    %c0_85 = arith.constant 0 : index
    %c0_86 = arith.constant 0 : index
    %147 = vector.load %arg2[%c24, %c0_85, %c0_86] : memref<27x16x16xbf16, #tpu.memory_space<vmem>>, vector<1x16x16xbf16>
    %148 = vector.shape_cast %147 : vector<1x16x16xbf16> to vector<16x16xbf16>
    %cst_87 = arith.constant dense<0.000000e+00> : vector<16x512xf32>
    %149 = tpu.matmul %148, %146, %cst_87 {dimension_numbers = #tpu.dot_dimension_numbers<[1], [0], [0], [1], [0, 0, 1, 1], [], []>} : vector<16x16xbf16>, vector<16x512xbf16>, vector<16x512xf32> -> vector<16x512xf32>
    %150 = arith.addf %145, %149 : vector<16x512xf32>
    %151 = vector.extract_strided_slice %25 {offsets = [0, 96], sizes = [16, 512], strides = [1, 1]} : vector<16x640xbf16> to vector<16x512xbf16>
    %c25 = arith.constant 25 : index
    %c0_88 = arith.constant 0 : index
    %c0_89 = arith.constant 0 : index
    %152 = vector.load %arg2[%c25, %c0_88, %c0_89] : memref<27x16x16xbf16, #tpu.memory_space<vmem>>, vector<1x16x16xbf16>
    %153 = vector.shape_cast %152 : vector<1x16x16xbf16> to vector<16x16xbf16>
    %cst_90 = arith.constant dense<0.000000e+00> : vector<16x512xf32>
    %154 = tpu.matmul %153, %151, %cst_90 {dimension_numbers = #tpu.dot_dimension_numbers<[1], [0], [0], [1], [0, 0, 1, 1], [], []>} : vector<16x16xbf16>, vector<16x512xbf16>, vector<16x512xf32> -> vector<16x512xf32>
    %155 = arith.addf %150, %154 : vector<16x512xf32>
    %156 = vector.extract_strided_slice %25 {offsets = [0, 97], sizes = [16, 512], strides = [1, 1]} : vector<16x640xbf16> to vector<16x512xbf16>
    %c26 = arith.constant 26 : index
    %c0_91 = arith.constant 0 : index
    %c0_92 = arith.constant 0 : index
    %157 = vector.load %arg2[%c26, %c0_91, %c0_92] : memref<27x16x16xbf16, #tpu.memory_space<vmem>>, vector<1x16x16xbf16>
    %158 = vector.shape_cast %157 : vector<1x16x16xbf16> to vector<16x16xbf16>
    %cst_93 = arith.constant dense<0.000000e+00> : vector<16x512xf32>
    %159 = tpu.matmul %158, %156, %cst_93 {dimension_numbers = #tpu.dot_dimension_numbers<[1], [0], [0], [1], [0, 0, 1, 1], [], []>} : vector<16x16xbf16>, vector<16x512xbf16>, vector<16x512xf32> -> vector<16x512xf32>
    %160 = arith.addf %155, %159 : vector<16x512xf32>
    %c0_94 = arith.constant 0 : index
    %c0_95 = arith.constant 0 : index
    %c0_96 = arith.constant 0 : index
    %c0_97 = arith.constant 0 : index
    %161 = vector.load %arg5[%c0_94, %c0_95, %c0_96, %c0_97] : memref<1x1x16x768xf32, #tpu.memory_space<vmem>>, vector<1x1x16x512xf32>
    %162 = vector.shape_cast %161 : vector<1x1x16x512xf32> to vector<16x512xf32>
    %163 = vector.shape_cast %160 : vector<16x512xf32> to vector<1x1x16x512xf32>
    tpu.vector_store %arg5[%c0_94, %c0_95, %c0_96, %c0_97], %163 {strides = array<i32>} : memref<1x1x16x768xf32, #tpu.memory_space<vmem>>, vector<1x1x16x512xf32>,
    %c0_i32_98 = arith.constant 0 : i32
    %164 = arith.addi %arg1, %c0_i32_98 : i32
    %c3_i32_99 = arith.constant 3 : i32
    %165 = arith.andi %164, %c3_i32_99 : i32
    %166 = arith.index_cast %165 : i32 to index
    %c0_100 = arith.constant 0 : index
    %c512 = arith.constant 512 : index
    %167 = vector.load %arg6[%166, %c0_100, %c512] : memref<4x16x896xbf16, #tpu.memory_space<vmem>>, vector<1x16x384xbf16>
    %168 = vector.shape_cast %167 : vector<1x16x384xbf16> to vector<16x384xbf16>
    %c1_i32_101 = arith.constant 1 : i32
    %169 = arith.addi %arg1, %c1_i32_101 : i32
    %c3_i32_102 = arith.constant 3 : i32
    %170 = arith.andi %169, %c3_i32_102 : i32
    %171 = arith.index_cast %170 : i32 to index
    %c0_103 = arith.constant 0 : index
    %c512_104 = arith.constant 512 : index
    %172 = vector.load %arg6[%171, %c0_103, %c512_104] : memref<4x16x896xbf16, #tpu.memory_space<vmem>>, vector<1x16x384xbf16>
    %173 = vector.shape_cast %172 : vector<1x16x384xbf16> to vector<16x384xbf16>
    %c2_i32_105 = arith.constant 2 : i32
    %174 = arith.addi %arg1, %c2_i32_105 : i32
    %c3_i32_106 = arith.constant 3 : i32
    %175 = arith.andi %174, %c3_i32_106 : i32
    %176 = arith.index_cast %175 : i32 to index
    %c0_107 = arith.constant 0 : index
    %c512_108 = arith.constant 512 : index
    %177 = vector.load %arg6[%176, %c0_107, %c512_108] : memref<4x16x896xbf16, #tpu.memory_space<vmem>>, vector<1x16x384xbf16>
    %178 = vector.shape_cast %177 : vector<1x16x384xbf16> to vector<16x384xbf16>
    %179 = vector.extract_strided_slice %168 {offsets = [0, 31], sizes = [16, 256], strides = [1, 1]} : vector<16x384xbf16> to vector<16x256xbf16>
    %c0_109 = arith.constant 0 : index
    %c0_110 = arith.constant 0 : index
    %c0_111 = arith.constant 0 : index
    %180 = vector.load %arg2[%c0_109, %c0_110, %c0_111] : memref<27x16x16xbf16, #tpu.memory_space<vmem>>, vector<1x16x16xbf16>
    %181 = vector.shape_cast %180 : vector<1x16x16xbf16> to vector<16x16xbf16>
    %cst_112 = arith.constant dense<0.000000e+00> : vector<16x256xf32>
    %182 = tpu.matmul %181, %179, %cst_112 {dimension_numbers = #tpu.dot_dimension_numbers<[1], [0], [0], [1], [0, 0, 1, 1], [], []>} : vector<16x16xbf16>, vector<16x256xbf16>, vector<16x256xf32> -> vector<16x256xf32>
    %183 = arith.addf %8, %182 : vector<16x256xf32>
    %184 = vector.extract_strided_slice %168 {offsets = [0, 32], sizes = [16, 256], strides = [1, 1]} : vector<16x384xbf16> to vector<16x256xbf16>
    %c1_113 = arith.constant 1 : index
    %c0_114 = arith.constant 0 : index
    %c0_115 = arith.constant 0 : index
    %185 = vector.load %arg2[%c1_113, %c0_114, %c0_115] : memref<27x16x16xbf16, #tpu.memory_space<vmem>>, vector<1x16x16xbf16>
    %186 = vector.shape_cast %185 : vector<1x16x16xbf16> to vector<16x16xbf16>
    %cst_116 = arith.constant dense<0.000000e+00> : vector<16x256xf32>
    %187 = tpu.matmul %186, %184, %cst_116 {dimension_numbers = #tpu.dot_dimension_numbers<[1], [0], [0], [1], [0, 0, 1, 1], [], []>} : vector<16x16xbf16>, vector<16x256xbf16>, vector<16x256xf32> -> vector<16x256xf32>
    %188 = arith.addf %183, %187 : vector<16x256xf32>
    %189 = vector.extract_strided_slice %168 {offsets = [0, 33], sizes = [16, 256], strides = [1, 1]} : vector<16x384xbf16> to vector<16x256xbf16>
    %c2_117 = arith.constant 2 : index
    %c0_118 = arith.constant 0 : index
    %c0_119 = arith.constant 0 : index
    %190 = vector.load %arg2[%c2_117, %c0_118, %c0_119] : memref<27x16x16xbf16, #tpu.memory_space<vmem>>, vector<1x16x16xbf16>
    %191 = vector.shape_cast %190 : vector<1x16x16xbf16> to vector<16x16xbf16>
    %cst_120 = arith.constant dense<0.000000e+00> : vector<16x256xf32>
    %192 = tpu.matmul %191, %189, %cst_120 {dimension_numbers = #tpu.dot_dimension_numbers<[1], [0], [0], [1], [0, 0, 1, 1], [], []>} : vector<16x16xbf16>, vector<16x256xbf16>, vector<16x256xf32> -> vector<16x256xf32>
    %193 = arith.addf %188, %192 : vector<16x256xf32>
    %194 = vector.extract_strided_slice %168 {offsets = [0, 63], sizes = [16, 256], strides = [1, 1]} : vector<16x384xbf16> to vector<16x256xbf16>
    %c3_121 = arith.constant 3 : index
    %c0_122 = arith.constant 0 : index
    %c0_123 = arith.constant 0 : index
    %195 = vector.load %arg2[%c3_121, %c0_122, %c0_123] : memref<27x16x16xbf16, #tpu.memory_space<vmem>>, vector<1x16x16xbf16>
    %196 = vector.shape_cast %195 : vector<1x16x16xbf16> to vector<16x16xbf16>
    %cst_124 = arith.constant dense<0.000000e+00> : vector<16x256xf32>
    %197 = tpu.matmul %196, %194, %cst_124 {dimension_numbers = #tpu.dot_dimension_numbers<[1], [0], [0], [1], [0, 0, 1, 1], [], []>} : vector<16x16xbf16>, vector<16x256xbf16>, vector<16x256xf32> -> vector<16x256xf32>
    %198 = arith.addf %193, %197 : vector<16x256xf32>
    %199 = vector.extract_strided_slice %168 {offsets = [0, 64], sizes = [16, 256], strides = [1, 1]} : vector<16x384xbf16> to vector<16x256xbf16>
    %c4_125 = arith.constant 4 : index
    %c0_126 = arith.constant 0 : index
    %c0_127 = arith.constant 0 : index
    %200 = vector.load %arg2[%c4_125, %c0_126, %c0_127] : memref<27x16x16xbf16, #tpu.memory_space<vmem>>, vector<1x16x16xbf16>
    %201 = vector.shape_cast %200 : vector<1x16x16xbf16> to vector<16x16xbf16>
    %cst_128 = arith.constant dense<0.000000e+00> : vector<16x256xf32>
    %202 = tpu.matmul %201, %199, %cst_128 {dimension_numbers = #tpu.dot_dimension_numbers<[1], [0], [0], [1], [0, 0, 1, 1], [], []>} : vector<16x16xbf16>, vector<16x256xbf16>, vector<16x256xf32> -> vector<16x256xf32>
    %203 = arith.addf %198, %202 : vector<16x256xf32>
    %204 = vector.extract_strided_slice %168 {offsets = [0, 65], sizes = [16, 256], strides = [1, 1]} : vector<16x384xbf16> to vector<16x256xbf16>
    %c5_129 = arith.constant 5 : index
    %c0_130 = arith.constant 0 : index
    %c0_131 = arith.constant 0 : index
    %205 = vector.load %arg2[%c5_129, %c0_130, %c0_131] : memref<27x16x16xbf16, #tpu.memory_space<vmem>>, vector<1x16x16xbf16>
    %206 = vector.shape_cast %205 : vector<1x16x16xbf16> to vector<16x16xbf16>
    %cst_132 = arith.constant dense<0.000000e+00> : vector<16x256xf32>
    %207 = tpu.matmul %206, %204, %cst_132 {dimension_numbers = #tpu.dot_dimension_numbers<[1], [0], [0], [1], [0, 0, 1, 1], [], []>} : vector<16x16xbf16>, vector<16x256xbf16>, vector<16x256xf32> -> vector<16x256xf32>
    %208 = arith.addf %203, %207 : vector<16x256xf32>
    %209 = vector.extract_strided_slice %168 {offsets = [0, 95], sizes = [16, 256], strides = [1, 1]} : vector<16x384xbf16> to vector<16x256xbf16>
    %c6_133 = arith.constant 6 : index
    %c0_134 = arith.constant 0 : index
    %c0_135 = arith.constant 0 : index
    %210 = vector.load %arg2[%c6_133, %c0_134, %c0_135] : memref<27x16x16xbf16, #tpu.memory_space<vmem>>, vector<1x16x16xbf16>
    %211 = vector.shape_cast %210 : vector<1x16x16xbf16> to vector<16x16xbf16>
    %cst_136 = arith.constant dense<0.000000e+00> : vector<16x256xf32>
    %212 = tpu.matmul %211, %209, %cst_136 {dimension_numbers = #tpu.dot_dimension_numbers<[1], [0], [0], [1], [0, 0, 1, 1], [], []>} : vector<16x16xbf16>, vector<16x256xbf16>, vector<16x256xf32> -> vector<16x256xf32>
    %213 = arith.addf %208, %212 : vector<16x256xf32>
    %214 = vector.extract_strided_slice %168 {offsets = [0, 96], sizes = [16, 256], strides = [1, 1]} : vector<16x384xbf16> to vector<16x256xbf16>
    %c7_137 = arith.constant 7 : index
    %c0_138 = arith.constant 0 : index
    %c0_139 = arith.constant 0 : index
    %215 = vector.load %arg2[%c7_137, %c0_138, %c0_139] : memref<27x16x16xbf16, #tpu.memory_space<vmem>>, vector<1x16x16xbf16>
    %216 = vector.shape_cast %215 : vector<1x16x16xbf16> to vector<16x16xbf16>
    %cst_140 = arith.constant dense<0.000000e+00> : vector<16x256xf32>
    %217 = tpu.matmul %216, %214, %cst_140 {dimension_numbers = #tpu.dot_dimension_numbers<[1], [0], [0], [1], [0, 0, 1, 1], [], []>} : vector<16x16xbf16>, vector<16x256xbf16>, vector<16x256xf32> -> vector<16x256xf32>
    %218 = arith.addf %213, %217 : vector<16x256xf32>
    %219 = vector.extract_strided_slice %168 {offsets = [0, 97], sizes = [16, 256], strides = [1, 1]} : vector<16x384xbf16> to vector<16x256xbf16>
    %c8_141 = arith.constant 8 : index
    %c0_142 = arith.constant 0 : index
    %c0_143 = arith.constant 0 : index
    %220 = vector.load %arg2[%c8_141, %c0_142, %c0_143] : memref<27x16x16xbf16, #tpu.memory_space<vmem>>, vector<1x16x16xbf16>
    %221 = vector.shape_cast %220 : vector<1x16x16xbf16> to vector<16x16xbf16>
    %cst_144 = arith.constant dense<0.000000e+00> : vector<16x256xf32>
    %222 = tpu.matmul %221, %219, %cst_144 {dimension_numbers = #tpu.dot_dimension_numbers<[1], [0], [0], [1], [0, 0, 1, 1], [], []>} : vector<16x16xbf16>, vector<16x256xbf16>, vector<16x256xf32> -> vector<16x256xf32>
    %223 = arith.addf %218, %222 : vector<16x256xf32>
    %224 = vector.extract_strided_slice %173 {offsets = [0, 31], sizes = [16, 256], strides = [1, 1]} : vector<16x384xbf16> to vector<16x256xbf16>
    %c9_145 = arith.constant 9 : index
    %c0_146 = arith.constant 0 : index
    %c0_147 = arith.constant 0 : index
    %225 = vector.load %arg2[%c9_145, %c0_146, %c0_147] : memref<27x16x16xbf16, #tpu.memory_space<vmem>>, vector<1x16x16xbf16>
    %226 = vector.shape_cast %225 : vector<1x16x16xbf16> to vector<16x16xbf16>
    %cst_148 = arith.constant dense<0.000000e+00> : vector<16x256xf32>
    %227 = tpu.matmul %226, %224, %cst_148 {dimension_numbers = #tpu.dot_dimension_numbers<[1], [0], [0], [1], [0, 0, 1, 1], [], []>} : vector<16x16xbf16>, vector<16x256xbf16>, vector<16x256xf32> -> vector<16x256xf32>
    %228 = arith.addf %223, %227 : vector<16x256xf32>
    %229 = vector.extract_strided_slice %173 {offsets = [0, 32], sizes = [16, 256], strides = [1, 1]} : vector<16x384xbf16> to vector<16x256xbf16>
    %c10_149 = arith.constant 10 : index
    %c0_150 = arith.constant 0 : index
    %c0_151 = arith.constant 0 : index
    %230 = vector.load %arg2[%c10_149, %c0_150, %c0_151] : memref<27x16x16xbf16, #tpu.memory_space<vmem>>, vector<1x16x16xbf16>
    %231 = vector.shape_cast %230 : vector<1x16x16xbf16> to vector<16x16xbf16>
    %cst_152 = arith.constant dense<0.000000e+00> : vector<16x256xf32>
    %232 = tpu.matmul %231, %229, %cst_152 {dimension_numbers = #tpu.dot_dimension_numbers<[1], [0], [0], [1], [0, 0, 1, 1], [], []>} : vector<16x16xbf16>, vector<16x256xbf16>, vector<16x256xf32> -> vector<16x256xf32>
    %233 = arith.addf %228, %232 : vector<16x256xf32>
    %234 = vector.extract_strided_slice %173 {offsets = [0, 33], sizes = [16, 256], strides = [1, 1]} : vector<16x384xbf16> to vector<16x256xbf16>
    %c11_153 = arith.constant 11 : index
    %c0_154 = arith.constant 0 : index
    %c0_155 = arith.constant 0 : index
    %235 = vector.load %arg2[%c11_153, %c0_154, %c0_155] : memref<27x16x16xbf16, #tpu.memory_space<vmem>>, vector<1x16x16xbf16>
    %236 = vector.shape_cast %235 : vector<1x16x16xbf16> to vector<16x16xbf16>
    %cst_156 = arith.constant dense<0.000000e+00> : vector<16x256xf32>
    %237 = tpu.matmul %236, %234, %cst_156 {dimension_numbers = #tpu.dot_dimension_numbers<[1], [0], [0], [1], [0, 0, 1, 1], [], []>} : vector<16x16xbf16>, vector<16x256xbf16>, vector<16x256xf32> -> vector<16x256xf32>
    %238 = arith.addf %233, %237 : vector<16x256xf32>
    %239 = vector.extract_strided_slice %173 {offsets = [0, 63], sizes = [16, 256], strides = [1, 1]} : vector<16x384xbf16> to vector<16x256xbf16>
    %c12_157 = arith.constant 12 : index
    %c0_158 = arith.constant 0 : index
    %c0_159 = arith.constant 0 : index
    %240 = vector.load %arg2[%c12_157, %c0_158, %c0_159] : memref<27x16x16xbf16, #tpu.memory_space<vmem>>, vector<1x16x16xbf16>
    %241 = vector.shape_cast %240 : vector<1x16x16xbf16> to vector<16x16xbf16>
    %cst_160 = arith.constant dense<0.000000e+00> : vector<16x256xf32>
    %242 = tpu.matmul %241, %239, %cst_160 {dimension_numbers = #tpu.dot_dimension_numbers<[1], [0], [0], [1], [0, 0, 1, 1], [], []>} : vector<16x16xbf16>, vector<16x256xbf16>, vector<16x256xf32> -> vector<16x256xf32>
    %243 = arith.addf %238, %242 : vector<16x256xf32>
    %244 = vector.extract_strided_slice %173 {offsets = [0, 64], sizes = [16, 256], strides = [1, 1]} : vector<16x384xbf16> to vector<16x256xbf16>
    %c13_161 = arith.constant 13 : index
    %c0_162 = arith.constant 0 : index
    %c0_163 = arith.constant 0 : index
    %245 = vector.load %arg2[%c13_161, %c0_162, %c0_163] : memref<27x16x16xbf16, #tpu.memory_space<vmem>>, vector<1x16x16xbf16>
    %246 = vector.shape_cast %245 : vector<1x16x16xbf16> to vector<16x16xbf16>
    %cst_164 = arith.constant dense<0.000000e+00> : vector<16x256xf32>
    %247 = tpu.matmul %246, %244, %cst_164 {dimension_numbers = #tpu.dot_dimension_numbers<[1], [0], [0], [1], [0, 0, 1, 1], [], []>} : vector<16x16xbf16>, vector<16x256xbf16>, vector<16x256xf32> -> vector<16x256xf32>
    %248 = arith.addf %243, %247 : vector<16x256xf32>
    %249 = vector.extract_strided_slice %173 {offsets = [0, 65], sizes = [16, 256], strides = [1, 1]} : vector<16x384xbf16> to vector<16x256xbf16>
    %c14_165 = arith.constant 14 : index
    %c0_166 = arith.constant 0 : index
    %c0_167 = arith.constant 0 : index
    %250 = vector.load %arg2[%c14_165, %c0_166, %c0_167] : memref<27x16x16xbf16, #tpu.memory_space<vmem>>, vector<1x16x16xbf16>
    %251 = vector.shape_cast %250 : vector<1x16x16xbf16> to vector<16x16xbf16>
    %cst_168 = arith.constant dense<0.000000e+00> : vector<16x256xf32>
    %252 = tpu.matmul %251, %249, %cst_168 {dimension_numbers = #tpu.dot_dimension_numbers<[1], [0], [0], [1], [0, 0, 1, 1], [], []>} : vector<16x16xbf16>, vector<16x256xbf16>, vector<16x256xf32> -> vector<16x256xf32>
    %253 = arith.addf %248, %252 : vector<16x256xf32>
    %254 = vector.extract_strided_slice %173 {offsets = [0, 95], sizes = [16, 256], strides = [1, 1]} : vector<16x384xbf16> to vector<16x256xbf16>
    %c15_169 = arith.constant 15 : index
    %c0_170 = arith.constant 0 : index
    %c0_171 = arith.constant 0 : index
    %255 = vector.load %arg2[%c15_169, %c0_170, %c0_171] : memref<27x16x16xbf16, #tpu.memory_space<vmem>>, vector<1x16x16xbf16>
    %256 = vector.shape_cast %255 : vector<1x16x16xbf16> to vector<16x16xbf16>
    %cst_172 = arith.constant dense<0.000000e+00> : vector<16x256xf32>
    %257 = tpu.matmul %256, %254, %cst_172 {dimension_numbers = #tpu.dot_dimension_numbers<[1], [0], [0], [1], [0, 0, 1, 1], [], []>} : vector<16x16xbf16>, vector<16x256xbf16>, vector<16x256xf32> -> vector<16x256xf32>
    %258 = arith.addf %253, %257 : vector<16x256xf32>
    %259 = vector.extract_strided_slice %173 {offsets = [0, 96], sizes = [16, 256], strides = [1, 1]} : vector<16x384xbf16> to vector<16x256xbf16>
    %c16_173 = arith.constant 16 : index
    %c0_174 = arith.constant 0 : index
    %c0_175 = arith.constant 0 : index
    %260 = vector.load %arg2[%c16_173, %c0_174, %c0_175] : memref<27x16x16xbf16, #tpu.memory_space<vmem>>, vector<1x16x16xbf16>
    %261 = vector.shape_cast %260 : vector<1x16x16xbf16> to vector<16x16xbf16>
    %cst_176 = arith.constant dense<0.000000e+00> : vector<16x256xf32>
    %262 = tpu.matmul %261, %259, %cst_176 {dimension_numbers = #tpu.dot_dimension_numbers<[1], [0], [0], [1], [0, 0, 1, 1], [], []>} : vector<16x16xbf16>, vector<16x256xbf16>, vector<16x256xf32> -> vector<16x256xf32>
    %263 = arith.addf %258, %262 : vector<16x256xf32>
    %264 = vector.extract_strided_slice %173 {offsets = [0, 97], sizes = [16, 256], strides = [1, 1]} : vector<16x384xbf16> to vector<16x256xbf16>
    %c17_177 = arith.constant 17 : index
    %c0_178 = arith.constant 0 : index
    %c0_179 = arith.constant 0 : index
    %265 = vector.load %arg2[%c17_177, %c0_178, %c0_179] : memref<27x16x16xbf16, #tpu.memory_space<vmem>>, vector<1x16x16xbf16>
    %266 = vector.shape_cast %265 : vector<1x16x16xbf16> to vector<16x16xbf16>
    %cst_180 = arith.constant dense<0.000000e+00> : vector<16x256xf32>
    %267 = tpu.matmul %266, %264, %cst_180 {dimension_numbers = #tpu.dot_dimension_numbers<[1], [0], [0], [1], [0, 0, 1, 1], [], []>} : vector<16x16xbf16>, vector<16x256xbf16>, vector<16x256xf32> -> vector<16x256xf32>
    %268 = arith.addf %263, %267 : vector<16x256xf32>
    %269 = vector.extract_strided_slice %178 {offsets = [0, 31], sizes = [16, 256], strides = [1, 1]} : vector<16x384xbf16> to vector<16x256xbf16>
    %c18_181 = arith.constant 18 : index
    %c0_182 = arith.constant 0 : index
    %c0_183 = arith.constant 0 : index
    %270 = vector.load %arg2[%c18_181, %c0_182, %c0_183] : memref<27x16x16xbf16, #tpu.memory_space<vmem>>, vector<1x16x16xbf16>
    %271 = vector.shape_cast %270 : vector<1x16x16xbf16> to vector<16x16xbf16>
    %cst_184 = arith.constant dense<0.000000e+00> : vector<16x256xf32>
    %272 = tpu.matmul %271, %269, %cst_184 {dimension_numbers = #tpu.dot_dimension_numbers<[1], [0], [0], [1], [0, 0, 1, 1], [], []>} : vector<16x16xbf16>, vector<16x256xbf16>, vector<16x256xf32> -> vector<16x256xf32>
    %273 = arith.addf %268, %272 : vector<16x256xf32>
    %274 = vector.extract_strided_slice %178 {offsets = [0, 32], sizes = [16, 256], strides = [1, 1]} : vector<16x384xbf16> to vector<16x256xbf16>
    %c19_185 = arith.constant 19 : index
    %c0_186 = arith.constant 0 : index
    %c0_187 = arith.constant 0 : index
    %275 = vector.load %arg2[%c19_185, %c0_186, %c0_187] : memref<27x16x16xbf16, #tpu.memory_space<vmem>>, vector<1x16x16xbf16>
    %276 = vector.shape_cast %275 : vector<1x16x16xbf16> to vector<16x16xbf16>
    %cst_188 = arith.constant dense<0.000000e+00> : vector<16x256xf32>
    %277 = tpu.matmul %276, %274, %cst_188 {dimension_numbers = #tpu.dot_dimension_numbers<[1], [0], [0], [1], [0, 0, 1, 1], [], []>} : vector<16x16xbf16>, vector<16x256xbf16>, vector<16x256xf32> -> vector<16x256xf32>
    %278 = arith.addf %273, %277 : vector<16x256xf32>
    %279 = vector.extract_strided_slice %178 {offsets = [0, 33], sizes = [16, 256], strides = [1, 1]} : vector<16x384xbf16> to vector<16x256xbf16>
    %c20_189 = arith.constant 20 : index
    %c0_190 = arith.constant 0 : index
    %c0_191 = arith.constant 0 : index
    %280 = vector.load %arg2[%c20_189, %c0_190, %c0_191] : memref<27x16x16xbf16, #tpu.memory_space<vmem>>, vector<1x16x16xbf16>
    %281 = vector.shape_cast %280 : vector<1x16x16xbf16> to vector<16x16xbf16>
    %cst_192 = arith.constant dense<0.000000e+00> : vector<16x256xf32>
    %282 = tpu.matmul %281, %279, %cst_192 {dimension_numbers = #tpu.dot_dimension_numbers<[1], [0], [0], [1], [0, 0, 1, 1], [], []>} : vector<16x16xbf16>, vector<16x256xbf16>, vector<16x256xf32> -> vector<16x256xf32>
    %283 = arith.addf %278, %282 : vector<16x256xf32>
    %284 = vector.extract_strided_slice %178 {offsets = [0, 63], sizes = [16, 256], strides = [1, 1]} : vector<16x384xbf16> to vector<16x256xbf16>
    %c21_193 = arith.constant 21 : index
    %c0_194 = arith.constant 0 : index
    %c0_195 = arith.constant 0 : index
    %285 = vector.load %arg2[%c21_193, %c0_194, %c0_195] : memref<27x16x16xbf16, #tpu.memory_space<vmem>>, vector<1x16x16xbf16>
    %286 = vector.shape_cast %285 : vector<1x16x16xbf16> to vector<16x16xbf16>
    %cst_196 = arith.constant dense<0.000000e+00> : vector<16x256xf32>
    %287 = tpu.matmul %286, %284, %cst_196 {dimension_numbers = #tpu.dot_dimension_numbers<[1], [0], [0], [1], [0, 0, 1, 1], [], []>} : vector<16x16xbf16>, vector<16x256xbf16>, vector<16x256xf32> -> vector<16x256xf32>
    %288 = arith.addf %283, %287 : vector<16x256xf32>
    %289 = vector.extract_strided_slice %178 {offsets = [0, 64], sizes = [16, 256], strides = [1, 1]} : vector<16x384xbf16> to vector<16x256xbf16>
    %c22_197 = arith.constant 22 : index
    %c0_198 = arith.constant 0 : index
    %c0_199 = arith.constant 0 : index
    %290 = vector.load %arg2[%c22_197, %c0_198, %c0_199] : memref<27x16x16xbf16, #tpu.memory_space<vmem>>, vector<1x16x16xbf16>
    %291 = vector.shape_cast %290 : vector<1x16x16xbf16> to vector<16x16xbf16>
    %cst_200 = arith.constant dense<0.000000e+00> : vector<16x256xf32>
    %292 = tpu.matmul %291, %289, %cst_200 {dimension_numbers = #tpu.dot_dimension_numbers<[1], [0], [0], [1], [0, 0, 1, 1], [], []>} : vector<16x16xbf16>, vector<16x256xbf16>, vector<16x256xf32> -> vector<16x256xf32>
    %293 = arith.addf %288, %292 : vector<16x256xf32>
    %294 = vector.extract_strided_slice %178 {offsets = [0, 65], sizes = [16, 256], strides = [1, 1]} : vector<16x384xbf16> to vector<16x256xbf16>
    %c23_201 = arith.constant 23 : index
    %c0_202 = arith.constant 0 : index
    %c0_203 = arith.constant 0 : index
    %295 = vector.load %arg2[%c23_201, %c0_202, %c0_203] : memref<27x16x16xbf16, #tpu.memory_space<vmem>>, vector<1x16x16xbf16>
    %296 = vector.shape_cast %295 : vector<1x16x16xbf16> to vector<16x16xbf16>
    %cst_204 = arith.constant dense<0.000000e+00> : vector<16x256xf32>
    %297 = tpu.matmul %296, %294, %cst_204 {dimension_numbers = #tpu.dot_dimension_numbers<[1], [0], [0], [1], [0, 0, 1, 1], [], []>} : vector<16x16xbf16>, vector<16x256xbf16>, vector<16x256xf32> -> vector<16x256xf32>
    %298 = arith.addf %293, %297 : vector<16x256xf32>
    %299 = vector.extract_strided_slice %178 {offsets = [0, 95], sizes = [16, 256], strides = [1, 1]} : vector<16x384xbf16> to vector<16x256xbf16>
    %c24_205 = arith.constant 24 : index
    %c0_206 = arith.constant 0 : index
    %c0_207 = arith.constant 0 : index
    %300 = vector.load %arg2[%c24_205, %c0_206, %c0_207] : memref<27x16x16xbf16, #tpu.memory_space<vmem>>, vector<1x16x16xbf16>
    %301 = vector.shape_cast %300 : vector<1x16x16xbf16> to vector<16x16xbf16>
    %cst_208 = arith.constant dense<0.000000e+00> : vector<16x256xf32>
    %302 = tpu.matmul %301, %299, %cst_208 {dimension_numbers = #tpu.dot_dimension_numbers<[1], [0], [0], [1], [0, 0, 1, 1], [], []>} : vector<16x16xbf16>, vector<16x256xbf16>, vector<16x256xf32> -> vector<16x256xf32>
    %303 = arith.addf %298, %302 : vector<16x256xf32>
    %304 = vector.extract_strided_slice %178 {offsets = [0, 96], sizes = [16, 256], strides = [1, 1]} : vector<16x384xbf16> to vector<16x256xbf16>
    %c25_209 = arith.constant 25 : index
    %c0_210 = arith.constant 0 : index
    %c0_211 = arith.constant 0 : index
    %305 = vector.load %arg2[%c25_209, %c0_210, %c0_211] : memref<27x16x16xbf16, #tpu.memory_space<vmem>>, vector<1x16x16xbf16>
    %306 = vector.shape_cast %305 : vector<1x16x16xbf16> to vector<16x16xbf16>
    %cst_212 = arith.constant dense<0.000000e+00> : vector<16x256xf32>
    %307 = tpu.matmul %306, %304, %cst_212 {dimension_numbers = #tpu.dot_dimension_numbers<[1], [0], [0], [1], [0, 0, 1, 1], [], []>} : vector<16x16xbf16>, vector<16x256xbf16>, vector<16x256xf32> -> vector<16x256xf32>
    %308 = arith.addf %303, %307 : vector<16x256xf32>
    %309 = vector.extract_strided_slice %178 {offsets = [0, 97], sizes = [16, 256], strides = [1, 1]} : vector<16x384xbf16> to vector<16x256xbf16>
    %c26_213 = arith.constant 26 : index
    %c0_214 = arith.constant 0 : index
    %c0_215 = arith.constant 0 : index
    %310 = vector.load %arg2[%c26_213, %c0_214, %c0_215] : memref<27x16x16xbf16, #tpu.memory_space<vmem>>, vector<1x16x16xbf16>
    %311 = vector.shape_cast %310 : vector<1x16x16xbf16> to vector<16x16xbf16>
    %cst_216 = arith.constant dense<0.000000e+00> : vector<16x256xf32>
    %312 = tpu.matmul %311, %309, %cst_216 {dimension_numbers = #tpu.dot_dimension_numbers<[1], [0], [0], [1], [0, 0, 1, 1], [], []>} : vector<16x16xbf16>, vector<16x256xbf16>, vector<16x256xf32> -> vector<16x256xf32>
    %313 = arith.addf %308, %312 : vector<16x256xf32>
    %c0_217 = arith.constant 0 : index
    %c0_218 = arith.constant 0 : index
    %c0_219 = arith.constant 0 : index
    %c512_220 = arith.constant 512 : index
    %314 = vector.load %arg5[%c0_217, %c0_218, %c0_219, %c512_220] : memref<1x1x16x768xf32, #tpu.memory_space<vmem>>, vector<1x1x16x256xf32>
    %315 = vector.shape_cast %314 : vector<1x1x16x256xf32> to vector<16x256xf32>
    %316 = vector.shape_cast %313 : vector<16x256xf32> to vector<1x1x16x256xf32>
    tpu.vector_store %arg5[%c0_217, %c0_218, %c0_219, %c512_220], %316 {strides = array<i32>} : memref<1x1x16x768xf32, #tpu.memory_space<vmem>>, vector<1x1x16x256xf32>,
    return
  }
  func.func @transform_0(%arg0: i32, %arg1: i32) -> (i32, i32, i32) {
    %c0_i32 = arith.constant 0 : i32
    %c0_i32_0 = arith.constant 0 : i32
    %c0_i32_1 = arith.constant 0 : i32
    %c0_i32_2 = arith.constant 0 : i32
    return %c0_i32, %c0_i32_0, %c0_i32_1 : i32, i32, i32
  }
  func.func @transform_1(%arg0: i32, %arg1: i32) -> (i32, i32) {
    %c0_i32 = arith.constant 0 : i32
    %c0_i32_0 = arith.constant 0 : i32
    %c0_i32_1 = arith.constant 0 : i32
    return %c0_i32, %c0_i32_0 : i32, i32
  }
  func.func @transform_3(%arg0: i32, %arg1: i32) -> (i32, i32, i32, i32) {
    %c0_i32 = arith.constant 0 : i32
    %c0_i32_0 = arith.constant 0 : i32
    %c0_i32_1 = arith.constant 0 : i32
    return %arg0, %arg1, %c0_i32, %c0_i32_0 : i32, i32, i32, i32
  }
}

</mosaic_0001>

<llo_original>
// kernel: tpu_custom_call.1
$region0: #{tpu_custom_call.1}
  #allocation0 [shape = 'u32[]', space=smem, size = 0x4, offset = 0x4, fixed_abs, tag = 'smem constant byte address 0x4 - core index']
  #allocation1 [shape = 'u32[144,128]{1,0:T(1,128)}', space=vmem, size = 0x12000, scoped, tag = 'internal scratch']
  #allocation2 [shape = 'bf16[4,16,896]{2,1,0:T(8,128)(2,1)}', space=vmem, size = 0x1c000, scoped, tag = 'scratch operand']
  #allocation3 [shape = 's32[4]{0}', space=sflag, size = 0x10, scoped, tag = 'scratch operand']
  #allocation6 [shape = 's32[]', space=sflag, size = 0x4, offset = 0, fixed_abs, tag = 'sflag constant byte address 0x0 - dummy sync flag']
  #allocation7 [shape = 's32[]', space=sflag, size = 0x4, offset = 0, fixed_abs, tag = 'sflag constant byte address 0x0 - dummy sync flag']
  #allocation8 [shape = 'u32[]', space=smem, size = 0x4, offset = 0x44, fixed_abs, tag = 'smem constant byte address 0x44 - assertion arg 0']
  #allocation9 [shape = 'u32[]', space=smem, size = 0x4, offset = 0x48, fixed_abs, tag = 'smem constant byte address 0x48 - assertion arg 1']
  #allocation10 [shape = 's32[]', space=sflag, size = 0x4, offset = 0, fixed_abs, tag = 'sflag constant byte address 0x0 - dummy sync flag']
  #allocation11 [shape = 's32[]', space=sflag, size = 0x4, offset = 0, fixed_abs, tag = 'sflag constant byte address 0x0 - dummy sync flag']
  #allocation12 [shape = 's32[]', space=sflag, size = 0x4, offset = 0, fixed_abs, tag = 'sflag constant byte address 0x0 - dummy sync flag']
  #allocation13 [shape = 's32[]', space=sflag, size = 0x4, offset = 0, fixed_abs, tag = 'sflag constant byte address 0x0 - dummy sync flag']
  #allocation14 [shape = 's32[]', space=sflag, size = 0x4, offset = 0, fixed_abs, tag = 'sflag constant byte address 0x0 - dummy sync flag']
  #allocation15 [shape = 's32[]', space=sflag, size = 0x4, offset = 0, fixed_abs, tag = 'sflag constant byte address 0x0 - dummy sync flag']
  #allocation16 [shape = 's32[]', space=sflag, size = 0x4, offset = 0, fixed_abs, tag = 'sflag constant byte address 0x0 - dummy sync flag']
  #allocation17 [shape = 's32[]', space=sflag, size = 0x4, offset = 0, fixed_abs, tag = 'sflag constant byte address 0x0 - dummy sync flag']
  %s0 = inlined_call_operand.vmem [shape: bf16[27,16,16], index: 0, kind: input, shape index: {}]
  %s1 = inlined_call_operand.vmem [shape: f32[16,1], index: 1, kind: input, shape index: {}]
  %s2 = inlined_call_operand.hbm [shape: bf16[2,7,16,896], index: 2, kind: input, shape index: {}]
  %s3 = inlined_call_operand.hbm [shape: f32[2,5,16,768], index: 3, kind: output, shape index: {}]
  %s4 = sld [smem:[#allocation0]]
  $region73: #{tpu_custom_call.1} parent=0
    _
  %s6 = ssub.s32 1, %s4
  %s7 = scalar_select 0, %s6, %s4
  $region1: #{tpu_custom_call.1} parent=0
    #allocation4 [shape = 'u8[98304]{0}', space=vmem, size = 0x18000, scoped, tag = 'output window, operand 0']
    #allocation5 [shape = 's32[2]{0}', space=sflag, size = 0x8, scoped, tag = 'scoped memory for tpu_custom_call.1']
    %8 = vsyncpa [#allocation5], 0
    %s9 = scalar_lea.sflag [#allocation5], 1
    %10 = vsyncpa %s9, 0
    loop: start=0, step=1, limit=12
    $region2: #{tpu_custom_call.1} parent=1 // loop_pre_header
      _
    $region3: #{tpu_custom_call.1} parent=1 // loop_header
      %s12 = sphi 0, %s16
      %p13 = scmp.ge.s32.totalorder %s12, 12
      %s19 = sphi 0, %s31
      %s20 = sphi 0, %s27
      %s21 = sphi 0, %s19
      %s22 = sphi 0, %s20
      %s23 = sphi 0, %s21
      %s24 = sphi 0, %s22
      %s32 = sphi 0, %s32
      %s34 = sphi 0, %s32
      %s35 = sphi 0, %s34
      %s49 = sphi 0, %s35
      %s53 = sphi 0, %s53
      %s55 = sphi 0, %s53
      %s56 = sphi 0, %s55
      %s70 = sphi 0, %s56
      %s78 = sphi 0, %s80
      %s81 = sphi 0, %s78
      %s82 = sphi 0, %s81
      %s98 = sphi 0, %s82
    $region4: #{tpu_custom_call.1} parent=1 // loop_header_branch
      %15 = sbr.rel (%p13) target = $region8
    $region5: #{tpu_custom_call.1} parent=1 // loop_body
      %s17 = ssub.s32 %s12, 1
      %s18 = ssub.s32 %s12, 2
      %s25 = sadd.s32 1, %s20
      %p26 = scmp.ge.s32.totalorder %s25, 5
      %s27 = scalar_select %p26, 0, %s25
      %s28 = sadd.s32 1, %s19
      %s29 = scalar_select %p26, %s28, %s19
      %p30 = scmp.ge.s32.totalorder %s29, 2
      %s31 = scalar_select %p30, 0, %s29
      %s33 = sadd.s32 %s32, 1
      %p36 = scmp.eq.s32.totalorder %s12, 9
      %p37 = scmp.ne.s32.totalorder %s32, %s34
      %p38 = scmp.eq.s32.totalorder %s12, 0
      %p39 = por %p37, %p38
      %p40 = scmp.ne.s32.totalorder %s32, %s34
      %p41 = scmp.eq.s32.totalorder %s17, 9
      %p42 = por %p40, %p41
      %p43 = scmp.ne.s32.totalorder %s34, %s35
      %p44 = scmp.eq.s32.totalorder %s17, 0
      %p45 = por %p43, %p44
      %p46 = scmp.ne.s32.totalorder %s34, %s35
      %p47 = scmp.eq.s32.totalorder %s18, 9
      %p48 = por %p46, %p47
      %p50 = scmp.ne.s32.totalorder %s35, %s49
      %p51 = scmp.eq.s32.totalorder %s18, 0
      %p52 = por %p50, %p51
      %s54 = sadd.s32 %s53, 1
      %p57 = scmp.eq.s32.totalorder %s12, 9
      %p58 = scmp.ne.s32.totalorder %s53, %s55
      %p59 = scmp.eq.s32.totalorder %s12, 0
      %p60 = por %p58, %p59
      %p61 = scmp.ne.s32.totalorder %s53, %s55
      %p62 = scmp.eq.s32.totalorder %s17, 9
      %p63 = por %p61, %p62
      %p64 = scmp.ne.s32.totalorder %s55, %s56
      %p65 = scmp.eq.s32.totalorder %s17, 0
      %p66 = por %p64, %p65
      %p67 = scmp.ne.s32.totalorder %s55, %s56
      %p68 = scmp.eq.s32.totalorder %s18, 9
      %p69 = por %p67, %p68
      %p71 = scmp.ne.s32.totalorder %s56, %s70
      %p72 = scmp.eq.s32.totalorder %s18, 0
      %p73 = por %p71, %p72
      %s74 = ssub.s32 %s19, %s31
      %s75 = ssub.s32 %s20, %s27
      %s76 = sor.u32 %s74, %s75
      %p77 = scmp.eq.s32.totalorder %s76, 0
      %s79 = sadd.s32 %s78, 1
      %s80 = scalar_select %p77, %s78, %s79
      %p83 = pneg %p77
      %p84 = scmp.eq.s32.totalorder %s12, 9
      %p85 = por %p83, %p84
      %p86 = scmp.ne.s32.totalorder %s78, %s81
      %p87 = scmp.eq.s32.totalorder %s12, 0
      %p88 = por %p86, %p87
      %p89 = scmp.ne.s32.totalorder %s78, %s81
      %p90 = scmp.eq.s32.totalorder %s17, 9
      %p91 = por %p89, %p90
      %p92 = scmp.ne.s32.totalorder %s81, %s82
      %p93 = scmp.eq.s32.totalorder %s17, 0
      %p94 = por %p92, %p93
      %p95 = scmp.ne.s32.totalorder %s81, %s82
      %p96 = scmp.eq.s32.totalorder %s18, 9
      %p97 = por %p95, %p96
      %p99 = scmp.ne.s32.totalorder %s82, %s98
      %p100 = scmp.eq.s32.totalorder %s18, 0
      %p101 = por %p99, %p100
      %p102 = scmp.le.s32.totalorder 1, %s12
      %p103 = scmp.lt.s32.totalorder %s12, 11
      %p104 = pnand %p102, %p103
      %p105 = pneg %p104
      // Predicated region
      $region9: #{tpu_custom_call.1} parent=5 // pred_check
        _
      $region10: #{tpu_custom_call.1} parent=5 // pred_check_branch
        %107 = sbr.rel (%p104) target = $region12
      $region11: #{tpu_custom_call.1} parent=5 // pred_region
        %s108 = ssub.s32 %s12, 1
        // Predicated region
        $region13: #{tpu_custom_call.1} parent=11 // pred_check
          %p109 = pneg %p45
        $region14: #{tpu_custom_call.1} parent=11 // pred_check_branch
          %111 = sbr.rel (%p109) target = $region16
        $region15: #{tpu_custom_call.1} parent=11 // pred_region
          _
        $region16: #{tpu_custom_call.1} parent=11 // pred_fallthru
          _
        // Predicated region
        $region17: #{tpu_custom_call.1} parent=11 // pred_check
          %p112 = pneg %p66
        $region18: #{tpu_custom_call.1} parent=11 // pred_check_branch
          %114 = sbr.rel (%p112) target = $region20
        $region19: #{tpu_custom_call.1} parent=11 // pred_region
          _
        $region20: #{tpu_custom_call.1} parent=11 // pred_fallthru
          _
      $region12: #{tpu_custom_call.1} parent=5 // pred_fallthru
        _
      %p115 = scmp.lt.s32.totalorder %s12, 10
      // Predicated region
      $region21: #{tpu_custom_call.1} parent=5 // pred_check
        %p116 = pneg %p115
      $region22: #{tpu_custom_call.1} parent=5 // pred_check_branch
        %118 = sbr.rel (%p116) target = $region24
      $region23: #{tpu_custom_call.1} parent=5 // pred_region
        _
      $region24: #{tpu_custom_call.1} parent=5 // pred_fallthru
        _
      %p119 = scmp.le.s32.totalorder 1, %s12
      %p120 = scmp.lt.s32.totalorder %s12, 11
      %p121 = pnand %p119, %p120
      %p122 = pneg %p121
      // Predicated region
      $region25: #{tpu_custom_call.1} parent=5 // pred_check
        _
      $region26: #{tpu_custom_call.1} parent=5 // pred_check_branch
        %124 = sbr.rel (%p121) target = $region28
      $region27: #{tpu_custom_call.1} parent=5 // pred_region
        %s125 = ssub.s32 %s12, 1
        %p126 = pneg %p45
        %p127 = pneg %p42
        %p128 = pneg %p66
        %p129 = pneg %p63
        %p130 = pneg %p94
        %p131 = pneg %p91
        %s132 = sand.u32 %s81, 1
        %s133 = scalar_lea.sflag [#allocation5], %s132
        %s134 = sand.u32 %s81, 1
        %s135 = smul.addr %s134, 96
        %s136 = scalar_lea.vmem [#allocation4], %s135
        %p138 = scmp.eq.s32.totalorder %s22, 0
        // Predicated region
        $region29: #{tpu_custom_call.1} parent=27 // pred_check
          %p139 = pneg %p138
        $region30: #{tpu_custom_call.1} parent=27 // pred_check_branch
          %141 = sbr.rel (%p139) target = $region32
        $region31: #{tpu_custom_call.1} parent=27 // pred_region
          %s142 = smul.u32 %s21, 98
          %s143 = smul.addr %s142, 64
          %s144 = scalar_lea.hbm %s2, %s143
          // Predicated region
          $region33: #{tpu_custom_call.1} parent=31 // pred_check
            _
          $region34: #{tpu_custom_call.1} parent=31 // pred_check_branch
            %146 = sbr.rel target = $region36
          $region35: #{tpu_custom_call.1} parent=31 // pred_region
            %147 = sst [smem:[#allocation8]] [#allocation7]
            %148 = sst [smem:[#allocation9]] [#allocation6]
          $region36: #{tpu_custom_call.1} parent=31 // pred_fallthru
            _
          %150 = shalt.err (0)
          %s152 = sshll.u32 [#allocation2], 4
          %s153 = int_to_ptr.vmem [resolvable:$true] %s152
          %155 = dma.hbm_to_vmem [thread:$0]  %s144, 896, %s153, [#allocation3]
          %s156 = sadd.s32 14, %s142
          %s157 = smul.addr %s156, 64
          %s158 = scalar_lea.hbm %s2, %s157
          %s159 = scalar_lea.vmem [#allocation2], 56
          %s160 = scalar_lea.sflag [#allocation3], 1
          // Predicated region
          $region37: #{tpu_custom_call.1} parent=31 // pred_check
            _
          $region38: #{tpu_custom_call.1} parent=31 // pred_check_branch
            %162 = sbr.rel target = $region40
          $region39: #{tpu_custom_call.1} parent=31 // pred_region
            %163 = sst [smem:[#allocation8]] [#allocation11]
            %164 = sst [smem:[#allocation9]] [#allocation10]
          $region40: #{tpu_custom_call.1} parent=31 // pred_fallthru
            _
          %166 = shalt.err (0)
          %s168 = sshll.u32 %s159, 4
          %s169 = int_to_ptr.vmem [resolvable:$true] %s168
          %171 = dma.hbm_to_vmem [thread:$0]  %s158, 896, %s169, %s160
          %s172 = sadd.s32 28, %s142
          %s173 = smul.addr %s172, 64
          %s174 = scalar_lea.hbm %s2, %s173
          %s175 = scalar_lea.vmem [#allocation2], 112
          %s176 = scalar_lea.sflag [#allocation3], 2
          // Predicated region
          $region41: #{tpu_custom_call.1} parent=31 // pred_check
            _
          $region42: #{tpu_custom_call.1} parent=31 // pred_check_branch
            %178 = sbr.rel target = $region44
          $region43: #{tpu_custom_call.1} parent=31 // pred_region
            %179 = sst [smem:[#allocation8]] [#allocation13]
            %180 = sst [smem:[#allocation9]] [#allocation12]
          $region44: #{tpu_custom_call.1} parent=31 // pred_fallthru
            _
          %182 = shalt.err (0)
          %s184 = sshll.u32 %s175, 4
          %s185 = int_to_ptr.vmem [resolvable:$true] %s184
          %187 = dma.hbm_to_vmem [thread:$0]  %s174, 896, %s185, %s176
          %s188 = sadd.s32 42, %s142
          %s189 = smul.addr %s188, 64
          %s190 = scalar_lea.hbm %s2, %s189
          %s191 = scalar_lea.vmem [#allocation2], 168
          %s192 = scalar_lea.sflag [#allocation3], 3
          // Predicated region
          $region45: #{tpu_custom_call.1} parent=31 // pred_check
            _
          $region46: #{tpu_custom_call.1} parent=31 // pred_check_branch
            %194 = sbr.rel target = $region48
          $region47: #{tpu_custom_call.1} parent=31 // pred_region
            %195 = sst [smem:[#allocation8]] [#allocation15]
            %196 = sst [smem:[#allocation9]] [#allocation14]
          $region48: #{tpu_custom_call.1} parent=31 // pred_fallthru
            _
          %198 = shalt.err (0)
          %s200 = sshll.u32 %s191, 4
          %s201 = int_to_ptr.vmem [resolvable:$true] %s200
          %203 = dma.hbm_to_vmem [thread:$0]  %s190, 896, %s201, %s192
          %s204 = smul.u32 4, 2
          %s205 = smul.u32 %s204, 7
          %s206 = sshll.u32 %s205, 4
          %207 = dma.done [#allocation3], %s206
          %s208 = sshll.u32 %s205, 4
          %209 = dma.done %s160, %s208
          %s210 = sshll.u32 %s205, 4
          %211 = dma.done %s176, %s210
        $region32: #{tpu_custom_call.1} parent=27 // pred_fallthru
          _
        %p212 = scmp.gt.s32.totalorder %s22, 0
        // Predicated region
        $region49: #{tpu_custom_call.1} parent=27 // pred_check
          %p213 = pneg %p212
        $region50: #{tpu_custom_call.1} parent=27 // pred_check_branch
          %215 = sbr.rel (%p213) target = $region52
        $region51: #{tpu_custom_call.1} parent=27 // pred_region
          %s216 = sadd.s32 %s22, 3
          %p217 = scmp.le.s32.totalorder %s216, 6
          // Predicated region
          $region53: #{tpu_custom_call.1} parent=51 // pred_check
            %p218 = pneg %p217
          $region54: #{tpu_custom_call.1} parent=51 // pred_check_branch
            %220 = sbr.rel (%p218) target = $region56
          $region55: #{tpu_custom_call.1} parent=51 // pred_region
            %s221 = sand.u32 %s216, 3
            %s222 = smul.u32 %s216, 14
            %s223 = smul.u32 %s21, 98
            %s224 = sadd.s32 %s222, %s223
            %s225 = smul.addr %s224, 64
            %s226 = scalar_lea.hbm %s2, %s225
            %s227 = smul.u32 %s221, 14
            %s228 = smul.addr %s227, 4
            %s229 = scalar_lea.vmem [#allocation2], %s228
            %s230 = scalar_lea.sflag [#allocation3], %s221
            // Predicated region
            $region57: #{tpu_custom_call.1} parent=55 // pred_check
              _
            $region58: #{tpu_custom_call.1} parent=55 // pred_check_branch
              %232 = sbr.rel target = $region60
            $region59: #{tpu_custom_call.1} parent=55 // pred_region
              %233 = sst [smem:[#allocation8]] [#allocation17]
              %234 = sst [smem:[#allocation9]] [#allocation16]
            $region60: #{tpu_custom_call.1} parent=55 // pred_fallthru
              _
            %236 = shalt.err (0)
            %s238 = sshll.u32 %s229, 4
            %s239 = int_to_ptr.vmem [resolvable:$true] %s238
            %241 = dma.hbm_to_vmem [thread:$0]  %s226, 896, %s239, %s230
          $region56: #{tpu_custom_call.1} parent=51 // pred_fallthru
            _
          %s242 = sadd.s32 %s22, 2
          %s243 = sand.u32 %s242, 3
          %s244 = scalar_lea.sflag [#allocation3], %s243
          %s245 = smul.u32 4, 2
          %s246 = smul.u32 %s245, 7
          %s247 = sshll.u32 %s246, 4
          %248 = dma.done %s244, %s247
        $region52: #{tpu_custom_call.1} parent=27 // pred_fallthru
          _
        %v249 = vld [vmem:[%s1] sm:$0xff]
        %v250 = vld [vmem:[%s1 + $0x8] sm:$0xff]
        %252 = vset.pattern.permute.xlu0 0
        %253 = vperm.xlu0 %252, %v249
        %v254 = vpop.permute.xlu0 %253
        %257 = vset.pattern.permute.xlu0 0
        %258 = vperm.xlu0 %257, %v250
        %v259 = vpop.permute.xlu0 %258
        %s261 = sand.u32 %s22, 3
        %s262 = smul.u32 %s261, 14
        %s263 = smul.addr %s262, 4
        %s264 = scalar_lea.vmem [#allocation2], %s263
        %v265 = vld [vmem:[%s264] sm:$0xff]
        %v266 = vld [vmem:[%s264 + $0x8] sm:$0xff]
        %v267 = vld [vmem:[%s264 + $0x10] sm:$0xf]
        %v268 = vld [vmem:[%s264 + $0x1c] sm:$0xff]
        %v269 = vld [vmem:[%s264 + $0x24] sm:$0xff]
        %v270 = vld [vmem:[%s264 + $0x2c] sm:$0xf]
        %s271 = sadd.s32 %s22, 1
        %s272 = sand.u32 %s271, 3
        %s273 = smul.u32 %s272, 14
        %s274 = smul.addr %s273, 4
        %s275 = scalar_lea.vmem [#allocation2], %s274
        %v276 = vld [vmem:[%s275] sm:$0xff]
        %v277 = vld [vmem:[%s275 + $0x8] sm:$0xff]
        %v278 = vld [vmem:[%s275 + $0x10] sm:$0xf]
        %v279 = vld [vmem:[%s275 + $0x1c] sm:$0xff]
        %v280 = vld [vmem:[%s275 + $0x24] sm:$0xff]
        %v281 = vld [vmem:[%s275 + $0x2c] sm:$0xf]
        %s282 = sadd.s32 %s22, 2
        %s283 = sand.u32 %s282, 3
        %s284 = smul.u32 %s283, 14
        %s285 = smul.addr %s284, 4
        %s286 = scalar_lea.vmem [#allocation2], %s285
        %v287 = vld [vmem:[%s286] sm:$0xff]
        %v288 = vld [vmem:[%s286 + $0x8] sm:$0xff]
        %v289 = vld [vmem:[%s286 + $0x10] sm:$0xf]
        %v290 = vld [vmem:[%s286 + $0x1c] sm:$0xff]
        %v291 = vld [vmem:[%s286 + $0x24] sm:$0xff]
        %v292 = vld [vmem:[%s286 + $0x2c] sm:$0xf]
        %v293 = vld [vmem:[%s0] sm:$0xf]
        %v294 = vld [vmem:[%s0 + $0x4] sm:$0xf]
        %v297 = vunpack.c.l.b16 %v293
        %v298 = vunpack.c.l.b16 %v294
        %v299 = vpack.c.b16 %v298, %v297
        %v306 = vunpack.c.l.b16 %v265
        %v307 = vunpack.c.h.b16 %v265
        %v308 = vunpack.c.l.b16 %v266
        %v309 = vunpack.c.h.b16 %v266
        %v310 = vunpack.c.l.b16 %v267
        %v311 = vunpack.c.l.b16 %v268
        %v312 = vunpack.c.h.b16 %v268
        %v313 = vunpack.c.l.b16 %v269
        %v314 = vunpack.c.h.b16 %v269
        %v315 = vunpack.c.l.b16 %v270
        %v316 = vpack.c.b16 %v311, %v306
        %v317 = vpack.c.b16 %v312, %v307
        %v318 = vpack.c.b16 %v313, %v308
        %v319 = vpack.c.b16 %v314, %v309
        %v320 = vpack.c.b16 %v315, %v310
        %321 = vrot.lane.b32.xlu0 %v316, 97
        %v322 = vpop.permute.xlu0 %321
        %323 = vrot.lane.b32.xlu0 %v317, 97
        %v324 = vpop.permute.xlu0 %323
        %325 = vrot.lane.b32.xlu0 %v318, 97
        %v326 = vpop.permute.xlu0 %325
        %327 = vrot.lane.b32.xlu0 %v319, 97
        %v328 = vpop.permute.xlu0 %327
        %329 = vrot.lane.b32.xlu0 %v320, 97
        %v330 = vpop.permute.xlu0 %329
        %vm331 = vcmask 793600
        %v332 = vsel %vm331, %v322, %v324
        %v333 = vsel %vm331, %v324, %v326
        %v334 = vsel %vm331, %v326, %v328
        %v335 = vsel %vm331, %v328, %v330
        %vm340 = vcmask 130048
        %v342 = vsel %vm340, %v299, 0
        %344 = vmatprep.subr.bf16.mxu0 0
        %345 = vmatpush1.bf16.msra.mxu0 0
        %346 = vmatprep.subr.bf16.mxu0 0
        %347 = vmatpush1.bf16.msra.mxu0 0
        %348 = vmatprep.subr.bf16.mxu0 0
        %349 = vmatpush1.bf16.msra.mxu0 0
        %350 = vmatprep.subr.bf16.mxu0 0
        %351 = vmatpush1.bf16.msra.mxu0 0
        %352 = vmatprep.subr.bf16.mxu0 0
        %353 = vmatpush1.bf16.msra.mxu0 0
        %354 = vmatprep.subr.bf16.mxu0 0
        %355 = vmatpush1.bf16.msra.mxu0 0
        %356 = vmatprep.subr.bf16.mxu0 0
        %357 = vmatpush1.bf16.msra.mxu0 0
        %358 = vmatprep.subr.bf16.mxu0 %v333
        %359 = vmatpush1.bf16.msra.mxu0 %v332
        %360 = vmatprep.subr.bf16.mxu0 0
        %361 = vmatpush2.bf16.msra.mxu0 0
        %362 = vmatprep.subr.bf16.mxu0 0
        %363 = vmatpush2.bf16.msra.mxu0 0
        %364 = vmatprep.subr.bf16.mxu0 0
        %365 = vmatpush2.bf16.msra.mxu0 0
        %366 = vmatprep.subr.bf16.mxu0 0
        %367 = vmatpush2.bf16.msra.mxu0 0
        %368 = vmatprep.subr.bf16.mxu0 0
        %369 = vmatpush2.bf16.msra.mxu0 0
        %370 = vmatprep.subr.bf16.mxu0 0
        %371 = vmatpush2.bf16.msra.mxu0 0
        %372 = vmatprep.subr.bf16.mxu0 0
        %373 = vmatpush2.bf16.msra.mxu0 0
        %374 = vmatprep.subr.bf16.mxu0 0
        %375 = vmatpush2.bf16.msra.mxu0 0
        %376 = vmatprep.mubr.bf16.mxu0 0
        %377 = vmatmul.mubr.bf16.gmra.mxu0 %v342
        %v378 = vpop.f32.mrf.mxu0
        %v379 = vadd.f32 0.0, %v378
        %v380 = vpop.f32.mrf.mxu0
        %v381 = vadd.f32 0.0, %v380
        %v382 = vpop.f32.mrf.mxu0
        %v383 = vadd.f32 0.0, %v382
        %v384 = vpop.f32.mrf.mxu0
        %v385 = vadd.f32 0.0, %v384
        %386 = vdwg.mxu0
        %387 = vmatprep.subr.bf16.mxu0 0
        %388 = vmatpush1.bf16.msra.mxu0 0
        %389 = vmatprep.subr.bf16.mxu0 0
        %390 = vmatpush1.bf16.msra.mxu0 0
        %391 = vmatprep.subr.bf16.mxu0 0
        %392 = vmatpush1.bf16.msra.mxu0 0
        %393 = vmatprep.subr.bf16.mxu0 0
        %394 = vmatpush1.bf16.msra.mxu0 0
        %395 = vmatprep.subr.bf16.mxu0 0
        %396 = vmatpush1.bf16.msra.mxu0 0
        %397 = vmatprep.subr.bf16.mxu0 0
        %398 = vmatpush1.bf16.msra.mxu0 0
        %399 = vmatprep.subr.bf16.mxu0 0
        %400 = vmatpush1.bf16.msra.mxu0 0
        %401 = vmatprep.subr.bf16.mxu0 %v335
        %402 = vmatpush1.bf16.msra.mxu0 %v334
        %403 = vmatprep.subr.bf16.mxu0 0
        %404 = vmatpush2.bf16.msra.mxu0 0
        %405 = vmatprep.subr.bf16.mxu0 0
        %406 = vmatpush2.bf16.msra.mxu0 0
        %407 = vmatprep.subr.bf16.mxu0 0
        %408 = vmatpush2.bf16.msra.mxu0 0
        %409 = vmatprep.subr.bf16.mxu0 0
        %410 = vmatpush2.bf16.msra.mxu0 0
        %411 = vmatprep.subr.bf16.mxu0 0
        %412 = vmatpush2.bf16.msra.mxu0 0
        %413 = vmatprep.subr.bf16.mxu0 0
        %414 = vmatpush2.bf16.msra.mxu0 0
        %415 = vmatprep.subr.bf16.mxu0 0
        %416 = vmatpush2.bf16.msra.mxu0 0
        %417 = vmatprep.subr.bf16.mxu0 0
        %418 = vmatpush2.bf16.msra.mxu0 0
        %419 = vmatprep.mubr.bf16.mxu0 0
        %420 = vmatmul.mubr.bf16.gmra.mxu0 %v342
        %v421 = vpop.f32.mrf.mxu0
        %v422 = vadd.f32 0.0, %v421
        %v423 = vpop.f32.mrf.mxu0
        %v424 = vadd.f32 0.0, %v423
        %v425 = vpop.f32.mrf.mxu0
        %v426 = vadd.f32 0.0, %v425
        %v427 = vpop.f32.mrf.mxu0
        %v428 = vadd.f32 0.0, %v427
        %429 = vdwg.mxu0
        %v430 = vadd.f32 %v254, %v379
        %v431 = vadd.f32 %v254, %v381
        %v432 = vadd.f32 %v254, %v422
        %v433 = vadd.f32 %v254, %v424
        %v434 = vadd.f32 %v259, %v383
        %v435 = vadd.f32 %v259, %v385
        %v436 = vadd.f32 %v259, %v426
        %v437 = vadd.f32 %v259, %v428
        %s438 = scalar_lea.vmem %s0, 8
        %v439 = vld [vmem:[%s438] sm:$0xf]
        %v440 = vld [vmem:[%s438 + $0x4] sm:$0xf]
        %v443 = vunpack.c.l.b16 %v439
        %v444 = vunpack.c.l.b16 %v440
        %v445 = vpack.c.b16 %v444, %v443
        %446 = vrot.lane.b32.xlu0 %v316, 96
        %v447 = vpop.permute.xlu0 %446
        %448 = vrot.lane.b32.xlu0 %v317, 96
        %v449 = vpop.permute.xlu0 %448
        %450 = vrot.lane.b32.xlu0 %v318, 96
        %v451 = vpop.permute.xlu0 %450
        %452 = vrot.lane.b32.xlu0 %v319, 96
        %v453 = vpop.permute.xlu0 %452
        %454 = vrot.lane.b32.xlu0 %v320, 96
        %v455 = vpop.permute.xlu0 %454
        %vm456 = vcmask 785408
        %v457 = vsel %vm456, %v447, %v449
        %v458 = vsel %vm456, %v449, %v451
        %v459 = vsel %vm456, %v451, %v453
        %v460 = vsel %vm456, %v453, %v455
        %v466 = vsel %vm340, %v445, 0
        %468 = vmatprep.subr.bf16.mxu0 0
        %469 = vmatpush1.bf16.msra.mxu0 0
        %470 = vmatprep.subr.bf16.mxu0 0
        %471 = vmatpush1.bf16.msra.mxu0 0
        %472 = vmatprep.subr.bf16.mxu0 0
        %473 = vmatpush1.bf16.msra.mxu0 0
        %474 = vmatprep.subr.bf16.mxu0 0
        %475 = vmatpush1.bf16.msra.mxu0 0
        %476 = vmatprep.subr.bf16.mxu0 0
        %477 = vmatpush1.bf16.msra.mxu0 0
        %478 = vmatprep.subr.bf16.mxu0 0
        %479 = vmatpush1.bf16.msra.mxu0 0
        %480 = vmatprep.subr.bf16.mxu0 0
        %481 = vmatpush1.bf16.msra.mxu0 0
        %482 = vmatprep.subr.bf16.mxu0 %v458
        %483 = vmatpush1.bf16.msra.mxu0 %v457
        %484 = vmatprep.subr.bf16.mxu0 0
        %485 = vmatpush2.bf16.msra.mxu0 0
        %486 = vmatprep.subr.bf16.mxu0 0
        %487 = vmatpush2.bf16.msra.mxu0 0
        %488 = vmatprep.subr.bf16.mxu0 0
        %489 = vmatpush2.bf16.msra.mxu0 0
        %490 = vmatprep.subr.bf16.mxu0 0
        %491 = vmatpush2.bf16.msra.mxu0 0
        %492 = vmatprep.subr.bf16.mxu0 0
        %493 = vmatpush2.bf16.msra.mxu0 0
        %494 = vmatprep.subr.bf16.mxu0 0
        %495 = vmatpush2.bf16.msra.mxu0 0
        %496 = vmatprep.subr.bf16.mxu0 0
        %497 = vmatpush2.bf16.msra.mxu0 0
        %498 = vmatprep.subr.bf16.mxu0 0
        %499 = vmatpush2.bf16.msra.mxu0 0
        %500 = vmatprep.mubr.bf16.mxu0 0
        %501 = vmatmul.mubr.bf16.gmra.mxu0 %v466
        %v502 = vpop.f32.mrf.mxu0
        %v503 = vadd.f32 0.0, %v502
        %v504 = vpop.f32.mrf.mxu0
        %v505 = vadd.f32 0.0, %v504
        %v506 = vpop.f32.mrf.mxu0
        %v507 = vadd.f32 0.0, %v506
        %v508 = vpop.f32.mrf.mxu0
        %v509 = vadd.f32 0.0, %v508
        %510 = vdwg.mxu0
        %511 = vmatprep.subr.bf16.mxu0 0
        %512 = vmatpush1.bf16.msra.mxu0 0
        %513 = vmatprep.subr.bf16.mxu0 0
        %514 = vmatpush1.bf16.msra.mxu0 0
        %515 = vmatprep.subr.bf16.mxu0 0
        %516 = vmatpush1.bf16.msra.mxu0 0
        %517 = vmatprep.subr.bf16.mxu0 0
        %518 = vmatpush1.bf16.msra.mxu0 0
        %519 = vmatprep.subr.bf16.mxu0 0
        %520 = vmatpush1.bf16.msra.mxu0 0
        %521 = vmatprep.subr.bf16.mxu0 0
        %522 = vmatpush1.bf16.msra.mxu0 0
        %523 = vmatprep.subr.bf16.mxu0 0
        %524 = vmatpush1.bf16.msra.mxu0 0
        %525 = vmatprep.subr.bf16.mxu0 %v460
        %526 = vmatpush1.bf16.msra.mxu0 %v459
        %527 = vmatprep.subr.bf16.mxu0 0
        %528 = vmatpush2.bf16.msra.mxu0 0
        %529 = vmatprep.subr.bf16.mxu0 0
        %530 = vmatpush2.bf16.msra.mxu0 0
        %531 = vmatprep.subr.bf16.mxu0 0
        %532 = vmatpush2.bf16.msra.mxu0 0
        %533 = vmatprep.subr.bf16.mxu0 0
        %534 = vmatpush2.bf16.msra.mxu0 0
        %535 = vmatprep.subr.bf16.mxu0 0
        %536 = vmatpush2.bf16.msra.mxu0 0
        %537 = vmatprep.subr.bf16.mxu0 0
        %538 = vmatpush2.bf16.msra.mxu0 0
        %539 = vmatprep.subr.bf16.mxu0 0
        %540 = vmatpush2.bf16.msra.mxu0 0
        %541 = vmatprep.subr.bf16.mxu0 0
        %542 = vmatpush2.bf16.msra.mxu0 0
        %543 = vmatprep.mubr.bf16.mxu0 0
        %544 = vmatmul.mubr.bf16.gmra.mxu0 %v466
        %v545 = vpop.f32.mrf.mxu0
        %v546 = vadd.f32 0.0, %v545
        %v547 = vpop.f32.mrf.mxu0
        %v548 = vadd.f32 0.0, %v547
        %v549 = vpop.f32.mrf.mxu0
        %v550 = vadd.f32 0.0, %v549
        %v551 = vpop.f32.mrf.mxu0
        %v552 = vadd.f32 0.0, %v551
        %553 = vdwg.mxu0
        %v554 = vadd.f32 %v430, %v503
        %v555 = vadd.f32 %v431, %v505
        %v556 = vadd.f32 %v432, %v546
        %v557 = vadd.f32 %v433, %v548
        %v558 = vadd.f32 %v434, %v507
        %v559 = vadd.f32 %v435, %v509
        %v560 = vadd.f32 %v436, %v550
        %v561 = vadd.f32 %v437, %v552
        %s562 = scalar_lea.vmem %s0, 16
        %v563 = vld [vmem:[%s562] sm:$0xf]
        %v564 = vld [vmem:[%s562 + $0x4] sm:$0xf]
        %v567 = vunpack.c.l.b16 %v563
        %v568 = vunpack.c.l.b16 %v564
        %v569 = vpack.c.b16 %v568, %v567
        %570 = vrot.lane.b32.xlu0 %v316, 95
        %v571 = vpop.permute.xlu0 %570
        %572 = vrot.lane.b32.xlu0 %v317, 95
        %v573 = vpop.permute.xlu0 %572
        %574 = vrot.lane.b32.xlu0 %v318, 95
        %v575 = vpop.permute.xlu0 %574
        %576 = vrot.lane.b32.xlu0 %v319, 95
        %v577 = vpop.permute.xlu0 %576
        %578 = vrot.lane.b32.xlu0 %v320, 95
        %v579 = vpop.permute.xlu0 %578
        %vm580 = vcmask 777216
        %v581 = vsel %vm580, %v571, %v573
        %v582 = vsel %vm580, %v573, %v575
        %v583 = vsel %vm580, %v575, %v577
        %v584 = vsel %vm580, %v577, %v579
        %v590 = vsel %vm340, %v569, 0
        %592 = vmatprep.subr.bf16.mxu0 0
        %593 = vmatpush1.bf16.msra.mxu0 0
        %594 = vmatprep.subr.bf16.mxu0 0
        %595 = vmatpush1.bf16.msra.mxu0 0
        %596 = vmatprep.subr.bf16.mxu0 0
        %597 = vmatpush1.bf16.msra.mxu0 0
        %598 = vmatprep.subr.bf16.mxu0 0
        %599 = vmatpush1.bf16.msra.mxu0 0
        %600 = vmatprep.subr.bf16.mxu0 0
        %601 = vmatpush1.bf16.msra.mxu0 0
        %602 = vmatprep.subr.bf16.mxu0 0
        %603 = vmatpush1.bf16.msra.mxu0 0
        %604 = vmatprep.subr.bf16.mxu0 0
        %605 = vmatpush1.bf16.msra.mxu0 0
        %606 = vmatprep.subr.bf16.mxu0 %v582
        %607 = vmatpush1.bf16.msra.mxu0 %v581
        %608 = vmatprep.subr.bf16.mxu0 0
        %609 = vmatpush2.bf16.msra.mxu0 0
        %610 = vmatprep.subr.bf16.mxu0 0
        %611 = vmatpush2.bf16.msra.mxu0 0
        %612 = vmatprep.subr.bf16.mxu0 0
        %613 = vmatpush2.bf16.msra.mxu0 0
        %614 = vmatprep.subr.bf16.mxu0 0
        %615 = vmatpush2.bf16.msra.mxu0 0
        %616 = vmatprep.subr.bf16.mxu0 0
        %617 = vmatpush2.bf16.msra.mxu0 0
        %618 = vmatprep.subr.bf16.mxu0 0
        %619 = vmatpush2.bf16.msra.mxu0 0
        %620 = vmatprep.subr.bf16.mxu0 0
        %621 = vmatpush2.bf16.msra.mxu0 0
        %622 = vmatprep.subr.bf16.mxu0 0
        %623 = vmatpush2.bf16.msra.mxu0 0
        %624 = vmatprep.mubr.bf16.mxu0 0
        %625 = vmatmul.mubr.bf16.gmra.mxu0 %v590
        %v626 = vpop.f32.mrf.mxu0
        %v627 = vadd.f32 0.0, %v626
        %v628 = vpop.f32.mrf.mxu0
        %v629 = vadd.f32 0.0, %v628
        %v630 = vpop.f32.mrf.mxu0
        %v631 = vadd.f32 0.0, %v630
        %v632 = vpop.f32.mrf.mxu0
        %v633 = vadd.f32 0.0, %v632
        %634 = vdwg.mxu0
        %635 = vmatprep.subr.bf16.mxu0 0
        %636 = vmatpush1.bf16.msra.mxu0 0
        %637 = vmatprep.subr.bf16.mxu0 0
        %638 = vmatpush1.bf16.msra.mxu0 0
        %639 = vmatprep.subr.bf16.mxu0 0
        %640 = vmatpush1.bf16.msra.mxu0 0
        %641 = vmatprep.subr.bf16.mxu0 0
        %642 = vmatpush1.bf16.msra.mxu0 0
        %643 = vmatprep.subr.bf16.mxu0 0
        %644 = vmatpush1.bf16.msra.mxu0 0
        %645 = vmatprep.subr.bf16.mxu0 0
        %646 = vmatpush1.bf16.msra.mxu0 0
        %647 = vmatprep.subr.bf16.mxu0 0
        %648 = vmatpush1.bf16.msra.mxu0 0
        %649 = vmatprep.subr.bf16.mxu0 %v584
        %650 = vmatpush1.bf16.msra.mxu0 %v583
        %651 = vmatprep.subr.bf16.mxu0 0
        %652 = vmatpush2.bf16.msra.mxu0 0
        %653 = vmatprep.subr.bf16.mxu0 0
        %654 = vmatpush2.bf16.msra.mxu0 0
        %655 = vmatprep.subr.bf16.mxu0 0
        %656 = vmatpush2.bf16.msra.mxu0 0
        %657 = vmatprep.subr.bf16.mxu0 0
        %658 = vmatpush2.bf16.msra.mxu0 0
        %659 = vmatprep.subr.bf16.mxu0 0
        %660 = vmatpush2.bf16.msra.mxu0 0
        %661 = vmatprep.subr.bf16.mxu0 0
        %662 = vmatpush2.bf16.msra.mxu0 0
        %663 = vmatprep.subr.bf16.mxu0 0
        %664 = vmatpush2.bf16.msra.mxu0 0
        %665 = vmatprep.subr.bf16.mxu0 0
        %666 = vmatpush2.bf16.msra.mxu0 0
        %667 = vmatprep.mubr.bf16.mxu0 0
        %668 = vmatmul.mubr.bf16.gmra.mxu0 %v590
        %v669 = vpop.f32.mrf.mxu0
        %v670 = vadd.f32 0.0, %v669
        %v671 = vpop.f32.mrf.mxu0
        %v672 = vadd.f32 0.0, %v671
        %v673 = vpop.f32.mrf.mxu0
        %v674 = vadd.f32 0.0, %v673
        %v675 = vpop.f32.mrf.mxu0
        %v676 = vadd.f32 0.0, %v675
        %677 = vdwg.mxu0
        %v678 = vadd.f32 %v554, %v627
        %v679 = vadd.f32 %v555, %v629
        %v680 = vadd.f32 %v556, %v670
        %v681 = vadd.f32 %v557, %v672
        %v682 = vadd.f32 %v558, %v631
        %v683 = vadd.f32 %v559, %v633
        %v684 = vadd.f32 %v560, %v674
        %v685 = vadd.f32 %v561, %v676
        %s686 = scalar_lea.vmem %s0, 24
        %v687 = vld [vmem:[%s686] sm:$0xf]
        %v688 = vld [vmem:[%s686 + $0x4] sm:$0xf]
        %v691 = vunpack.c.l.b16 %v687
        %v692 = vunpack.c.l.b16 %v688
        %v693 = vpack.c.b16 %v692, %v691
        %694 = vrot.lane.b32.xlu0 %v316, 65
        %v695 = vpop.permute.xlu0 %694
        %696 = vrot.lane.b32.xlu0 %v317, 65
        %v697 = vpop.permute.xlu0 %696
        %698 = vrot.lane.b32.xlu0 %v318, 65
        %v699 = vpop.permute.xlu0 %698
        %700 = vrot.lane.b32.xlu0 %v319, 65
        %v701 = vpop.permute.xlu0 %700
        %702 = vrot.lane.b32.xlu0 %v320, 65
        %v703 = vpop.permute.xlu0 %702
        %vm704 = vcmask 531456
        %v705 = vsel %vm704, %v695, %v697
        %v706 = vsel %vm704, %v697, %v699
        %v707 = vsel %vm704, %v699, %v701
        %v708 = vsel %vm704, %v701, %v703
        %v714 = vsel %vm340, %v693, 0
        %716 = vmatprep.subr.bf16.mxu0 0
        %717 = vmatpush1.bf16.msra.mxu0 0
        %718 = vmatprep.subr.bf16.mxu0 0
        %719 = vmatpush1.bf16.msra.mxu0 0
        %720 = vmatprep.subr.bf16.mxu0 0
        %721 = vmatpush1.bf16.msra.mxu0 0
        %722 = vmatprep.subr.bf16.mxu0 0
        %723 = vmatpush1.bf16.msra.mxu0 0
        %724 = vmatprep.subr.bf16.mxu0 0
        %725 = vmatpush1.bf16.msra.mxu0 0
        %726 = vmatprep.subr.bf16.mxu0 0
        %727 = vmatpush1.bf16.msra.mxu0 0
        %728 = vmatprep.subr.bf16.mxu0 0
        %729 = vmatpush1.bf16.msra.mxu0 0
        %730 = vmatprep.subr.bf16.mxu0 %v706
        %731 = vmatpush1.bf16.msra.mxu0 %v705
        %732 = vmatprep.subr.bf16.mxu0 0
        %733 = vmatpush2.bf16.msra.mxu0 0
        %734 = vmatprep.subr.bf16.mxu0 0
        %735 = vmatpush2.bf16.msra.mxu0 0
        %736 = vmatprep.subr.bf16.mxu0 0
        %737 = vmatpush2.bf16.msra.mxu0 0
        %738 = vmatprep.subr.bf16.mxu0 0
        %739 = vmatpush2.bf16.msra.mxu0 0
        %740 = vmatprep.subr.bf16.mxu0 0
        %741 = vmatpush2.bf16.msra.mxu0 0
        %742 = vmatprep.subr.bf16.mxu0 0
        %743 = vmatpush2.bf16.msra.mxu0 0
        %744 = vmatprep.subr.bf16.mxu0 0
        %745 = vmatpush2.bf16.msra.mxu0 0
        %746 = vmatprep.subr.bf16.mxu0 0
        %747 = vmatpush2.bf16.msra.mxu0 0
        %748 = vmatprep.mubr.bf16.mxu0 0
        %749 = vmatmul.mubr.bf16.gmra.mxu0 %v714
        %v750 = vpop.f32.mrf.mxu0
        %v751 = vadd.f32 0.0, %v750
        %v752 = vpop.f32.mrf.mxu0
        %v753 = vadd.f32 0.0, %v752
        %v754 = vpop.f32.mrf.mxu0
        %v755 = vadd.f32 0.0, %v754
        %v756 = vpop.f32.mrf.mxu0
        %v757 = vadd.f32 0.0, %v756
        %758 = vdwg.mxu0
        %759 = vmatprep.subr.bf16.mxu0 0
        %760 = vmatpush1.bf16.msra.mxu0 0
        %761 = vmatprep.subr.bf16.mxu0 0
        %762 = vmatpush1.bf16.msra.mxu0 0
        %763 = vmatprep.subr.bf16.mxu0 0
        %764 = vmatpush1.bf16.msra.mxu0 0
        %765 = vmatprep.subr.bf16.mxu0 0
        %766 = vmatpush1.bf16.msra.mxu0 0
        %767 = vmatprep.subr.bf16.mxu0 0
        %768 = vmatpush1.bf16.msra.mxu0 0
        %769 = vmatprep.subr.bf16.mxu0 0
        %770 = vmatpush1.bf16.msra.mxu0 0
        %771 = vmatprep.subr.bf16.mxu0 0
        %772 = vmatpush1.bf16.msra.mxu0 0
        %773 = vmatprep.subr.bf16.mxu0 %v708
        %774 = vmatpush1.bf16.msra.mxu0 %v707
        %775 = vmatprep.subr.bf16.mxu0 0
        %776 = vmatpush2.bf16.msra.mxu0 0
        %777 = vmatprep.subr.bf16.mxu0 0
        %778 = vmatpush2.bf16.msra.mxu0 0
        %779 = vmatprep.subr.bf16.mxu0 0
        %780 = vmatpush2.bf16.msra.mxu0 0
        %781 = vmatprep.subr.bf16.mxu0 0
        %782 = vmatpush2.bf16.msra.mxu0 0
        %783 = vmatprep.subr.bf16.mxu0 0
        %784 = vmatpush2.bf16.msra.mxu0 0
        %785 = vmatprep.subr.bf16.mxu0 0
        %786 = vmatpush2.bf16.msra.mxu0 0
        %787 = vmatprep.subr.bf16.mxu0 0
        %788 = vmatpush2.bf16.msra.mxu0 0
        %789 = vmatprep.subr.bf16.mxu0 0
        %790 = vmatpush2.bf16.msra.mxu0 0
        %791 = vmatprep.mubr.bf16.mxu0 0
        %792 = vmatmul.mubr.bf16.gmra.mxu0 %v714
        %v793 = vpop.f32.mrf.mxu0
        %v794 = vadd.f32 0.0, %v793
        %v795 = vpop.f32.mrf.mxu0
        %v796 = vadd.f32 0.0, %v795
        %v797 = vpop.f32.mrf.mxu0
        %v798 = vadd.f32 0.0, %v797
        %v799 = vpop.f32.mrf.mxu0
        %v800 = vadd.f32 0.0, %v799
        %801 = vdwg.mxu0
        %v802 = vadd.f32 %v678, %v751
        %v803 = vadd.f32 %v679, %v753
        %v804 = vadd.f32 %v680, %v794
        %v805 = vadd.f32 %v681, %v796
        %v806 = vadd.f32 %v682, %v755
        %v807 = vadd.f32 %v683, %v757
        %v808 = vadd.f32 %v684, %v798
        %v809 = vadd.f32 %v685, %v800
        %s810 = scalar_lea.vmem %s0, 32
        %v811 = vld [vmem:[%s810] sm:$0xf]
        %v812 = vld [vmem:[%s810 + $0x4] sm:$0xf]
        %v815 = vunpack.c.l.b16 %v811
        %v816 = vunpack.c.l.b16 %v812
        %v817 = vpack.c.b16 %v816, %v815
        %818 = vrot.lane.b32.xlu0 %v316, 64
        %v819 = vpop.permute.xlu0 %818
        %820 = vrot.lane.b32.xlu0 %v317, 64
        %v821 = vpop.permute.xlu0 %820
        %822 = vrot.lane.b32.xlu0 %v318, 64
        %v823 = vpop.permute.xlu0 %822
        %824 = vrot.lane.b32.xlu0 %v319, 64
        %v825 = vpop.permute.xlu0 %824
        %826 = vrot.lane.b32.xlu0 %v320, 64
        %v827 = vpop.permute.xlu0 %826
        %vm828 = vcmask 523264
        %v829 = vsel %vm828, %v819, %v821
        %v830 = vsel %vm828, %v821, %v823
        %v831 = vsel %vm828, %v823, %v825
        %v832 = vsel %vm828, %v825, %v827
        %v838 = vsel %vm340, %v817, 0
        %840 = vmatprep.subr.bf16.mxu0 0
        %841 = vmatpush1.bf16.msra.mxu0 0
        %842 = vmatprep.subr.bf16.mxu0 0
        %843 = vmatpush1.bf16.msra.mxu0 0
        %844 = vmatprep.subr.bf16.mxu0 0
        %845 = vmatpush1.bf16.msra.mxu0 0
        %846 = vmatprep.subr.bf16.mxu0 0
        %847 = vmatpush1.bf16.msra.mxu0 0
        %848 = vmatprep.subr.bf16.mxu0 0
        %849 = vmatpush1.bf16.msra.mxu0 0
        %850 = vmatprep.subr.bf16.mxu0 0
        %851 = vmatpush1.bf16.msra.mxu0 0
        %852 = vmatprep.subr.bf16.mxu0 0
        %853 = vmatpush1.bf16.msra.mxu0 0
        %854 = vmatprep.subr.bf16.mxu0 %v830
        %855 = vmatpush1.bf16.msra.mxu0 %v829
        %856 = vmatprep.subr.bf16.mxu0 0
        %857 = vmatpush2.bf16.msra.mxu0 0
        %858 = vmatprep.subr.bf16.mxu0 0
        %859 = vmatpush2.bf16.msra.mxu0 0
        %860 = vmatprep.subr.bf16.mxu0 0
        %861 = vmatpush2.bf16.msra.mxu0 0
        %862 = vmatprep.subr.bf16.mxu0 0
        %863 = vmatpush2.bf16.msra.mxu0 0
        %864 = vmatprep.subr.bf16.mxu0 0
        %865 = vmatpush2.bf16.msra.mxu0 0
        %866 = vmatprep.subr.bf16.mxu0 0
        %867 = vmatpush2.bf16.msra.mxu0 0
        %868 = vmatprep.subr.bf16.mxu0 0
        %869 = vmatpush2.bf16.msra.mxu0 0
        %870 = vmatprep.subr.bf16.mxu0 0
        %871 = vmatpush2.bf16.msra.mxu0 0
        %872 = vmatprep.mubr.bf16.mxu0 0
        %873 = vmatmul.mubr.bf16.gmra.mxu0 %v838
        %v874 = vpop.f32.mrf.mxu0
        %v875 = vadd.f32 0.0, %v874
        %v876 = vpop.f32.mrf.mxu0
        %v877 = vadd.f32 0.0, %v876
        %v878 = vpop.f32.mrf.mxu0
        %v879 = vadd.f32 0.0, %v878
        %v880 = vpop.f32.mrf.mxu0
        %v881 = vadd.f32 0.0, %v880
        %882 = vdwg.mxu0
        %883 = vmatprep.subr.bf16.mxu0 0
        %884 = vmatpush1.bf16.msra.mxu0 0
        %885 = vmatprep.subr.bf16.mxu0 0
        %886 = vmatpush1.bf16.msra.mxu0 0
        %887 = vmatprep.subr.bf16.mxu0 0
        %888 = vmatpush1.bf16.msra.mxu0 0
        %889 = vmatprep.subr.bf16.mxu0 0
        %890 = vmatpush1.bf16.msra.mxu0 0
        %891 = vmatprep.subr.bf16.mxu0 0
        %892 = vmatpush1.bf16.msra.mxu0 0
        %893 = vmatprep.subr.bf16.mxu0 0
        %894 = vmatpush1.bf16.msra.mxu0 0
        %895 = vmatprep.subr.bf16.mxu0 0
        %896 = vmatpush1.bf16.msra.mxu0 0
        %897 = vmatprep.subr.bf16.mxu0 %v832
        %898 = vmatpush1.bf16.msra.mxu0 %v831
        %899 = vmatprep.subr.bf16.mxu0 0
        %900 = vmatpush2.bf16.msra.mxu0 0
        %901 = vmatprep.subr.bf16.mxu0 0
        %902 = vmatpush2.bf16.msra.mxu0 0
        %903 = vmatprep.subr.bf16.mxu0 0
        %904 = vmatpush2.bf16.msra.mxu0 0
        %905 = vmatprep.subr.bf16.mxu0 0
        %906 = vmatpush2.bf16.msra.mxu0 0
        %907 = vmatprep.subr.bf16.mxu0 0
        %908 = vmatpush2.bf16.msra.mxu0 0
        %909 = vmatprep.subr.bf16.mxu0 0
        %910 = vmatpush2.bf16.msra.mxu0 0
        %911 = vmatprep.subr.bf16.mxu0 0
        %912 = vmatpush2.bf16.msra.mxu0 0
        %913 = vmatprep.subr.bf16.mxu0 0
        %914 = vmatpush2.bf16.msra.mxu0 0
        %915 = vmatprep.mubr.bf16.mxu0 0
        %916 = vmatmul.mubr.bf16.gmra.mxu0 %v838
        %v917 = vpop.f32.mrf.mxu0
        %v918 = vadd.f32 0.0, %v917
        %v919 = vpop.f32.mrf.mxu0
        %v920 = vadd.f32 0.0, %v919
        %v921 = vpop.f32.mrf.mxu0
        %v922 = vadd.f32 0.0, %v921
        %v923 = vpop.f32.mrf.mxu0
        %v924 = vadd.f32 0.0, %v923
        %925 = vdwg.mxu0
        %v926 = vadd.f32 %v802, %v875
        %v927 = vadd.f32 %v803, %v877
        %v928 = vadd.f32 %v804, %v918
        %v929 = vadd.f32 %v805, %v920
        %v930 = vadd.f32 %v806, %v879
        %v931 = vadd.f32 %v807, %v881
        %v932 = vadd.f32 %v808, %v922
        %v933 = vadd.f32 %v809, %v924
        %s934 = scalar_lea.vmem %s0, 40
        %v935 = vld [vmem:[%s934] sm:$0xf]
        %v936 = vld [vmem:[%s934 + $0x4] sm:$0xf]
        %v939 = vunpack.c.l.b16 %v935
        %v940 = vunpack.c.l.b16 %v936
        %v941 = vpack.c.b16 %v940, %v939
        %942 = vrot.lane.b32.xlu0 %v316, 63
        %v943 = vpop.permute.xlu0 %942
        %944 = vrot.lane.b32.xlu0 %v317, 63
        %v945 = vpop.permute.xlu0 %944
        %946 = vrot.lane.b32.xlu0 %v318, 63
        %v947 = vpop.permute.xlu0 %946
        %948 = vrot.lane.b32.xlu0 %v319, 63
        %v949 = vpop.permute.xlu0 %948
        %950 = vrot.lane.b32.xlu0 %v320, 63
        %v951 = vpop.permute.xlu0 %950
        %vm952 = vcmask 515072
        %v953 = vsel %vm952, %v943, %v945
        %v954 = vsel %vm952, %v945, %v947
        %v955 = vsel %vm952, %v947, %v949
        %v956 = vsel %vm952, %v949, %v951
        %v962 = vsel %vm340, %v941, 0
        %964 = vmatprep.subr.bf16.mxu0 0
        %965 = vmatpush1.bf16.msra.mxu0 0
        %966 = vmatprep.subr.bf16.mxu0 0
        %967 = vmatpush1.bf16.msra.mxu0 0
        %968 = vmatprep.subr.bf16.mxu0 0
        %969 = vmatpush1.bf16.msra.mxu0 0
        %970 = vmatprep.subr.bf16.mxu0 0
        %971 = vmatpush1.bf16.msra.mxu0 0
        %972 = vmatprep.subr.bf16.mxu0 0
        %973 = vmatpush1.bf16.msra.mxu0 0
        %974 = vmatprep.subr.bf16.mxu0 0
        %975 = vmatpush1.bf16.msra.mxu0 0
        %976 = vmatprep.subr.bf16.mxu0 0
        %977 = vmatpush1.bf16.msra.mxu0 0
        %978 = vmatprep.subr.bf16.mxu0 %v954
        %979 = vmatpush1.bf16.msra.mxu0 %v953
        %980 = vmatprep.subr.bf16.mxu0 0
        %981 = vmatpush2.bf16.msra.mxu0 0
        %982 = vmatprep.subr.bf16.mxu0 0
        %983 = vmatpush2.bf16.msra.mxu0 0
        %984 = vmatprep.subr.bf16.mxu0 0
        %985 = vmatpush2.bf16.msra.mxu0 0
        %986 = vmatprep.subr.bf16.mxu0 0
        %987 = vmatpush2.bf16.msra.mxu0 0
        %988 = vmatprep.subr.bf16.mxu0 0
        %989 = vmatpush2.bf16.msra.mxu0 0
        %990 = vmatprep.subr.bf16.mxu0 0
        %991 = vmatpush2.bf16.msra.mxu0 0
        %992 = vmatprep.subr.bf16.mxu0 0
        %993 = vmatpush2.bf16.msra.mxu0 0
        %994 = vmatprep.subr.bf16.mxu0 0
        %995 = vmatpush2.bf16.msra.mxu0 0
        %996 = vmatprep.mubr.bf16.mxu0 0
        %997 = vmatmul.mubr.bf16.gmra.mxu0 %v962
        %v998 = vpop.f32.mrf.mxu0
        %v999 = vadd.f32 0.0, %v998
        %v1000 = vpop.f32.mrf.mxu0
        %v1001 = vadd.f32 0.0, %v1000
        %v1002 = vpop.f32.mrf.mxu0
        %v1003 = vadd.f32 0.0, %v1002
        %v1004 = vpop.f32.mrf.mxu0
        %v1005 = vadd.f32 0.0, %v1004
        %1006 = vdwg.mxu0
        %1007 = vmatprep.subr.bf16.mxu0 0
        %1008 = vmatpush1.bf16.msra.mxu0 0
        %1009 = vmatprep.subr.bf16.mxu0 0
        %1010 = vmatpush1.bf16.msra.mxu0 0
        %1011 = vmatprep.subr.bf16.mxu0 0
        %1012 = vmatpush1.bf16.msra.mxu0 0
        %1013 = vmatprep.subr.bf16.mxu0 0
        %1014 = vmatpush1.bf16.msra.mxu0 0
        %1015 = vmatprep.subr.bf16.mxu0 0
        %1016 = vmatpush1.bf16.msra.mxu0 0
        %1017 = vmatprep.subr.bf16.mxu0 0
        %1018 = vmatpush1.bf16.msra.mxu0 0
        %1019 = vmatprep.subr.bf16.mxu0 0
        %1020 = vmatpush1.bf16.msra.mxu0 0
        %1021 = vmatprep.subr.bf16.mxu0 %v956
        %1022 = vmatpush1.bf16.msra.mxu0 %v955
        %1023 = vmatprep.subr.bf16.mxu0 0
        %1024 = vmatpush2.bf16.msra.mxu0 0
        %1025 = vmatprep.subr.bf16.mxu0 0
        %1026 = vmatpush2.bf16.msra.mxu0 0
        %1027 = vmatprep.subr.bf16.mxu0 0
        %1028 = vmatpush2.bf16.msra.mxu0 0
        %1029 = vmatprep.subr.bf16.mxu0 0
        %1030 = vmatpush2.bf16.msra.mxu0 0
        %1031 = vmatprep.subr.bf16.mxu0 0
        %1032 = vmatpush2.bf16.msra.mxu0 0
        %1033 = vmatprep.subr.bf16.mxu0 0
        %1034 = vmatpush2.bf16.msra.mxu0 0
        %1035 = vmatprep.subr.bf16.mxu0 0
        %1036 = vmatpush2.bf16.msra.mxu0 0
        %1037 = vmatprep.subr.bf16.mxu0 0
        %1038 = vmatpush2.bf16.msra.mxu0 0
        %1039 = vmatprep.mubr.bf16.mxu0 0
        %1040 = vmatmul.mubr.bf16.gmra.mxu0 %v962
        %v1041 = vpop.f32.mrf.mxu0
        %v1042 = vadd.f32 0.0, %v1041
        %v1043 = vpop.f32.mrf.mxu0
        %v1044 = vadd.f32 0.0, %v1043
        %v1045 = vpop.f32.mrf.mxu0
        %v1046 = vadd.f32 0.0, %v1045
        %v1047 = vpop.f32.mrf.mxu0
        %v1048 = vadd.f32 0.0, %v1047
        %1049 = vdwg.mxu0
        %v1050 = vadd.f32 %v926, %v999
        %v1051 = vadd.f32 %v927, %v1001
        %v1052 = vadd.f32 %v928, %v1042
        %v1053 = vadd.f32 %v929, %v1044
        %v1054 = vadd.f32 %v930, %v1003
        %v1055 = vadd.f32 %v931, %v1005
        %v1056 = vadd.f32 %v932, %v1046
        %v1057 = vadd.f32 %v933, %v1048
        %s1058 = scalar_lea.vmem %s0, 48
        %v1059 = vld [vmem:[%s1058] sm:$0xf]
        %v1060 = vld [vmem:[%s1058 + $0x4] sm:$0xf]
        %v1063 = vunpack.c.l.b16 %v1059
        %v1064 = vunpack.c.l.b16 %v1060
        %v1065 = vpack.c.b16 %v1064, %v1063
        %1066 = vrot.lane.b32.xlu0 %v316, 33
        %v1067 = vpop.permute.xlu0 %1066
        %1068 = vrot.lane.b32.xlu0 %v317, 33
        %v1069 = vpop.permute.xlu0 %1068
        %1070 = vrot.lane.b32.xlu0 %v318, 33
        %v1071 = vpop.permute.xlu0 %1070
        %1072 = vrot.lane.b32.xlu0 %v319, 33
        %v1073 = vpop.permute.xlu0 %1072
        %1074 = vrot.lane.b32.xlu0 %v320, 33
        %v1075 = vpop.permute.xlu0 %1074
        %vm1076 = vcmask 269312
        %v1077 = vsel %vm1076, %v1067, %v1069
        %v1078 = vsel %vm1076, %v1069, %v1071
        %v1079 = vsel %vm1076, %v1071, %v1073
        %v1080 = vsel %vm1076, %v1073, %v1075
        %v1086 = vsel %vm340, %v1065, 0
        %1088 = vmatprep.subr.bf16.mxu0 0
        %1089 = vmatpush1.bf16.msra.mxu0 0
        %1090 = vmatprep.subr.bf16.mxu0 0
        %1091 = vmatpush1.bf16.msra.mxu0 0
        %1092 = vmatprep.subr.bf16.mxu0 0
        %1093 = vmatpush1.bf16.msra.mxu0 0
        %1094 = vmatprep.subr.bf16.mxu0 0
        %1095 = vmatpush1.bf16.msra.mxu0 0
        %1096 = vmatprep.subr.bf16.mxu0 0
        %1097 = vmatpush1.bf16.msra.mxu0 0
        %1098 = vmatprep.subr.bf16.mxu0 0
        %1099 = vmatpush1.bf16.msra.mxu0 0
        %1100 = vmatprep.subr.bf16.mxu0 0
        %1101 = vmatpush1.bf16.msra.mxu0 0
        %1102 = vmatprep.subr.bf16.mxu0 %v1078
        %1103 = vmatpush1.bf16.msra.mxu0 %v1077
        %1104 = vmatprep.subr.bf16.mxu0 0
        %1105 = vmatpush2.bf16.msra.mxu0 0
        %1106 = vmatprep.subr.bf16.mxu0 0
        %1107 = vmatpush2.bf16.msra.mxu0 0
        %1108 = vmatprep.subr.bf16.mxu0 0
        %1109 = vmatpush2.bf16.msra.mxu0 0
        %1110 = vmatprep.subr.bf16.mxu0 0
        %1111 = vmatpush2.bf16.msra.mxu0 0
        %1112 = vmatprep.subr.bf16.mxu0 0
        %1113 = vmatpush2.bf16.msra.mxu0 0
        %1114 = vmatprep.subr.bf16.mxu0 0
        %1115 = vmatpush2.bf16.msra.mxu0 0
        %1116 = vmatprep.subr.bf16.mxu0 0
        %1117 = vmatpush2.bf16.msra.mxu0 0
        %1118 = vmatprep.subr.bf16.mxu0 0
        %1119 = vmatpush2.bf16.msra.mxu0 0
        %1120 = vmatprep.mubr.bf16.mxu0 0
        %1121 = vmatmul.mubr.bf16.gmra.mxu0 %v1086
        %v1122 = vpop.f32.mrf.mxu0
        %v1123 = vadd.f32 0.0, %v1122
        %v1124 = vpop.f32.mrf.mxu0
        %v1125 = vadd.f32 0.0, %v1124
        %v1126 = vpop.f32.mrf.mxu0
        %v1127 = vadd.f32 0.0, %v1126
        %v1128 = vpop.f32.mrf.mxu0
        %v1129 = vadd.f32 0.0, %v1128
        %1130 = vdwg.mxu0
        %1131 = vmatprep.subr.bf16.mxu0 0
        %1132 = vmatpush1.bf16.msra.mxu0 0
        %1133 = vmatprep.subr.bf16.mxu0 0
        %1134 = vmatpush1.bf16.msra.mxu0 0
        %1135 = vmatprep.subr.bf16.mxu0 0
        %1136 = vmatpush1.bf16.msra.mxu0 0
        %1137 = vmatprep.subr.bf16.mxu0 0
        %1138 = vmatpush1.bf16.msra.mxu0 0
        %1139 = vmatprep.subr.bf16.mxu0 0
        %1140 = vmatpush1.bf16.msra.mxu0 0
        %1141 = vmatprep.subr.bf16.mxu0 0
        %1142 = vmatpush1.bf16.msra.mxu0 0
        %1143 = vmatprep.subr.bf16.mxu0 0
        %1144 = vmatpush1.bf16.msra.mxu0 0
        %1145 = vmatprep.subr.bf16.mxu0 %v1080
        %1146 = vmatpush1.bf16.msra.mxu0 %v1079
        %1147 = vmatprep.subr.bf16.mxu0 0
        %1148 = vmatpush2.bf16.msra.mxu0 0
        %1149 = vmatprep.subr.bf16.mxu0 0
        %1150 = vmatpush2.bf16.msra.mxu0 0
        %1151 = vmatprep.subr.bf16.mxu0 0
        %1152 = vmatpush2.bf16.msra.mxu0 0
        %1153 = vmatprep.subr.bf16.mxu0 0
        %1154 = vmatpush2.bf16.msra.mxu0 0
        %1155 = vmatprep.subr.bf16.mxu0 0
        %1156 = vmatpush2.bf16.msra.mxu0 0
        %1157 = vmatprep.subr.bf16.mxu0 0
        %1158 = vmatpush2.bf16.msra.mxu0 0
        %1159 = vmatprep.subr.bf16.mxu0 0
        %1160 = vmatpush2.bf16.msra.mxu0 0
        %1161 = vmatprep.subr.bf16.mxu0 0
        %1162 = vmatpush2.bf16.msra.mxu0 0
        %1163 = vmatprep.mubr.bf16.mxu0 0
        %1164 = vmatmul.mubr.bf16.gmra.mxu0 %v1086
        %v1165 = vpop.f32.mrf.mxu0
        %v1166 = vadd.f32 0.0, %v1165
        %v1167 = vpop.f32.mrf.mxu0
        %v1168 = vadd.f32 0.0, %v1167
        %v1169 = vpop.f32.mrf.mxu0
        %v1170 = vadd.f32 0.0, %v1169
        %v1171 = vpop.f32.mrf.mxu0
        %v1172 = vadd.f32 0.0, %v1171
        %1173 = vdwg.mxu0
        %v1174 = vadd.f32 %v1050, %v1123
        %v1175 = vadd.f32 %v1051, %v1125
        %v1176 = vadd.f32 %v1052, %v1166
        %v1177 = vadd.f32 %v1053, %v1168
        %v1178 = vadd.f32 %v1054, %v1127
        %v1179 = vadd.f32 %v1055, %v1129
        %v1180 = vadd.f32 %v1056, %v1170
        %v1181 = vadd.f32 %v1057, %v1172
        %s1182 = scalar_lea.vmem %s0, 56
        %v1183 = vld [vmem:[%s1182] sm:$0xf]
        %v1184 = vld [vmem:[%s1182 + $0x4] sm:$0xf]
        %v1187 = vunpack.c.l.b16 %v1183
        %v1188 = vunpack.c.l.b16 %v1184
        %v1189 = vpack.c.b16 %v1188, %v1187
        %1190 = vrot.lane.b32.xlu0 %v316, 32
        %v1191 = vpop.permute.xlu0 %1190
        %1192 = vrot.lane.b32.xlu0 %v317, 32
        %v1193 = vpop.permute.xlu0 %1192
        %1194 = vrot.lane.b32.xlu0 %v318, 32
        %v1195 = vpop.permute.xlu0 %1194
        %1196 = vrot.lane.b32.xlu0 %v319, 32
        %v1197 = vpop.permute.xlu0 %1196
        %1198 = vrot.lane.b32.xlu0 %v320, 32
        %v1199 = vpop.permute.xlu0 %1198
        %vm1200 = vcmask 261120
        %v1201 = vsel %vm1200, %v1191, %v1193
        %v1202 = vsel %vm1200, %v1193, %v1195
        %v1203 = vsel %vm1200, %v1195, %v1197
        %v1204 = vsel %vm1200, %v1197, %v1199
        %v1210 = vsel %vm340, %v1189, 0
        %1212 = vmatprep.subr.bf16.mxu0 0
        %1213 = vmatpush1.bf16.msra.mxu0 0
        %1214 = vmatprep.subr.bf16.mxu0 0
        %1215 = vmatpush1.bf16.msra.mxu0 0
        %1216 = vmatprep.subr.bf16.mxu0 0
        %1217 = vmatpush1.bf16.msra.mxu0 0
        %1218 = vmatprep.subr.bf16.mxu0 0
        %1219 = vmatpush1.bf16.msra.mxu0 0
        %1220 = vmatprep.subr.bf16.mxu0 0
        %1221 = vmatpush1.bf16.msra.mxu0 0
        %1222 = vmatprep.subr.bf16.mxu0 0
        %1223 = vmatpush1.bf16.msra.mxu0 0
        %1224 = vmatprep.subr.bf16.mxu0 0
        %1225 = vmatpush1.bf16.msra.mxu0 0
        %1226 = vmatprep.subr.bf16.mxu0 %v1202
        %1227 = vmatpush1.bf16.msra.mxu0 %v1201
        %1228 = vmatprep.subr.bf16.mxu0 0
        %1229 = vmatpush2.bf16.msra.mxu0 0
        %1230 = vmatprep.subr.bf16.mxu0 0
        %1231 = vmatpush2.bf16.msra.mxu0 0
        %1232 = vmatprep.subr.bf16.mxu0 0
        %1233 = vmatpush2.bf16.msra.mxu0 0
        %1234 = vmatprep.subr.bf16.mxu0 0
        %1235 = vmatpush2.bf16.msra.mxu0 0
        %1236 = vmatprep.subr.bf16.mxu0 0
        %1237 = vmatpush2.bf16.msra.mxu0 0
        %1238 = vmatprep.subr.bf16.mxu0 0
        %1239 = vmatpush2.bf16.msra.mxu0 0
        %1240 = vmatprep.subr.bf16.mxu0 0
        %1241 = vmatpush2.bf16.msra.mxu0 0
        %1242 = vmatprep.subr.bf16.mxu0 0
        %1243 = vmatpush2.bf16.msra.mxu0 0
        %1244 = vmatprep.mubr.bf16.mxu0 0
        %1245 = vmatmul.mubr.bf16.gmra.mxu0 %v1210
        %v1246 = vpop.f32.mrf.mxu0
        %v1247 = vadd.f32 0.0, %v1246
        %v1248 = vpop.f32.mrf.mxu0
        %v1249 = vadd.f32 0.0, %v1248
        %v1250 = vpop.f32.mrf.mxu0
        %v1251 = vadd.f32 0.0, %v1250
        %v1252 = vpop.f32.mrf.mxu0
        %v1253 = vadd.f32 0.0, %v1252
        %1254 = vdwg.mxu0
        %1255 = vmatprep.subr.bf16.mxu0 0
        %1256 = vmatpush1.bf16.msra.mxu0 0
        %1257 = vmatprep.subr.bf16.mxu0 0
        %1258 = vmatpush1.bf16.msra.mxu0 0
        %1259 = vmatprep.subr.bf16.mxu0 0
        %1260 = vmatpush1.bf16.msra.mxu0 0
        %1261 = vmatprep.subr.bf16.mxu0 0
        %1262 = vmatpush1.bf16.msra.mxu0 0
        %1263 = vmatprep.subr.bf16.mxu0 0
        %1264 = vmatpush1.bf16.msra.mxu0 0
        %1265 = vmatprep.subr.bf16.mxu0 0
        %1266 = vmatpush1.bf16.msra.mxu0 0
        %1267 = vmatprep.subr.bf16.mxu0 0
        %1268 = vmatpush1.bf16.msra.mxu0 0
        %1269 = vmatprep.subr.bf16.mxu0 %v1204
        %1270 = vmatpush1.bf16.msra.mxu0 %v1203
        %1271 = vmatprep.subr.bf16.mxu0 0
        %1272 = vmatpush2.bf16.msra.mxu0 0
        %1273 = vmatprep.subr.bf16.mxu0 0
        %1274 = vmatpush2.bf16.msra.mxu0 0
        %1275 = vmatprep.subr.bf16.mxu0 0
        %1276 = vmatpush2.bf16.msra.mxu0 0
        %1277 = vmatprep.subr.bf16.mxu0 0
        %1278 = vmatpush2.bf16.msra.mxu0 0
        %1279 = vmatprep.subr.bf16.mxu0 0
        %1280 = vmatpush2.bf16.msra.mxu0 0
        %1281 = vmatprep.subr.bf16.mxu0 0
        %1282 = vmatpush2.bf16.msra.mxu0 0
        %1283 = vmatprep.subr.bf16.mxu0 0
        %1284 = vmatpush2.bf16.msra.mxu0 0
        %1285 = vmatprep.subr.bf16.mxu0 0
        %1286 = vmatpush2.bf16.msra.mxu0 0
        %1287 = vmatprep.mubr.bf16.mxu0 0
        %1288 = vmatmul.mubr.bf16.gmra.mxu0 %v1210
        %v1289 = vpop.f32.mrf.mxu0
        %v1290 = vadd.f32 0.0, %v1289
        %v1291 = vpop.f32.mrf.mxu0
        %v1292 = vadd.f32 0.0, %v1291
        %v1293 = vpop.f32.mrf.mxu0
        %v1294 = vadd.f32 0.0, %v1293
        %v1295 = vpop.f32.mrf.mxu0
        %v1296 = vadd.f32 0.0, %v1295
        %1297 = vdwg.mxu0
        %v1298 = vadd.f32 %v1174, %v1247
        %v1299 = vadd.f32 %v1175, %v1249
        %v1300 = vadd.f32 %v1176, %v1290
        %v1301 = vadd.f32 %v1177, %v1292
        %v1302 = vadd.f32 %v1178, %v1251
        %v1303 = vadd.f32 %v1179, %v1253
        %v1304 = vadd.f32 %v1180, %v1294
        %v1305 = vadd.f32 %v1181, %v1296
        %s1306 = scalar_lea.vmem %s0, 64
        %v1307 = vld [vmem:[%s1306] sm:$0xf]
        %v1308 = vld [vmem:[%s1306 + $0x4] sm:$0xf]
        %v1311 = vunpack.c.l.b16 %v1307
        %v1312 = vunpack.c.l.b16 %v1308
        %v1313 = vpack.c.b16 %v1312, %v1311
        %1314 = vrot.lane.b32.xlu0 %v316, 31
        %v1315 = vpop.permute.xlu0 %1314
        %1316 = vrot.lane.b32.xlu0 %v317, 31
        %v1317 = vpop.permute.xlu0 %1316
        %1318 = vrot.lane.b32.xlu0 %v318, 31
        %v1319 = vpop.permute.xlu0 %1318
        %1320 = vrot.lane.b32.xlu0 %v319, 31
        %v1321 = vpop.permute.xlu0 %1320
        %1322 = vrot.lane.b32.xlu0 %v320, 31
        %v1323 = vpop.permute.xlu0 %1322
        %vm1324 = vcmask 252928
        %v1325 = vsel %vm1324, %v1315, %v1317
        %v1326 = vsel %vm1324, %v1317, %v1319
        %v1327 = vsel %vm1324, %v1319, %v1321
        %v1328 = vsel %vm1324, %v1321, %v1323
        %v1334 = vsel %vm340, %v1313, 0
        %1336 = vmatprep.subr.bf16.mxu0 0
        %1337 = vmatpush1.bf16.msra.mxu0 0
        %1338 = vmatprep.subr.bf16.mxu0 0
        %1339 = vmatpush1.bf16.msra.mxu0 0
        %1340 = vmatprep.subr.bf16.mxu0 0
        %1341 = vmatpush1.bf16.msra.mxu0 0
        %1342 = vmatprep.subr.bf16.mxu0 0
        %1343 = vmatpush1.bf16.msra.mxu0 0
        %1344 = vmatprep.subr.bf16.mxu0 0
        %1345 = vmatpush1.bf16.msra.mxu0 0
        %1346 = vmatprep.subr.bf16.mxu0 0
        %1347 = vmatpush1.bf16.msra.mxu0 0
        %1348 = vmatprep.subr.bf16.mxu0 0
        %1349 = vmatpush1.bf16.msra.mxu0 0
        %1350 = vmatprep.subr.bf16.mxu0 %v1326
        %1351 = vmatpush1.bf16.msra.mxu0 %v1325
        %1352 = vmatprep.subr.bf16.mxu0 0
        %1353 = vmatpush2.bf16.msra.mxu0 0
        %1354 = vmatprep.subr.bf16.mxu0 0
        %1355 = vmatpush2.bf16.msra.mxu0 0
        %1356 = vmatprep.subr.bf16.mxu0 0
        %1357 = vmatpush2.bf16.msra.mxu0 0
        %1358 = vmatprep.subr.bf16.mxu0 0
        %1359 = vmatpush2.bf16.msra.mxu0 0
        %1360 = vmatprep.subr.bf16.mxu0 0
        %1361 = vmatpush2.bf16.msra.mxu0 0
        %1362 = vmatprep.subr.bf16.mxu0 0
        %1363 = vmatpush2.bf16.msra.mxu0 0
        %1364 = vmatprep.subr.bf16.mxu0 0
        %1365 = vmatpush2.bf16.msra.mxu0 0
        %1366 = vmatprep.subr.bf16.mxu0 0
        %1367 = vmatpush2.bf16.msra.mxu0 0
        %1368 = vmatprep.mubr.bf16.mxu0 0
        %1369 = vmatmul.mubr.bf16.gmra.mxu0 %v1334
        %v1370 = vpop.f32.mrf.mxu0
        %v1371 = vadd.f32 0.0, %v1370
        %v1372 = vpop.f32.mrf.mxu0
        %v1373 = vadd.f32 0.0, %v1372
        %v1374 = vpop.f32.mrf.mxu0
        %v1375 = vadd.f32 0.0, %v1374
        %v1376 = vpop.f32.mrf.mxu0
        %v1377 = vadd.f32 0.0, %v1376
        %1378 = vdwg.mxu0
        %1379 = vmatprep.subr.bf16.mxu0 0
        %1380 = vmatpush1.bf16.msra.mxu0 0
        %1381 = vmatprep.subr.bf16.mxu0 0
        %1382 = vmatpush1.bf16.msra.mxu0 0
        %1383 = vmatprep.subr.bf16.mxu0 0
        %1384 = vmatpush1.bf16.msra.mxu0 0
        %1385 = vmatprep.subr.bf16.mxu0 0
        %1386 = vmatpush1.bf16.msra.mxu0 0
        %1387 = vmatprep.subr.bf16.mxu0 0
        %1388 = vmatpush1.bf16.msra.mxu0 0
        %1389 = vmatprep.subr.bf16.mxu0 0
        %1390 = vmatpush1.bf16.msra.mxu0 0
        %1391 = vmatprep.subr.bf16.mxu0 0
        %1392 = vmatpush1.bf16.msra.mxu0 0
        %1393 = vmatprep.subr.bf16.mxu0 %v1328
        %1394 = vmatpush1.bf16.msra.mxu0 %v1327
        %1395 = vmatprep.subr.bf16.mxu0 0
        %1396 = vmatpush2.bf16.msra.mxu0 0
        %1397 = vmatprep.subr.bf16.mxu0 0
        %1398 = vmatpush2.bf16.msra.mxu0 0
        %1399 = vmatprep.subr.bf16.mxu0 0
        %1400 = vmatpush2.bf16.msra.mxu0 0
        %1401 = vmatprep.subr.bf16.mxu0 0
        %1402 = vmatpush2.bf16.msra.mxu0 0
        %1403 = vmatprep.subr.bf16.mxu0 0
        %1404 = vmatpush2.bf16.msra.mxu0 0
        %1405 = vmatprep.subr.bf16.mxu0 0
        %1406 = vmatpush2.bf16.msra.mxu0 0
        %1407 = vmatprep.subr.bf16.mxu0 0
        %1408 = vmatpush2.bf16.msra.mxu0 0
        %1409 = vmatprep.subr.bf16.mxu0 0
        %1410 = vmatpush2.bf16.msra.mxu0 0
        %1411 = vmatprep.mubr.bf16.mxu0 0
        %1412 = vmatmul.mubr.bf16.gmra.mxu0 %v1334
        %v1413 = vpop.f32.mrf.mxu0
        %v1414 = vadd.f32 0.0, %v1413
        %v1415 = vpop.f32.mrf.mxu0
        %v1416 = vadd.f32 0.0, %v1415
        %v1417 = vpop.f32.mrf.mxu0
        %v1418 = vadd.f32 0.0, %v1417
        %v1419 = vpop.f32.mrf.mxu0
        %v1420 = vadd.f32 0.0, %v1419
        %1421 = vdwg.mxu0
        %v1422 = vadd.f32 %v1298, %v1371
        %v1423 = vadd.f32 %v1299, %v1373
        %v1424 = vadd.f32 %v1300, %v1414
        %v1425 = vadd.f32 %v1301, %v1416
        %v1426 = vadd.f32 %v1302, %v1375
        %v1427 = vadd.f32 %v1303, %v1377
        %v1428 = vadd.f32 %v1304, %v1418
        %v1429 = vadd.f32 %v1305, %v1420
        %s1430 = scalar_lea.vmem %s0, 72
        %v1431 = vld [vmem:[%s1430] sm:$0xf]
        %v1432 = vld [vmem:[%s1430 + $0x4] sm:$0xf]
        %v1435 = vunpack.c.l.b16 %v1431
        %v1436 = vunpack.c.l.b16 %v1432
        %v1437 = vpack.c.b16 %v1436, %v1435
        %v1444 = vunpack.c.l.b16 %v276
        %v1445 = vunpack.c.h.b16 %v276
        %v1446 = vunpack.c.l.b16 %v277
        %v1447 = vunpack.c.h.b16 %v277
        %v1448 = vunpack.c.l.b16 %v278
        %v1449 = vunpack.c.l.b16 %v279
        %v1450 = vunpack.c.h.b16 %v279
        %v1451 = vunpack.c.l.b16 %v280
        %v1452 = vunpack.c.h.b16 %v280
        %v1453 = vunpack.c.l.b16 %v281
        %v1454 = vpack.c.b16 %v1449, %v1444
        %v1455 = vpack.c.b16 %v1450, %v1445
        %v1456 = vpack.c.b16 %v1451, %v1446
        %v1457 = vpack.c.b16 %v1452, %v1447
        %v1458 = vpack.c.b16 %v1453, %v1448
        %1459 = vrot.lane.b32.xlu0 %v1454, 97
        %v1460 = vpop.permute.xlu0 %1459
        %1461 = vrot.lane.b32.xlu0 %v1455, 97
        %v1462 = vpop.permute.xlu0 %1461
        %1463 = vrot.lane.b32.xlu0 %v1456, 97
        %v1464 = vpop.permute.xlu0 %1463
        %1465 = vrot.lane.b32.xlu0 %v1457, 97
        %v1466 = vpop.permute.xlu0 %1465
        %1467 = vrot.lane.b32.xlu0 %v1458, 97
        %v1468 = vpop.permute.xlu0 %1467
        %v1469 = vsel %vm331, %v1460, %v1462
        %v1470 = vsel %vm331, %v1462, %v1464
        %v1471 = vsel %vm331, %v1464, %v1466
        %v1472 = vsel %vm331, %v1466, %v1468
        %v1478 = vsel %vm340, %v1437, 0
        %1480 = vmatprep.subr.bf16.mxu0 0
        %1481 = vmatpush1.bf16.msra.mxu0 0
        %1482 = vmatprep.subr.bf16.mxu0 0
        %1483 = vmatpush1.bf16.msra.mxu0 0
        %1484 = vmatprep.subr.bf16.mxu0 0
        %1485 = vmatpush1.bf16.msra.mxu0 0
        %1486 = vmatprep.subr.bf16.mxu0 0
        %1487 = vmatpush1.bf16.msra.mxu0 0
        %1488 = vmatprep.subr.bf16.mxu0 0
        %1489 = vmatpush1.bf16.msra.mxu0 0
        %1490 = vmatprep.subr.bf16.mxu0 0
        %1491 = vmatpush1.bf16.msra.mxu0 0
        %1492 = vmatprep.subr.bf16.mxu0 0
        %1493 = vmatpush1.bf16.msra.mxu0 0
        %1494 = vmatprep.subr.bf16.mxu0 %v1470
        %1495 = vmatpush1.bf16.msra.mxu0 %v1469
        %1496 = vmatprep.subr.bf16.mxu0 0
        %1497 = vmatpush2.bf16.msra.mxu0 0
        %1498 = vmatprep.subr.bf16.mxu0 0
        %1499 = vmatpush2.bf16.msra.mxu0 0
        %1500 = vmatprep.subr.bf16.mxu0 0
        %1501 = vmatpush2.bf16.msra.mxu0 0
        %1502 = vmatprep.subr.bf16.mxu0 0
        %1503 = vmatpush2.bf16.msra.mxu0 0
        %1504 = vmatprep.subr.bf16.mxu0 0
        %1505 = vmatpush2.bf16.msra.mxu0 0
        %1506 = vmatprep.subr.bf16.mxu0 0
        %1507 = vmatpush2.bf16.msra.mxu0 0
        %1508 = vmatprep.subr.bf16.mxu0 0
        %1509 = vmatpush2.bf16.msra.mxu0 0
        %1510 = vmatprep.subr.bf16.mxu0 0
        %1511 = vmatpush2.bf16.msra.mxu0 0
        %1512 = vmatprep.mubr.bf16.mxu0 0
        %1513 = vmatmul.mubr.bf16.gmra.mxu0 %v1478
        %v1514 = vpop.f32.mrf.mxu0
        %v1515 = vadd.f32 0.0, %v1514
        %v1516 = vpop.f32.mrf.mxu0
        %v1517 = vadd.f32 0.0, %v1516
        %v1518 = vpop.f32.mrf.mxu0
        %v1519 = vadd.f32 0.0, %v1518
        %v1520 = vpop.f32.mrf.mxu0
        %v1521 = vadd.f32 0.0, %v1520
        %1522 = vdwg.mxu0
        %1523 = vmatprep.subr.bf16.mxu0 0
        %1524 = vmatpush1.bf16.msra.mxu0 0
        %1525 = vmatprep.subr.bf16.mxu0 0
        %1526 = vmatpush1.bf16.msra.mxu0 0
        %1527 = vmatprep.subr.bf16.mxu0 0
        %1528 = vmatpush1.bf16.msra.mxu0 0
        %1529 = vmatprep.subr.bf16.mxu0 0
        %1530 = vmatpush1.bf16.msra.mxu0 0
        %1531 = vmatprep.subr.bf16.mxu0 0
        %1532 = vmatpush1.bf16.msra.mxu0 0
        %1533 = vmatprep.subr.bf16.mxu0 0
        %1534 = vmatpush1.bf16.msra.mxu0 0
        %1535 = vmatprep.subr.bf16.mxu0 0
        %1536 = vmatpush1.bf16.msra.mxu0 0
        %1537 = vmatprep.subr.bf16.mxu0 %v1472
        %1538 = vmatpush1.bf16.msra.mxu0 %v1471
        %1539 = vmatprep.subr.bf16.mxu0 0
        %1540 = vmatpush2.bf16.msra.mxu0 0
        %1541 = vmatprep.subr.bf16.mxu0 0
        %1542 = vmatpush2.bf16.msra.mxu0 0
        %1543 = vmatprep.subr.bf16.mxu0 0
        %1544 = vmatpush2.bf16.msra.mxu0 0
        %1545 = vmatprep.subr.bf16.mxu0 0
        %1546 = vmatpush2.bf16.msra.mxu0 0
        %1547 = vmatprep.subr.bf16.mxu0 0
        %1548 = vmatpush2.bf16.msra.mxu0 0
        %1549 = vmatprep.subr.bf16.mxu0 0
        %1550 = vmatpush2.bf16.msra.mxu0 0
        %1551 = vmatprep.subr.bf16.mxu0 0
        %1552 = vmatpush2.bf16.msra.mxu0 0
        %1553 = vmatprep.subr.bf16.mxu0 0
        %1554 = vmatpush2.bf16.msra.mxu0 0
        %1555 = vmatprep.mubr.bf16.mxu0 0
        %1556 = vmatmul.mubr.bf16.gmra.mxu0 %v1478
        %v1557 = vpop.f32.mrf.mxu0
        %v1558 = vadd.f32 0.0, %v1557
        %v1559 = vpop.f32.mrf.mxu0
        %v1560 = vadd.f32 0.0, %v1559
        %v1561 = vpop.f32.mrf.mxu0
        %v1562 = vadd.f32 0.0, %v1561
        %v1563 = vpop.f32.mrf.mxu0
        %v1564 = vadd.f32 0.0, %v1563
        %1565 = vdwg.mxu0
        %v1566 = vadd.f32 %v1422, %v1515
        %v1567 = vadd.f32 %v1423, %v1517
        %v1568 = vadd.f32 %v1424, %v1558
        %v1569 = vadd.f32 %v1425, %v1560
        %v1570 = vadd.f32 %v1426, %v1519
        %v1571 = vadd.f32 %v1427, %v1521
        %v1572 = vadd.f32 %v1428, %v1562
        %v1573 = vadd.f32 %v1429, %v1564
        %s1574 = scalar_lea.vmem %s0, 80
        %v1575 = vld [vmem:[%s1574] sm:$0xf]
        %v1576 = vld [vmem:[%s1574 + $0x4] sm:$0xf]
        %v1579 = vunpack.c.l.b16 %v1575
        %v1580 = vunpack.c.l.b16 %v1576
        %v1581 = vpack.c.b16 %v1580, %v1579
        %1582 = vrot.lane.b32.xlu0 %v1454, 96
        %v1583 = vpop.permute.xlu0 %1582
        %1584 = vrot.lane.b32.xlu0 %v1455, 96
        %v1585 = vpop.permute.xlu0 %1584
        %1586 = vrot.lane.b32.xlu0 %v1456, 96
        %v1587 = vpop.permute.xlu0 %1586
        %1588 = vrot.lane.b32.xlu0 %v1457, 96
        %v1589 = vpop.permute.xlu0 %1588
        %1590 = vrot.lane.b32.xlu0 %v1458, 96
        %v1591 = vpop.permute.xlu0 %1590
        %v1592 = vsel %vm456, %v1583, %v1585
        %v1593 = vsel %vm456, %v1585, %v1587
        %v1594 = vsel %vm456, %v1587, %v1589
        %v1595 = vsel %vm456, %v1589, %v1591
        %v1601 = vsel %vm340, %v1581, 0
        %1603 = vmatprep.subr.bf16.mxu0 0
        %1604 = vmatpush1.bf16.msra.mxu0 0
        %1605 = vmatprep.subr.bf16.mxu0 0
        %1606 = vmatpush1.bf16.msra.mxu0 0
        %1607 = vmatprep.subr.bf16.mxu0 0
        %1608 = vmatpush1.bf16.msra.mxu0 0
        %1609 = vmatprep.subr.bf16.mxu0 0
        %1610 = vmatpush1.bf16.msra.mxu0 0
        %1611 = vmatprep.subr.bf16.mxu0 0
        %1612 = vmatpush1.bf16.msra.mxu0 0
        %1613 = vmatprep.subr.bf16.mxu0 0
        %1614 = vmatpush1.bf16.msra.mxu0 0
        %1615 = vmatprep.subr.bf16.mxu0 0
        %1616 = vmatpush1.bf16.msra.mxu0 0
        %1617 = vmatprep.subr.bf16.mxu0 %v1593
        %1618 = vmatpush1.bf16.msra.mxu0 %v1592
        %1619 = vmatprep.subr.bf16.mxu0 0
        %1620 = vmatpush2.bf16.msra.mxu0 0
        %1621 = vmatprep.subr.bf16.mxu0 0
        %1622 = vmatpush2.bf16.msra.mxu0 0
        %1623 = vmatprep.subr.bf16.mxu0 0
        %1624 = vmatpush2.bf16.msra.mxu0 0
        %1625 = vmatprep.subr.bf16.mxu0 0
        %1626 = vmatpush2.bf16.msra.mxu0 0
        %1627 = vmatprep.subr.bf16.mxu0 0
        %1628 = vmatpush2.bf16.msra.mxu0 0
        %1629 = vmatprep.subr.bf16.mxu0 0
        %1630 = vmatpush2.bf16.msra.mxu0 0
        %1631 = vmatprep.subr.bf16.mxu0 0
        %1632 = vmatpush2.bf16.msra.mxu0 0
        %1633 = vmatprep.subr.bf16.mxu0 0
        %1634 = vmatpush2.bf16.msra.mxu0 0
        %1635 = vmatprep.mubr.bf16.mxu0 0
        %1636 = vmatmul.mubr.bf16.gmra.mxu0 %v1601
        %v1637 = vpop.f32.mrf.mxu0
        %v1638 = vadd.f32 0.0, %v1637
        %v1639 = vpop.f32.mrf.mxu0
        %v1640 = vadd.f32 0.0, %v1639
        %v1641 = vpop.f32.mrf.mxu0
        %v1642 = vadd.f32 0.0, %v1641
        %v1643 = vpop.f32.mrf.mxu0
        %v1644 = vadd.f32 0.0, %v1643
        %1645 = vdwg.mxu0
        %1646 = vmatprep.subr.bf16.mxu0 0
        %1647 = vmatpush1.bf16.msra.mxu0 0
        %1648 = vmatprep.subr.bf16.mxu0 0
        %1649 = vmatpush1.bf16.msra.mxu0 0
        %1650 = vmatprep.subr.bf16.mxu0 0
        %1651 = vmatpush1.bf16.msra.mxu0 0
        %1652 = vmatprep.subr.bf16.mxu0 0
        %1653 = vmatpush1.bf16.msra.mxu0 0
        %1654 = vmatprep.subr.bf16.mxu0 0
        %1655 = vmatpush1.bf16.msra.mxu0 0
        %1656 = vmatprep.subr.bf16.mxu0 0
        %1657 = vmatpush1.bf16.msra.mxu0 0
        %1658 = vmatprep.subr.bf16.mxu0 0
        %1659 = vmatpush1.bf16.msra.mxu0 0
        %1660 = vmatprep.subr.bf16.mxu0 %v1595
        %1661 = vmatpush1.bf16.msra.mxu0 %v1594
        %1662 = vmatprep.subr.bf16.mxu0 0
        %1663 = vmatpush2.bf16.msra.mxu0 0
        %1664 = vmatprep.subr.bf16.mxu0 0
        %1665 = vmatpush2.bf16.msra.mxu0 0
        %1666 = vmatprep.subr.bf16.mxu0 0
        %1667 = vmatpush2.bf16.msra.mxu0 0
        %1668 = vmatprep.subr.bf16.mxu0 0
        %1669 = vmatpush2.bf16.msra.mxu0 0
        %1670 = vmatprep.subr.bf16.mxu0 0
        %1671 = vmatpush2.bf16.msra.mxu0 0
        %1672 = vmatprep.subr.bf16.mxu0 0
        %1673 = vmatpush2.bf16.msra.mxu0 0
        %1674 = vmatprep.subr.bf16.mxu0 0
        %1675 = vmatpush2.bf16.msra.mxu0 0
        %1676 = vmatprep.subr.bf16.mxu0 0
        %1677 = vmatpush2.bf16.msra.mxu0 0
        %1678 = vmatprep.mubr.bf16.mxu0 0
        %1679 = vmatmul.mubr.bf16.gmra.mxu0 %v1601
        %v1680 = vpop.f32.mrf.mxu0
        %v1681 = vadd.f32 0.0, %v1680
        %v1682 = vpop.f32.mrf.mxu0
        %v1683 = vadd.f32 0.0, %v1682
        %v1684 = vpop.f32.mrf.mxu0
        %v1685 = vadd.f32 0.0, %v1684
        %v1686 = vpop.f32.mrf.mxu0
        %v1687 = vadd.f32 0.0, %v1686
        %1688 = vdwg.mxu0
        %v1689 = vadd.f32 %v1566, %v1638
        %v1690 = vadd.f32 %v1567, %v1640
        %v1691 = vadd.f32 %v1568, %v1681
        %v1692 = vadd.f32 %v1569, %v1683
        %v1693 = vadd.f32 %v1570, %v1642
        %v1694 = vadd.f32 %v1571, %v1644
        %v1695 = vadd.f32 %v1572, %v1685
        %v1696 = vadd.f32 %v1573, %v1687
        %s1697 = scalar_lea.vmem %s0, 88
        %v1698 = vld [vmem:[%s1697] sm:$0xf]
        %v1699 = vld [vmem:[%s1697 + $0x4] sm:$0xf]
        %v1702 = vunpack.c.l.b16 %v1698
        %v1703 = vunpack.c.l.b16 %v1699
        %v1704 = vpack.c.b16 %v1703, %v1702
        %1705 = vrot.lane.b32.xlu0 %v1454, 95
        %v1706 = vpop.permute.xlu0 %1705
        %1707 = vrot.lane.b32.xlu0 %v1455, 95
        %v1708 = vpop.permute.xlu0 %1707
        %1709 = vrot.lane.b32.xlu0 %v1456, 95
        %v1710 = vpop.permute.xlu0 %1709
        %1711 = vrot.lane.b32.xlu0 %v1457, 95
        %v1712 = vpop.permute.xlu0 %1711
        %1713 = vrot.lane.b32.xlu0 %v1458, 95
        %v1714 = vpop.permute.xlu0 %1713
        %v1715 = vsel %vm580, %v1706, %v1708
        %v1716 = vsel %vm580, %v1708, %v1710
        %v1717 = vsel %vm580, %v1710, %v1712
        %v1718 = vsel %vm580, %v1712, %v1714
        %v1724 = vsel %vm340, %v1704, 0
        %1726 = vmatprep.subr.bf16.mxu0 0
        %1727 = vmatpush1.bf16.msra.mxu0 0
        %1728 = vmatprep.subr.bf16.mxu0 0
        %1729 = vmatpush1.bf16.msra.mxu0 0
        %1730 = vmatprep.subr.bf16.mxu0 0
        %1731 = vmatpush1.bf16.msra.mxu0 0
        %1732 = vmatprep.subr.bf16.mxu0 0
        %1733 = vmatpush1.bf16.msra.mxu0 0
        %1734 = vmatprep.subr.bf16.mxu0 0
        %1735 = vmatpush1.bf16.msra.mxu0 0
        %1736 = vmatprep.subr.bf16.mxu0 0
        %1737 = vmatpush1.bf16.msra.mxu0 0
        %1738 = vmatprep.subr.bf16.mxu0 0
        %1739 = vmatpush1.bf16.msra.mxu0 0
        %1740 = vmatprep.subr.bf16.mxu0 %v1716
        %1741 = vmatpush1.bf16.msra.mxu0 %v1715
        %1742 = vmatprep.subr.bf16.mxu0 0
        %1743 = vmatpush2.bf16.msra.mxu0 0
        %1744 = vmatprep.subr.bf16.mxu0 0
        %1745 = vmatpush2.bf16.msra.mxu0 0
        %1746 = vmatprep.subr.bf16.mxu0 0
        %1747 = vmatpush2.bf16.msra.mxu0 0
        %1748 = vmatprep.subr.bf16.mxu0 0
        %1749 = vmatpush2.bf16.msra.mxu0 0
        %1750 = vmatprep.subr.bf16.mxu0 0
        %1751 = vmatpush2.bf16.msra.mxu0 0
        %1752 = vmatprep.subr.bf16.mxu0 0
        %1753 = vmatpush2.bf16.msra.mxu0 0
        %1754 = vmatprep.subr.bf16.mxu0 0
        %1755 = vmatpush2.bf16.msra.mxu0 0
        %1756 = vmatprep.subr.bf16.mxu0 0
        %1757 = vmatpush2.bf16.msra.mxu0 0
        %1758 = vmatprep.mubr.bf16.mxu0 0
        %1759 = vmatmul.mubr.bf16.gmra.mxu0 %v1724
        %v1760 = vpop.f32.mrf.mxu0
        %v1761 = vadd.f32 0.0, %v1760
        %v1762 = vpop.f32.mrf.mxu0
        %v1763 = vadd.f32 0.0, %v1762
        %v1764 = vpop.f32.mrf.mxu0
        %v1765 = vadd.f32 0.0, %v1764
        %v1766 = vpop.f32.mrf.mxu0
        %v1767 = vadd.f32 0.0, %v1766
        %1768 = vdwg.mxu0
        %1769 = vmatprep.subr.bf16.mxu0 0
        %1770 = vmatpush1.bf16.msra.mxu0 0
        %1771 = vmatprep.subr.bf16.mxu0 0
        %1772 = vmatpush1.bf16.msra.mxu0 0
        %1773 = vmatprep.subr.bf16.mxu0 0
        %1774 = vmatpush1.bf16.msra.mxu0 0
        %1775 = vmatprep.subr.bf16.mxu0 0
        %1776 = vmatpush1.bf16.msra.mxu0 0
        %1777 = vmatprep.subr.bf16.mxu0 0
        %1778 = vmatpush1.bf16.msra.mxu0 0
        %1779 = vmatprep.subr.bf16.mxu0 0
        %1780 = vmatpush1.bf16.msra.mxu0 0
        %1781 = vmatprep.subr.bf16.mxu0 0
        %1782 = vmatpush1.bf16.msra.mxu0 0
        %1783 = vmatprep.subr.bf16.mxu0 %v1718
        %1784 = vmatpush1.bf16.msra.mxu0 %v1717
        %1785 = vmatprep.subr.bf16.mxu0 0
        %1786 = vmatpush2.bf16.msra.mxu0 0
        %1787 = vmatprep.subr.bf16.mxu0 0
        %1788 = vmatpush2.bf16.msra.mxu0 0
        %1789 = vmatprep.subr.bf16.mxu0 0
        %1790 = vmatpush2.bf16.msra.mxu0 0
        %1791 = vmatprep.subr.bf16.mxu0 0
        %1792 = vmatpush2.bf16.msra.mxu0 0
        %1793 = vmatprep.subr.bf16.mxu0 0
        %1794 = vmatpush2.bf16.msra.mxu0 0
        %1795 = vmatprep.subr.bf16.mxu0 0
        %1796 = vmatpush2.bf16.msra.mxu0 0
        %1797 = vmatprep.subr.bf16.mxu0 0
        %1798 = vmatpush2.bf16.msra.mxu0 0
        %1799 = vmatprep.subr.bf16.mxu0 0
        %1800 = vmatpush2.bf16.msra.mxu0 0
        %1801 = vmatprep.mubr.bf16.mxu0 0
        %1802 = vmatmul.mubr.bf16.gmra.mxu0 %v1724
        %v1803 = vpop.f32.mrf.mxu0
        %v1804 = vadd.f32 0.0, %v1803
        %v1805 = vpop.f32.mrf.mxu0
        %v1806 = vadd.f32 0.0, %v1805
        %v1807 = vpop.f32.mrf.mxu0
        %v1808 = vadd.f32 0.0, %v1807
        %v1809 = vpop.f32.mrf.mxu0
        %v1810 = vadd.f32 0.0, %v1809
        %1811 = vdwg.mxu0
        %v1812 = vadd.f32 %v1689, %v1761
        %v1813 = vadd.f32 %v1690, %v1763
        %v1814 = vadd.f32 %v1691, %v1804
        %v1815 = vadd.f32 %v1692, %v1806
        %v1816 = vadd.f32 %v1693, %v1765
        %v1817 = vadd.f32 %v1694, %v1767
        %v1818 = vadd.f32 %v1695, %v1808
        %v1819 = vadd.f32 %v1696, %v1810
        %s1820 = scalar_lea.vmem %s0, 96
        %v1821 = vld [vmem:[%s1820] sm:$0xf]
        %v1822 = vld [vmem:[%s1820 + $0x4] sm:$0xf]
        %v1825 = vunpack.c.l.b16 %v1821
        %v1826 = vunpack.c.l.b16 %v1822
        %v1827 = vpack.c.b16 %v1826, %v1825
        %1828 = vrot.lane.b32.xlu0 %v1454, 65
        %v1829 = vpop.permute.xlu0 %1828
        %1830 = vrot.lane.b32.xlu0 %v1455, 65
        %v1831 = vpop.permute.xlu0 %1830
        %1832 = vrot.lane.b32.xlu0 %v1456, 65
        %v1833 = vpop.permute.xlu0 %1832
        %1834 = vrot.lane.b32.xlu0 %v1457, 65
        %v1835 = vpop.permute.xlu0 %1834
        %1836 = vrot.lane.b32.xlu0 %v1458, 65
        %v1837 = vpop.permute.xlu0 %1836
        %v1838 = vsel %vm704, %v1829, %v1831
        %v1839 = vsel %vm704, %v1831, %v1833
        %v1840 = vsel %vm704, %v1833, %v1835
        %v1841 = vsel %vm704, %v1835, %v1837
        %v1847 = vsel %vm340, %v1827, 0
        %1849 = vmatprep.subr.bf16.mxu0 0
        %1850 = vmatpush1.bf16.msra.mxu0 0
        %1851 = vmatprep.subr.bf16.mxu0 0
        %1852 = vmatpush1.bf16.msra.mxu0 0
        %1853 = vmatprep.subr.bf16.mxu0 0
        %1854 = vmatpush1.bf16.msra.mxu0 0
        %1855 = vmatprep.subr.bf16.mxu0 0
        %1856 = vmatpush1.bf16.msra.mxu0 0
        %1857 = vmatprep.subr.bf16.mxu0 0
        %1858 = vmatpush1.bf16.msra.mxu0 0
        %1859 = vmatprep.subr.bf16.mxu0 0
        %1860 = vmatpush1.bf16.msra.mxu0 0
        %1861 = vmatprep.subr.bf16.mxu0 0
        %1862 = vmatpush1.bf16.msra.mxu0 0
        %1863 = vmatprep.subr.bf16.mxu0 %v1839
        %1864 = vmatpush1.bf16.msra.mxu0 %v1838
        %1865 = vmatprep.subr.bf16.mxu0 0
        %1866 = vmatpush2.bf16.msra.mxu0 0
        %1867 = vmatprep.subr.bf16.mxu0 0
        %1868 = vmatpush2.bf16.msra.mxu0 0
        %1869 = vmatprep.subr.bf16.mxu0 0
        %1870 = vmatpush2.bf16.msra.mxu0 0
        %1871 = vmatprep.subr.bf16.mxu0 0
        %1872 = vmatpush2.bf16.msra.mxu0 0
        %1873 = vmatprep.subr.bf16.mxu0 0
        %1874 = vmatpush2.bf16.msra.mxu0 0
        %1875 = vmatprep.subr.bf16.mxu0 0
        %1876 = vmatpush2.bf16.msra.mxu0 0
        %1877 = vmatprep.subr.bf16.mxu0 0
        %1878 = vmatpush2.bf16.msra.mxu0 0
        %1879 = vmatprep.subr.bf16.mxu0 0
        %1880 = vmatpush2.bf16.msra.mxu0 0
        %1881 = vmatprep.mubr.bf16.mxu0 0
        %1882 = vmatmul.mubr.bf16.gmra.mxu0 %v1847
        %v1883 = vpop.f32.mrf.mxu0
        %v1884 = vadd.f32 0.0, %v1883
        %v1885 = vpop.f32.mrf.mxu0
        %v1886 = vadd.f32 0.0, %v1885
        %v1887 = vpop.f32.mrf.mxu0
        %v1888 = vadd.f32 0.0, %v1887
        %v1889 = vpop.f32.mrf.mxu0
        %v1890 = vadd.f32 0.0, %v1889
        %1891 = vdwg.mxu0
        %1892 = vmatprep.subr.bf16.mxu0 0
        %1893 = vmatpush1.bf16.msra.mxu0 0
        %1894 = vmatprep.subr.bf16.mxu0 0
        %1895 = vmatpush1.bf16.msra.mxu0 0
        %1896 = vmatprep.subr.bf16.mxu0 0
        %1897 = vmatpush1.bf16.msra.mxu0 0
        %1898 = vmatprep.subr.bf16.mxu0 0
        %1899 = vmatpush1.bf16.msra.mxu0 0
        %1900 = vmatprep.subr.bf16.mxu0 0
        %1901 = vmatpush1.bf16.msra.mxu0 0
        %1902 = vmatprep.subr.bf16.mxu0 0
        %1903 = vmatpush1.bf16.msra.mxu0 0
        %1904 = vmatprep.subr.bf16.mxu0 0
        %1905 = vmatpush1.bf16.msra.mxu0 0
        %1906 = vmatprep.subr.bf16.mxu0 %v1841
        %1907 = vmatpush1.bf16.msra.mxu0 %v1840
        %1908 = vmatprep.subr.bf16.mxu0 0
        %1909 = vmatpush2.bf16.msra.mxu0 0
        %1910 = vmatprep.subr.bf16.mxu0 0
        %1911 = vmatpush2.bf16.msra.mxu0 0
        %1912 = vmatprep.subr.bf16.mxu0 0
        %1913 = vmatpush2.bf16.msra.mxu0 0
        %1914 = vmatprep.subr.bf16.mxu0 0
        %1915 = vmatpush2.bf16.msra.mxu0 0
        %1916 = vmatprep.subr.bf16.mxu0 0
        %1917 = vmatpush2.bf16.msra.mxu0 0
        %1918 = vmatprep.subr.bf16.mxu0 0
        %1919 = vmatpush2.bf16.msra.mxu0 0
        %1920 = vmatprep.subr.bf16.mxu0 0
        %1921 = vmatpush2.bf16.msra.mxu0 0
        %1922 = vmatprep.subr.bf16.mxu0 0
        %1923 = vmatpush2.bf16.msra.mxu0 0
        %1924 = vmatprep.mubr.bf16.mxu0 0
        %1925 = vmatmul.mubr.bf16.gmra.mxu0 %v1847
        %v1926 = vpop.f32.mrf.mxu0
        %v1927 = vadd.f32 0.0, %v1926
        %v1928 = vpop.f32.mrf.mxu0
        %v1929 = vadd.f32 0.0, %v1928
        %v1930 = vpop.f32.mrf.mxu0
        %v1931 = vadd.f32 0.0, %v1930
        %v1932 = vpop.f32.mrf.mxu0
        %v1933 = vadd.f32 0.0, %v1932
        %1934 = vdwg.mxu0
        %v1935 = vadd.f32 %v1812, %v1884
        %v1936 = vadd.f32 %v1813, %v1886
        %v1937 = vadd.f32 %v1814, %v1927
        %v1938 = vadd.f32 %v1815, %v1929
        %v1939 = vadd.f32 %v1816, %v1888
        %v1940 = vadd.f32 %v1817, %v1890
        %v1941 = vadd.f32 %v1818, %v1931
        %v1942 = vadd.f32 %v1819, %v1933
        %s1943 = scalar_lea.vmem %s0, 104
        %v1944 = vld [vmem:[%s1943] sm:$0xf]
        %v1945 = vld [vmem:[%s1943 + $0x4] sm:$0xf]
        %v1948 = vunpack.c.l.b16 %v1944
        %v1949 = vunpack.c.l.b16 %v1945
        %v1950 = vpack.c.b16 %v1949, %v1948
        %1951 = vrot.lane.b32.xlu0 %v1454, 64
        %v1952 = vpop.permute.xlu0 %1951
        %1953 = vrot.lane.b32.xlu0 %v1455, 64
        %v1954 = vpop.permute.xlu0 %1953
        %1955 = vrot.lane.b32.xlu0 %v1456, 64
        %v1956 = vpop.permute.xlu0 %1955
        %1957 = vrot.lane.b32.xlu0 %v1457, 64
        %v1958 = vpop.permute.xlu0 %1957
        %1959 = vrot.lane.b32.xlu0 %v1458, 64
        %v1960 = vpop.permute.xlu0 %1959
        %v1961 = vsel %vm828, %v1952, %v1954
        %v1962 = vsel %vm828, %v1954, %v1956
        %v1963 = vsel %vm828, %v1956, %v1958
        %v1964 = vsel %vm828, %v1958, %v1960
        %v1970 = vsel %vm340, %v1950, 0
        %1972 = vmatprep.subr.bf16.mxu0 0
        %1973 = vmatpush1.bf16.msra.mxu0 0
        %1974 = vmatprep.subr.bf16.mxu0 0
        %1975 = vmatpush1.bf16.msra.mxu0 0
        %1976 = vmatprep.subr.bf16.mxu0 0
        %1977 = vmatpush1.bf16.msra.mxu0 0
        %1978 = vmatprep.subr.bf16.mxu0 0
        %1979 = vmatpush1.bf16.msra.mxu0 0
        %1980 = vmatprep.subr.bf16.mxu0 0
        %1981 = vmatpush1.bf16.msra.mxu0 0
        %1982 = vmatprep.subr.bf16.mxu0 0
        %1983 = vmatpush1.bf16.msra.mxu0 0
        %1984 = vmatprep.subr.bf16.mxu0 0
        %1985 = vmatpush1.bf16.msra.mxu0 0
        %1986 = vmatprep.subr.bf16.mxu0 %v1962
        %1987 = vmatpush1.bf16.msra.mxu0 %v1961
        %1988 = vmatprep.subr.bf16.mxu0 0
        %1989 = vmatpush2.bf16.msra.mxu0 0
        %1990 = vmatprep.subr.bf16.mxu0 0
        %1991 = vmatpush2.bf16.msra.mxu0 0
        %1992 = vmatprep.subr.bf16.mxu0 0
        %1993 = vmatpush2.bf16.msra.mxu0 0
        %1994 = vmatprep.subr.bf16.mxu0 0
        %1995 = vmatpush2.bf16.msra.mxu0 0
        %1996 = vmatprep.subr.bf16.mxu0 0
        %1997 = vmatpush2.bf16.msra.mxu0 0
        %1998 = vmatprep.subr.bf16.mxu0 0
        %1999 = vmatpush2.bf16.msra.mxu0 0
        %2000 = vmatprep.subr.bf16.mxu0 0
        %2001 = vmatpush2.bf16.msra.mxu0 0
        %2002 = vmatprep.subr.bf16.mxu0 0
        %2003 = vmatpush2.bf16.msra.mxu0 0
        %2004 = vmatprep.mubr.bf16.mxu0 0
        %2005 = vmatmul.mubr.bf16.gmra.mxu0 %v1970
        %v2006 = vpop.f32.mrf.mxu0
        %v2007 = vadd.f32 0.0, %v2006
        %v2008 = vpop.f32.mrf.mxu0
        %v2009 = vadd.f32 0.0, %v2008
        %v2010 = vpop.f32.mrf.mxu0
        %v2011 = vadd.f32 0.0, %v2010
        %v2012 = vpop.f32.mrf.mxu0
        %v2013 = vadd.f32 0.0, %v2012
        %2014 = vdwg.mxu0
        %2015 = vmatprep.subr.bf16.mxu0 0
        %2016 = vmatpush1.bf16.msra.mxu0 0
        %2017 = vmatprep.subr.bf16.mxu0 0
        %2018 = vmatpush1.bf16.msra.mxu0 0
        %2019 = vmatprep.subr.bf16.mxu0 0
        %2020 = vmatpush1.bf16.msra.mxu0 0
        %2021 = vmatprep.subr.bf16.mxu0 0
        %2022 = vmatpush1.bf16.msra.mxu0 0
        %2023 = vmatprep.subr.bf16.mxu0 0
        %2024 = vmatpush1.bf16.msra.mxu0 0
        %2025 = vmatprep.subr.bf16.mxu0 0
        %2026 = vmatpush1.bf16.msra.mxu0 0
        %2027 = vmatprep.subr.bf16.mxu0 0
        %2028 = vmatpush1.bf16.msra.mxu0 0
        %2029 = vmatprep.subr.bf16.mxu0 %v1964
        %2030 = vmatpush1.bf16.msra.mxu0 %v1963
        %2031 = vmatprep.subr.bf16.mxu0 0
        %2032 = vmatpush2.bf16.msra.mxu0 0
        %2033 = vmatprep.subr.bf16.mxu0 0
        %2034 = vmatpush2.bf16.msra.mxu0 0
        %2035 = vmatprep.subr.bf16.mxu0 0
        %2036 = vmatpush2.bf16.msra.mxu0 0
        %2037 = vmatprep.subr.bf16.mxu0 0
        %2038 = vmatpush2.bf16.msra.mxu0 0
        %2039 = vmatprep.subr.bf16.mxu0 0
        %2040 = vmatpush2.bf16.msra.mxu0 0
        %2041 = vmatprep.subr.bf16.mxu0 0
        %2042 = vmatpush2.bf16.msra.mxu0 0
        %2043 = vmatprep.subr.bf16.mxu0 0
        %2044 = vmatpush2.bf16.msra.mxu0 0
        %2045 = vmatprep.subr.bf16.mxu0 0
        %2046 = vmatpush2.bf16.msra.mxu0 0
        %2047 = vmatprep.mubr.bf16.mxu0 0
        %2048 = vmatmul.mubr.bf16.gmra.mxu0 %v1970
        %v2049 = vpop.f32.mrf.mxu0
        %v2050 = vadd.f32 0.0, %v2049
        %v2051 = vpop.f32.mrf.mxu0
        %v2052 = vadd.f32 0.0, %v2051
        %v2053 = vpop.f32.mrf.mxu0
        %v2054 = vadd.f32 0.0, %v2053
        %v2055 = vpop.f32.mrf.mxu0
        %v2056 = vadd.f32 0.0, %v2055
        %2057 = vdwg.mxu0
        %v2058 = vadd.f32 %v1935, %v2007
        %v2059 = vadd.f32 %v1936, %v2009
        %v2060 = vadd.f32 %v1937, %v2050
        %v2061 = vadd.f32 %v1938, %v2052
        %v2062 = vadd.f32 %v1939, %v2011
        %v2063 = vadd.f32 %v1940, %v2013
        %v2064 = vadd.f32 %v1941, %v2054
        %v2065 = vadd.f32 %v1942, %v2056
        %s2066 = scalar_lea.vmem %s0, 112
        %v2067 = vld [vmem:[%s2066] sm:$0xf]
        %v2068 = vld [vmem:[%s2066 + $0x4] sm:$0xf]
        %v2071 = vunpack.c.l.b16 %v2067
        %v2072 = vunpack.c.l.b16 %v2068
        %v2073 = vpack.c.b16 %v2072, %v2071
        %2074 = vrot.lane.b32.xlu0 %v1454, 63
        %v2075 = vpop.permute.xlu0 %2074
        %2076 = vrot.lane.b32.xlu0 %v1455, 63
        %v2077 = vpop.permute.xlu0 %2076
        %2078 = vrot.lane.b32.xlu0 %v1456, 63
        %v2079 = vpop.permute.xlu0 %2078
        %2080 = vrot.lane.b32.xlu0 %v1457, 63
        %v2081 = vpop.permute.xlu0 %2080
        %2082 = vrot.lane.b32.xlu0 %v1458, 63
        %v2083 = vpop.permute.xlu0 %2082
        %v2084 = vsel %vm952, %v2075, %v2077
        %v2085 = vsel %vm952, %v2077, %v2079
        %v2086 = vsel %vm952, %v2079, %v2081
        %v2087 = vsel %vm952, %v2081, %v2083
        %v2093 = vsel %vm340, %v2073, 0
        %2095 = vmatprep.subr.bf16.mxu0 0
        %2096 = vmatpush1.bf16.msra.mxu0 0
        %2097 = vmatprep.subr.bf16.mxu0 0
        %2098 = vmatpush1.bf16.msra.mxu0 0
        %2099 = vmatprep.subr.bf16.mxu0 0
        %2100 = vmatpush1.bf16.msra.mxu0 0
        %2101 = vmatprep.subr.bf16.mxu0 0
        %2102 = vmatpush1.bf16.msra.mxu0 0
        %2103 = vmatprep.subr.bf16.mxu0 0
        %2104 = vmatpush1.bf16.msra.mxu0 0
        %2105 = vmatprep.subr.bf16.mxu0 0
        %2106 = vmatpush1.bf16.msra.mxu0 0
        %2107 = vmatprep.subr.bf16.mxu0 0
        %2108 = vmatpush1.bf16.msra.mxu0 0
        %2109 = vmatprep.subr.bf16.mxu0 %v2085
        %2110 = vmatpush1.bf16.msra.mxu0 %v2084
        %2111 = vmatprep.subr.bf16.mxu0 0
        %2112 = vmatpush2.bf16.msra.mxu0 0
        %2113 = vmatprep.subr.bf16.mxu0 0
        %2114 = vmatpush2.bf16.msra.mxu0 0
        %2115 = vmatprep.subr.bf16.mxu0 0
        %2116 = vmatpush2.bf16.msra.mxu0 0
        %2117 = vmatprep.subr.bf16.mxu0 0
        %2118 = vmatpush2.bf16.msra.mxu0 0
        %2119 = vmatprep.subr.bf16.mxu0 0
        %2120 = vmatpush2.bf16.msra.mxu0 0
        %2121 = vmatprep.subr.bf16.mxu0 0
        %2122 = vmatpush2.bf16.msra.mxu0 0
        %2123 = vmatprep.subr.bf16.mxu0 0
        %2124 = vmatpush2.bf16.msra.mxu0 0
        %2125 = vmatprep.subr.bf16.mxu0 0
        %2126 = vmatpush2.bf16.msra.mxu0 0
        %2127 = vmatprep.mubr.bf16.mxu0 0
        %2128 = vmatmul.mubr.bf16.gmra.mxu0 %v2093
        %v2129 = vpop.f32.mrf.mxu0
        %v2130 = vadd.f32 0.0, %v2129
        %v2131 = vpop.f32.mrf.mxu0
        %v2132 = vadd.f32 0.0, %v2131
        %v2133 = vpop.f32.mrf.mxu0
        %v2134 = vadd.f32 0.0, %v2133
        %v2135 = vpop.f32.mrf.mxu0
        %v2136 = vadd.f32 0.0, %v2135
        %2137 = vdwg.mxu0
        %2138 = vmatprep.subr.bf16.mxu0 0
        %2139 = vmatpush1.bf16.msra.mxu0 0
        %2140 = vmatprep.subr.bf16.mxu0 0
        %2141 = vmatpush1.bf16.msra.mxu0 0
        %2142 = vmatprep.subr.bf16.mxu0 0
        %2143 = vmatpush1.bf16.msra.mxu0 0
        %2144 = vmatprep.subr.bf16.mxu0 0
        %2145 = vmatpush1.bf16.msra.mxu0 0
        %2146 = vmatprep.subr.bf16.mxu0 0
        %2147 = vmatpush1.bf16.msra.mxu0 0
        %2148 = vmatprep.subr.bf16.mxu0 0
        %2149 = vmatpush1.bf16.msra.mxu0 0
        %2150 = vmatprep.subr.bf16.mxu0 0
        %2151 = vmatpush1.bf16.msra.mxu0 0
        %2152 = vmatprep.subr.bf16.mxu0 %v2087
        %2153 = vmatpush1.bf16.msra.mxu0 %v2086
        %2154 = vmatprep.subr.bf16.mxu0 0
        %2155 = vmatpush2.bf16.msra.mxu0 0
        %2156 = vmatprep.subr.bf16.mxu0 0
        %2157 = vmatpush2.bf16.msra.mxu0 0
        %2158 = vmatprep.subr.bf16.mxu0 0
        %2159 = vmatpush2.bf16.msra.mxu0 0
        %2160 = vmatprep.subr.bf16.mxu0 0
        %2161 = vmatpush2.bf16.msra.mxu0 0
        %2162 = vmatprep.subr.bf16.mxu0 0
        %2163 = vmatpush2.bf16.msra.mxu0 0
        %2164 = vmatprep.subr.bf16.mxu0 0
        %2165 = vmatpush2.bf16.msra.mxu0 0
        %2166 = vmatprep.subr.bf16.mxu0 0
        %2167 = vmatpush2.bf16.msra.mxu0 0
        %2168 = vmatprep.subr.bf16.mxu0 0
        %2169 = vmatpush2.bf16.msra.mxu0 0
        %2170 = vmatprep.mubr.bf16.mxu0 0
        %2171 = vmatmul.mubr.bf16.gmra.mxu0 %v2093
        %v2172 = vpop.f32.mrf.mxu0
        %v2173 = vadd.f32 0.0, %v2172
        %v2174 = vpop.f32.mrf.mxu0
        %v2175 = vadd.f32 0.0, %v2174
        %v2176 = vpop.f32.mrf.mxu0
        %v2177 = vadd.f32 0.0, %v2176
        %v2178 = vpop.f32.mrf.mxu0
        %v2179 = vadd.f32 0.0, %v2178
        %2180 = vdwg.mxu0
        %v2181 = vadd.f32 %v2058, %v2130
        %v2182 = vadd.f32 %v2059, %v2132
        %v2183 = vadd.f32 %v2060, %v2173
        %v2184 = vadd.f32 %v2061, %v2175
        %v2185 = vadd.f32 %v2062, %v2134
        %v2186 = vadd.f32 %v2063, %v2136
        %v2187 = vadd.f32 %v2064, %v2177
        %v2188 = vadd.f32 %v2065, %v2179
        %s2189 = scalar_lea.vmem %s0, 120
        %v2190 = vld [vmem:[%s2189] sm:$0xf]
        %v2191 = vld [vmem:[%s2189 + $0x4] sm:$0xf]
        %v2194 = vunpack.c.l.b16 %v2190
        %v2195 = vunpack.c.l.b16 %v2191
        %v2196 = vpack.c.b16 %v2195, %v2194
        %2197 = vrot.lane.b32.xlu0 %v1454, 33
        %v2198 = vpop.permute.xlu0 %2197
        %2199 = vrot.lane.b32.xlu0 %v1455, 33
        %v2200 = vpop.permute.xlu0 %2199
        %2201 = vrot.lane.b32.xlu0 %v1456, 33
        %v2202 = vpop.permute.xlu0 %2201
        %2203 = vrot.lane.b32.xlu0 %v1457, 33
        %v2204 = vpop.permute.xlu0 %2203
        %2205 = vrot.lane.b32.xlu0 %v1458, 33
        %v2206 = vpop.permute.xlu0 %2205
        %v2207 = vsel %vm1076, %v2198, %v2200
        %v2208 = vsel %vm1076, %v2200, %v2202
        %v2209 = vsel %vm1076, %v2202, %v2204
        %v2210 = vsel %vm1076, %v2204, %v2206
        %v2216 = vsel %vm340, %v2196, 0
        %2218 = vmatprep.subr.bf16.mxu0 0
        %2219 = vmatpush1.bf16.msra.mxu0 0
        %2220 = vmatprep.subr.bf16.mxu0 0
        %2221 = vmatpush1.bf16.msra.mxu0 0
        %2222 = vmatprep.subr.bf16.mxu0 0
        %2223 = vmatpush1.bf16.msra.mxu0 0
        %2224 = vmatprep.subr.bf16.mxu0 0
        %2225 = vmatpush1.bf16.msra.mxu0 0
        %2226 = vmatprep.subr.bf16.mxu0 0
        %2227 = vmatpush1.bf16.msra.mxu0 0
        %2228 = vmatprep.subr.bf16.mxu0 0
        %2229 = vmatpush1.bf16.msra.mxu0 0
        %2230 = vmatprep.subr.bf16.mxu0 0
        %2231 = vmatpush1.bf16.msra.mxu0 0
        %2232 = vmatprep.subr.bf16.mxu0 %v2208
        %2233 = vmatpush1.bf16.msra.mxu0 %v2207
        %2234 = vmatprep.subr.bf16.mxu0 0
        %2235 = vmatpush2.bf16.msra.mxu0 0
        %2236 = vmatprep.subr.bf16.mxu0 0
        %2237 = vmatpush2.bf16.msra.mxu0 0
        %2238 = vmatprep.subr.bf16.mxu0 0
        %2239 = vmatpush2.bf16.msra.mxu0 0
        %2240 = vmatprep.subr.bf16.mxu0 0
        %2241 = vmatpush2.bf16.msra.mxu0 0
        %2242 = vmatprep.subr.bf16.mxu0 0
        %2243 = vmatpush2.bf16.msra.mxu0 0
        %2244 = vmatprep.subr.bf16.mxu0 0
        %2245 = vmatpush2.bf16.msra.mxu0 0
        %2246 = vmatprep.subr.bf16.mxu0 0
        %2247 = vmatpush2.bf16.msra.mxu0 0
        %2248 = vmatprep.subr.bf16.mxu0 0
        %2249 = vmatpush2.bf16.msra.mxu0 0
        %2250 = vmatprep.mubr.bf16.mxu0 0
        %2251 = vmatmul.mubr.bf16.gmra.mxu0 %v2216
        %v2252 = vpop.f32.mrf.mxu0
        %v2253 = vadd.f32 0.0, %v2252
        %v2254 = vpop.f32.mrf.mxu0
        %v2255 = vadd.f32 0.0, %v2254
        %v2256 = vpop.f32.mrf.mxu0
        %v2257 = vadd.f32 0.0, %v2256
        %v2258 = vpop.f32.mrf.mxu0
        %v2259 = vadd.f32 0.0, %v2258
        %2260 = vdwg.mxu0
        %2261 = vmatprep.subr.bf16.mxu0 0
        %2262 = vmatpush1.bf16.msra.mxu0 0
        %2263 = vmatprep.subr.bf16.mxu0 0
        %2264 = vmatpush1.bf16.msra.mxu0 0
        %2265 = vmatprep.subr.bf16.mxu0 0
        %2266 = vmatpush1.bf16.msra.mxu0 0
        %2267 = vmatprep.subr.bf16.mxu0 0
        %2268 = vmatpush1.bf16.msra.mxu0 0
        %2269 = vmatprep.subr.bf16.mxu0 0
        %2270 = vmatpush1.bf16.msra.mxu0 0
        %2271 = vmatprep.subr.bf16.mxu0 0
        %2272 = vmatpush1.bf16.msra.mxu0 0
        %2273 = vmatprep.subr.bf16.mxu0 0
        %2274 = vmatpush1.bf16.msra.mxu0 0
        %2275 = vmatprep.subr.bf16.mxu0 %v2210
        %2276 = vmatpush1.bf16.msra.mxu0 %v2209
        %2277 = vmatprep.subr.bf16.mxu0 0
        %2278 = vmatpush2.bf16.msra.mxu0 0
        %2279 = vmatprep.subr.bf16.mxu0 0
        %2280 = vmatpush2.bf16.msra.mxu0 0
        %2281 = vmatprep.subr.bf16.mxu0 0
        %2282 = vmatpush2.bf16.msra.mxu0 0
        %2283 = vmatprep.subr.bf16.mxu0 0
        %2284 = vmatpush2.bf16.msra.mxu0 0
        %2285 = vmatprep.subr.bf16.mxu0 0
        %2286 = vmatpush2.bf16.msra.mxu0 0
        %2287 = vmatprep.subr.bf16.mxu0 0
        %2288 = vmatpush2.bf16.msra.mxu0 0
        %2289 = vmatprep.subr.bf16.mxu0 0
        %2290 = vmatpush2.bf16.msra.mxu0 0
        %2291 = vmatprep.subr.bf16.mxu0 0
        %2292 = vmatpush2.bf16.msra.mxu0 0
        %2293 = vmatprep.mubr.bf16.mxu0 0
        %2294 = vmatmul.mubr.bf16.gmra.mxu0 %v2216
        %v2295 = vpop.f32.mrf.mxu0
        %v2296 = vadd.f32 0.0, %v2295
        %v2297 = vpop.f32.mrf.mxu0
        %v2298 = vadd.f32 0.0, %v2297
        %v2299 = vpop.f32.mrf.mxu0
        %v2300 = vadd.f32 0.0, %v2299
        %v2301 = vpop.f32.mrf.mxu0
        %v2302 = vadd.f32 0.0, %v2301
        %2303 = vdwg.mxu0
        %v2304 = vadd.f32 %v2181, %v2253
        %v2305 = vadd.f32 %v2182, %v2255
        %v2306 = vadd.f32 %v2183, %v2296
        %v2307 = vadd.f32 %v2184, %v2298
        %v2308 = vadd.f32 %v2185, %v2257
        %v2309 = vadd.f32 %v2186, %v2259
        %v2310 = vadd.f32 %v2187, %v2300
        %v2311 = vadd.f32 %v2188, %v2302
        %s2312 = scalar_lea.vmem %s0, 128
        %v2313 = vld [vmem:[%s2312] sm:$0xf]
        %v2314 = vld [vmem:[%s2312 + $0x4] sm:$0xf]
        %v2317 = vunpack.c.l.b16 %v2313
        %v2318 = vunpack.c.l.b16 %v2314
        %v2319 = vpack.c.b16 %v2318, %v2317
        %2320 = vrot.lane.b32.xlu0 %v1454, 32
        %v2321 = vpop.permute.xlu0 %2320
        %2322 = vrot.lane.b32.xlu0 %v1455, 32
        %v2323 = vpop.permute.xlu0 %2322
        %2324 = vrot.lane.b32.xlu0 %v1456, 32
        %v2325 = vpop.permute.xlu0 %2324
        %2326 = vrot.lane.b32.xlu0 %v1457, 32
        %v2327 = vpop.permute.xlu0 %2326
        %2328 = vrot.lane.b32.xlu0 %v1458, 32
        %v2329 = vpop.permute.xlu0 %2328
        %v2330 = vsel %vm1200, %v2321, %v2323
        %v2331 = vsel %vm1200, %v2323, %v2325
        %v2332 = vsel %vm1200, %v2325, %v2327
        %v2333 = vsel %vm1200, %v2327, %v2329
        %v2339 = vsel %vm340, %v2319, 0
        %2341 = vmatprep.subr.bf16.mxu0 0
        %2342 = vmatpush1.bf16.msra.mxu0 0
        %2343 = vmatprep.subr.bf16.mxu0 0
        %2344 = vmatpush1.bf16.msra.mxu0 0
        %2345 = vmatprep.subr.bf16.mxu0 0
        %2346 = vmatpush1.bf16.msra.mxu0 0
        %2347 = vmatprep.subr.bf16.mxu0 0
        %2348 = vmatpush1.bf16.msra.mxu0 0
        %2349 = vmatprep.subr.bf16.mxu0 0
        %2350 = vmatpush1.bf16.msra.mxu0 0
        %2351 = vmatprep.subr.bf16.mxu0 0
        %2352 = vmatpush1.bf16.msra.mxu0 0
        %2353 = vmatprep.subr.bf16.mxu0 0
        %2354 = vmatpush1.bf16.msra.mxu0 0
        %2355 = vmatprep.subr.bf16.mxu0 %v2331
        %2356 = vmatpush1.bf16.msra.mxu0 %v2330
        %2357 = vmatprep.subr.bf16.mxu0 0
        %2358 = vmatpush2.bf16.msra.mxu0 0
        %2359 = vmatprep.subr.bf16.mxu0 0
        %2360 = vmatpush2.bf16.msra.mxu0 0
        %2361 = vmatprep.subr.bf16.mxu0 0
        %2362 = vmatpush2.bf16.msra.mxu0 0
        %2363 = vmatprep.subr.bf16.mxu0 0
        %2364 = vmatpush2.bf16.msra.mxu0 0
        %2365 = vmatprep.subr.bf16.mxu0 0
        %2366 = vmatpush2.bf16.msra.mxu0 0
        %2367 = vmatprep.subr.bf16.mxu0 0
        %2368 = vmatpush2.bf16.msra.mxu0 0
        %2369 = vmatprep.subr.bf16.mxu0 0
        %2370 = vmatpush2.bf16.msra.mxu0 0
        %2371 = vmatprep.subr.bf16.mxu0 0
        %2372 = vmatpush2.bf16.msra.mxu0 0
        %2373 = vmatprep.mubr.bf16.mxu0 0
        %2374 = vmatmul.mubr.bf16.gmra.mxu0 %v2339
        %v2375 = vpop.f32.mrf.mxu0
        %v2376 = vadd.f32 0.0, %v2375
        %v2377 = vpop.f32.mrf.mxu0
        %v2378 = vadd.f32 0.0, %v2377
        %v2379 = vpop.f32.mrf.mxu0
        %v2380 = vadd.f32 0.0, %v2379
        %v2381 = vpop.f32.mrf.mxu0
        %v2382 = vadd.f32 0.0, %v2381
        %2383 = vdwg.mxu0
        %2384 = vmatprep.subr.bf16.mxu0 0
        %2385 = vmatpush1.bf16.msra.mxu0 0
        %2386 = vmatprep.subr.bf16.mxu0 0
        %2387 = vmatpush1.bf16.msra.mxu0 0
        %2388 = vmatprep.subr.bf16.mxu0 0
        %2389 = vmatpush1.bf16.msra.mxu0 0
        %2390 = vmatprep.subr.bf16.mxu0 0
        %2391 = vmatpush1.bf16.msra.mxu0 0
        %2392 = vmatprep.subr.bf16.mxu0 0
        %2393 = vmatpush1.bf16.msra.mxu0 0
        %2394 = vmatprep.subr.bf16.mxu0 0
        %2395 = vmatpush1.bf16.msra.mxu0 0
        %2396 = vmatprep.subr.bf16.mxu0 0
        %2397 = vmatpush1.bf16.msra.mxu0 0
        %2398 = vmatprep.subr.bf16.mxu0 %v2333
        %2399 = vmatpush1.bf16.msra.mxu0 %v2332
        %2400 = vmatprep.subr.bf16.mxu0 0
        %2401 = vmatpush2.bf16.msra.mxu0 0
        %2402 = vmatprep.subr.bf16.mxu0 0
        %2403 = vmatpush2.bf16.msra.mxu0 0
        %2404 = vmatprep.subr.bf16.mxu0 0
        %2405 = vmatpush2.bf16.msra.mxu0 0
        %2406 = vmatprep.subr.bf16.mxu0 0
        %2407 = vmatpush2.bf16.msra.mxu0 0
        %2408 = vmatprep.subr.bf16.mxu0 0
        %2409 = vmatpush2.bf16.msra.mxu0 0
        %2410 = vmatprep.subr.bf16.mxu0 0
        %2411 = vmatpush2.bf16.msra.mxu0 0
        %2412 = vmatprep.subr.bf16.mxu0 0
        %2413 = vmatpush2.bf16.msra.mxu0 0
        %2414 = vmatprep.subr.bf16.mxu0 0
        %2415 = vmatpush2.bf16.msra.mxu0 0
        %2416 = vmatprep.mubr.bf16.mxu0 0
        %2417 = vmatmul.mubr.bf16.gmra.mxu0 %v2339
        %v2418 = vpop.f32.mrf.mxu0
        %v2419 = vadd.f32 0.0, %v2418
        %v2420 = vpop.f32.mrf.mxu0
        %v2421 = vadd.f32 0.0, %v2420
        %v2422 = vpop.f32.mrf.mxu0
        %v2423 = vadd.f32 0.0, %v2422
        %v2424 = vpop.f32.mrf.mxu0
        %v2425 = vadd.f32 0.0, %v2424
        %2426 = vdwg.mxu0
        %v2427 = vadd.f32 %v2304, %v2376
        %v2428 = vadd.f32 %v2305, %v2378
        %v2429 = vadd.f32 %v2306, %v2419
        %v2430 = vadd.f32 %v2307, %v2421
        %v2431 = vadd.f32 %v2308, %v2380
        %v2432 = vadd.f32 %v2309, %v2382
        %v2433 = vadd.f32 %v2310, %v2423
        %v2434 = vadd.f32 %v2311, %v2425
        %s2435 = scalar_lea.vmem %s0, 136
        %v2436 = vld [vmem:[%s2435] sm:$0xf]
        %v2437 = vld [vmem:[%s2435 + $0x4] sm:$0xf]
        %v2440 = vunpack.c.l.b16 %v2436
        %v2441 = vunpack.c.l.b16 %v2437
        %v2442 = vpack.c.b16 %v2441, %v2440
        %2443 = vrot.lane.b32.xlu0 %v1454, 31
        %v2444 = vpop.permute.xlu0 %2443
        %2445 = vrot.lane.b32.xlu0 %v1455, 31
        %v2446 = vpop.permute.xlu0 %2445
        %2447 = vrot.lane.b32.xlu0 %v1456, 31
        %v2448 = vpop.permute.xlu0 %2447
        %2449 = vrot.lane.b32.xlu0 %v1457, 31
        %v2450 = vpop.permute.xlu0 %2449
        %2451 = vrot.lane.b32.xlu0 %v1458, 31
        %v2452 = vpop.permute.xlu0 %2451
        %v2453 = vsel %vm1324, %v2444, %v2446
        %v2454 = vsel %vm1324, %v2446, %v2448
        %v2455 = vsel %vm1324, %v2448, %v2450
        %v2456 = vsel %vm1324, %v2450, %v2452
        %v2462 = vsel %vm340, %v2442, 0
        %2464 = vmatprep.subr.bf16.mxu0 0
        %2465 = vmatpush1.bf16.msra.mxu0 0
        %2466 = vmatprep.subr.bf16.mxu0 0
        %2467 = vmatpush1.bf16.msra.mxu0 0
        %2468 = vmatprep.subr.bf16.mxu0 0
        %2469 = vmatpush1.bf16.msra.mxu0 0
        %2470 = vmatprep.subr.bf16.mxu0 0
        %2471 = vmatpush1.bf16.msra.mxu0 0
        %2472 = vmatprep.subr.bf16.mxu0 0
        %2473 = vmatpush1.bf16.msra.mxu0 0
        %2474 = vmatprep.subr.bf16.mxu0 0
        %2475 = vmatpush1.bf16.msra.mxu0 0
        %2476 = vmatprep.subr.bf16.mxu0 0
        %2477 = vmatpush1.bf16.msra.mxu0 0
        %2478 = vmatprep.subr.bf16.mxu0 %v2454
        %2479 = vmatpush1.bf16.msra.mxu0 %v2453
        %2480 = vmatprep.subr.bf16.mxu0 0
        %2481 = vmatpush2.bf16.msra.mxu0 0
        %2482 = vmatprep.subr.bf16.mxu0 0
        %2483 = vmatpush2.bf16.msra.mxu0 0
        %2484 = vmatprep.subr.bf16.mxu0 0
        %2485 = vmatpush2.bf16.msra.mxu0 0
        %2486 = vmatprep.subr.bf16.mxu0 0
        %2487 = vmatpush2.bf16.msra.mxu0 0
        %2488 = vmatprep.subr.bf16.mxu0 0
        %2489 = vmatpush2.bf16.msra.mxu0 0
        %2490 = vmatprep.subr.bf16.mxu0 0
        %2491 = vmatpush2.bf16.msra.mxu0 0
        %2492 = vmatprep.subr.bf16.mxu0 0
        %2493 = vmatpush2.bf16.msra.mxu0 0
        %2494 = vmatprep.subr.bf16.mxu0 0
        %2495 = vmatpush2.bf16.msra.mxu0 0
        %2496 = vmatprep.mubr.bf16.mxu0 0
        %2497 = vmatmul.mubr.bf16.gmra.mxu0 %v2462
        %v2498 = vpop.f32.mrf.mxu0
        %v2499 = vadd.f32 0.0, %v2498
        %v2500 = vpop.f32.mrf.mxu0
        %v2501 = vadd.f32 0.0, %v2500
        %v2502 = vpop.f32.mrf.mxu0
        %v2503 = vadd.f32 0.0, %v2502
        %v2504 = vpop.f32.mrf.mxu0
        %v2505 = vadd.f32 0.0, %v2504
        %2506 = vdwg.mxu0
        %2507 = vmatprep.subr.bf16.mxu0 0
        %2508 = vmatpush1.bf16.msra.mxu0 0
        %2509 = vmatprep.subr.bf16.mxu0 0
        %2510 = vmatpush1.bf16.msra.mxu0 0
        %2511 = vmatprep.subr.bf16.mxu0 0
        %2512 = vmatpush1.bf16.msra.mxu0 0
        %2513 = vmatprep.subr.bf16.mxu0 0
        %2514 = vmatpush1.bf16.msra.mxu0 0
        %2515 = vmatprep.subr.bf16.mxu0 0
        %2516 = vmatpush1.bf16.msra.mxu0 0
        %2517 = vmatprep.subr.bf16.mxu0 0
        %2518 = vmatpush1.bf16.msra.mxu0 0
        %2519 = vmatprep.subr.bf16.mxu0 0
        %2520 = vmatpush1.bf16.msra.mxu0 0
        %2521 = vmatprep.subr.bf16.mxu0 %v2456
        %2522 = vmatpush1.bf16.msra.mxu0 %v2455
        %2523 = vmatprep.subr.bf16.mxu0 0
        %2524 = vmatpush2.bf16.msra.mxu0 0
        %2525 = vmatprep.subr.bf16.mxu0 0
        %2526 = vmatpush2.bf16.msra.mxu0 0
        %2527 = vmatprep.subr.bf16.mxu0 0
        %2528 = vmatpush2.bf16.msra.mxu0 0
        %2529 = vmatprep.subr.bf16.mxu0 0
        %2530 = vmatpush2.bf16.msra.mxu0 0
        %2531 = vmatprep.subr.bf16.mxu0 0
        %2532 = vmatpush2.bf16.msra.mxu0 0
        %2533 = vmatprep.subr.bf16.mxu0 0
        %2534 = vmatpush2.bf16.msra.mxu0 0
        %2535 = vmatprep.subr.bf16.mxu0 0
        %2536 = vmatpush2.bf16.msra.mxu0 0
        %2537 = vmatprep.subr.bf16.mxu0 0
        %2538 = vmatpush2.bf16.msra.mxu0 0
        %2539 = vmatprep.mubr.bf16.mxu0 0
        %2540 = vmatmul.mubr.bf16.gmra.mxu0 %v2462
        %v2541 = vpop.f32.mrf.mxu0
        %v2542 = vadd.f32 0.0, %v2541
        %v2543 = vpop.f32.mrf.mxu0
        %v2544 = vadd.f32 0.0, %v2543
        %v2545 = vpop.f32.mrf.mxu0
        %v2546 = vadd.f32 0.0, %v2545
        %v2547 = vpop.f32.mrf.mxu0
        %v2548 = vadd.f32 0.0, %v2547
        %2549 = vdwg.mxu0
        %v2550 = vadd.f32 %v2427, %v2499
        %v2551 = vadd.f32 %v2428, %v2501
        %v2552 = vadd.f32 %v2429, %v2542
        %v2553 = vadd.f32 %v2430, %v2544
        %v2554 = vadd.f32 %v2431, %v2503
        %v2555 = vadd.f32 %v2432, %v2505
        %v2556 = vadd.f32 %v2433, %v2546
        %v2557 = vadd.f32 %v2434, %v2548
        %s2558 = scalar_lea.vmem %s0, 144
        %v2559 = vld [vmem:[%s2558] sm:$0xf]
        %v2560 = vld [vmem:[%s2558 + $0x4] sm:$0xf]
        %v2563 = vunpack.c.l.b16 %v2559
        %v2564 = vunpack.c.l.b16 %v2560
        %v2565 = vpack.c.b16 %v2564, %v2563
        %v2572 = vunpack.c.l.b16 %v287
        %v2573 = vunpack.c.h.b16 %v287
        %v2574 = vunpack.c.l.b16 %v288
        %v2575 = vunpack.c.h.b16 %v288
        %v2576 = vunpack.c.l.b16 %v289
        %v2577 = vunpack.c.l.b16 %v290
        %v2578 = vunpack.c.h.b16 %v290
        %v2579 = vunpack.c.l.b16 %v291
        %v2580 = vunpack.c.h.b16 %v291
        %v2581 = vunpack.c.l.b16 %v292
        %v2582 = vpack.c.b16 %v2577, %v2572
        %v2583 = vpack.c.b16 %v2578, %v2573
        %v2584 = vpack.c.b16 %v2579, %v2574
        %v2585 = vpack.c.b16 %v2580, %v2575
        %v2586 = vpack.c.b16 %v2581, %v2576
        %2587 = vrot.lane.b32.xlu0 %v2582, 97
        %v2588 = vpop.permute.xlu0 %2587
        %2589 = vrot.lane.b32.xlu0 %v2583, 97
        %v2590 = vpop.permute.xlu0 %2589
        %2591 = vrot.lane.b32.xlu0 %v2584, 97
        %v2592 = vpop.permute.xlu0 %2591
        %2593 = vrot.lane.b32.xlu0 %v2585, 97
        %v2594 = vpop.permute.xlu0 %2593
        %2595 = vrot.lane.b32.xlu0 %v2586, 97
        %v2596 = vpop.permute.xlu0 %2595
        %v2597 = vsel %vm331, %v2588, %v2590
        %v2598 = vsel %vm331, %v2590, %v2592
        %v2599 = vsel %vm331, %v2592, %v2594
        %v2600 = vsel %vm331, %v2594, %v2596
        %v2606 = vsel %vm340, %v2565, 0
        %2608 = vmatprep.subr.bf16.mxu0 0
        %2609 = vmatpush1.bf16.msra.mxu0 0
        %2610 = vmatprep.subr.bf16.mxu0 0
        %2611 = vmatpush1.bf16.msra.mxu0 0
        %2612 = vmatprep.subr.bf16.mxu0 0
        %2613 = vmatpush1.bf16.msra.mxu0 0
        %2614 = vmatprep.subr.bf16.mxu0 0
        %2615 = vmatpush1.bf16.msra.mxu0 0
        %2616 = vmatprep.subr.bf16.mxu0 0
        %2617 = vmatpush1.bf16.msra.mxu0 0
        %2618 = vmatprep.subr.bf16.mxu0 0
        %2619 = vmatpush1.bf16.msra.mxu0 0
        %2620 = vmatprep.subr.bf16.mxu0 0
        %2621 = vmatpush1.bf16.msra.mxu0 0
        %2622 = vmatprep.subr.bf16.mxu0 %v2598
        %2623 = vmatpush1.bf16.msra.mxu0 %v2597
        %2624 = vmatprep.subr.bf16.mxu0 0
        %2625 = vmatpush2.bf16.msra.mxu0 0
        %2626 = vmatprep.subr.bf16.mxu0 0
        %2627 = vmatpush2.bf16.msra.mxu0 0
        %2628 = vmatprep.subr.bf16.mxu0 0
        %2629 = vmatpush2.bf16.msra.mxu0 0
        %2630 = vmatprep.subr.bf16.mxu0 0
        %2631 = vmatpush2.bf16.msra.mxu0 0
        %2632 = vmatprep.subr.bf16.mxu0 0
        %2633 = vmatpush2.bf16.msra.mxu0 0
        %2634 = vmatprep.subr.bf16.mxu0 0
        %2635 = vmatpush2.bf16.msra.mxu0 0
        %2636 = vmatprep.subr.bf16.mxu0 0
        %2637 = vmatpush2.bf16.msra.mxu0 0
        %2638 = vmatprep.subr.bf16.mxu0 0
        %2639 = vmatpush2.bf16.msra.mxu0 0
        %2640 = vmatprep.mubr.bf16.mxu0 0
        %2641 = vmatmul.mubr.bf16.gmra.mxu0 %v2606
        %v2642 = vpop.f32.mrf.mxu0
        %v2643 = vadd.f32 0.0, %v2642
        %v2644 = vpop.f32.mrf.mxu0
        %v2645 = vadd.f32 0.0, %v2644
        %v2646 = vpop.f32.mrf.mxu0
        %v2647 = vadd.f32 0.0, %v2646
        %v2648 = vpop.f32.mrf.mxu0
        %v2649 = vadd.f32 0.0, %v2648
        %2650 = vdwg.mxu0
        %2651 = vmatprep.subr.bf16.mxu0 0
        %2652 = vmatpush1.bf16.msra.mxu0 0
        %2653 = vmatprep.subr.bf16.mxu0 0
        %2654 = vmatpush1.bf16.msra.mxu0 0
        %2655 = vmatprep.subr.bf16.mxu0 0
        %2656 = vmatpush1.bf16.msra.mxu0 0
        %2657 = vmatprep.subr.bf16.mxu0 0
        %2658 = vmatpush1.bf16.msra.mxu0 0
        %2659 = vmatprep.subr.bf16.mxu0 0
        %2660 = vmatpush1.bf16.msra.mxu0 0
        %2661 = vmatprep.subr.bf16.mxu0 0
        %2662 = vmatpush1.bf16.msra.mxu0 0
        %2663 = vmatprep.subr.bf16.mxu0 0
        %2664 = vmatpush1.bf16.msra.mxu0 0
        %2665 = vmatprep.subr.bf16.mxu0 %v2600
        %2666 = vmatpush1.bf16.msra.mxu0 %v2599
        %2667 = vmatprep.subr.bf16.mxu0 0
        %2668 = vmatpush2.bf16.msra.mxu0 0
        %2669 = vmatprep.subr.bf16.mxu0 0
        %2670 = vmatpush2.bf16.msra.mxu0 0
        %2671 = vmatprep.subr.bf16.mxu0 0
        %2672 = vmatpush2.bf16.msra.mxu0 0
        %2673 = vmatprep.subr.bf16.mxu0 0
        %2674 = vmatpush2.bf16.msra.mxu0 0
        %2675 = vmatprep.subr.bf16.mxu0 0
        %2676 = vmatpush2.bf16.msra.mxu0 0
        %2677 = vmatprep.subr.bf16.mxu0 0
        %2678 = vmatpush2.bf16.msra.mxu0 0
        %2679 = vmatprep.subr.bf16.mxu0 0
        %2680 = vmatpush2.bf16.msra.mxu0 0
        %2681 = vmatprep.subr.bf16.mxu0 0
        %2682 = vmatpush2.bf16.msra.mxu0 0
        %2683 = vmatprep.mubr.bf16.mxu0 0
        %2684 = vmatmul.mubr.bf16.gmra.mxu0 %v2606
        %v2685 = vpop.f32.mrf.mxu0
        %v2686 = vadd.f32 0.0, %v2685
        %v2687 = vpop.f32.mrf.mxu0
        %v2688 = vadd.f32 0.0, %v2687
        %v2689 = vpop.f32.mrf.mxu0
        %v2690 = vadd.f32 0.0, %v2689
        %v2691 = vpop.f32.mrf.mxu0
        %v2692 = vadd.f32 0.0, %v2691
        %2693 = vdwg.mxu0
        %v2694 = vadd.f32 %v2550, %v2643
        %v2695 = vadd.f32 %v2551, %v2645
        %v2696 = vadd.f32 %v2552, %v2686
        %v2697 = vadd.f32 %v2553, %v2688
        %v2698 = vadd.f32 %v2554, %v2647
        %v2699 = vadd.f32 %v2555, %v2649
        %v2700 = vadd.f32 %v2556, %v2690
        %v2701 = vadd.f32 %v2557, %v2692
        %s2702 = scalar_lea.vmem %s0, 152
        %v2703 = vld [vmem:[%s2702] sm:$0xf]
        %v2704 = vld [vmem:[%s2702 + $0x4] sm:$0xf]
        %v2707 = vunpack.c.l.b16 %v2703
        %v2708 = vunpack.c.l.b16 %v2704
        %v2709 = vpack.c.b16 %v2708, %v2707
        %2710 = vrot.lane.b32.xlu0 %v2582, 96
        %v2711 = vpop.permute.xlu0 %2710
        %2712 = vrot.lane.b32.xlu0 %v2583, 96
        %v2713 = vpop.permute.xlu0 %2712
        %2714 = vrot.lane.b32.xlu0 %v2584, 96
        %v2715 = vpop.permute.xlu0 %2714
        %2716 = vrot.lane.b32.xlu0 %v2585, 96
        %v2717 = vpop.permute.xlu0 %2716
        %2718 = vrot.lane.b32.xlu0 %v2586, 96
        %v2719 = vpop.permute.xlu0 %2718
        %v2720 = vsel %vm456, %v2711, %v2713
        %v2721 = vsel %vm456, %v2713, %v2715
        %v2722 = vsel %vm456, %v2715, %v2717
        %v2723 = vsel %vm456, %v2717, %v2719
        %v2729 = vsel %vm340, %v2709, 0
        %2731 = vmatprep.subr.bf16.mxu0 0
        %2732 = vmatpush1.bf16.msra.mxu0 0
        %2733 = vmatprep.subr.bf16.mxu0 0
        %2734 = vmatpush1.bf16.msra.mxu0 0
        %2735 = vmatprep.subr.bf16.mxu0 0
        %2736 = vmatpush1.bf16.msra.mxu0 0
        %2737 = vmatprep.subr.bf16.mxu0 0
        %2738 = vmatpush1.bf16.msra.mxu0 0
        %2739 = vmatprep.subr.bf16.mxu0 0
        %2740 = vmatpush1.bf16.msra.mxu0 0
        %2741 = vmatprep.subr.bf16.mxu0 0
        %2742 = vmatpush1.bf16.msra.mxu0 0
        %2743 = vmatprep.subr.bf16.mxu0 0
        %2744 = vmatpush1.bf16.msra.mxu0 0
        %2745 = vmatprep.subr.bf16.mxu0 %v2721
        %2746 = vmatpush1.bf16.msra.mxu0 %v2720
        %2747 = vmatprep.subr.bf16.mxu0 0
        %2748 = vmatpush2.bf16.msra.mxu0 0
        %2749 = vmatprep.subr.bf16.mxu0 0
        %2750 = vmatpush2.bf16.msra.mxu0 0
        %2751 = vmatprep.subr.bf16.mxu0 0
        %2752 = vmatpush2.bf16.msra.mxu0 0
        %2753 = vmatprep.subr.bf16.mxu0 0
        %2754 = vmatpush2.bf16.msra.mxu0 0
        %2755 = vmatprep.subr.bf16.mxu0 0
        %2756 = vmatpush2.bf16.msra.mxu0 0
        %2757 = vmatprep.subr.bf16.mxu0 0
        %2758 = vmatpush2.bf16.msra.mxu0 0
        %2759 = vmatprep.subr.bf16.mxu0 0
        %2760 = vmatpush2.bf16.msra.mxu0 0
        %2761 = vmatprep.subr.bf16.mxu0 0
        %2762 = vmatpush2.bf16.msra.mxu0 0
        %2763 = vmatprep.mubr.bf16.mxu0 0
        %2764 = vmatmul.mubr.bf16.gmra.mxu0 %v2729
        %v2765 = vpop.f32.mrf.mxu0
        %v2766 = vadd.f32 0.0, %v2765
        %v2767 = vpop.f32.mrf.mxu0
        %v2768 = vadd.f32 0.0, %v2767
        %v2769 = vpop.f32.mrf.mxu0
        %v2770 = vadd.f32 0.0, %v2769
        %v2771 = vpop.f32.mrf.mxu0
        %v2772 = vadd.f32 0.0, %v2771
        %2773 = vdwg.mxu0
        %2774 = vmatprep.subr.bf16.mxu0 0
        %2775 = vmatpush1.bf16.msra.mxu0 0
        %2776 = vmatprep.subr.bf16.mxu0 0
        %2777 = vmatpush1.bf16.msra.mxu0 0
        %2778 = vmatprep.subr.bf16.mxu0 0
        %2779 = vmatpush1.bf16.msra.mxu0 0
        %2780 = vmatprep.subr.bf16.mxu0 0
        %2781 = vmatpush1.bf16.msra.mxu0 0
        %2782 = vmatprep.subr.bf16.mxu0 0
        %2783 = vmatpush1.bf16.msra.mxu0 0
        %2784 = vmatprep.subr.bf16.mxu0 0
        %2785 = vmatpush1.bf16.msra.mxu0 0
        %2786 = vmatprep.subr.bf16.mxu0 0
        %2787 = vmatpush1.bf16.msra.mxu0 0
        %2788 = vmatprep.subr.bf16.mxu0 %v2723
        %2789 = vmatpush1.bf16.msra.mxu0 %v2722
        %2790 = vmatprep.subr.bf16.mxu0 0
        %2791 = vmatpush2.bf16.msra.mxu0 0
        %2792 = vmatprep.subr.bf16.mxu0 0
        %2793 = vmatpush2.bf16.msra.mxu0 0
        %2794 = vmatprep.subr.bf16.mxu0 0
        %2795 = vmatpush2.bf16.msra.mxu0 0
        %2796 = vmatprep.subr.bf16.mxu0 0
        %2797 = vmatpush2.bf16.msra.mxu0 0
        %2798 = vmatprep.subr.bf16.mxu0 0
        %2799 = vmatpush2.bf16.msra.mxu0 0
        %2800 = vmatprep.subr.bf16.mxu0 0
        %2801 = vmatpush2.bf16.msra.mxu0 0
        %2802 = vmatprep.subr.bf16.mxu0 0
        %2803 = vmatpush2.bf16.msra.mxu0 0
        %2804 = vmatprep.subr.bf16.mxu0 0
        %2805 = vmatpush2.bf16.msra.mxu0 0
        %2806 = vmatprep.mubr.bf16.mxu0 0
        %2807 = vmatmul.mubr.bf16.gmra.mxu0 %v2729
        %v2808 = vpop.f32.mrf.mxu0
        %v2809 = vadd.f32 0.0, %v2808
        %v2810 = vpop.f32.mrf.mxu0
        %v2811 = vadd.f32 0.0, %v2810
        %v2812 = vpop.f32.mrf.mxu0
        %v2813 = vadd.f32 0.0, %v2812
        %v2814 = vpop.f32.mrf.mxu0
        %v2815 = vadd.f32 0.0, %v2814
        %2816 = vdwg.mxu0
        %v2817 = vadd.f32 %v2694, %v2766
        %v2818 = vadd.f32 %v2695, %v2768
        %v2819 = vadd.f32 %v2696, %v2809
        %v2820 = vadd.f32 %v2697, %v2811
        %v2821 = vadd.f32 %v2698, %v2770
        %v2822 = vadd.f32 %v2699, %v2772
        %v2823 = vadd.f32 %v2700, %v2813
        %v2824 = vadd.f32 %v2701, %v2815
        %s2825 = scalar_lea.vmem %s0, 160
        %v2826 = vld [vmem:[%s2825] sm:$0xf]
        %v2827 = vld [vmem:[%s2825 + $0x4] sm:$0xf]
        %v2830 = vunpack.c.l.b16 %v2826
        %v2831 = vunpack.c.l.b16 %v2827
        %v2832 = vpack.c.b16 %v2831, %v2830
        %2833 = vrot.lane.b32.xlu0 %v2582, 95
        %v2834 = vpop.permute.xlu0 %2833
        %2835 = vrot.lane.b32.xlu0 %v2583, 95
        %v2836 = vpop.permute.xlu0 %2835
        %2837 = vrot.lane.b32.xlu0 %v2584, 95
        %v2838 = vpop.permute.xlu0 %2837
        %2839 = vrot.lane.b32.xlu0 %v2585, 95
        %v2840 = vpop.permute.xlu0 %2839
        %2841 = vrot.lane.b32.xlu0 %v2586, 95
        %v2842 = vpop.permute.xlu0 %2841
        %v2843 = vsel %vm580, %v2834, %v2836
        %v2844 = vsel %vm580, %v2836, %v2838
        %v2845 = vsel %vm580, %v2838, %v2840
        %v2846 = vsel %vm580, %v2840, %v2842
        %v2852 = vsel %vm340, %v2832, 0
        %2854 = vmatprep.subr.bf16.mxu0 0
        %2855 = vmatpush1.bf16.msra.mxu0 0
        %2856 = vmatprep.subr.bf16.mxu0 0
        %2857 = vmatpush1.bf16.msra.mxu0 0
        %2858 = vmatprep.subr.bf16.mxu0 0
        %2859 = vmatpush1.bf16.msra.mxu0 0
        %2860 = vmatprep.subr.bf16.mxu0 0
        %2861 = vmatpush1.bf16.msra.mxu0 0
        %2862 = vmatprep.subr.bf16.mxu0 0
        %2863 = vmatpush1.bf16.msra.mxu0 0
        %2864 = vmatprep.subr.bf16.mxu0 0
        %2865 = vmatpush1.bf16.msra.mxu0 0
        %2866 = vmatprep.subr.bf16.mxu0 0
        %2867 = vmatpush1.bf16.msra.mxu0 0
        %2868 = vmatprep.subr.bf16.mxu0 %v2844
        %2869 = vmatpush1.bf16.msra.mxu0 %v2843
        %2870 = vmatprep.subr.bf16.mxu0 0
        %2871 = vmatpush2.bf16.msra.mxu0 0
        %2872 = vmatprep.subr.bf16.mxu0 0
        %2873 = vmatpush2.bf16.msra.mxu0 0
        %2874 = vmatprep.subr.bf16.mxu0 0
        %2875 = vmatpush2.bf16.msra.mxu0 0
        %2876 = vmatprep.subr.bf16.mxu0 0
        %2877 = vmatpush2.bf16.msra.mxu0 0
        %2878 = vmatprep.subr.bf16.mxu0 0
        %2879 = vmatpush2.bf16.msra.mxu0 0
        %2880 = vmatprep.subr.bf16.mxu0 0
        %2881 = vmatpush2.bf16.msra.mxu0 0
        %2882 = vmatprep.subr.bf16.mxu0 0
        %2883 = vmatpush2.bf16.msra.mxu0 0
        %2884 = vmatprep.subr.bf16.mxu0 0
        %2885 = vmatpush2.bf16.msra.mxu0 0
        %2886 = vmatprep.mubr.bf16.mxu0 0
        %2887 = vmatmul.mubr.bf16.gmra.mxu0 %v2852
        %v2888 = vpop.f32.mrf.mxu0
        %v2889 = vadd.f32 0.0, %v2888
        %v2890 = vpop.f32.mrf.mxu0
        %v2891 = vadd.f32 0.0, %v2890
        %v2892 = vpop.f32.mrf.mxu0
        %v2893 = vadd.f32 0.0, %v2892
        %v2894 = vpop.f32.mrf.mxu0
        %v2895 = vadd.f32 0.0, %v2894
        %2896 = vdwg.mxu0
        %2897 = vmatprep.subr.bf16.mxu0 0
        %2898 = vmatpush1.bf16.msra.mxu0 0
        %2899 = vmatprep.subr.bf16.mxu0 0
        %2900 = vmatpush1.bf16.msra.mxu0 0
        %2901 = vmatprep.subr.bf16.mxu0 0
        %2902 = vmatpush1.bf16.msra.mxu0 0
        %2903 = vmatprep.subr.bf16.mxu0 0
        %2904 = vmatpush1.bf16.msra.mxu0 0
        %2905 = vmatprep.subr.bf16.mxu0 0
        %2906 = vmatpush1.bf16.msra.mxu0 0
        %2907 = vmatprep.subr.bf16.mxu0 0
        %2908 = vmatpush1.bf16.msra.mxu0 0
        %2909 = vmatprep.subr.bf16.mxu0 0
        %2910 = vmatpush1.bf16.msra.mxu0 0
        %2911 = vmatprep.subr.bf16.mxu0 %v2846
        %2912 = vmatpush1.bf16.msra.mxu0 %v2845
        %2913 = vmatprep.subr.bf16.mxu0 0
        %2914 = vmatpush2.bf16.msra.mxu0 0
        %2915 = vmatprep.subr.bf16.mxu0 0
        %2916 = vmatpush2.bf16.msra.mxu0 0
        %2917 = vmatprep.subr.bf16.mxu0 0
        %2918 = vmatpush2.bf16.msra.mxu0 0
        %2919 = vmatprep.subr.bf16.mxu0 0
        %2920 = vmatpush2.bf16.msra.mxu0 0
        %2921 = vmatprep.subr.bf16.mxu0 0
        %2922 = vmatpush2.bf16.msra.mxu0 0
        %2923 = vmatprep.subr.bf16.mxu0 0
        %2924 = vmatpush2.bf16.msra.mxu0 0
        %2925 = vmatprep.subr.bf16.mxu0 0
        %2926 = vmatpush2.bf16.msra.mxu0 0
        %2927 = vmatprep.subr.bf16.mxu0 0
        %2928 = vmatpush2.bf16.msra.mxu0 0
        %2929 = vmatprep.mubr.bf16.mxu0 0
        %2930 = vmatmul.mubr.bf16.gmra.mxu0 %v2852
        %v2931 = vpop.f32.mrf.mxu0
        %v2932 = vadd.f32 0.0, %v2931
        %v2933 = vpop.f32.mrf.mxu0
        %v2934 = vadd.f32 0.0, %v2933
        %v2935 = vpop.f32.mrf.mxu0
        %v2936 = vadd.f32 0.0, %v2935
        %v2937 = vpop.f32.mrf.mxu0
        %v2938 = vadd.f32 0.0, %v2937
        %2939 = vdwg.mxu0
        %v2940 = vadd.f32 %v2817, %v2889
        %v2941 = vadd.f32 %v2818, %v2891
        %v2942 = vadd.f32 %v2819, %v2932
        %v2943 = vadd.f32 %v2820, %v2934
        %v2944 = vadd.f32 %v2821, %v2893
        %v2945 = vadd.f32 %v2822, %v2895
        %v2946 = vadd.f32 %v2823, %v2936
        %v2947 = vadd.f32 %v2824, %v2938
        %s2948 = scalar_lea.vmem %s0, 168
        %v2949 = vld [vmem:[%s2948] sm:$0xf]
        %v2950 = vld [vmem:[%s2948 + $0x4] sm:$0xf]
        %v2953 = vunpack.c.l.b16 %v2949
        %v2954 = vunpack.c.l.b16 %v2950
        %v2955 = vpack.c.b16 %v2954, %v2953
        %2956 = vrot.lane.b32.xlu0 %v2582, 65
        %v2957 = vpop.permute.xlu0 %2956
        %2958 = vrot.lane.b32.xlu0 %v2583, 65
        %v2959 = vpop.permute.xlu0 %2958
        %2960 = vrot.lane.b32.xlu0 %v2584, 65
        %v2961 = vpop.permute.xlu0 %2960
        %2962 = vrot.lane.b32.xlu0 %v2585, 65
        %v2963 = vpop.permute.xlu0 %2962
        %2964 = vrot.lane.b32.xlu0 %v2586, 65
        %v2965 = vpop.permute.xlu0 %2964
        %v2966 = vsel %vm704, %v2957, %v2959
        %v2967 = vsel %vm704, %v2959, %v2961
        %v2968 = vsel %vm704, %v2961, %v2963
        %v2969 = vsel %vm704, %v2963, %v2965
        %v2975 = vsel %vm340, %v2955, 0
        %2977 = vmatprep.subr.bf16.mxu0 0
        %2978 = vmatpush1.bf16.msra.mxu0 0
        %2979 = vmatprep.subr.bf16.mxu0 0
        %2980 = vmatpush1.bf16.msra.mxu0 0
        %2981 = vmatprep.subr.bf16.mxu0 0
        %2982 = vmatpush1.bf16.msra.mxu0 0
        %2983 = vmatprep.subr.bf16.mxu0 0
        %2984 = vmatpush1.bf16.msra.mxu0 0
        %2985 = vmatprep.subr.bf16.mxu0 0
        %2986 = vmatpush1.bf16.msra.mxu0 0
        %2987 = vmatprep.subr.bf16.mxu0 0
        %2988 = vmatpush1.bf16.msra.mxu0 0
        %2989 = vmatprep.subr.bf16.mxu0 0
        %2990 = vmatpush1.bf16.msra.mxu0 0
        %2991 = vmatprep.subr.bf16.mxu0 %v2967
        %2992 = vmatpush1.bf16.msra.mxu0 %v2966
        %2993 = vmatprep.subr.bf16.mxu0 0
        %2994 = vmatpush2.bf16.msra.mxu0 0
        %2995 = vmatprep.subr.bf16.mxu0 0
        %2996 = vmatpush2.bf16.msra.mxu0 0
        %2997 = vmatprep.subr.bf16.mxu0 0
        %2998 = vmatpush2.bf16.msra.mxu0 0
        %2999 = vmatprep.subr.bf16.mxu0 0
        %3000 = vmatpush2.bf16.msra.mxu0 0
        %3001 = vmatprep.subr.bf16.mxu0 0
        %3002 = vmatpush2.bf16.msra.mxu0 0
        %3003 = vmatprep.subr.bf16.mxu0 0
        %3004 = vmatpush2.bf16.msra.mxu0 0
        %3005 = vmatprep.subr.bf16.mxu0 0
        %3006 = vmatpush2.bf16.msra.mxu0 0
        %3007 = vmatprep.subr.bf16.mxu0 0
        %3008 = vmatpush2.bf16.msra.mxu0 0
        %3009 = vmatprep.mubr.bf16.mxu0 0
        %3010 = vmatmul.mubr.bf16.gmra.mxu0 %v2975
        %v3011 = vpop.f32.mrf.mxu0
        %v3012 = vadd.f32 0.0, %v3011
        %v3013 = vpop.f32.mrf.mxu0
        %v3014 = vadd.f32 0.0, %v3013
        %v3015 = vpop.f32.mrf.mxu0
        %v3016 = vadd.f32 0.0, %v3015
        %v3017 = vpop.f32.mrf.mxu0
        %v3018 = vadd.f32 0.0, %v3017
        %3019 = vdwg.mxu0
        %3020 = vmatprep.subr.bf16.mxu0 0
        %3021 = vmatpush1.bf16.msra.mxu0 0
        %3022 = vmatprep.subr.bf16.mxu0 0
        %3023 = vmatpush1.bf16.msra.mxu0 0
        %3024 = vmatprep.subr.bf16.mxu0 0
        %3025 = vmatpush1.bf16.msra.mxu0 0
        %3026 = vmatprep.subr.bf16.mxu0 0
        %3027 = vmatpush1.bf16.msra.mxu0 0
        %3028 = vmatprep.subr.bf16.mxu0 0
        %3029 = vmatpush1.bf16.msra.mxu0 0
        %3030 = vmatprep.subr.bf16.mxu0 0
        %3031 = vmatpush1.bf16.msra.mxu0 0
        %3032 = vmatprep.subr.bf16.mxu0 0
        %3033 = vmatpush1.bf16.msra.mxu0 0
        %3034 = vmatprep.subr.bf16.mxu0 %v2969
        %3035 = vmatpush1.bf16.msra.mxu0 %v2968
        %3036 = vmatprep.subr.bf16.mxu0 0
        %3037 = vmatpush2.bf16.msra.mxu0 0
        %3038 = vmatprep.subr.bf16.mxu0 0
        %3039 = vmatpush2.bf16.msra.mxu0 0
        %3040 = vmatprep.subr.bf16.mxu0 0
        %3041 = vmatpush2.bf16.msra.mxu0 0
        %3042 = vmatprep.subr.bf16.mxu0 0
        %3043 = vmatpush2.bf16.msra.mxu0 0
        %3044 = vmatprep.subr.bf16.mxu0 0
        %3045 = vmatpush2.bf16.msra.mxu0 0
        %3046 = vmatprep.subr.bf16.mxu0 0
        %3047 = vmatpush2.bf16.msra.mxu0 0
        %3048 = vmatprep.subr.bf16.mxu0 0
        %3049 = vmatpush2.bf16.msra.mxu0 0
        %3050 = vmatprep.subr.bf16.mxu0 0
        %3051 = vmatpush2.bf16.msra.mxu0 0
        %3052 = vmatprep.mubr.bf16.mxu0 0
        %3053 = vmatmul.mubr.bf16.gmra.mxu0 %v2975
        %v3054 = vpop.f32.mrf.mxu0
        %v3055 = vadd.f32 0.0, %v3054
        %v3056 = vpop.f32.mrf.mxu0
        %v3057 = vadd.f32 0.0, %v3056
        %v3058 = vpop.f32.mrf.mxu0
        %v3059 = vadd.f32 0.0, %v3058
        %v3060 = vpop.f32.mrf.mxu0
        %v3061 = vadd.f32 0.0, %v3060
        %3062 = vdwg.mxu0
        %v3063 = vadd.f32 %v2940, %v3012
        %v3064 = vadd.f32 %v2941, %v3014
        %v3065 = vadd.f32 %v2942, %v3055
        %v3066 = vadd.f32 %v2943, %v3057
        %v3067 = vadd.f32 %v2944, %v3016
        %v3068 = vadd.f32 %v2945, %v3018
        %v3069 = vadd.f32 %v2946, %v3059
        %v3070 = vadd.f32 %v2947, %v3061
        %s3071 = scalar_lea.vmem %s0, 176
        %v3072 = vld [vmem:[%s3071] sm:$0xf]
        %v3073 = vld [vmem:[%s3071 + $0x4] sm:$0xf]
        %v3076 = vunpack.c.l.b16 %v3072
        %v3077 = vunpack.c.l.b16 %v3073
        %v3078 = vpack.c.b16 %v3077, %v3076
        %3079 = vrot.lane.b32.xlu0 %v2582, 64
        %v3080 = vpop.permute.xlu0 %3079
        %3081 = vrot.lane.b32.xlu0 %v2583, 64
        %v3082 = vpop.permute.xlu0 %3081
        %3083 = vrot.lane.b32.xlu0 %v2584, 64
        %v3084 = vpop.permute.xlu0 %3083
        %3085 = vrot.lane.b32.xlu0 %v2585, 64
        %v3086 = vpop.permute.xlu0 %3085
        %3087 = vrot.lane.b32.xlu0 %v2586, 64
        %v3088 = vpop.permute.xlu0 %3087
        %v3089 = vsel %vm828, %v3080, %v3082
        %v3090 = vsel %vm828, %v3082, %v3084
        %v3091 = vsel %vm828, %v3084, %v3086
        %v3092 = vsel %vm828, %v3086, %v3088
        %v3098 = vsel %vm340, %v3078, 0
        %3100 = vmatprep.subr.bf16.mxu0 0
        %3101 = vmatpush1.bf16.msra.mxu0 0
        %3102 = vmatprep.subr.bf16.mxu0 0
        %3103 = vmatpush1.bf16.msra.mxu0 0
        %3104 = vmatprep.subr.bf16.mxu0 0
        %3105 = vmatpush1.bf16.msra.mxu0 0
        %3106 = vmatprep.subr.bf16.mxu0 0
        %3107 = vmatpush1.bf16.msra.mxu0 0
        %3108 = vmatprep.subr.bf16.mxu0 0
        %3109 = vmatpush1.bf16.msra.mxu0 0
        %3110 = vmatprep.subr.bf16.mxu0 0
        %3111 = vmatpush1.bf16.msra.mxu0 0
        %3112 = vmatprep.subr.bf16.mxu0 0
        %3113 = vmatpush1.bf16.msra.mxu0 0
        %3114 = vmatprep.subr.bf16.mxu0 %v3090
        %3115 = vmatpush1.bf16.msra.mxu0 %v3089
        %3116 = vmatprep.subr.bf16.mxu0 0
        %3117 = vmatpush2.bf16.msra.mxu0 0
        %3118 = vmatprep.subr.bf16.mxu0 0
        %3119 = vmatpush2.bf16.msra.mxu0 0
        %3120 = vmatprep.subr.bf16.mxu0 0
        %3121 = vmatpush2.bf16.msra.mxu0 0
        %3122 = vmatprep.subr.bf16.mxu0 0
        %3123 = vmatpush2.bf16.msra.mxu0 0
        %3124 = vmatprep.subr.bf16.mxu0 0
        %3125 = vmatpush2.bf16.msra.mxu0 0
        %3126 = vmatprep.subr.bf16.mxu0 0
        %3127 = vmatpush2.bf16.msra.mxu0 0
        %3128 = vmatprep.subr.bf16.mxu0 0
        %3129 = vmatpush2.bf16.msra.mxu0 0
        %3130 = vmatprep.subr.bf16.mxu0 0
        %3131 = vmatpush2.bf16.msra.mxu0 0
        %3132 = vmatprep.mubr.bf16.mxu0 0
        %3133 = vmatmul.mubr.bf16.gmra.mxu0 %v3098
        %v3134 = vpop.f32.mrf.mxu0
        %v3135 = vadd.f32 0.0, %v3134
        %v3136 = vpop.f32.mrf.mxu0
        %v3137 = vadd.f32 0.0, %v3136
        %v3138 = vpop.f32.mrf.mxu0
        %v3139 = vadd.f32 0.0, %v3138
        %v3140 = vpop.f32.mrf.mxu0
        %v3141 = vadd.f32 0.0, %v3140
        %3142 = vdwg.mxu0
        %3143 = vmatprep.subr.bf16.mxu0 0
        %3144 = vmatpush1.bf16.msra.mxu0 0
        %3145 = vmatprep.subr.bf16.mxu0 0
        %3146 = vmatpush1.bf16.msra.mxu0 0
        %3147 = vmatprep.subr.bf16.mxu0 0
        %3148 = vmatpush1.bf16.msra.mxu0 0
        %3149 = vmatprep.subr.bf16.mxu0 0
        %3150 = vmatpush1.bf16.msra.mxu0 0
        %3151 = vmatprep.subr.bf16.mxu0 0
        %3152 = vmatpush1.bf16.msra.mxu0 0
        %3153 = vmatprep.subr.bf16.mxu0 0
        %3154 = vmatpush1.bf16.msra.mxu0 0
        %3155 = vmatprep.subr.bf16.mxu0 0
        %3156 = vmatpush1.bf16.msra.mxu0 0
        %3157 = vmatprep.subr.bf16.mxu0 %v3092
        %3158 = vmatpush1.bf16.msra.mxu0 %v3091
        %3159 = vmatprep.subr.bf16.mxu0 0
        %3160 = vmatpush2.bf16.msra.mxu0 0
        %3161 = vmatprep.subr.bf16.mxu0 0
        %3162 = vmatpush2.bf16.msra.mxu0 0
        %3163 = vmatprep.subr.bf16.mxu0 0
        %3164 = vmatpush2.bf16.msra.mxu0 0
        %3165 = vmatprep.subr.bf16.mxu0 0
        %3166 = vmatpush2.bf16.msra.mxu0 0
        %3167 = vmatprep.subr.bf16.mxu0 0
        %3168 = vmatpush2.bf16.msra.mxu0 0
        %3169 = vmatprep.subr.bf16.mxu0 0
        %3170 = vmatpush2.bf16.msra.mxu0 0
        %3171 = vmatprep.subr.bf16.mxu0 0
        %3172 = vmatpush2.bf16.msra.mxu0 0
        %3173 = vmatprep.subr.bf16.mxu0 0
        %3174 = vmatpush2.bf16.msra.mxu0 0
        %3175 = vmatprep.mubr.bf16.mxu0 0
        %3176 = vmatmul.mubr.bf16.gmra.mxu0 %v3098
        %v3177 = vpop.f32.mrf.mxu0
        %v3178 = vadd.f32 0.0, %v3177
        %v3179 = vpop.f32.mrf.mxu0
        %v3180 = vadd.f32 0.0, %v3179
        %v3181 = vpop.f32.mrf.mxu0
        %v3182 = vadd.f32 0.0, %v3181
        %v3183 = vpop.f32.mrf.mxu0
        %v3184 = vadd.f32 0.0, %v3183
        %3185 = vdwg.mxu0
        %v3186 = vadd.f32 %v3063, %v3135
        %v3187 = vadd.f32 %v3064, %v3137
        %v3188 = vadd.f32 %v3065, %v3178
        %v3189 = vadd.f32 %v3066, %v3180
        %v3190 = vadd.f32 %v3067, %v3139
        %v3191 = vadd.f32 %v3068, %v3141
        %v3192 = vadd.f32 %v3069, %v3182
        %v3193 = vadd.f32 %v3070, %v3184
        %s3194 = scalar_lea.vmem %s0, 184
        %v3195 = vld [vmem:[%s3194] sm:$0xf]
        %v3196 = vld [vmem:[%s3194 + $0x4] sm:$0xf]
        %v3199 = vunpack.c.l.b16 %v3195
        %v3200 = vunpack.c.l.b16 %v3196
        %v3201 = vpack.c.b16 %v3200, %v3199
        %3202 = vrot.lane.b32.xlu0 %v2582, 63
        %v3203 = vpop.permute.xlu0 %3202
        %3204 = vrot.lane.b32.xlu0 %v2583, 63
        %v3205 = vpop.permute.xlu0 %3204
        %3206 = vrot.lane.b32.xlu0 %v2584, 63
        %v3207 = vpop.permute.xlu0 %3206
        %3208 = vrot.lane.b32.xlu0 %v2585, 63
        %v3209 = vpop.permute.xlu0 %3208
        %3210 = vrot.lane.b32.xlu0 %v2586, 63
        %v3211 = vpop.permute.xlu0 %3210
        %v3212 = vsel %vm952, %v3203, %v3205
        %v3213 = vsel %vm952, %v3205, %v3207
        %v3214 = vsel %vm952, %v3207, %v3209
        %v3215 = vsel %vm952, %v3209, %v3211
        %v3221 = vsel %vm340, %v3201, 0
        %3223 = vmatprep.subr.bf16.mxu0 0
        %3224 = vmatpush1.bf16.msra.mxu0 0
        %3225 = vmatprep.subr.bf16.mxu0 0
        %3226 = vmatpush1.bf16.msra.mxu0 0
        %3227 = vmatprep.subr.bf16.mxu0 0
        %3228 = vmatpush1.bf16.msra.mxu0 0
        %3229 = vmatprep.subr.bf16.mxu0 0
        %3230 = vmatpush1.bf16.msra.mxu0 0
        %3231 = vmatprep.subr.bf16.mxu0 0
        %3232 = vmatpush1.bf16.msra.mxu0 0
        %3233 = vmatprep.subr.bf16.mxu0 0
        %3234 = vmatpush1.bf16.msra.mxu0 0
        %3235 = vmatprep.subr.bf16.mxu0 0
        %3236 = vmatpush1.bf16.msra.mxu0 0
        %3237 = vmatprep.subr.bf16.mxu0 %v3213
        %3238 = vmatpush1.bf16.msra.mxu0 %v3212
        %3239 = vmatprep.subr.bf16.mxu0 0
        %3240 = vmatpush2.bf16.msra.mxu0 0
        %3241 = vmatprep.subr.bf16.mxu0 0
        %3242 = vmatpush2.bf16.msra.mxu0 0
        %3243 = vmatprep.subr.bf16.mxu0 0
        %3244 = vmatpush2.bf16.msra.mxu0 0
        %3245 = vmatprep.subr.bf16.mxu0 0
        %3246 = vmatpush2.bf16.msra.mxu0 0
        %3247 = vmatprep.subr.bf16.mxu0 0
        %3248 = vmatpush2.bf16.msra.mxu0 0
        %3249 = vmatprep.subr.bf16.mxu0 0
        %3250 = vmatpush2.bf16.msra.mxu0 0
        %3251 = vmatprep.subr.bf16.mxu0 0
        %3252 = vmatpush2.bf16.msra.mxu0 0
        %3253 = vmatprep.subr.bf16.mxu0 0
        %3254 = vmatpush2.bf16.msra.mxu0 0
        %3255 = vmatprep.mubr.bf16.mxu0 0
        %3256 = vmatmul.mubr.bf16.gmra.mxu0 %v3221
        %v3257 = vpop.f32.mrf.mxu0
        %v3258 = vadd.f32 0.0, %v3257
        %v3259 = vpop.f32.mrf.mxu0
        %v3260 = vadd.f32 0.0, %v3259
        %v3261 = vpop.f32.mrf.mxu0
        %v3262 = vadd.f32 0.0, %v3261
        %v3263 = vpop.f32.mrf.mxu0
        %v3264 = vadd.f32 0.0, %v3263
        %3265 = vdwg.mxu0
        %3266 = vmatprep.subr.bf16.mxu0 0
        %3267 = vmatpush1.bf16.msra.mxu0 0
        %3268 = vmatprep.subr.bf16.mxu0 0
        %3269 = vmatpush1.bf16.msra.mxu0 0
        %3270 = vmatprep.subr.bf16.mxu0 0
        %3271 = vmatpush1.bf16.msra.mxu0 0
        %3272 = vmatprep.subr.bf16.mxu0 0
        %3273 = vmatpush1.bf16.msra.mxu0 0
        %3274 = vmatprep.subr.bf16.mxu0 0
        %3275 = vmatpush1.bf16.msra.mxu0 0
        %3276 = vmatprep.subr.bf16.mxu0 0
        %3277 = vmatpush1.bf16.msra.mxu0 0
        %3278 = vmatprep.subr.bf16.mxu0 0
        %3279 = vmatpush1.bf16.msra.mxu0 0
        %3280 = vmatprep.subr.bf16.mxu0 %v3215
        %3281 = vmatpush1.bf16.msra.mxu0 %v3214
        %3282 = vmatprep.subr.bf16.mxu0 0
        %3283 = vmatpush2.bf16.msra.mxu0 0
        %3284 = vmatprep.subr.bf16.mxu0 0
        %3285 = vmatpush2.bf16.msra.mxu0 0
        %3286 = vmatprep.subr.bf16.mxu0 0
        %3287 = vmatpush2.bf16.msra.mxu0 0
        %3288 = vmatprep.subr.bf16.mxu0 0
        %3289 = vmatpush2.bf16.msra.mxu0 0
        %3290 = vmatprep.subr.bf16.mxu0 0
        %3291 = vmatpush2.bf16.msra.mxu0 0
        %3292 = vmatprep.subr.bf16.mxu0 0
        %3293 = vmatpush2.bf16.msra.mxu0 0
        %3294 = vmatprep.subr.bf16.mxu0 0
        %3295 = vmatpush2.bf16.msra.mxu0 0
        %3296 = vmatprep.subr.bf16.mxu0 0
        %3297 = vmatpush2.bf16.msra.mxu0 0
        %3298 = vmatprep.mubr.bf16.mxu0 0
        %3299 = vmatmul.mubr.bf16.gmra.mxu0 %v3221
        %v3300 = vpop.f32.mrf.mxu0
        %v3301 = vadd.f32 0.0, %v3300
        %v3302 = vpop.f32.mrf.mxu0
        %v3303 = vadd.f32 0.0, %v3302
        %v3304 = vpop.f32.mrf.mxu0
        %v3305 = vadd.f32 0.0, %v3304
        %v3306 = vpop.f32.mrf.mxu0
        %v3307 = vadd.f32 0.0, %v3306
        %3308 = vdwg.mxu0
        %v3309 = vadd.f32 %v3186, %v3258
        %v3310 = vadd.f32 %v3187, %v3260
        %v3311 = vadd.f32 %v3188, %v3301
        %v3312 = vadd.f32 %v3189, %v3303
        %v3313 = vadd.f32 %v3190, %v3262
        %v3314 = vadd.f32 %v3191, %v3264
        %v3315 = vadd.f32 %v3192, %v3305
        %v3316 = vadd.f32 %v3193, %v3307
        %s3317 = scalar_lea.vmem %s0, 192
        %v3318 = vld [vmem:[%s3317] sm:$0xf]
        %v3319 = vld [vmem:[%s3317 + $0x4] sm:$0xf]
        %v3322 = vunpack.c.l.b16 %v3318
        %v3323 = vunpack.c.l.b16 %v3319
        %v3324 = vpack.c.b16 %v3323, %v3322
        %3325 = vrot.lane.b32.xlu0 %v2582, 33
        %v3326 = vpop.permute.xlu0 %3325
        %3327 = vrot.lane.b32.xlu0 %v2583, 33
        %v3328 = vpop.permute.xlu0 %3327
        %3329 = vrot.lane.b32.xlu0 %v2584, 33
        %v3330 = vpop.permute.xlu0 %3329
        %3331 = vrot.lane.b32.xlu0 %v2585, 33
        %v3332 = vpop.permute.xlu0 %3331
        %3333 = vrot.lane.b32.xlu0 %v2586, 33
        %v3334 = vpop.permute.xlu0 %3333
        %v3335 = vsel %vm1076, %v3326, %v3328
        %v3336 = vsel %vm1076, %v3328, %v3330
        %v3337 = vsel %vm1076, %v3330, %v3332
        %v3338 = vsel %vm1076, %v3332, %v3334
        %v3344 = vsel %vm340, %v3324, 0
        %3346 = vmatprep.subr.bf16.mxu0 0
        %3347 = vmatpush1.bf16.msra.mxu0 0
        %3348 = vmatprep.subr.bf16.mxu0 0
        %3349 = vmatpush1.bf16.msra.mxu0 0
        %3350 = vmatprep.subr.bf16.mxu0 0
        %3351 = vmatpush1.bf16.msra.mxu0 0
        %3352 = vmatprep.subr.bf16.mxu0 0
        %3353 = vmatpush1.bf16.msra.mxu0 0
        %3354 = vmatprep.subr.bf16.mxu0 0
        %3355 = vmatpush1.bf16.msra.mxu0 0
        %3356 = vmatprep.subr.bf16.mxu0 0
        %3357 = vmatpush1.bf16.msra.mxu0 0
        %3358 = vmatprep.subr.bf16.mxu0 0
        %3359 = vmatpush1.bf16.msra.mxu0 0
        %3360 = vmatprep.subr.bf16.mxu0 %v3336
        %3361 = vmatpush1.bf16.msra.mxu0 %v3335
        %3362 = vmatprep.subr.bf16.mxu0 0
        %3363 = vmatpush2.bf16.msra.mxu0 0
        %3364 = vmatprep.subr.bf16.mxu0 0
        %3365 = vmatpush2.bf16.msra.mxu0 0
        %3366 = vmatprep.subr.bf16.mxu0 0
        %3367 = vmatpush2.bf16.msra.mxu0 0
        %3368 = vmatprep.subr.bf16.mxu0 0
        %3369 = vmatpush2.bf16.msra.mxu0 0
        %3370 = vmatprep.subr.bf16.mxu0 0
        %3371 = vmatpush2.bf16.msra.mxu0 0
        %3372 = vmatprep.subr.bf16.mxu0 0
        %3373 = vmatpush2.bf16.msra.mxu0 0
        %3374 = vmatprep.subr.bf16.mxu0 0
        %3375 = vmatpush2.bf16.msra.mxu0 0
        %3376 = vmatprep.subr.bf16.mxu0 0
        %3377 = vmatpush2.bf16.msra.mxu0 0
        %3378 = vmatprep.mubr.bf16.mxu0 0
        %3379 = vmatmul.mubr.bf16.gmra.mxu0 %v3344
        %v3380 = vpop.f32.mrf.mxu0
        %v3381 = vadd.f32 0.0, %v3380
        %v3382 = vpop.f32.mrf.mxu0
        %v3383 = vadd.f32 0.0, %v3382
        %v3384 = vpop.f32.mrf.mxu0
        %v3385 = vadd.f32 0.0, %v3384
        %v3386 = vpop.f32.mrf.mxu0
        %v3387 = vadd.f32 0.0, %v3386
        %3388 = vdwg.mxu0
        %3389 = vmatprep.subr.bf16.mxu0 0
        %3390 = vmatpush1.bf16.msra.mxu0 0
        %3391 = vmatprep.subr.bf16.mxu0 0
        %3392 = vmatpush1.bf16.msra.mxu0 0
        %3393 = vmatprep.subr.bf16.mxu0 0
        %3394 = vmatpush1.bf16.msra.mxu0 0
        %3395 = vmatprep.subr.bf16.mxu0 0
        %3396 = vmatpush1.bf16.msra.mxu0 0
        %3397 = vmatprep.subr.bf16.mxu0 0
        %3398 = vmatpush1.bf16.msra.mxu0 0
        %3399 = vmatprep.subr.bf16.mxu0 0
        %3400 = vmatpush1.bf16.msra.mxu0 0
        %3401 = vmatprep.subr.bf16.mxu0 0
        %3402 = vmatpush1.bf16.msra.mxu0 0
        %3403 = vmatprep.subr.bf16.mxu0 %v3338
        %3404 = vmatpush1.bf16.msra.mxu0 %v3337
        %3405 = vmatprep.subr.bf16.mxu0 0
        %3406 = vmatpush2.bf16.msra.mxu0 0
        %3407 = vmatprep.subr.bf16.mxu0 0
        %3408 = vmatpush2.bf16.msra.mxu0 0
        %3409 = vmatprep.subr.bf16.mxu0 0
        %3410 = vmatpush2.bf16.msra.mxu0 0
        %3411 = vmatprep.subr.bf16.mxu0 0
        %3412 = vmatpush2.bf16.msra.mxu0 0
        %3413 = vmatprep.subr.bf16.mxu0 0
        %3414 = vmatpush2.bf16.msra.mxu0 0
        %3415 = vmatprep.subr.bf16.mxu0 0
        %3416 = vmatpush2.bf16.msra.mxu0 0
        %3417 = vmatprep.subr.bf16.mxu0 0
        %3418 = vmatpush2.bf16.msra.mxu0 0
        %3419 = vmatprep.subr.bf16.mxu0 0
        %3420 = vmatpush2.bf16.msra.mxu0 0
        %3421 = vmatprep.mubr.bf16.mxu0 0
        %3422 = vmatmul.mubr.bf16.gmra.mxu0 %v3344
        %v3423 = vpop.f32.mrf.mxu0
        %v3424 = vadd.f32 0.0, %v3423
        %v3425 = vpop.f32.mrf.mxu0
        %v3426 = vadd.f32 0.0, %v3425
        %v3427 = vpop.f32.mrf.mxu0
        %v3428 = vadd.f32 0.0, %v3427
        %v3429 = vpop.f32.mrf.mxu0
        %v3430 = vadd.f32 0.0, %v3429
        %3431 = vdwg.mxu0
        %v3432 = vadd.f32 %v3309, %v3381
        %v3433 = vadd.f32 %v3310, %v3383
        %v3434 = vadd.f32 %v3311, %v3424
        %v3435 = vadd.f32 %v3312, %v3426
        %v3436 = vadd.f32 %v3313, %v3385
        %v3437 = vadd.f32 %v3314, %v3387
        %v3438 = vadd.f32 %v3315, %v3428
        %v3439 = vadd.f32 %v3316, %v3430
        %s3440 = scalar_lea.vmem %s0, 200
        %v3441 = vld [vmem:[%s3440] sm:$0xf]
        %v3442 = vld [vmem:[%s3440 + $0x4] sm:$0xf]
        %v3445 = vunpack.c.l.b16 %v3441
        %v3446 = vunpack.c.l.b16 %v3442
        %v3447 = vpack.c.b16 %v3446, %v3445
        %3448 = vrot.lane.b32.xlu0 %v2582, 32
        %v3449 = vpop.permute.xlu0 %3448
        %3450 = vrot.lane.b32.xlu0 %v2583, 32
        %v3451 = vpop.permute.xlu0 %3450
        %3452 = vrot.lane.b32.xlu0 %v2584, 32
        %v3453 = vpop.permute.xlu0 %3452
        %3454 = vrot.lane.b32.xlu0 %v2585, 32
        %v3455 = vpop.permute.xlu0 %3454
        %3456 = vrot.lane.b32.xlu0 %v2586, 32
        %v3457 = vpop.permute.xlu0 %3456
        %v3458 = vsel %vm1200, %v3449, %v3451
        %v3459 = vsel %vm1200, %v3451, %v3453
        %v3460 = vsel %vm1200, %v3453, %v3455
        %v3461 = vsel %vm1200, %v3455, %v3457
        %v3467 = vsel %vm340, %v3447, 0
        %3469 = vmatprep.subr.bf16.mxu0 0
        %3470 = vmatpush1.bf16.msra.mxu0 0
        %3471 = vmatprep.subr.bf16.mxu0 0
        %3472 = vmatpush1.bf16.msra.mxu0 0
        %3473 = vmatprep.subr.bf16.mxu0 0
        %3474 = vmatpush1.bf16.msra.mxu0 0
        %3475 = vmatprep.subr.bf16.mxu0 0
        %3476 = vmatpush1.bf16.msra.mxu0 0
        %3477 = vmatprep.subr.bf16.mxu0 0
        %3478 = vmatpush1.bf16.msra.mxu0 0
        %3479 = vmatprep.subr.bf16.mxu0 0
        %3480 = vmatpush1.bf16.msra.mxu0 0
        %3481 = vmatprep.subr.bf16.mxu0 0
        %3482 = vmatpush1.bf16.msra.mxu0 0
        %3483 = vmatprep.subr.bf16.mxu0 %v3459
        %3484 = vmatpush1.bf16.msra.mxu0 %v3458
        %3485 = vmatprep.subr.bf16.mxu0 0
        %3486 = vmatpush2.bf16.msra.mxu0 0
        %3487 = vmatprep.subr.bf16.mxu0 0
        %3488 = vmatpush2.bf16.msra.mxu0 0
        %3489 = vmatprep.subr.bf16.mxu0 0
        %3490 = vmatpush2.bf16.msra.mxu0 0
        %3491 = vmatprep.subr.bf16.mxu0 0
        %3492 = vmatpush2.bf16.msra.mxu0 0
        %3493 = vmatprep.subr.bf16.mxu0 0
        %3494 = vmatpush2.bf16.msra.mxu0 0
        %3495 = vmatprep.subr.bf16.mxu0 0
        %3496 = vmatpush2.bf16.msra.mxu0 0
        %3497 = vmatprep.subr.bf16.mxu0 0
        %3498 = vmatpush2.bf16.msra.mxu0 0
        %3499 = vmatprep.subr.bf16.mxu0 0
        %3500 = vmatpush2.bf16.msra.mxu0 0
        %3501 = vmatprep.mubr.bf16.mxu0 0
        %3502 = vmatmul.mubr.bf16.gmra.mxu0 %v3467
        %v3503 = vpop.f32.mrf.mxu0
        %v3504 = vadd.f32 0.0, %v3503
        %v3505 = vpop.f32.mrf.mxu0
        %v3506 = vadd.f32 0.0, %v3505
        %v3507 = vpop.f32.mrf.mxu0
        %v3508 = vadd.f32 0.0, %v3507
        %v3509 = vpop.f32.mrf.mxu0
        %v3510 = vadd.f32 0.0, %v3509
        %3511 = vdwg.mxu0
        %3512 = vmatprep.subr.bf16.mxu0 0
        %3513 = vmatpush1.bf16.msra.mxu0 0
        %3514 = vmatprep.subr.bf16.mxu0 0
        %3515 = vmatpush1.bf16.msra.mxu0 0
        %3516 = vmatprep.subr.bf16.mxu0 0
        %3517 = vmatpush1.bf16.msra.mxu0 0
        %3518 = vmatprep.subr.bf16.mxu0 0
        %3519 = vmatpush1.bf16.msra.mxu0 0
        %3520 = vmatprep.subr.bf16.mxu0 0
        %3521 = vmatpush1.bf16.msra.mxu0 0
        %3522 = vmatprep.subr.bf16.mxu0 0
        %3523 = vmatpush1.bf16.msra.mxu0 0
        %3524 = vmatprep.subr.bf16.mxu0 0
        %3525 = vmatpush1.bf16.msra.mxu0 0
        %3526 = vmatprep.subr.bf16.mxu0 %v3461
        %3527 = vmatpush1.bf16.msra.mxu0 %v3460
        %3528 = vmatprep.subr.bf16.mxu0 0
        %3529 = vmatpush2.bf16.msra.mxu0 0
        %3530 = vmatprep.subr.bf16.mxu0 0
        %3531 = vmatpush2.bf16.msra.mxu0 0
        %3532 = vmatprep.subr.bf16.mxu0 0
        %3533 = vmatpush2.bf16.msra.mxu0 0
        %3534 = vmatprep.subr.bf16.mxu0 0
        %3535 = vmatpush2.bf16.msra.mxu0 0
        %3536 = vmatprep.subr.bf16.mxu0 0
        %3537 = vmatpush2.bf16.msra.mxu0 0
        %3538 = vmatprep.subr.bf16.mxu0 0
        %3539 = vmatpush2.bf16.msra.mxu0 0
        %3540 = vmatprep.subr.bf16.mxu0 0
        %3541 = vmatpush2.bf16.msra.mxu0 0
        %3542 = vmatprep.subr.bf16.mxu0 0
        %3543 = vmatpush2.bf16.msra.mxu0 0
        %3544 = vmatprep.mubr.bf16.mxu0 0
        %3545 = vmatmul.mubr.bf16.gmra.mxu0 %v3467
        %v3546 = vpop.f32.mrf.mxu0
        %v3547 = vadd.f32 0.0, %v3546
        %v3548 = vpop.f32.mrf.mxu0
        %v3549 = vadd.f32 0.0, %v3548
        %v3550 = vpop.f32.mrf.mxu0
        %v3551 = vadd.f32 0.0, %v3550
        %v3552 = vpop.f32.mrf.mxu0
        %v3553 = vadd.f32 0.0, %v3552
        %3554 = vdwg.mxu0
        %v3555 = vadd.f32 %v3432, %v3504
        %v3556 = vadd.f32 %v3433, %v3506
        %v3557 = vadd.f32 %v3434, %v3547
        %v3558 = vadd.f32 %v3435, %v3549
        %v3559 = vadd.f32 %v3436, %v3508
        %v3560 = vadd.f32 %v3437, %v3510
        %v3561 = vadd.f32 %v3438, %v3551
        %v3562 = vadd.f32 %v3439, %v3553
        %s3563 = scalar_lea.vmem %s0, 208
        %v3564 = vld [vmem:[%s3563] sm:$0xf]
        %v3565 = vld [vmem:[%s3563 + $0x4] sm:$0xf]
        %v3568 = vunpack.c.l.b16 %v3564
        %v3569 = vunpack.c.l.b16 %v3565
        %v3570 = vpack.c.b16 %v3569, %v3568
        %3571 = vrot.lane.b32.xlu0 %v2582, 31
        %v3572 = vpop.permute.xlu0 %3571
        %3573 = vrot.lane.b32.xlu0 %v2583, 31
        %v3574 = vpop.permute.xlu0 %3573
        %3575 = vrot.lane.b32.xlu0 %v2584, 31
        %v3576 = vpop.permute.xlu0 %3575
        %3577 = vrot.lane.b32.xlu0 %v2585, 31
        %v3578 = vpop.permute.xlu0 %3577
        %3579 = vrot.lane.b32.xlu0 %v2586, 31
        %v3580 = vpop.permute.xlu0 %3579
        %v3581 = vsel %vm1324, %v3572, %v3574
        %v3582 = vsel %vm1324, %v3574, %v3576
        %v3583 = vsel %vm1324, %v3576, %v3578
        %v3584 = vsel %vm1324, %v3578, %v3580
        %v3590 = vsel %vm340, %v3570, 0
        %3592 = vmatprep.subr.bf16.mxu0 0
        %3593 = vmatpush1.bf16.msra.mxu0 0
        %3594 = vmatprep.subr.bf16.mxu0 0
        %3595 = vmatpush1.bf16.msra.mxu0 0
        %3596 = vmatprep.subr.bf16.mxu0 0
        %3597 = vmatpush1.bf16.msra.mxu0 0
        %3598 = vmatprep.subr.bf16.mxu0 0
        %3599 = vmatpush1.bf16.msra.mxu0 0
        %3600 = vmatprep.subr.bf16.mxu0 0
        %3601 = vmatpush1.bf16.msra.mxu0 0
        %3602 = vmatprep.subr.bf16.mxu0 0
        %3603 = vmatpush1.bf16.msra.mxu0 0
        %3604 = vmatprep.subr.bf16.mxu0 0
        %3605 = vmatpush1.bf16.msra.mxu0 0
        %3606 = vmatprep.subr.bf16.mxu0 %v3582
        %3607 = vmatpush1.bf16.msra.mxu0 %v3581
        %3608 = vmatprep.subr.bf16.mxu0 0
        %3609 = vmatpush2.bf16.msra.mxu0 0
        %3610 = vmatprep.subr.bf16.mxu0 0
        %3611 = vmatpush2.bf16.msra.mxu0 0
        %3612 = vmatprep.subr.bf16.mxu0 0
        %3613 = vmatpush2.bf16.msra.mxu0 0
        %3614 = vmatprep.subr.bf16.mxu0 0
        %3615 = vmatpush2.bf16.msra.mxu0 0
        %3616 = vmatprep.subr.bf16.mxu0 0
        %3617 = vmatpush2.bf16.msra.mxu0 0
        %3618 = vmatprep.subr.bf16.mxu0 0
        %3619 = vmatpush2.bf16.msra.mxu0 0
        %3620 = vmatprep.subr.bf16.mxu0 0
        %3621 = vmatpush2.bf16.msra.mxu0 0
        %3622 = vmatprep.subr.bf16.mxu0 0
        %3623 = vmatpush2.bf16.msra.mxu0 0
        %3624 = vmatprep.mubr.bf16.mxu0 0
        %3625 = vmatmul.mubr.bf16.gmra.mxu0 %v3590
        %v3626 = vpop.f32.mrf.mxu0
        %v3627 = vadd.f32 0.0, %v3626
        %v3628 = vpop.f32.mrf.mxu0
        %v3629 = vadd.f32 0.0, %v3628
        %v3630 = vpop.f32.mrf.mxu0
        %v3631 = vadd.f32 0.0, %v3630
        %v3632 = vpop.f32.mrf.mxu0
        %v3633 = vadd.f32 0.0, %v3632
        %3634 = vdwg.mxu0
        %3635 = vmatprep.subr.bf16.mxu0 0
        %3636 = vmatpush1.bf16.msra.mxu0 0
        %3637 = vmatprep.subr.bf16.mxu0 0
        %3638 = vmatpush1.bf16.msra.mxu0 0
        %3639 = vmatprep.subr.bf16.mxu0 0
        %3640 = vmatpush1.bf16.msra.mxu0 0
        %3641 = vmatprep.subr.bf16.mxu0 0
        %3642 = vmatpush1.bf16.msra.mxu0 0
        %3643 = vmatprep.subr.bf16.mxu0 0
        %3644 = vmatpush1.bf16.msra.mxu0 0
        %3645 = vmatprep.subr.bf16.mxu0 0
        %3646 = vmatpush1.bf16.msra.mxu0 0
        %3647 = vmatprep.subr.bf16.mxu0 0
        %3648 = vmatpush1.bf16.msra.mxu0 0
        %3649 = vmatprep.subr.bf16.mxu0 %v3584
        %3650 = vmatpush1.bf16.msra.mxu0 %v3583
        %3651 = vmatprep.subr.bf16.mxu0 0
        %3652 = vmatpush2.bf16.msra.mxu0 0
        %3653 = vmatprep.subr.bf16.mxu0 0
        %3654 = vmatpush2.bf16.msra.mxu0 0
        %3655 = vmatprep.subr.bf16.mxu0 0
        %3656 = vmatpush2.bf16.msra.mxu0 0
        %3657 = vmatprep.subr.bf16.mxu0 0
        %3658 = vmatpush2.bf16.msra.mxu0 0
        %3659 = vmatprep.subr.bf16.mxu0 0
        %3660 = vmatpush2.bf16.msra.mxu0 0
        %3661 = vmatprep.subr.bf16.mxu0 0
        %3662 = vmatpush2.bf16.msra.mxu0 0
        %3663 = vmatprep.subr.bf16.mxu0 0
        %3664 = vmatpush2.bf16.msra.mxu0 0
        %3665 = vmatprep.subr.bf16.mxu0 0
        %3666 = vmatpush2.bf16.msra.mxu0 0
        %3667 = vmatprep.mubr.bf16.mxu0 0
        %3668 = vmatmul.mubr.bf16.gmra.mxu0 %v3590
        %v3669 = vpop.f32.mrf.mxu0
        %v3670 = vadd.f32 0.0, %v3669
        %v3671 = vpop.f32.mrf.mxu0
        %v3672 = vadd.f32 0.0, %v3671
        %v3673 = vpop.f32.mrf.mxu0
        %v3674 = vadd.f32 0.0, %v3673
        %v3675 = vpop.f32.mrf.mxu0
        %v3676 = vadd.f32 0.0, %v3675
        %3677 = vdwg.mxu0
        %v3678 = vadd.f32 %v3555, %v3627
        %v3679 = vadd.f32 %v3556, %v3629
        %v3680 = vadd.f32 %v3557, %v3670
        %v3681 = vadd.f32 %v3558, %v3672
        %v3682 = vadd.f32 %v3559, %v3631
        %v3683 = vadd.f32 %v3560, %v3633
        %v3684 = vadd.f32 %v3561, %v3674
        %v3685 = vadd.f32 %v3562, %v3676
        %3686 = vst [vmem:[%s136] sm:$0xff] %v3678
        %3687 = vst [vmem:[%s136 + $0x8] sm:$0xff] %v3679
        %3688 = vst [vmem:[%s136 + $0x10] sm:$0xff] %v3680
        %3689 = vst [vmem:[%s136 + $0x18] sm:$0xff] %v3681
        %3690 = vst [vmem:[%s136 + $0x30] sm:$0xff] %v3682
        %3691 = vst [vmem:[%s136 + $0x38] sm:$0xff] %v3683
        %3692 = vst [vmem:[%s136 + $0x40] sm:$0xff] %v3684
        %3693 = vst [vmem:[%s136 + $0x48] sm:$0xff] %v3685
        %v3694 = vld [vmem:[%s264 + $0x10] sm:$0xff]
        %v3695 = vld [vmem:[%s264 + $0x18] sm:$0xf]
        %v3696 = vld [vmem:[%s264 + $0x2c] sm:$0xff]
        %v3697 = vld [vmem:[%s264 + $0x34] sm:$0xf]
        %v3698 = vld [vmem:[%s275 + $0x10] sm:$0xff]
        %v3699 = vld [vmem:[%s275 + $0x18] sm:$0xf]
        %v3700 = vld [vmem:[%s275 + $0x2c] sm:$0xff]
        %v3701 = vld [vmem:[%s275 + $0x34] sm:$0xf]
        %v3702 = vld [vmem:[%s286 + $0x10] sm:$0xff]
        %v3703 = vld [vmem:[%s286 + $0x18] sm:$0xf]
        %v3704 = vld [vmem:[%s286 + $0x2c] sm:$0xff]
        %v3705 = vld [vmem:[%s286 + $0x34] sm:$0xf]
        %v3706 = vld [vmem:[%s0] sm:$0xf]
        %v3707 = vld [vmem:[%s0 + $0x4] sm:$0xf]
        %v3710 = vunpack.c.l.b16 %v3706
        %v3711 = vunpack.c.l.b16 %v3707
        %v3712 = vpack.c.b16 %v3711, %v3710
        %v3717 = vunpack.c.l.b16 %v3694
        %v3718 = vunpack.c.h.b16 %v3694
        %v3719 = vunpack.c.l.b16 %v3695
        %v3720 = vunpack.c.l.b16 %v3696
        %v3721 = vunpack.c.h.b16 %v3696
        %v3722 = vunpack.c.l.b16 %v3697
        %v3723 = vpack.c.b16 %v3720, %v3717
        %v3724 = vpack.c.b16 %v3721, %v3718
        %v3725 = vpack.c.b16 %v3722, %v3719
        %3726 = vrot.lane.b32.xlu0 %v3723, 97
        %v3727 = vpop.permute.xlu0 %3726
        %3728 = vrot.lane.b32.xlu0 %v3724, 97
        %v3729 = vpop.permute.xlu0 %3728
        %3730 = vrot.lane.b32.xlu0 %v3725, 97
        %v3731 = vpop.permute.xlu0 %3730
        %v3732 = vsel %vm331, %v3727, %v3729
        %v3733 = vsel %vm331, %v3729, %v3731
        %v3737 = vsel %vm340, %v3712, 0
        %3739 = vmatprep.subr.bf16.mxu0 0
        %3740 = vmatpush1.bf16.msra.mxu0 0
        %3741 = vmatprep.subr.bf16.mxu0 0
        %3742 = vmatpush1.bf16.msra.mxu0 0
        %3743 = vmatprep.subr.bf16.mxu0 0
        %3744 = vmatpush1.bf16.msra.mxu0 0
        %3745 = vmatprep.subr.bf16.mxu0 0
        %3746 = vmatpush1.bf16.msra.mxu0 0
        %3747 = vmatprep.subr.bf16.mxu0 0
        %3748 = vmatpush1.bf16.msra.mxu0 0
        %3749 = vmatprep.subr.bf16.mxu0 0
        %3750 = vmatpush1.bf16.msra.mxu0 0
        %3751 = vmatprep.subr.bf16.mxu0 0
        %3752 = vmatpush1.bf16.msra.mxu0 0
        %3753 = vmatprep.subr.bf16.mxu0 %v3733
        %3754 = vmatpush1.bf16.msra.mxu0 %v3732
        %3755 = vmatprep.subr.bf16.mxu0 0
        %3756 = vmatpush2.bf16.msra.mxu0 0
        %3757 = vmatprep.subr.bf16.mxu0 0
        %3758 = vmatpush2.bf16.msra.mxu0 0
        %3759 = vmatprep.subr.bf16.mxu0 0
        %3760 = vmatpush2.bf16.msra.mxu0 0
        %3761 = vmatprep.subr.bf16.mxu0 0
        %3762 = vmatpush2.bf16.msra.mxu0 0
        %3763 = vmatprep.subr.bf16.mxu0 0
        %3764 = vmatpush2.bf16.msra.mxu0 0
        %3765 = vmatprep.subr.bf16.mxu0 0
        %3766 = vmatpush2.bf16.msra.mxu0 0
        %3767 = vmatprep.subr.bf16.mxu0 0
        %3768 = vmatpush2.bf16.msra.mxu0 0
        %3769 = vmatprep.subr.bf16.mxu0 0
        %3770 = vmatpush2.bf16.msra.mxu0 0
        %3771 = vmatprep.mubr.bf16.mxu0 0
        %3772 = vmatmul.mubr.bf16.gmra.mxu0 %v3737
        %v3773 = vpop.f32.mrf.mxu0
        %v3774 = vadd.f32 0.0, %v3773
        %v3775 = vpop.f32.mrf.mxu0
        %v3776 = vadd.f32 0.0, %v3775
        %v3777 = vpop.f32.mrf.mxu0
        %v3778 = vadd.f32 0.0, %v3777
        %v3779 = vpop.f32.mrf.mxu0
        %v3780 = vadd.f32 0.0, %v3779
        %3781 = vdwg.mxu0
        %v3782 = vadd.f32 %v254, %v3774
        %v3783 = vadd.f32 %v254, %v3776
        %v3784 = vadd.f32 %v259, %v3778
        %v3785 = vadd.f32 %v259, %v3780
        %v3786 = vld [vmem:[%s438] sm:$0xf]
        %v3787 = vld [vmem:[%s438 + $0x4] sm:$0xf]
        %v3790 = vunpack.c.l.b16 %v3786
        %v3791 = vunpack.c.l.b16 %v3787
        %v3792 = vpack.c.b16 %v3791, %v3790
        %3793 = vrot.lane.b32.xlu0 %v3723, 96
        %v3794 = vpop.permute.xlu0 %3793
        %3795 = vrot.lane.b32.xlu0 %v3724, 96
        %v3796 = vpop.permute.xlu0 %3795
        %3797 = vrot.lane.b32.xlu0 %v3725, 96
        %v3798 = vpop.permute.xlu0 %3797
        %v3799 = vsel %vm456, %v3794, %v3796
        %v3800 = vsel %vm456, %v3796, %v3798
        %v3804 = vsel %vm340, %v3792, 0
        %3806 = vmatprep.subr.bf16.mxu0 0
        %3807 = vmatpush1.bf16.msra.mxu0 0
        %3808 = vmatprep.subr.bf16.mxu0 0
        %3809 = vmatpush1.bf16.msra.mxu0 0
        %3810 = vmatprep.subr.bf16.mxu0 0
        %3811 = vmatpush1.bf16.msra.mxu0 0
        %3812 = vmatprep.subr.bf16.mxu0 0
        %3813 = vmatpush1.bf16.msra.mxu0 0
        %3814 = vmatprep.subr.bf16.mxu0 0
        %3815 = vmatpush1.bf16.msra.mxu0 0
        %3816 = vmatprep.subr.bf16.mxu0 0
        %3817 = vmatpush1.bf16.msra.mxu0 0
        %3818 = vmatprep.subr.bf16.mxu0 0
        %3819 = vmatpush1.bf16.msra.mxu0 0
        %3820 = vmatprep.subr.bf16.mxu0 %v3800
        %3821 = vmatpush1.bf16.msra.mxu0 %v3799
        %3822 = vmatprep.subr.bf16.mxu0 0
        %3823 = vmatpush2.bf16.msra.mxu0 0
        %3824 = vmatprep.subr.bf16.mxu0 0
        %3825 = vmatpush2.bf16.msra.mxu0 0
        %3826 = vmatprep.subr.bf16.mxu0 0
        %3827 = vmatpush2.bf16.msra.mxu0 0
        %3828 = vmatprep.subr.bf16.mxu0 0
        %3829 = vmatpush2.bf16.msra.mxu0 0
        %3830 = vmatprep.subr.bf16.mxu0 0
        %3831 = vmatpush2.bf16.msra.mxu0 0
        %3832 = vmatprep.subr.bf16.mxu0 0
        %3833 = vmatpush2.bf16.msra.mxu0 0
        %3834 = vmatprep.subr.bf16.mxu0 0
        %3835 = vmatpush2.bf16.msra.mxu0 0
        %3836 = vmatprep.subr.bf16.mxu0 0
        %3837 = vmatpush2.bf16.msra.mxu0 0
        %3838 = vmatprep.mubr.bf16.mxu0 0
        %3839 = vmatmul.mubr.bf16.gmra.mxu0 %v3804
        %v3840 = vpop.f32.mrf.mxu0
        %v3841 = vadd.f32 0.0, %v3840
        %v3842 = vpop.f32.mrf.mxu0
        %v3843 = vadd.f32 0.0, %v3842
        %v3844 = vpop.f32.mrf.mxu0
        %v3845 = vadd.f32 0.0, %v3844
        %v3846 = vpop.f32.mrf.mxu0
        %v3847 = vadd.f32 0.0, %v3846
        %3848 = vdwg.mxu0
        %v3849 = vadd.f32 %v3782, %v3841
        %v3850 = vadd.f32 %v3783, %v3843
        %v3851 = vadd.f32 %v3784, %v3845
        %v3852 = vadd.f32 %v3785, %v3847
        %v3853 = vld [vmem:[%s562] sm:$0xf]
        %v3854 = vld [vmem:[%s562 + $0x4] sm:$0xf]
        %v3857 = vunpack.c.l.b16 %v3853
        %v3858 = vunpack.c.l.b16 %v3854
        %v3859 = vpack.c.b16 %v3858, %v3857
        %3860 = vrot.lane.b32.xlu0 %v3723, 95
        %v3861 = vpop.permute.xlu0 %3860
        %3862 = vrot.lane.b32.xlu0 %v3724, 95
        %v3863 = vpop.permute.xlu0 %3862
        %3864 = vrot.lane.b32.xlu0 %v3725, 95
        %v3865 = vpop.permute.xlu0 %3864
        %v3866 = vsel %vm580, %v3861, %v3863
        %v3867 = vsel %vm580, %v3863, %v3865
        %v3871 = vsel %vm340, %v3859, 0
        %3873 = vmatprep.subr.bf16.mxu0 0
        %3874 = vmatpush1.bf16.msra.mxu0 0
        %3875 = vmatprep.subr.bf16.mxu0 0
        %3876 = vmatpush1.bf16.msra.mxu0 0
        %3877 = vmatprep.subr.bf16.mxu0 0
        %3878 = vmatpush1.bf16.msra.mxu0 0
        %3879 = vmatprep.subr.bf16.mxu0 0
        %3880 = vmatpush1.bf16.msra.mxu0 0
        %3881 = vmatprep.subr.bf16.mxu0 0
        %3882 = vmatpush1.bf16.msra.mxu0 0
        %3883 = vmatprep.subr.bf16.mxu0 0
        %3884 = vmatpush1.bf16.msra.mxu0 0
        %3885 = vmatprep.subr.bf16.mxu0 0
        %3886 = vmatpush1.bf16.msra.mxu0 0
        %3887 = vmatprep.subr.bf16.mxu0 %v3867
        %3888 = vmatpush1.bf16.msra.mxu0 %v3866
        %3889 = vmatprep.subr.bf16.mxu0 0
        %3890 = vmatpush2.bf16.msra.mxu0 0
        %3891 = vmatprep.subr.bf16.mxu0 0
        %3892 = vmatpush2.bf16.msra.mxu0 0
        %3893 = vmatprep.subr.bf16.mxu0 0
        %3894 = vmatpush2.bf16.msra.mxu0 0
        %3895 = vmatprep.subr.bf16.mxu0 0
        %3896 = vmatpush2.bf16.msra.mxu0 0
        %3897 = vmatprep.subr.bf16.mxu0 0
        %3898 = vmatpush2.bf16.msra.mxu0 0
        %3899 = vmatprep.subr.bf16.mxu0 0
        %3900 = vmatpush2.bf16.msra.mxu0 0
        %3901 = vmatprep.subr.bf16.mxu0 0
        %3902 = vmatpush2.bf16.msra.mxu0 0
        %3903 = vmatprep.subr.bf16.mxu0 0
        %3904 = vmatpush2.bf16.msra.mxu0 0
        %3905 = vmatprep.mubr.bf16.mxu0 0
        %3906 = vmatmul.mubr.bf16.gmra.mxu0 %v3871
        %v3907 = vpop.f32.mrf.mxu0
        %v3908 = vadd.f32 0.0, %v3907
        %v3909 = vpop.f32.mrf.mxu0
        %v3910 = vadd.f32 0.0, %v3909
        %v3911 = vpop.f32.mrf.mxu0
        %v3912 = vadd.f32 0.0, %v3911
        %v3913 = vpop.f32.mrf.mxu0
        %v3914 = vadd.f32 0.0, %v3913
        %3915 = vdwg.mxu0
        %v3916 = vadd.f32 %v3849, %v3908
        %v3917 = vadd.f32 %v3850, %v3910
        %v3918 = vadd.f32 %v3851, %v3912
        %v3919 = vadd.f32 %v3852, %v3914
        %v3920 = vld [vmem:[%s686] sm:$0xf]
        %v3921 = vld [vmem:[%s686 + $0x4] sm:$0xf]
        %v3924 = vunpack.c.l.b16 %v3920
        %v3925 = vunpack.c.l.b16 %v3921
        %v3926 = vpack.c.b16 %v3925, %v3924
        %3927 = vrot.lane.b32.xlu0 %v3723, 65
        %v3928 = vpop.permute.xlu0 %3927
        %3929 = vrot.lane.b32.xlu0 %v3724, 65
        %v3930 = vpop.permute.xlu0 %3929
        %3931 = vrot.lane.b32.xlu0 %v3725, 65
        %v3932 = vpop.permute.xlu0 %3931
        %v3933 = vsel %vm704, %v3928, %v3930
        %v3934 = vsel %vm704, %v3930, %v3932
        %v3938 = vsel %vm340, %v3926, 0
        %3940 = vmatprep.subr.bf16.mxu0 0
        %3941 = vmatpush1.bf16.msra.mxu0 0
        %3942 = vmatprep.subr.bf16.mxu0 0
        %3943 = vmatpush1.bf16.msra.mxu0 0
        %3944 = vmatprep.subr.bf16.mxu0 0
        %3945 = vmatpush1.bf16.msra.mxu0 0
        %3946 = vmatprep.subr.bf16.mxu0 0
        %3947 = vmatpush1.bf16.msra.mxu0 0
        %3948 = vmatprep.subr.bf16.mxu0 0
        %3949 = vmatpush1.bf16.msra.mxu0 0
        %3950 = vmatprep.subr.bf16.mxu0 0
        %3951 = vmatpush1.bf16.msra.mxu0 0
        %3952 = vmatprep.subr.bf16.mxu0 0
        %3953 = vmatpush1.bf16.msra.mxu0 0
        %3954 = vmatprep.subr.bf16.mxu0 %v3934
        %3955 = vmatpush1.bf16.msra.mxu0 %v3933
        %3956 = vmatprep.subr.bf16.mxu0 0
        %3957 = vmatpush2.bf16.msra.mxu0 0
        %3958 = vmatprep.subr.bf16.mxu0 0
        %3959 = vmatpush2.bf16.msra.mxu0 0
        %3960 = vmatprep.subr.bf16.mxu0 0
        %3961 = vmatpush2.bf16.msra.mxu0 0
        %3962 = vmatprep.subr.bf16.mxu0 0
        %3963 = vmatpush2.bf16.msra.mxu0 0
        %3964 = vmatprep.subr.bf16.mxu0 0
        %3965 = vmatpush2.bf16.msra.mxu0 0
        %3966 = vmatprep.subr.bf16.mxu0 0
        %3967 = vmatpush2.bf16.msra.mxu0 0
        %3968 = vmatprep.subr.bf16.mxu0 0
        %3969 = vmatpush2.bf16.msra.mxu0 0
        %3970 = vmatprep.subr.bf16.mxu0 0
        %3971 = vmatpush2.bf16.msra.mxu0 0
        %3972 = vmatprep.mubr.bf16.mxu0 0
        %3973 = vmatmul.mubr.bf16.gmra.mxu0 %v3938
        %v3974 = vpop.f32.mrf.mxu0
        %v3975 = vadd.f32 0.0, %v3974
        %v3976 = vpop.f32.mrf.mxu0
        %v3977 = vadd.f32 0.0, %v3976
        %v3978 = vpop.f32.mrf.mxu0
        %v3979 = vadd.f32 0.0, %v3978
        %v3980 = vpop.f32.mrf.mxu0
        %v3981 = vadd.f32 0.0, %v3980
        %3982 = vdwg.mxu0
        %v3983 = vadd.f32 %v3916, %v3975
        %v3984 = vadd.f32 %v3917, %v3977
        %v3985 = vadd.f32 %v3918, %v3979
        %v3986 = vadd.f32 %v3919, %v3981
        %v3987 = vld [vmem:[%s810] sm:$0xf]
        %v3988 = vld [vmem:[%s810 + $0x4] sm:$0xf]
        %v3991 = vunpack.c.l.b16 %v3987
        %v3992 = vunpack.c.l.b16 %v3988
        %v3993 = vpack.c.b16 %v3992, %v3991
        %3994 = vrot.lane.b32.xlu0 %v3723, 64
        %v3995 = vpop.permute.xlu0 %3994
        %3996 = vrot.lane.b32.xlu0 %v3724, 64
        %v3997 = vpop.permute.xlu0 %3996
        %3998 = vrot.lane.b32.xlu0 %v3725, 64
        %v3999 = vpop.permute.xlu0 %3998
        %v4000 = vsel %vm828, %v3995, %v3997
        %v4001 = vsel %vm828, %v3997, %v3999
        %v4005 = vsel %vm340, %v3993, 0
        %4007 = vmatprep.subr.bf16.mxu0 0
        %4008 = vmatpush1.bf16.msra.mxu0 0
        %4009 = vmatprep.subr.bf16.mxu0 0
        %4010 = vmatpush1.bf16.msra.mxu0 0
        %4011 = vmatprep.subr.bf16.mxu0 0
        %4012 = vmatpush1.bf16.msra.mxu0 0
        %4013 = vmatprep.subr.bf16.mxu0 0
        %4014 = vmatpush1.bf16.msra.mxu0 0
        %4015 = vmatprep.subr.bf16.mxu0 0
        %4016 = vmatpush1.bf16.msra.mxu0 0
        %4017 = vmatprep.subr.bf16.mxu0 0
        %4018 = vmatpush1.bf16.msra.mxu0 0
        %4019 = vmatprep.subr.bf16.mxu0 0
        %4020 = vmatpush1.bf16.msra.mxu0 0
        %4021 = vmatprep.subr.bf16.mxu0 %v4001
        %4022 = vmatpush1.bf16.msra.mxu0 %v4000
        %4023 = vmatprep.subr.bf16.mxu0 0
        %4024 = vmatpush2.bf16.msra.mxu0 0
        %4025 = vmatprep.subr.bf16.mxu0 0
        %4026 = vmatpush2.bf16.msra.mxu0 0
        %4027 = vmatprep.subr.bf16.mxu0 0
        %4028 = vmatpush2.bf16.msra.mxu0 0
        %4029 = vmatprep.subr.bf16.mxu0 0
        %4030 = vmatpush2.bf16.msra.mxu0 0
        %4031 = vmatprep.subr.bf16.mxu0 0
        %4032 = vmatpush2.bf16.msra.mxu0 0
        %4033 = vmatprep.subr.bf16.mxu0 0
        %4034 = vmatpush2.bf16.msra.mxu0 0
        %4035 = vmatprep.subr.bf16.mxu0 0
        %4036 = vmatpush2.bf16.msra.mxu0 0
        %4037 = vmatprep.subr.bf16.mxu0 0
        %4038 = vmatpush2.bf16.msra.mxu0 0
        %4039 = vmatprep.mubr.bf16.mxu0 0
        %4040 = vmatmul.mubr.bf16.gmra.mxu0 %v4005
        %v4041 = vpop.f32.mrf.mxu0
        %v4042 = vadd.f32 0.0, %v4041
        %v4043 = vpop.f32.mrf.mxu0
        %v4044 = vadd.f32 0.0, %v4043
        %v4045 = vpop.f32.mrf.mxu0
        %v4046 = vadd.f32 0.0, %v4045
        %v4047 = vpop.f32.mrf.mxu0
        %v4048 = vadd.f32 0.0, %v4047
        %4049 = vdwg.mxu0
        %v4050 = vadd.f32 %v3983, %v4042
        %v4051 = vadd.f32 %v3984, %v4044
        %v4052 = vadd.f32 %v3985, %v4046
        %v4053 = vadd.f32 %v3986, %v4048
        %v4054 = vld [vmem:[%s934] sm:$0xf]
        %v4055 = vld [vmem:[%s934 + $0x4] sm:$0xf]
        %v4058 = vunpack.c.l.b16 %v4054
        %v4059 = vunpack.c.l.b16 %v4055
        %v4060 = vpack.c.b16 %v4059, %v4058
        %4061 = vrot.lane.b32.xlu0 %v3723, 63
        %v4062 = vpop.permute.xlu0 %4061
        %4063 = vrot.lane.b32.xlu0 %v3724, 63
        %v4064 = vpop.permute.xlu0 %4063
        %4065 = vrot.lane.b32.xlu0 %v3725, 63
        %v4066 = vpop.permute.xlu0 %4065
        %v4067 = vsel %vm952, %v4062, %v4064
        %v4068 = vsel %vm952, %v4064, %v4066
        %v4072 = vsel %vm340, %v4060, 0
        %4074 = vmatprep.subr.bf16.mxu0 0
        %4075 = vmatpush1.bf16.msra.mxu0 0
        %4076 = vmatprep.subr.bf16.mxu0 0
        %4077 = vmatpush1.bf16.msra.mxu0 0
        %4078 = vmatprep.subr.bf16.mxu0 0
        %4079 = vmatpush1.bf16.msra.mxu0 0
        %4080 = vmatprep.subr.bf16.mxu0 0
        %4081 = vmatpush1.bf16.msra.mxu0 0
        %4082 = vmatprep.subr.bf16.mxu0 0
        %4083 = vmatpush1.bf16.msra.mxu0 0
        %4084 = vmatprep.subr.bf16.mxu0 0
        %4085 = vmatpush1.bf16.msra.mxu0 0
        %4086 = vmatprep.subr.bf16.mxu0 0
        %4087 = vmatpush1.bf16.msra.mxu0 0
        %4088 = vmatprep.subr.bf16.mxu0 %v4068
        %4089 = vmatpush1.bf16.msra.mxu0 %v4067
        %4090 = vmatprep.subr.bf16.mxu0 0
        %4091 = vmatpush2.bf16.msra.mxu0 0
        %4092 = vmatprep.subr.bf16.mxu0 0
        %4093 = vmatpush2.bf16.msra.mxu0 0
        %4094 = vmatprep.subr.bf16.mxu0 0
        %4095 = vmatpush2.bf16.msra.mxu0 0
        %4096 = vmatprep.subr.bf16.mxu0 0
        %4097 = vmatpush2.bf16.msra.mxu0 0
        %4098 = vmatprep.subr.bf16.mxu0 0
        %4099 = vmatpush2.bf16.msra.mxu0 0
        %4100 = vmatprep.subr.bf16.mxu0 0
        %4101 = vmatpush2.bf16.msra.mxu0 0
        %4102 = vmatprep.subr.bf16.mxu0 0
        %4103 = vmatpush2.bf16.msra.mxu0 0
        %4104 = vmatprep.subr.bf16.mxu0 0
        %4105 = vmatpush2.bf16.msra.mxu0 0
        %4106 = vmatprep.mubr.bf16.mxu0 0
        %4107 = vmatmul.mubr.bf16.gmra.mxu0 %v4072
        %v4108 = vpop.f32.mrf.mxu0
        %v4109 = vadd.f32 0.0, %v4108
        %v4110 = vpop.f32.mrf.mxu0
        %v4111 = vadd.f32 0.0, %v4110
        %v4112 = vpop.f32.mrf.mxu0
        %v4113 = vadd.f32 0.0, %v4112
        %v4114 = vpop.f32.mrf.mxu0
        %v4115 = vadd.f32 0.0, %v4114
        %4116 = vdwg.mxu0
        %v4117 = vadd.f32 %v4050, %v4109
        %v4118 = vadd.f32 %v4051, %v4111
        %v4119 = vadd.f32 %v4052, %v4113
        %v4120 = vadd.f32 %v4053, %v4115
        %v4121 = vld [vmem:[%s1058] sm:$0xf]
        %v4122 = vld [vmem:[%s1058 + $0x4] sm:$0xf]
        %v4125 = vunpack.c.l.b16 %v4121
        %v4126 = vunpack.c.l.b16 %v4122
        %v4127 = vpack.c.b16 %v4126, %v4125
        %4128 = vrot.lane.b32.xlu0 %v3723, 33
        %v4129 = vpop.permute.xlu0 %4128
        %4130 = vrot.lane.b32.xlu0 %v3724, 33
        %v4131 = vpop.permute.xlu0 %4130
        %4132 = vrot.lane.b32.xlu0 %v3725, 33
        %v4133 = vpop.permute.xlu0 %4132
        %v4134 = vsel %vm1076, %v4129, %v4131
        %v4135 = vsel %vm1076, %v4131, %v4133
        %v4139 = vsel %vm340, %v4127, 0
        %4141 = vmatprep.subr.bf16.mxu0 0
        %4142 = vmatpush1.bf16.msra.mxu0 0
        %4143 = vmatprep.subr.bf16.mxu0 0
        %4144 = vmatpush1.bf16.msra.mxu0 0
        %4145 = vmatprep.subr.bf16.mxu0 0
        %4146 = vmatpush1.bf16.msra.mxu0 0
        %4147 = vmatprep.subr.bf16.mxu0 0
        %4148 = vmatpush1.bf16.msra.mxu0 0
        %4149 = vmatprep.subr.bf16.mxu0 0
        %4150 = vmatpush1.bf16.msra.mxu0 0
        %4151 = vmatprep.subr.bf16.mxu0 0
        %4152 = vmatpush1.bf16.msra.mxu0 0
        %4153 = vmatprep.subr.bf16.mxu0 0
        %4154 = vmatpush1.bf16.msra.mxu0 0
        %4155 = vmatprep.subr.bf16.mxu0 %v4135
        %4156 = vmatpush1.bf16.msra.mxu0 %v4134
        %4157 = vmatprep.subr.bf16.mxu0 0
        %4158 = vmatpush2.bf16.msra.mxu0 0
        %4159 = vmatprep.subr.bf16.mxu0 0
        %4160 = vmatpush2.bf16.msra.mxu0 0
        %4161 = vmatprep.subr.bf16.mxu0 0
        %4162 = vmatpush2.bf16.msra.mxu0 0
        %4163 = vmatprep.subr.bf16.mxu0 0
        %4164 = vmatpush2.bf16.msra.mxu0 0
        %4165 = vmatprep.subr.bf16.mxu0 0
        %4166 = vmatpush2.bf16.msra.mxu0 0
        %4167 = vmatprep.subr.bf16.mxu0 0
        %4168 = vmatpush2.bf16.msra.mxu0 0
        %4169 = vmatprep.subr.bf16.mxu0 0
        %4170 = vmatpush2.bf16.msra.mxu0 0
        %4171 = vmatprep.subr.bf16.mxu0 0
        %4172 = vmatpush2.bf16.msra.mxu0 0
        %4173 = vmatprep.mubr.bf16.mxu0 0
        %4174 = vmatmul.mubr.bf16.gmra.mxu0 %v4139
        %v4175 = vpop.f32.mrf.mxu0
        %v4176 = vadd.f32 0.0, %v4175
        %v4177 = vpop.f32.mrf.mxu0
        %v4178 = vadd.f32 0.0, %v4177
        %v4179 = vpop.f32.mrf.mxu0
        %v4180 = vadd.f32 0.0, %v4179
        %v4181 = vpop.f32.mrf.mxu0
        %v4182 = vadd.f32 0.0, %v4181
        %4183 = vdwg.mxu0
        %v4184 = vadd.f32 %v4117, %v4176
        %v4185 = vadd.f32 %v4118, %v4178
        %v4186 = vadd.f32 %v4119, %v4180
        %v4187 = vadd.f32 %v4120, %v4182
        %v4188 = vld [vmem:[%s1182] sm:$0xf]
        %v4189 = vld [vmem:[%s1182 + $0x4] sm:$0xf]
        %v4192 = vunpack.c.l.b16 %v4188
        %v4193 = vunpack.c.l.b16 %v4189
        %v4194 = vpack.c.b16 %v4193, %v4192
        %4195 = vrot.lane.b32.xlu0 %v3723, 32
        %v4196 = vpop.permute.xlu0 %4195
        %4197 = vrot.lane.b32.xlu0 %v3724, 32
        %v4198 = vpop.permute.xlu0 %4197
        %4199 = vrot.lane.b32.xlu0 %v3725, 32
        %v4200 = vpop.permute.xlu0 %4199
        %v4201 = vsel %vm1200, %v4196, %v4198
        %v4202 = vsel %vm1200, %v4198, %v4200
        %v4206 = vsel %vm340, %v4194, 0
        %4208 = vmatprep.subr.bf16.mxu0 0
        %4209 = vmatpush1.bf16.msra.mxu0 0
        %4210 = vmatprep.subr.bf16.mxu0 0
        %4211 = vmatpush1.bf16.msra.mxu0 0
        %4212 = vmatprep.subr.bf16.mxu0 0
        %4213 = vmatpush1.bf16.msra.mxu0 0
        %4214 = vmatprep.subr.bf16.mxu0 0
        %4215 = vmatpush1.bf16.msra.mxu0 0
        %4216 = vmatprep.subr.bf16.mxu0 0
        %4217 = vmatpush1.bf16.msra.mxu0 0
        %4218 = vmatprep.subr.bf16.mxu0 0
        %4219 = vmatpush1.bf16.msra.mxu0 0
        %4220 = vmatprep.subr.bf16.mxu0 0
        %4221 = vmatpush1.bf16.msra.mxu0 0
        %4222 = vmatprep.subr.bf16.mxu0 %v4202
        %4223 = vmatpush1.bf16.msra.mxu0 %v4201
        %4224 = vmatprep.subr.bf16.mxu0 0
        %4225 = vmatpush2.bf16.msra.mxu0 0
        %4226 = vmatprep.subr.bf16.mxu0 0
        %4227 = vmatpush2.bf16.msra.mxu0 0
        %4228 = vmatprep.subr.bf16.mxu0 0
        %4229 = vmatpush2.bf16.msra.mxu0 0
        %4230 = vmatprep.subr.bf16.mxu0 0
        %4231 = vmatpush2.bf16.msra.mxu0 0
        %4232 = vmatprep.subr.bf16.mxu0 0
        %4233 = vmatpush2.bf16.msra.mxu0 0
        %4234 = vmatprep.subr.bf16.mxu0 0
        %4235 = vmatpush2.bf16.msra.mxu0 0
        %4236 = vmatprep.subr.bf16.mxu0 0
        %4237 = vmatpush2.bf16.msra.mxu0 0
        %4238 = vmatprep.subr.bf16.mxu0 0
        %4239 = vmatpush2.bf16.msra.mxu0 0
        %4240 = vmatprep.mubr.bf16.mxu0 0
        %4241 = vmatmul.mubr.bf16.gmra.mxu0 %v4206
        %v4242 = vpop.f32.mrf.mxu0
        %v4243 = vadd.f32 0.0, %v4242
        %v4244 = vpop.f32.mrf.mxu0
        %v4245 = vadd.f32 0.0, %v4244
        %v4246 = vpop.f32.mrf.mxu0
        %v4247 = vadd.f32 0.0, %v4246
        %v4248 = vpop.f32.mrf.mxu0
        %v4249 = vadd.f32 0.0, %v4248
        %4250 = vdwg.mxu0
        %v4251 = vadd.f32 %v4184, %v4243
        %v4252 = vadd.f32 %v4185, %v4245
        %v4253 = vadd.f32 %v4186, %v4247
        %v4254 = vadd.f32 %v4187, %v4249
        %v4255 = vld [vmem:[%s1306] sm:$0xf]
        %v4256 = vld [vmem:[%s1306 + $0x4] sm:$0xf]
        %v4259 = vunpack.c.l.b16 %v4255
        %v4260 = vunpack.c.l.b16 %v4256
        %v4261 = vpack.c.b16 %v4260, %v4259
        %4262 = vrot.lane.b32.xlu0 %v3723, 31
        %v4263 = vpop.permute.xlu0 %4262
        %4264 = vrot.lane.b32.xlu0 %v3724, 31
        %v4265 = vpop.permute.xlu0 %4264
        %4266 = vrot.lane.b32.xlu0 %v3725, 31
        %v4267 = vpop.permute.xlu0 %4266
        %v4268 = vsel %vm1324, %v4263, %v4265
        %v4269 = vsel %vm1324, %v4265, %v4267
        %v4273 = vsel %vm340, %v4261, 0
        %4275 = vmatprep.subr.bf16.mxu0 0
        %4276 = vmatpush1.bf16.msra.mxu0 0
        %4277 = vmatprep.subr.bf16.mxu0 0
        %4278 = vmatpush1.bf16.msra.mxu0 0
        %4279 = vmatprep.subr.bf16.mxu0 0
        %4280 = vmatpush1.bf16.msra.mxu0 0
        %4281 = vmatprep.subr.bf16.mxu0 0
        %4282 = vmatpush1.bf16.msra.mxu0 0
        %4283 = vmatprep.subr.bf16.mxu0 0
        %4284 = vmatpush1.bf16.msra.mxu0 0
        %4285 = vmatprep.subr.bf16.mxu0 0
        %4286 = vmatpush1.bf16.msra.mxu0 0
        %4287 = vmatprep.subr.bf16.mxu0 0
        %4288 = vmatpush1.bf16.msra.mxu0 0
        %4289 = vmatprep.subr.bf16.mxu0 %v4269
        %4290 = vmatpush1.bf16.msra.mxu0 %v4268
        %4291 = vmatprep.subr.bf16.mxu0 0
        %4292 = vmatpush2.bf16.msra.mxu0 0
        %4293 = vmatprep.subr.bf16.mxu0 0
        %4294 = vmatpush2.bf16.msra.mxu0 0
        %4295 = vmatprep.subr.bf16.mxu0 0
        %4296 = vmatpush2.bf16.msra.mxu0 0
        %4297 = vmatprep.subr.bf16.mxu0 0
        %4298 = vmatpush2.bf16.msra.mxu0 0
        %4299 = vmatprep.subr.bf16.mxu0 0
        %4300 = vmatpush2.bf16.msra.mxu0 0
        %4301 = vmatprep.subr.bf16.mxu0 0
        %4302 = vmatpush2.bf16.msra.mxu0 0
        %4303 = vmatprep.subr.bf16.mxu0 0
        %4304 = vmatpush2.bf16.msra.mxu0 0
        %4305 = vmatprep.subr.bf16.mxu0 0
        %4306 = vmatpush2.bf16.msra.mxu0 0
        %4307 = vmatprep.mubr.bf16.mxu0 0
        %4308 = vmatmul.mubr.bf16.gmra.mxu0 %v4273
        %v4309 = vpop.f32.mrf.mxu0
        %v4310 = vadd.f32 0.0, %v4309
        %v4311 = vpop.f32.mrf.mxu0
        %v4312 = vadd.f32 0.0, %v4311
        %v4313 = vpop.f32.mrf.mxu0
        %v4314 = vadd.f32 0.0, %v4313
        %v4315 = vpop.f32.mrf.mxu0
        %v4316 = vadd.f32 0.0, %v4315
        %4317 = vdwg.mxu0
        %v4318 = vadd.f32 %v4251, %v4310
        %v4319 = vadd.f32 %v4252, %v4312
        %v4320 = vadd.f32 %v4253, %v4314
        %v4321 = vadd.f32 %v4254, %v4316
        %v4322 = vld [vmem:[%s1430] sm:$0xf]
        %v4323 = vld [vmem:[%s1430 + $0x4] sm:$0xf]
        %v4326 = vunpack.c.l.b16 %v4322
        %v4327 = vunpack.c.l.b16 %v4323
        %v4328 = vpack.c.b16 %v4327, %v4326
        %v4333 = vunpack.c.l.b16 %v3698
        %v4334 = vunpack.c.h.b16 %v3698
        %v4335 = vunpack.c.l.b16 %v3699
        %v4336 = vunpack.c.l.b16 %v3700
        %v4337 = vunpack.c.h.b16 %v3700
        %v4338 = vunpack.c.l.b16 %v3701
        %v4339 = vpack.c.b16 %v4336, %v4333
        %v4340 = vpack.c.b16 %v4337, %v4334
        %v4341 = vpack.c.b16 %v4338, %v4335
        %4342 = vrot.lane.b32.xlu0 %v4339, 97
        %v4343 = vpop.permute.xlu0 %4342
        %4344 = vrot.lane.b32.xlu0 %v4340, 97
        %v4345 = vpop.permute.xlu0 %4344
        %4346 = vrot.lane.b32.xlu0 %v4341, 97
        %v4347 = vpop.permute.xlu0 %4346
        %v4348 = vsel %vm331, %v4343, %v4345
        %v4349 = vsel %vm331, %v4345, %v4347
        %v4353 = vsel %vm340, %v4328, 0
        %4355 = vmatprep.subr.bf16.mxu0 0
        %4356 = vmatpush1.bf16.msra.mxu0 0
        %4357 = vmatprep.subr.bf16.mxu0 0
        %4358 = vmatpush1.bf16.msra.mxu0 0
        %4359 = vmatprep.subr.bf16.mxu0 0
        %4360 = vmatpush1.bf16.msra.mxu0 0
        %4361 = vmatprep.subr.bf16.mxu0 0
        %4362 = vmatpush1.bf16.msra.mxu0 0
        %4363 = vmatprep.subr.bf16.mxu0 0
        %4364 = vmatpush1.bf16.msra.mxu0 0
        %4365 = vmatprep.subr.bf16.mxu0 0
        %4366 = vmatpush1.bf16.msra.mxu0 0
        %4367 = vmatprep.subr.bf16.mxu0 0
        %4368 = vmatpush1.bf16.msra.mxu0 0
        %4369 = vmatprep.subr.bf16.mxu0 %v4349
        %4370 = vmatpush1.bf16.msra.mxu0 %v4348
        %4371 = vmatprep.subr.bf16.mxu0 0
        %4372 = vmatpush2.bf16.msra.mxu0 0
        %4373 = vmatprep.subr.bf16.mxu0 0
        %4374 = vmatpush2.bf16.msra.mxu0 0
        %4375 = vmatprep.subr.bf16.mxu0 0
        %4376 = vmatpush2.bf16.msra.mxu0 0
        %4377 = vmatprep.subr.bf16.mxu0 0
        %4378 = vmatpush2.bf16.msra.mxu0 0
        %4379 = vmatprep.subr.bf16.mxu0 0
        %4380 = vmatpush2.bf16.msra.mxu0 0
        %4381 = vmatprep.subr.bf16.mxu0 0
        %4382 = vmatpush2.bf16.msra.mxu0 0
        %4383 = vmatprep.subr.bf16.mxu0 0
        %4384 = vmatpush2.bf16.msra.mxu0 0
        %4385 = vmatprep.subr.bf16.mxu0 0
        %4386 = vmatpush2.bf16.msra.mxu0 0
        %4387 = vmatprep.mubr.bf16.mxu0 0
        %4388 = vmatmul.mubr.bf16.gmra.mxu0 %v4353
        %v4389 = vpop.f32.mrf.mxu0
        %v4390 = vadd.f32 0.0, %v4389
        %v4391 = vpop.f32.mrf.mxu0
        %v4392 = vadd.f32 0.0, %v4391
        %v4393 = vpop.f32.mrf.mxu0
        %v4394 = vadd.f32 0.0, %v4393
        %v4395 = vpop.f32.mrf.mxu0
        %v4396 = vadd.f32 0.0, %v4395
        %4397 = vdwg.mxu0
        %v4398 = vadd.f32 %v4318, %v4390
        %v4399 = vadd.f32 %v4319, %v4392
        %v4400 = vadd.f32 %v4320, %v4394
        %v4401 = vadd.f32 %v4321, %v4396
        %v4402 = vld [vmem:[%s1574] sm:$0xf]
        %v4403 = vld [vmem:[%s1574 + $0x4] sm:$0xf]
        %v4406 = vunpack.c.l.b16 %v4402
        %v4407 = vunpack.c.l.b16 %v4403
        %v4408 = vpack.c.b16 %v4407, %v4406
        %4409 = vrot.lane.b32.xlu0 %v4339, 96
        %v4410 = vpop.permute.xlu0 %4409
        %4411 = vrot.lane.b32.xlu0 %v4340, 96
        %v4412 = vpop.permute.xlu0 %4411
        %4413 = vrot.lane.b32.xlu0 %v4341, 96
        %v4414 = vpop.permute.xlu0 %4413
        %v4415 = vsel %vm456, %v4410, %v4412
        %v4416 = vsel %vm456, %v4412, %v4414
        %v4420 = vsel %vm340, %v4408, 0
        %4422 = vmatprep.subr.bf16.mxu0 0
        %4423 = vmatpush1.bf16.msra.mxu0 0
        %4424 = vmatprep.subr.bf16.mxu0 0
        %4425 = vmatpush1.bf16.msra.mxu0 0
        %4426 = vmatprep.subr.bf16.mxu0 0
        %4427 = vmatpush1.bf16.msra.mxu0 0
        %4428 = vmatprep.subr.bf16.mxu0 0
        %4429 = vmatpush1.bf16.msra.mxu0 0
        %4430 = vmatprep.subr.bf16.mxu0 0
        %4431 = vmatpush1.bf16.msra.mxu0 0
        %4432 = vmatprep.subr.bf16.mxu0 0
        %4433 = vmatpush1.bf16.msra.mxu0 0
        %4434 = vmatprep.subr.bf16.mxu0 0
        %4435 = vmatpush1.bf16.msra.mxu0 0
        %4436 = vmatprep.subr.bf16.mxu0 %v4416
        %4437 = vmatpush1.bf16.msra.mxu0 %v4415
        %4438 = vmatprep.subr.bf16.mxu0 0
        %4439 = vmatpush2.bf16.msra.mxu0 0
        %4440 = vmatprep.subr.bf16.mxu0 0
        %4441 = vmatpush2.bf16.msra.mxu0 0
        %4442 = vmatprep.subr.bf16.mxu0 0
        %4443 = vmatpush2.bf16.msra.mxu0 0
        %4444 = vmatprep.subr.bf16.mxu0 0
        %4445 = vmatpush2.bf16.msra.mxu0 0
        %4446 = vmatprep.subr.bf16.mxu0 0
        %4447 = vmatpush2.bf16.msra.mxu0 0
        %4448 = vmatprep.subr.bf16.mxu0 0
        %4449 = vmatpush2.bf16.msra.mxu0 0
        %4450 = vmatprep.subr.bf16.mxu0 0
        %4451 = vmatpush2.bf16.msra.mxu0 0
        %4452 = vmatprep.subr.bf16.mxu0 0
        %4453 = vmatpush2.bf16.msra.mxu0 0
        %4454 = vmatprep.mubr.bf16.mxu0 0
        %4455 = vmatmul.mubr.bf16.gmra.mxu0 %v4420
        %v4456 = vpop.f32.mrf.mxu0
        %v4457 = vadd.f32 0.0, %v4456
        %v4458 = vpop.f32.mrf.mxu0
        %v4459 = vadd.f32 0.0, %v4458
        %v4460 = vpop.f32.mrf.mxu0
        %v4461 = vadd.f32 0.0, %v4460
        %v4462 = vpop.f32.mrf.mxu0
        %v4463 = vadd.f32 0.0, %v4462
        %4464 = vdwg.mxu0
        %v4465 = vadd.f32 %v4398, %v4457
        %v4466 = vadd.f32 %v4399, %v4459
        %v4467 = vadd.f32 %v4400, %v4461
        %v4468 = vadd.f32 %v4401, %v4463
        %v4469 = vld [vmem:[%s1697] sm:$0xf]
        %v4470 = vld [vmem:[%s1697 + $0x4] sm:$0xf]
        %v4473 = vunpack.c.l.b16 %v4469
        %v4474 = vunpack.c.l.b16 %v4470
        %v4475 = vpack.c.b16 %v4474, %v4473
        %4476 = vrot.lane.b32.xlu0 %v4339, 95
        %v4477 = vpop.permute.xlu0 %4476
        %4478 = vrot.lane.b32.xlu0 %v4340, 95
        %v4479 = vpop.permute.xlu0 %4478
        %4480 = vrot.lane.b32.xlu0 %v4341, 95
        %v4481 = vpop.permute.xlu0 %4480
        %v4482 = vsel %vm580, %v4477, %v4479
        %v4483 = vsel %vm580, %v4479, %v4481
        %v4487 = vsel %vm340, %v4475, 0
        %4489 = vmatprep.subr.bf16.mxu0 0
        %4490 = vmatpush1.bf16.msra.mxu0 0
        %4491 = vmatprep.subr.bf16.mxu0 0
        %4492 = vmatpush1.bf16.msra.mxu0 0
        %4493 = vmatprep.subr.bf16.mxu0 0
        %4494 = vmatpush1.bf16.msra.mxu0 0
        %4495 = vmatprep.subr.bf16.mxu0 0
        %4496 = vmatpush1.bf16.msra.mxu0 0
        %4497 = vmatprep.subr.bf16.mxu0 0
        %4498 = vmatpush1.bf16.msra.mxu0 0
        %4499 = vmatprep.subr.bf16.mxu0 0
        %4500 = vmatpush1.bf16.msra.mxu0 0
        %4501 = vmatprep.subr.bf16.mxu0 0
        %4502 = vmatpush1.bf16.msra.mxu0 0
        %4503 = vmatprep.subr.bf16.mxu0 %v4483
        %4504 = vmatpush1.bf16.msra.mxu0 %v4482
        %4505 = vmatprep.subr.bf16.mxu0 0
        %4506 = vmatpush2.bf16.msra.mxu0 0
        %4507 = vmatprep.subr.bf16.mxu0 0
        %4508 = vmatpush2.bf16.msra.mxu0 0
        %4509 = vmatprep.subr.bf16.mxu0 0
        %4510 = vmatpush2.bf16.msra.mxu0 0
        %4511 = vmatprep.subr.bf16.mxu0 0
        %4512 = vmatpush2.bf16.msra.mxu0 0
        %4513 = vmatprep.subr.bf16.mxu0 0
        %4514 = vmatpush2.bf16.msra.mxu0 0
        %4515 = vmatprep.subr.bf16.mxu0 0
        %4516 = vmatpush2.bf16.msra.mxu0 0
        %4517 = vmatprep.subr.bf16.mxu0 0
        %4518 = vmatpush2.bf16.msra.mxu0 0
        %4519 = vmatprep.subr.bf16.mxu0 0
        %4520 = vmatpush2.bf16.msra.mxu0 0
        %4521 = vmatprep.mubr.bf16.mxu0 0
        %4522 = vmatmul.mubr.bf16.gmra.mxu0 %v4487
        %v4523 = vpop.f32.mrf.mxu0
        %v4524 = vadd.f32 0.0, %v4523
        %v4525 = vpop.f32.mrf.mxu0
        %v4526 = vadd.f32 0.0, %v4525
        %v4527 = vpop.f32.mrf.mxu0
        %v4528 = vadd.f32 0.0, %v4527
        %v4529 = vpop.f32.mrf.mxu0
        %v4530 = vadd.f32 0.0, %v4529
        %4531 = vdwg.mxu0
        %v4532 = vadd.f32 %v4465, %v4524
        %v4533 = vadd.f32 %v4466, %v4526
        %v4534 = vadd.f32 %v4467, %v4528
        %v4535 = vadd.f32 %v4468, %v4530
        %v4536 = vld [vmem:[%s1820] sm:$0xf]
        %v4537 = vld [vmem:[%s1820 + $0x4] sm:$0xf]
        %v4540 = vunpack.c.l.b16 %v4536
        %v4541 = vunpack.c.l.b16 %v4537
        %v4542 = vpack.c.b16 %v4541, %v4540
        %4543 = vrot.lane.b32.xlu0 %v4339, 65
        %v4544 = vpop.permute.xlu0 %4543
        %4545 = vrot.lane.b32.xlu0 %v4340, 65
        %v4546 = vpop.permute.xlu0 %4545
        %4547 = vrot.lane.b32.xlu0 %v4341, 65
        %v4548 = vpop.permute.xlu0 %4547
        %v4549 = vsel %vm704, %v4544, %v4546
        %v4550 = vsel %vm704, %v4546, %v4548
        %v4554 = vsel %vm340, %v4542, 0
        %4556 = vmatprep.subr.bf16.mxu0 0
        %4557 = vmatpush1.bf16.msra.mxu0 0
        %4558 = vmatprep.subr.bf16.mxu0 0
        %4559 = vmatpush1.bf16.msra.mxu0 0
        %4560 = vmatprep.subr.bf16.mxu0 0
        %4561 = vmatpush1.bf16.msra.mxu0 0
        %4562 = vmatprep.subr.bf16.mxu0 0
        %4563 = vmatpush1.bf16.msra.mxu0 0
        %4564 = vmatprep.subr.bf16.mxu0 0
        %4565 = vmatpush1.bf16.msra.mxu0 0
        %4566 = vmatprep.subr.bf16.mxu0 0
        %4567 = vmatpush1.bf16.msra.mxu0 0
        %4568 = vmatprep.subr.bf16.mxu0 0
        %4569 = vmatpush1.bf16.msra.mxu0 0
        %4570 = vmatprep.subr.bf16.mxu0 %v4550
        %4571 = vmatpush1.bf16.msra.mxu0 %v4549
        %4572 = vmatprep.subr.bf16.mxu0 0
        %4573 = vmatpush2.bf16.msra.mxu0 0
        %4574 = vmatprep.subr.bf16.mxu0 0
        %4575 = vmatpush2.bf16.msra.mxu0 0
        %4576 = vmatprep.subr.bf16.mxu0 0
        %4577 = vmatpush2.bf16.msra.mxu0 0
        %4578 = vmatprep.subr.bf16.mxu0 0
        %4579 = vmatpush2.bf16.msra.mxu0 0
        %4580 = vmatprep.subr.bf16.mxu0 0
        %4581 = vmatpush2.bf16.msra.mxu0 0
        %4582 = vmatprep.subr.bf16.mxu0 0
        %4583 = vmatpush2.bf16.msra.mxu0 0
        %4584 = vmatprep.subr.bf16.mxu0 0
        %4585 = vmatpush2.bf16.msra.mxu0 0
        %4586 = vmatprep.subr.bf16.mxu0 0
        %4587 = vmatpush2.bf16.msra.mxu0 0
        %4588 = vmatprep.mubr.bf16.mxu0 0
        %4589 = vmatmul.mubr.bf16.gmra.mxu0 %v4554
        %v4590 = vpop.f32.mrf.mxu0
        %v4591 = vadd.f32 0.0, %v4590
        %v4592 = vpop.f32.mrf.mxu0
        %v4593 = vadd.f32 0.0, %v4592
        %v4594 = vpop.f32.mrf.mxu0
        %v4595 = vadd.f32 0.0, %v4594
        %v4596 = vpop.f32.mrf.mxu0
        %v4597 = vadd.f32 0.0, %v4596
        %4598 = vdwg.mxu0
        %v4599 = vadd.f32 %v4532, %v4591
        %v4600 = vadd.f32 %v4533, %v4593
        %v4601 = vadd.f32 %v4534, %v4595
        %v4602 = vadd.f32 %v4535, %v4597
        %v4603 = vld [vmem:[%s1943] sm:$0xf]
        %v4604 = vld [vmem:[%s1943 + $0x4] sm:$0xf]
        %v4607 = vunpack.c.l.b16 %v4603
        %v4608 = vunpack.c.l.b16 %v4604
        %v4609 = vpack.c.b16 %v4608, %v4607
        %4610 = vrot.lane.b32.xlu0 %v4339, 64
        %v4611 = vpop.permute.xlu0 %4610
        %4612 = vrot.lane.b32.xlu0 %v4340, 64
        %v4613 = vpop.permute.xlu0 %4612
        %4614 = vrot.lane.b32.xlu0 %v4341, 64
        %v4615 = vpop.permute.xlu0 %4614
        %v4616 = vsel %vm828, %v4611, %v4613
        %v4617 = vsel %vm828, %v4613, %v4615
        %v4621 = vsel %vm340, %v4609, 0
        %4623 = vmatprep.subr.bf16.mxu0 0
        %4624 = vmatpush1.bf16.msra.mxu0 0
        %4625 = vmatprep.subr.bf16.mxu0 0
        %4626 = vmatpush1.bf16.msra.mxu0 0
        %4627 = vmatprep.subr.bf16.mxu0 0
        %4628 = vmatpush1.bf16.msra.mxu0 0
        %4629 = vmatprep.subr.bf16.mxu0 0
        %4630 = vmatpush1.bf16.msra.mxu0 0
        %4631 = vmatprep.subr.bf16.mxu0 0
        %4632 = vmatpush1.bf16.msra.mxu0 0
        %4633 = vmatprep.subr.bf16.mxu0 0
        %4634 = vmatpush1.bf16.msra.mxu0 0
        %4635 = vmatprep.subr.bf16.mxu0 0
        %4636 = vmatpush1.bf16.msra.mxu0 0
        %4637 = vmatprep.subr.bf16.mxu0 %v4617
        %4638 = vmatpush1.bf16.msra.mxu0 %v4616
        %4639 = vmatprep.subr.bf16.mxu0 0
        %4640 = vmatpush2.bf16.msra.mxu0 0
        %4641 = vmatprep.subr.bf16.mxu0 0
        %4642 = vmatpush2.bf16.msra.mxu0 0
        %4643 = vmatprep.subr.bf16.mxu0 0
        %4644 = vmatpush2.bf16.msra.mxu0 0
        %4645 = vmatprep.subr.bf16.mxu0 0
        %4646 = vmatpush2.bf16.msra.mxu0 0
        %4647 = vmatprep.subr.bf16.mxu0 0
        %4648 = vmatpush2.bf16.msra.mxu0 0
        %4649 = vmatprep.subr.bf16.mxu0 0
        %4650 = vmatpush2.bf16.msra.mxu0 0
        %4651 = vmatprep.subr.bf16.mxu0 0
        %4652 = vmatpush2.bf16.msra.mxu0 0
        %4653 = vmatprep.subr.bf16.mxu0 0
        %4654 = vmatpush2.bf16.msra.mxu0 0
        %4655 = vmatprep.mubr.bf16.mxu0 0
        %4656 = vmatmul.mubr.bf16.gmra.mxu0 %v4621
        %v4657 = vpop.f32.mrf.mxu0
        %v4658 = vadd.f32 0.0, %v4657
        %v4659 = vpop.f32.mrf.mxu0
        %v4660 = vadd.f32 0.0, %v4659
        %v4661 = vpop.f32.mrf.mxu0
        %v4662 = vadd.f32 0.0, %v4661
        %v4663 = vpop.f32.mrf.mxu0
        %v4664 = vadd.f32 0.0, %v4663
        %4665 = vdwg.mxu0
        %v4666 = vadd.f32 %v4599, %v4658
        %v4667 = vadd.f32 %v4600, %v4660
        %v4668 = vadd.f32 %v4601, %v4662
        %v4669 = vadd.f32 %v4602, %v4664
        %v4670 = vld [vmem:[%s2066] sm:$0xf]
        %v4671 = vld [vmem:[%s2066 + $0x4] sm:$0xf]
        %v4674 = vunpack.c.l.b16 %v4670
        %v4675 = vunpack.c.l.b16 %v4671
        %v4676 = vpack.c.b16 %v4675, %v4674
        %4677 = vrot.lane.b32.xlu0 %v4339, 63
        %v4678 = vpop.permute.xlu0 %4677
        %4679 = vrot.lane.b32.xlu0 %v4340, 63
        %v4680 = vpop.permute.xlu0 %4679
        %4681 = vrot.lane.b32.xlu0 %v4341, 63
        %v4682 = vpop.permute.xlu0 %4681
        %v4683 = vsel %vm952, %v4678, %v4680
        %v4684 = vsel %vm952, %v4680, %v4682
        %v4688 = vsel %vm340, %v4676, 0
        %4690 = vmatprep.subr.bf16.mxu0 0
        %4691 = vmatpush1.bf16.msra.mxu0 0
        %4692 = vmatprep.subr.bf16.mxu0 0
        %4693 = vmatpush1.bf16.msra.mxu0 0
        %4694 = vmatprep.subr.bf16.mxu0 0
        %4695 = vmatpush1.bf16.msra.mxu0 0
        %4696 = vmatprep.subr.bf16.mxu0 0
        %4697 = vmatpush1.bf16.msra.mxu0 0
        %4698 = vmatprep.subr.bf16.mxu0 0
        %4699 = vmatpush1.bf16.msra.mxu0 0
        %4700 = vmatprep.subr.bf16.mxu0 0
        %4701 = vmatpush1.bf16.msra.mxu0 0
        %4702 = vmatprep.subr.bf16.mxu0 0
        %4703 = vmatpush1.bf16.msra.mxu0 0
        %4704 = vmatprep.subr.bf16.mxu0 %v4684
        %4705 = vmatpush1.bf16.msra.mxu0 %v4683
        %4706 = vmatprep.subr.bf16.mxu0 0
        %4707 = vmatpush2.bf16.msra.mxu0 0
        %4708 = vmatprep.subr.bf16.mxu0 0
        %4709 = vmatpush2.bf16.msra.mxu0 0
        %4710 = vmatprep.subr.bf16.mxu0 0
        %4711 = vmatpush2.bf16.msra.mxu0 0
        %4712 = vmatprep.subr.bf16.mxu0 0
        %4713 = vmatpush2.bf16.msra.mxu0 0
        %4714 = vmatprep.subr.bf16.mxu0 0
        %4715 = vmatpush2.bf16.msra.mxu0 0
        %4716 = vmatprep.subr.bf16.mxu0 0
        %4717 = vmatpush2.bf16.msra.mxu0 0
        %4718 = vmatprep.subr.bf16.mxu0 0
        %4719 = vmatpush2.bf16.msra.mxu0 0
        %4720 = vmatprep.subr.bf16.mxu0 0
        %4721 = vmatpush2.bf16.msra.mxu0 0
        %4722 = vmatprep.mubr.bf16.mxu0 0
        %4723 = vmatmul.mubr.bf16.gmra.mxu0 %v4688
        %v4724 = vpop.f32.mrf.mxu0
        %v4725 = vadd.f32 0.0, %v4724
        %v4726 = vpop.f32.mrf.mxu0
        %v4727 = vadd.f32 0.0, %v4726
        %v4728 = vpop.f32.mrf.mxu0
        %v4729 = vadd.f32 0.0, %v4728
        %v4730 = vpop.f32.mrf.mxu0
        %v4731 = vadd.f32 0.0, %v4730
        %4732 = vdwg.mxu0
        %v4733 = vadd.f32 %v4666, %v4725
        %v4734 = vadd.f32 %v4667, %v4727
        %v4735 = vadd.f32 %v4668, %v4729
        %v4736 = vadd.f32 %v4669, %v4731
        %v4737 = vld [vmem:[%s2189] sm:$0xf]
        %v4738 = vld [vmem:[%s2189 + $0x4] sm:$0xf]
        %v4741 = vunpack.c.l.b16 %v4737
        %v4742 = vunpack.c.l.b16 %v4738
        %v4743 = vpack.c.b16 %v4742, %v4741
        %4744 = vrot.lane.b32.xlu0 %v4339, 33
        %v4745 = vpop.permute.xlu0 %4744
        %4746 = vrot.lane.b32.xlu0 %v4340, 33
        %v4747 = vpop.permute.xlu0 %4746
        %4748 = vrot.lane.b32.xlu0 %v4341, 33
        %v4749 = vpop.permute.xlu0 %4748
        %v4750 = vsel %vm1076, %v4745, %v4747
        %v4751 = vsel %vm1076, %v4747, %v4749
        %v4755 = vsel %vm340, %v4743, 0
        %4757 = vmatprep.subr.bf16.mxu0 0
        %4758 = vmatpush1.bf16.msra.mxu0 0
        %4759 = vmatprep.subr.bf16.mxu0 0
        %4760 = vmatpush1.bf16.msra.mxu0 0
        %4761 = vmatprep.subr.bf16.mxu0 0
        %4762 = vmatpush1.bf16.msra.mxu0 0
        %4763 = vmatprep.subr.bf16.mxu0 0
        %4764 = vmatpush1.bf16.msra.mxu0 0
        %4765 = vmatprep.subr.bf16.mxu0 0
        %4766 = vmatpush1.bf16.msra.mxu0 0
        %4767 = vmatprep.subr.bf16.mxu0 0
        %4768 = vmatpush1.bf16.msra.mxu0 0
        %4769 = vmatprep.subr.bf16.mxu0 0
        %4770 = vmatpush1.bf16.msra.mxu0 0
        %4771 = vmatprep.subr.bf16.mxu0 %v4751
        %4772 = vmatpush1.bf16.msra.mxu0 %v4750
        %4773 = vmatprep.subr.bf16.mxu0 0
        %4774 = vmatpush2.bf16.msra.mxu0 0
        %4775 = vmatprep.subr.bf16.mxu0 0
        %4776 = vmatpush2.bf16.msra.mxu0 0
        %4777 = vmatprep.subr.bf16.mxu0 0
        %4778 = vmatpush2.bf16.msra.mxu0 0
        %4779 = vmatprep.subr.bf16.mxu0 0
        %4780 = vmatpush2.bf16.msra.mxu0 0
        %4781 = vmatprep.subr.bf16.mxu0 0
        %4782 = vmatpush2.bf16.msra.mxu0 0
        %4783 = vmatprep.subr.bf16.mxu0 0
        %4784 = vmatpush2.bf16.msra.mxu0 0
        %4785 = vmatprep.subr.bf16.mxu0 0
        %4786 = vmatpush2.bf16.msra.mxu0 0
        %4787 = vmatprep.subr.bf16.mxu0 0
        %4788 = vmatpush2.bf16.msra.mxu0 0
        %4789 = vmatprep.mubr.bf16.mxu0 0
        %4790 = vmatmul.mubr.bf16.gmra.mxu0 %v4755
        %v4791 = vpop.f32.mrf.mxu0
        %v4792 = vadd.f32 0.0, %v4791
        %v4793 = vpop.f32.mrf.mxu0
        %v4794 = vadd.f32 0.0, %v4793
        %v4795 = vpop.f32.mrf.mxu0
        %v4796 = vadd.f32 0.0, %v4795
        %v4797 = vpop.f32.mrf.mxu0
        %v4798 = vadd.f32 0.0, %v4797
        %4799 = vdwg.mxu0
        %v4800 = vadd.f32 %v4733, %v4792
        %v4801 = vadd.f32 %v4734, %v4794
        %v4802 = vadd.f32 %v4735, %v4796
        %v4803 = vadd.f32 %v4736, %v4798
        %v4804 = vld [vmem:[%s2312] sm:$0xf]
        %v4805 = vld [vmem:[%s2312 + $0x4] sm:$0xf]
        %v4808 = vunpack.c.l.b16 %v4804
        %v4809 = vunpack.c.l.b16 %v4805
        %v4810 = vpack.c.b16 %v4809, %v4808
        %4811 = vrot.lane.b32.xlu0 %v4339, 32
        %v4812 = vpop.permute.xlu0 %4811
        %4813 = vrot.lane.b32.xlu0 %v4340, 32
        %v4814 = vpop.permute.xlu0 %4813
        %4815 = vrot.lane.b32.xlu0 %v4341, 32
        %v4816 = vpop.permute.xlu0 %4815
        %v4817 = vsel %vm1200, %v4812, %v4814
        %v4818 = vsel %vm1200, %v4814, %v4816
        %v4822 = vsel %vm340, %v4810, 0
        %4824 = vmatprep.subr.bf16.mxu0 0
        %4825 = vmatpush1.bf16.msra.mxu0 0
        %4826 = vmatprep.subr.bf16.mxu0 0
        %4827 = vmatpush1.bf16.msra.mxu0 0
        %4828 = vmatprep.subr.bf16.mxu0 0
        %4829 = vmatpush1.bf16.msra.mxu0 0
        %4830 = vmatprep.subr.bf16.mxu0 0
        %4831 = vmatpush1.bf16.msra.mxu0 0
        %4832 = vmatprep.subr.bf16.mxu0 0
        %4833 = vmatpush1.bf16.msra.mxu0 0
        %4834 = vmatprep.subr.bf16.mxu0 0
        %4835 = vmatpush1.bf16.msra.mxu0 0
        %4836 = vmatprep.subr.bf16.mxu0 0
        %4837 = vmatpush1.bf16.msra.mxu0 0
        %4838 = vmatprep.subr.bf16.mxu0 %v4818
        %4839 = vmatpush1.bf16.msra.mxu0 %v4817
        %4840 = vmatprep.subr.bf16.mxu0 0
        %4841 = vmatpush2.bf16.msra.mxu0 0
        %4842 = vmatprep.subr.bf16.mxu0 0
        %4843 = vmatpush2.bf16.msra.mxu0 0
        %4844 = vmatprep.subr.bf16.mxu0 0
        %4845 = vmatpush2.bf16.msra.mxu0 0
        %4846 = vmatprep.subr.bf16.mxu0 0
        %4847 = vmatpush2.bf16.msra.mxu0 0
        %4848 = vmatprep.subr.bf16.mxu0 0
        %4849 = vmatpush2.bf16.msra.mxu0 0
        %4850 = vmatprep.subr.bf16.mxu0 0
        %4851 = vmatpush2.bf16.msra.mxu0 0
        %4852 = vmatprep.subr.bf16.mxu0 0
        %4853 = vmatpush2.bf16.msra.mxu0 0
        %4854 = vmatprep.subr.bf16.mxu0 0
        %4855 = vmatpush2.bf16.msra.mxu0 0
        %4856 = vmatprep.mubr.bf16.mxu0 0
        %4857 = vmatmul.mubr.bf16.gmra.mxu0 %v4822
        %v4858 = vpop.f32.mrf.mxu0
        %v4859 = vadd.f32 0.0, %v4858
        %v4860 = vpop.f32.mrf.mxu0
        %v4861 = vadd.f32 0.0, %v4860
        %v4862 = vpop.f32.mrf.mxu0
        %v4863 = vadd.f32 0.0, %v4862
        %v4864 = vpop.f32.mrf.mxu0
        %v4865 = vadd.f32 0.0, %v4864
        %4866 = vdwg.mxu0
        %v4867 = vadd.f32 %v4800, %v4859
        %v4868 = vadd.f32 %v4801, %v4861
        %v4869 = vadd.f32 %v4802, %v4863
        %v4870 = vadd.f32 %v4803, %v4865
        %v4871 = vld [vmem:[%s2435] sm:$0xf]
        %v4872 = vld [vmem:[%s2435 + $0x4] sm:$0xf]
        %v4875 = vunpack.c.l.b16 %v4871
        %v4876 = vunpack.c.l.b16 %v4872
        %v4877 = vpack.c.b16 %v4876, %v4875
        %4878 = vrot.lane.b32.xlu0 %v4339, 31
        %v4879 = vpop.permute.xlu0 %4878
        %4880 = vrot.lane.b32.xlu0 %v4340, 31
        %v4881 = vpop.permute.xlu0 %4880
        %4882 = vrot.lane.b32.xlu0 %v4341, 31
        %v4883 = vpop.permute.xlu0 %4882
        %v4884 = vsel %vm1324, %v4879, %v4881
        %v4885 = vsel %vm1324, %v4881, %v4883
        %v4889 = vsel %vm340, %v4877, 0
        %4891 = vmatprep.subr.bf16.mxu0 0
        %4892 = vmatpush1.bf16.msra.mxu0 0
        %4893 = vmatprep.subr.bf16.mxu0 0
        %4894 = vmatpush1.bf16.msra.mxu0 0
        %4895 = vmatprep.subr.bf16.mxu0 0
        %4896 = vmatpush1.bf16.msra.mxu0 0
        %4897 = vmatprep.subr.bf16.mxu0 0
        %4898 = vmatpush1.bf16.msra.mxu0 0
        %4899 = vmatprep.subr.bf16.mxu0 0
        %4900 = vmatpush1.bf16.msra.mxu0 0
        %4901 = vmatprep.subr.bf16.mxu0 0
        %4902 = vmatpush1.bf16.msra.mxu0 0
        %4903 = vmatprep.subr.bf16.mxu0 0
        %4904 = vmatpush1.bf16.msra.mxu0 0
        %4905 = vmatprep.subr.bf16.mxu0 %v4885
        %4906 = vmatpush1.bf16.msra.mxu0 %v4884
        %4907 = vmatprep.subr.bf16.mxu0 0
        %4908 = vmatpush2.bf16.msra.mxu0 0
        %4909 = vmatprep.subr.bf16.mxu0 0
        %4910 = vmatpush2.bf16.msra.mxu0 0
        %4911 = vmatprep.subr.bf16.mxu0 0
        %4912 = vmatpush2.bf16.msra.mxu0 0
        %4913 = vmatprep.subr.bf16.mxu0 0
        %4914 = vmatpush2.bf16.msra.mxu0 0
        %4915 = vmatprep.subr.bf16.mxu0 0
        %4916 = vmatpush2.bf16.msra.mxu0 0
        %4917 = vmatprep.subr.bf16.mxu0 0
        %4918 = vmatpush2.bf16.msra.mxu0 0
        %4919 = vmatprep.subr.bf16.mxu0 0
        %4920 = vmatpush2.bf16.msra.mxu0 0
        %4921 = vmatprep.subr.bf16.mxu0 0
        %4922 = vmatpush2.bf16.msra.mxu0 0
        %4923 = vmatprep.mubr.bf16.mxu0 0
        %4924 = vmatmul.mubr.bf16.gmra.mxu0 %v4889
        %v4925 = vpop.f32.mrf.mxu0
        %v4926 = vadd.f32 0.0, %v4925
        %v4927 = vpop.f32.mrf.mxu0
        %v4928 = vadd.f32 0.0, %v4927
        %v4929 = vpop.f32.mrf.mxu0
        %v4930 = vadd.f32 0.0, %v4929
        %v4931 = vpop.f32.mrf.mxu0
        %v4932 = vadd.f32 0.0, %v4931
        %4933 = vdwg.mxu0
        %v4934 = vadd.f32 %v4867, %v4926
        %v4935 = vadd.f32 %v4868, %v4928
        %v4936 = vadd.f32 %v4869, %v4930
        %v4937 = vadd.f32 %v4870, %v4932
        %v4938 = vld [vmem:[%s2558] sm:$0xf]
        %v4939 = vld [vmem:[%s2558 + $0x4] sm:$0xf]
        %v4942 = vunpack.c.l.b16 %v4938
        %v4943 = vunpack.c.l.b16 %v4939
        %v4944 = vpack.c.b16 %v4943, %v4942
        %v4949 = vunpack.c.l.b16 %v3702
        %v4950 = vunpack.c.h.b16 %v3702
        %v4951 = vunpack.c.l.b16 %v3703
        %v4952 = vunpack.c.l.b16 %v3704
        %v4953 = vunpack.c.h.b16 %v3704
        %v4954 = vunpack.c.l.b16 %v3705
        %v4955 = vpack.c.b16 %v4952, %v4949
        %v4956 = vpack.c.b16 %v4953, %v4950
        %v4957 = vpack.c.b16 %v4954, %v4951
        %4958 = vrot.lane.b32.xlu0 %v4955, 97
        %v4959 = vpop.permute.xlu0 %4958
        %4960 = vrot.lane.b32.xlu0 %v4956, 97
        %v4961 = vpop.permute.xlu0 %4960
        %4962 = vrot.lane.b32.xlu0 %v4957, 97
        %v4963 = vpop.permute.xlu0 %4962
        %v4964 = vsel %vm331, %v4959, %v4961
        %v4965 = vsel %vm331, %v4961, %v4963
        %v4969 = vsel %vm340, %v4944, 0
        %4971 = vmatprep.subr.bf16.mxu0 0
        %4972 = vmatpush1.bf16.msra.mxu0 0
        %4973 = vmatprep.subr.bf16.mxu0 0
        %4974 = vmatpush1.bf16.msra.mxu0 0
        %4975 = vmatprep.subr.bf16.mxu0 0
        %4976 = vmatpush1.bf16.msra.mxu0 0
        %4977 = vmatprep.subr.bf16.mxu0 0
        %4978 = vmatpush1.bf16.msra.mxu0 0
        %4979 = vmatprep.subr.bf16.mxu0 0
        %4980 = vmatpush1.bf16.msra.mxu0 0
        %4981 = vmatprep.subr.bf16.mxu0 0
        %4982 = vmatpush1.bf16.msra.mxu0 0
        %4983 = vmatprep.subr.bf16.mxu0 0
        %4984 = vmatpush1.bf16.msra.mxu0 0
        %4985 = vmatprep.subr.bf16.mxu0 %v4965
        %4986 = vmatpush1.bf16.msra.mxu0 %v4964
        %4987 = vmatprep.subr.bf16.mxu0 0
        %4988 = vmatpush2.bf16.msra.mxu0 0
        %4989 = vmatprep.subr.bf16.mxu0 0
        %4990 = vmatpush2.bf16.msra.mxu0 0
        %4991 = vmatprep.subr.bf16.mxu0 0
        %4992 = vmatpush2.bf16.msra.mxu0 0
        %4993 = vmatprep.subr.bf16.mxu0 0
        %4994 = vmatpush2.bf16.msra.mxu0 0
        %4995 = vmatprep.subr.bf16.mxu0 0
        %4996 = vmatpush2.bf16.msra.mxu0 0
        %4997 = vmatprep.subr.bf16.mxu0 0
        %4998 = vmatpush2.bf16.msra.mxu0 0
        %4999 = vmatprep.subr.bf16.mxu0 0
        %5000 = vmatpush2.bf16.msra.mxu0 0
        %5001 = vmatprep.subr.bf16.mxu0 0
        %5002 = vmatpush2.bf16.msra.mxu0 0
        %5003 = vmatprep.mubr.bf16.mxu0 0
        %5004 = vmatmul.mubr.bf16.gmra.mxu0 %v4969
        %v5005 = vpop.f32.mrf.mxu0
        %v5006 = vadd.f32 0.0, %v5005
        %v5007 = vpop.f32.mrf.mxu0
        %v5008 = vadd.f32 0.0, %v5007
        %v5009 = vpop.f32.mrf.mxu0
        %v5010 = vadd.f32 0.0, %v5009
        %v5011 = vpop.f32.mrf.mxu0
        %v5012 = vadd.f32 0.0, %v5011
        %5013 = vdwg.mxu0
        %v5014 = vadd.f32 %v4934, %v5006
        %v5015 = vadd.f32 %v4935, %v5008
        %v5016 = vadd.f32 %v4936, %v5010
        %v5017 = vadd.f32 %v4937, %v5012
        %v5018 = vld [vmem:[%s2702] sm:$0xf]
        %v5019 = vld [vmem:[%s2702 + $0x4] sm:$0xf]
        %v5022 = vunpack.c.l.b16 %v5018
        %v5023 = vunpack.c.l.b16 %v5019
        %v5024 = vpack.c.b16 %v5023, %v5022
        %5025 = vrot.lane.b32.xlu0 %v4955, 96
        %v5026 = vpop.permute.xlu0 %5025
        %5027 = vrot.lane.b32.xlu0 %v4956, 96
        %v5028 = vpop.permute.xlu0 %5027
        %5029 = vrot.lane.b32.xlu0 %v4957, 96
        %v5030 = vpop.permute.xlu0 %5029
        %v5031 = vsel %vm456, %v5026, %v5028
        %v5032 = vsel %vm456, %v5028, %v5030
        %v5036 = vsel %vm340, %v5024, 0
        %5038 = vmatprep.subr.bf16.mxu0 0
        %5039 = vmatpush1.bf16.msra.mxu0 0
        %5040 = vmatprep.subr.bf16.mxu0 0
        %5041 = vmatpush1.bf16.msra.mxu0 0
        %5042 = vmatprep.subr.bf16.mxu0 0
        %5043 = vmatpush1.bf16.msra.mxu0 0
        %5044 = vmatprep.subr.bf16.mxu0 0
        %5045 = vmatpush1.bf16.msra.mxu0 0
        %5046 = vmatprep.subr.bf16.mxu0 0
        %5047 = vmatpush1.bf16.msra.mxu0 0
        %5048 = vmatprep.subr.bf16.mxu0 0
        %5049 = vmatpush1.bf16.msra.mxu0 0
        %5050 = vmatprep.subr.bf16.mxu0 0
        %5051 = vmatpush1.bf16.msra.mxu0 0
        %5052 = vmatprep.subr.bf16.mxu0 %v5032
        %5053 = vmatpush1.bf16.msra.mxu0 %v5031
        %5054 = vmatprep.subr.bf16.mxu0 0
        %5055 = vmatpush2.bf16.msra.mxu0 0
        %5056 = vmatprep.subr.bf16.mxu0 0
        %5057 = vmatpush2.bf16.msra.mxu0 0
        %5058 = vmatprep.subr.bf16.mxu0 0
        %5059 = vmatpush2.bf16.msra.mxu0 0
        %5060 = vmatprep.subr.bf16.mxu0 0
        %5061 = vmatpush2.bf16.msra.mxu0 0
        %5062 = vmatprep.subr.bf16.mxu0 0
        %5063 = vmatpush2.bf16.msra.mxu0 0
        %5064 = vmatprep.subr.bf16.mxu0 0
        %5065 = vmatpush2.bf16.msra.mxu0 0
        %5066 = vmatprep.subr.bf16.mxu0 0
        %5067 = vmatpush2.bf16.msra.mxu0 0
        %5068 = vmatprep.subr.bf16.mxu0 0
        %5069 = vmatpush2.bf16.msra.mxu0 0
        %5070 = vmatprep.mubr.bf16.mxu0 0
        %5071 = vmatmul.mubr.bf16.gmra.mxu0 %v5036
        %v5072 = vpop.f32.mrf.mxu0
        %v5073 = vadd.f32 0.0, %v5072
        %v5074 = vpop.f32.mrf.mxu0
        %v5075 = vadd.f32 0.0, %v5074
        %v5076 = vpop.f32.mrf.mxu0
        %v5077 = vadd.f32 0.0, %v5076
        %v5078 = vpop.f32.mrf.mxu0
        %v5079 = vadd.f32 0.0, %v5078
        %5080 = vdwg.mxu0
        %v5081 = vadd.f32 %v5014, %v5073
        %v5082 = vadd.f32 %v5015, %v5075
        %v5083 = vadd.f32 %v5016, %v5077
        %v5084 = vadd.f32 %v5017, %v5079
        %v5085 = vld [vmem:[%s2825] sm:$0xf]
        %v5086 = vld [vmem:[%s2825 + $0x4] sm:$0xf]
        %v5089 = vunpack.c.l.b16 %v5085
        %v5090 = vunpack.c.l.b16 %v5086
        %v5091 = vpack.c.b16 %v5090, %v5089
        %5092 = vrot.lane.b32.xlu0 %v4955, 95
        %v5093 = vpop.permute.xlu0 %5092
        %5094 = vrot.lane.b32.xlu0 %v4956, 95
        %v5095 = vpop.permute.xlu0 %5094
        %5096 = vrot.lane.b32.xlu0 %v4957, 95
        %v5097 = vpop.permute.xlu0 %5096
        %v5098 = vsel %vm580, %v5093, %v5095
        %v5099 = vsel %vm580, %v5095, %v5097
        %v5103 = vsel %vm340, %v5091, 0
        %5105 = vmatprep.subr.bf16.mxu0 0
        %5106 = vmatpush1.bf16.msra.mxu0 0
        %5107 = vmatprep.subr.bf16.mxu0 0
        %5108 = vmatpush1.bf16.msra.mxu0 0
        %5109 = vmatprep.subr.bf16.mxu0 0
        %5110 = vmatpush1.bf16.msra.mxu0 0
        %5111 = vmatprep.subr.bf16.mxu0 0
        %5112 = vmatpush1.bf16.msra.mxu0 0
        %5113 = vmatprep.subr.bf16.mxu0 0
        %5114 = vmatpush1.bf16.msra.mxu0 0
        %5115 = vmatprep.subr.bf16.mxu0 0
        %5116 = vmatpush1.bf16.msra.mxu0 0
        %5117 = vmatprep.subr.bf16.mxu0 0
        %5118 = vmatpush1.bf16.msra.mxu0 0
        %5119 = vmatprep.subr.bf16.mxu0 %v5099
        %5120 = vmatpush1.bf16.msra.mxu0 %v5098
        %5121 = vmatprep.subr.bf16.mxu0 0
        %5122 = vmatpush2.bf16.msra.mxu0 0
        %5123 = vmatprep.subr.bf16.mxu0 0
        %5124 = vmatpush2.bf16.msra.mxu0 0
        %5125 = vmatprep.subr.bf16.mxu0 0
        %5126 = vmatpush2.bf16.msra.mxu0 0
        %5127 = vmatprep.subr.bf16.mxu0 0
        %5128 = vmatpush2.bf16.msra.mxu0 0
        %5129 = vmatprep.subr.bf16.mxu0 0
        %5130 = vmatpush2.bf16.msra.mxu0 0
        %5131 = vmatprep.subr.bf16.mxu0 0
        %5132 = vmatpush2.bf16.msra.mxu0 0
        %5133 = vmatprep.subr.bf16.mxu0 0
        %5134 = vmatpush2.bf16.msra.mxu0 0
        %5135 = vmatprep.subr.bf16.mxu0 0
        %5136 = vmatpush2.bf16.msra.mxu0 0
        %5137 = vmatprep.mubr.bf16.mxu0 0
        %5138 = vmatmul.mubr.bf16.gmra.mxu0 %v5103
        %v5139 = vpop.f32.mrf.mxu0
        %v5140 = vadd.f32 0.0, %v5139
        %v5141 = vpop.f32.mrf.mxu0
        %v5142 = vadd.f32 0.0, %v5141
        %v5143 = vpop.f32.mrf.mxu0
        %v5144 = vadd.f32 0.0, %v5143
        %v5145 = vpop.f32.mrf.mxu0
        %v5146 = vadd.f32 0.0, %v5145
        %5147 = vdwg.mxu0
        %v5148 = vadd.f32 %v5081, %v5140
        %v5149 = vadd.f32 %v5082, %v5142
        %v5150 = vadd.f32 %v5083, %v5144
        %v5151 = vadd.f32 %v5084, %v5146
        %v5152 = vld [vmem:[%s2948] sm:$0xf]
        %v5153 = vld [vmem:[%s2948 + $0x4] sm:$0xf]
        %v5156 = vunpack.c.l.b16 %v5152
        %v5157 = vunpack.c.l.b16 %v5153
        %v5158 = vpack.c.b16 %v5157, %v5156
        %5159 = vrot.lane.b32.xlu0 %v4955, 65
        %v5160 = vpop.permute.xlu0 %5159
        %5161 = vrot.lane.b32.xlu0 %v4956, 65
        %v5162 = vpop.permute.xlu0 %5161
        %5163 = vrot.lane.b32.xlu0 %v4957, 65
        %v5164 = vpop.permute.xlu0 %5163
        %v5165 = vsel %vm704, %v5160, %v5162
        %v5166 = vsel %vm704, %v5162, %v5164
        %v5170 = vsel %vm340, %v5158, 0
        %5172 = vmatprep.subr.bf16.mxu0 0
        %5173 = vmatpush1.bf16.msra.mxu0 0
        %5174 = vmatprep.subr.bf16.mxu0 0
        %5175 = vmatpush1.bf16.msra.mxu0 0
        %5176 = vmatprep.subr.bf16.mxu0 0
        %5177 = vmatpush1.bf16.msra.mxu0 0
        %5178 = vmatprep.subr.bf16.mxu0 0
        %5179 = vmatpush1.bf16.msra.mxu0 0
        %5180 = vmatprep.subr.bf16.mxu0 0
        %5181 = vmatpush1.bf16.msra.mxu0 0
        %5182 = vmatprep.subr.bf16.mxu0 0
        %5183 = vmatpush1.bf16.msra.mxu0 0
        %5184 = vmatprep.subr.bf16.mxu0 0
        %5185 = vmatpush1.bf16.msra.mxu0 0
        %5186 = vmatprep.subr.bf16.mxu0 %v5166
        %5187 = vmatpush1.bf16.msra.mxu0 %v5165
        %5188 = vmatprep.subr.bf16.mxu0 0
        %5189 = vmatpush2.bf16.msra.mxu0 0
        %5190 = vmatprep.subr.bf16.mxu0 0
        %5191 = vmatpush2.bf16.msra.mxu0 0
        %5192 = vmatprep.subr.bf16.mxu0 0
        %5193 = vmatpush2.bf16.msra.mxu0 0
        %5194 = vmatprep.subr.bf16.mxu0 0
        %5195 = vmatpush2.bf16.msra.mxu0 0
        %5196 = vmatprep.subr.bf16.mxu0 0
        %5197 = vmatpush2.bf16.msra.mxu0 0
        %5198 = vmatprep.subr.bf16.mxu0 0
        %5199 = vmatpush2.bf16.msra.mxu0 0
        %5200 = vmatprep.subr.bf16.mxu0 0
        %5201 = vmatpush2.bf16.msra.mxu0 0
        %5202 = vmatprep.subr.bf16.mxu0 0
        %5203 = vmatpush2.bf16.msra.mxu0 0
        %5204 = vmatprep.mubr.bf16.mxu0 0
        %5205 = vmatmul.mubr.bf16.gmra.mxu0 %v5170
        %v5206 = vpop.f32.mrf.mxu0
        %v5207 = vadd.f32 0.0, %v5206
        %v5208 = vpop.f32.mrf.mxu0
        %v5209 = vadd.f32 0.0, %v5208
        %v5210 = vpop.f32.mrf.mxu0
        %v5211 = vadd.f32 0.0, %v5210
        %v5212 = vpop.f32.mrf.mxu0
        %v5213 = vadd.f32 0.0, %v5212
        %5214 = vdwg.mxu0
        %v5215 = vadd.f32 %v5148, %v5207
        %v5216 = vadd.f32 %v5149, %v5209
        %v5217 = vadd.f32 %v5150, %v5211
        %v5218 = vadd.f32 %v5151, %v5213
        %v5219 = vld [vmem:[%s3071] sm:$0xf]
        %v5220 = vld [vmem:[%s3071 + $0x4] sm:$0xf]
        %v5223 = vunpack.c.l.b16 %v5219
        %v5224 = vunpack.c.l.b16 %v5220
        %v5225 = vpack.c.b16 %v5224, %v5223
        %5226 = vrot.lane.b32.xlu0 %v4955, 64
        %v5227 = vpop.permute.xlu0 %5226
        %5228 = vrot.lane.b32.xlu0 %v4956, 64
        %v5229 = vpop.permute.xlu0 %5228
        %5230 = vrot.lane.b32.xlu0 %v4957, 64
        %v5231 = vpop.permute.xlu0 %5230
        %v5232 = vsel %vm828, %v5227, %v5229
        %v5233 = vsel %vm828, %v5229, %v5231
        %v5237 = vsel %vm340, %v5225, 0
        %5239 = vmatprep.subr.bf16.mxu0 0
        %5240 = vmatpush1.bf16.msra.mxu0 0
        %5241 = vmatprep.subr.bf16.mxu0 0
        %5242 = vmatpush1.bf16.msra.mxu0 0
        %5243 = vmatprep.subr.bf16.mxu0 0
        %5244 = vmatpush1.bf16.msra.mxu0 0
        %5245 = vmatprep.subr.bf16.mxu0 0
        %5246 = vmatpush1.bf16.msra.mxu0 0
        %5247 = vmatprep.subr.bf16.mxu0 0
        %5248 = vmatpush1.bf16.msra.mxu0 0
        %5249 = vmatprep.subr.bf16.mxu0 0
        %5250 = vmatpush1.bf16.msra.mxu0 0
        %5251 = vmatprep.subr.bf16.mxu0 0
        %5252 = vmatpush1.bf16.msra.mxu0 0
        %5253 = vmatprep.subr.bf16.mxu0 %v5233
        %5254 = vmatpush1.bf16.msra.mxu0 %v5232
        %5255 = vmatprep.subr.bf16.mxu0 0
        %5256 = vmatpush2.bf16.msra.mxu0 0
        %5257 = vmatprep.subr.bf16.mxu0 0
        %5258 = vmatpush2.bf16.msra.mxu0 0
        %5259 = vmatprep.subr.bf16.mxu0 0
        %5260 = vmatpush2.bf16.msra.mxu0 0
        %5261 = vmatprep.subr.bf16.mxu0 0
        %5262 = vmatpush2.bf16.msra.mxu0 0
        %5263 = vmatprep.subr.bf16.mxu0 0
        %5264 = vmatpush2.bf16.msra.mxu0 0
        %5265 = vmatprep.subr.bf16.mxu0 0
        %5266 = vmatpush2.bf16.msra.mxu0 0
        %5267 = vmatprep.subr.bf16.mxu0 0
        %5268 = vmatpush2.bf16.msra.mxu0 0
        %5269 = vmatprep.subr.bf16.mxu0 0
        %5270 = vmatpush2.bf16.msra.mxu0 0
        %5271 = vmatprep.mubr.bf16.mxu0 0
        %5272 = vmatmul.mubr.bf16.gmra.mxu0 %v5237
        %v5273 = vpop.f32.mrf.mxu0
        %v5274 = vadd.f32 0.0, %v5273
        %v5275 = vpop.f32.mrf.mxu0
        %v5276 = vadd.f32 0.0, %v5275
        %v5277 = vpop.f32.mrf.mxu0
        %v5278 = vadd.f32 0.0, %v5277
        %v5279 = vpop.f32.mrf.mxu0
        %v5280 = vadd.f32 0.0, %v5279
        %5281 = vdwg.mxu0
        %v5282 = vadd.f32 %v5215, %v5274
        %v5283 = vadd.f32 %v5216, %v5276
        %v5284 = vadd.f32 %v5217, %v5278
        %v5285 = vadd.f32 %v5218, %v5280
        %v5286 = vld [vmem:[%s3194] sm:$0xf]
        %v5287 = vld [vmem:[%s3194 + $0x4] sm:$0xf]
        %v5290 = vunpack.c.l.b16 %v5286
        %v5291 = vunpack.c.l.b16 %v5287
        %v5292 = vpack.c.b16 %v5291, %v5290
        %5293 = vrot.lane.b32.xlu0 %v4955, 63
        %v5294 = vpop.permute.xlu0 %5293
        %5295 = vrot.lane.b32.xlu0 %v4956, 63
        %v5296 = vpop.permute.xlu0 %5295
        %5297 = vrot.lane.b32.xlu0 %v4957, 63
        %v5298 = vpop.permute.xlu0 %5297
        %v5299 = vsel %vm952, %v5294, %v5296
        %v5300 = vsel %vm952, %v5296, %v5298
        %v5304 = vsel %vm340, %v5292, 0
        %5306 = vmatprep.subr.bf16.mxu0 0
        %5307 = vmatpush1.bf16.msra.mxu0 0
        %5308 = vmatprep.subr.bf16.mxu0 0
        %5309 = vmatpush1.bf16.msra.mxu0 0
        %5310 = vmatprep.subr.bf16.mxu0 0
        %5311 = vmatpush1.bf16.msra.mxu0 0
        %5312 = vmatprep.subr.bf16.mxu0 0
        %5313 = vmatpush1.bf16.msra.mxu0 0
        %5314 = vmatprep.subr.bf16.mxu0 0
        %5315 = vmatpush1.bf16.msra.mxu0 0
        %5316 = vmatprep.subr.bf16.mxu0 0
        %5317 = vmatpush1.bf16.msra.mxu0 0
        %5318 = vmatprep.subr.bf16.mxu0 0
        %5319 = vmatpush1.bf16.msra.mxu0 0
        %5320 = vmatprep.subr.bf16.mxu0 %v5300
        %5321 = vmatpush1.bf16.msra.mxu0 %v5299
        %5322 = vmatprep.subr.bf16.mxu0 0
        %5323 = vmatpush2.bf16.msra.mxu0 0
        %5324 = vmatprep.subr.bf16.mxu0 0
        %5325 = vmatpush2.bf16.msra.mxu0 0
        %5326 = vmatprep.subr.bf16.mxu0 0
        %5327 = vmatpush2.bf16.msra.mxu0 0
        %5328 = vmatprep.subr.bf16.mxu0 0
        %5329 = vmatpush2.bf16.msra.mxu0 0
        %5330 = vmatprep.subr.bf16.mxu0 0
        %5331 = vmatpush2.bf16.msra.mxu0 0
        %5332 = vmatprep.subr.bf16.mxu0 0
        %5333 = vmatpush2.bf16.msra.mxu0 0
        %5334 = vmatprep.subr.bf16.mxu0 0
        %5335 = vmatpush2.bf16.msra.mxu0 0
        %5336 = vmatprep.subr.bf16.mxu0 0
        %5337 = vmatpush2.bf16.msra.mxu0 0
        %5338 = vmatprep.mubr.bf16.mxu0 0
        %5339 = vmatmul.mubr.bf16.gmra.mxu0 %v5304
        %v5340 = vpop.f32.mrf.mxu0
        %v5341 = vadd.f32 0.0, %v5340
        %v5342 = vpop.f32.mrf.mxu0
        %v5343 = vadd.f32 0.0, %v5342
        %v5344 = vpop.f32.mrf.mxu0
        %v5345 = vadd.f32 0.0, %v5344
        %v5346 = vpop.f32.mrf.mxu0
        %v5347 = vadd.f32 0.0, %v5346
        %5348 = vdwg.mxu0
        %v5349 = vadd.f32 %v5282, %v5341
        %v5350 = vadd.f32 %v5283, %v5343
        %v5351 = vadd.f32 %v5284, %v5345
        %v5352 = vadd.f32 %v5285, %v5347
        %v5353 = vld [vmem:[%s3317] sm:$0xf]
        %v5354 = vld [vmem:[%s3317 + $0x4] sm:$0xf]
        %v5357 = vunpack.c.l.b16 %v5353
        %v5358 = vunpack.c.l.b16 %v5354
        %v5359 = vpack.c.b16 %v5358, %v5357
        %5360 = vrot.lane.b32.xlu0 %v4955, 33
        %v5361 = vpop.permute.xlu0 %5360
        %5362 = vrot.lane.b32.xlu0 %v4956, 33
        %v5363 = vpop.permute.xlu0 %5362
        %5364 = vrot.lane.b32.xlu0 %v4957, 33
        %v5365 = vpop.permute.xlu0 %5364
        %v5366 = vsel %vm1076, %v5361, %v5363
        %v5367 = vsel %vm1076, %v5363, %v5365
        %v5371 = vsel %vm340, %v5359, 0
        %5373 = vmatprep.subr.bf16.mxu0 0
        %5374 = vmatpush1.bf16.msra.mxu0 0
        %5375 = vmatprep.subr.bf16.mxu0 0
        %5376 = vmatpush1.bf16.msra.mxu0 0
        %5377 = vmatprep.subr.bf16.mxu0 0
        %5378 = vmatpush1.bf16.msra.mxu0 0
        %5379 = vmatprep.subr.bf16.mxu0 0
        %5380 = vmatpush1.bf16.msra.mxu0 0
        %5381 = vmatprep.subr.bf16.mxu0 0
        %5382 = vmatpush1.bf16.msra.mxu0 0
        %5383 = vmatprep.subr.bf16.mxu0 0
        %5384 = vmatpush1.bf16.msra.mxu0 0
        %5385 = vmatprep.subr.bf16.mxu0 0
        %5386 = vmatpush1.bf16.msra.mxu0 0
        %5387 = vmatprep.subr.bf16.mxu0 %v5367
        %5388 = vmatpush1.bf16.msra.mxu0 %v5366
        %5389 = vmatprep.subr.bf16.mxu0 0
        %5390 = vmatpush2.bf16.msra.mxu0 0
        %5391 = vmatprep.subr.bf16.mxu0 0
        %5392 = vmatpush2.bf16.msra.mxu0 0
        %5393 = vmatprep.subr.bf16.mxu0 0
        %5394 = vmatpush2.bf16.msra.mxu0 0
        %5395 = vmatprep.subr.bf16.mxu0 0
        %5396 = vmatpush2.bf16.msra.mxu0 0
        %5397 = vmatprep.subr.bf16.mxu0 0
        %5398 = vmatpush2.bf16.msra.mxu0 0
        %5399 = vmatprep.subr.bf16.mxu0 0
        %5400 = vmatpush2.bf16.msra.mxu0 0
        %5401 = vmatprep.subr.bf16.mxu0 0
        %5402 = vmatpush2.bf16.msra.mxu0 0
        %5403 = vmatprep.subr.bf16.mxu0 0
        %5404 = vmatpush2.bf16.msra.mxu0 0
        %5405 = vmatprep.mubr.bf16.mxu0 0
        %5406 = vmatmul.mubr.bf16.gmra.mxu0 %v5371
        %v5407 = vpop.f32.mrf.mxu0
        %v5408 = vadd.f32 0.0, %v5407
        %v5409 = vpop.f32.mrf.mxu0
        %v5410 = vadd.f32 0.0, %v5409
        %v5411 = vpop.f32.mrf.mxu0
        %v5412 = vadd.f32 0.0, %v5411
        %v5413 = vpop.f32.mrf.mxu0
        %v5414 = vadd.f32 0.0, %v5413
        %5415 = vdwg.mxu0
        %v5416 = vadd.f32 %v5349, %v5408
        %v5417 = vadd.f32 %v5350, %v5410
        %v5418 = vadd.f32 %v5351, %v5412
        %v5419 = vadd.f32 %v5352, %v5414
        %v5420 = vld [vmem:[%s3440] sm:$0xf]
        %v5421 = vld [vmem:[%s3440 + $0x4] sm:$0xf]
        %v5424 = vunpack.c.l.b16 %v5420
        %v5425 = vunpack.c.l.b16 %v5421
        %v5426 = vpack.c.b16 %v5425, %v5424
        %5427 = vrot.lane.b32.xlu0 %v4955, 32
        %v5428 = vpop.permute.xlu0 %5427
        %5429 = vrot.lane.b32.xlu0 %v4956, 32
        %v5430 = vpop.permute.xlu0 %5429
        %5431 = vrot.lane.b32.xlu0 %v4957, 32
        %v5432 = vpop.permute.xlu0 %5431
        %v5433 = vsel %vm1200, %v5428, %v5430
        %v5434 = vsel %vm1200, %v5430, %v5432
        %v5438 = vsel %vm340, %v5426, 0
        %5440 = vmatprep.subr.bf16.mxu0 0
        %5441 = vmatpush1.bf16.msra.mxu0 0
        %5442 = vmatprep.subr.bf16.mxu0 0
        %5443 = vmatpush1.bf16.msra.mxu0 0
        %5444 = vmatprep.subr.bf16.mxu0 0
        %5445 = vmatpush1.bf16.msra.mxu0 0
        %5446 = vmatprep.subr.bf16.mxu0 0
        %5447 = vmatpush1.bf16.msra.mxu0 0
        %5448 = vmatprep.subr.bf16.mxu0 0
        %5449 = vmatpush1.bf16.msra.mxu0 0
        %5450 = vmatprep.subr.bf16.mxu0 0
        %5451 = vmatpush1.bf16.msra.mxu0 0
        %5452 = vmatprep.subr.bf16.mxu0 0
        %5453 = vmatpush1.bf16.msra.mxu0 0
        %5454 = vmatprep.subr.bf16.mxu0 %v5434
        %5455 = vmatpush1.bf16.msra.mxu0 %v5433
        %5456 = vmatprep.subr.bf16.mxu0 0
        %5457 = vmatpush2.bf16.msra.mxu0 0
        %5458 = vmatprep.subr.bf16.mxu0 0
        %5459 = vmatpush2.bf16.msra.mxu0 0
        %5460 = vmatprep.subr.bf16.mxu0 0
        %5461 = vmatpush2.bf16.msra.mxu0 0
        %5462 = vmatprep.subr.bf16.mxu0 0
        %5463 = vmatpush2.bf16.msra.mxu0 0
        %5464 = vmatprep.subr.bf16.mxu0 0
        %5465 = vmatpush2.bf16.msra.mxu0 0
        %5466 = vmatprep.subr.bf16.mxu0 0
        %5467 = vmatpush2.bf16.msra.mxu0 0
        %5468 = vmatprep.subr.bf16.mxu0 0
        %5469 = vmatpush2.bf16.msra.mxu0 0
        %5470 = vmatprep.subr.bf16.mxu0 0
        %5471 = vmatpush2.bf16.msra.mxu0 0
        %5472 = vmatprep.mubr.bf16.mxu0 0
        %5473 = vmatmul.mubr.bf16.gmra.mxu0 %v5438
        %v5474 = vpop.f32.mrf.mxu0
        %v5475 = vadd.f32 0.0, %v5474
        %v5476 = vpop.f32.mrf.mxu0
        %v5477 = vadd.f32 0.0, %v5476
        %v5478 = vpop.f32.mrf.mxu0
        %v5479 = vadd.f32 0.0, %v5478
        %v5480 = vpop.f32.mrf.mxu0
        %v5481 = vadd.f32 0.0, %v5480
        %5482 = vdwg.mxu0
        %v5483 = vadd.f32 %v5416, %v5475
        %v5484 = vadd.f32 %v5417, %v5477
        %v5485 = vadd.f32 %v5418, %v5479
        %v5486 = vadd.f32 %v5419, %v5481
        %v5487 = vld [vmem:[%s3563] sm:$0xf]
        %v5488 = vld [vmem:[%s3563 + $0x4] sm:$0xf]
        %v5491 = vunpack.c.l.b16 %v5487
        %v5492 = vunpack.c.l.b16 %v5488
        %v5493 = vpack.c.b16 %v5492, %v5491
        %5494 = vrot.lane.b32.xlu0 %v4955, 31
        %v5495 = vpop.permute.xlu0 %5494
        %5496 = vrot.lane.b32.xlu0 %v4956, 31
        %v5497 = vpop.permute.xlu0 %5496
        %5498 = vrot.lane.b32.xlu0 %v4957, 31
        %v5499 = vpop.permute.xlu0 %5498
        %v5500 = vsel %vm1324, %v5495, %v5497
        %v5501 = vsel %vm1324, %v5497, %v5499
        %v5505 = vsel %vm340, %v5493, 0
        %5507 = vmatprep.subr.bf16.mxu0 0
        %5508 = vmatpush1.bf16.msra.mxu0 0
        %5509 = vmatprep.subr.bf16.mxu0 0
        %5510 = vmatpush1.bf16.msra.mxu0 0
        %5511 = vmatprep.subr.bf16.mxu0 0
        %5512 = vmatpush1.bf16.msra.mxu0 0
        %5513 = vmatprep.subr.bf16.mxu0 0
        %5514 = vmatpush1.bf16.msra.mxu0 0
        %5515 = vmatprep.subr.bf16.mxu0 0
        %5516 = vmatpush1.bf16.msra.mxu0 0
        %5517 = vmatprep.subr.bf16.mxu0 0
        %5518 = vmatpush1.bf16.msra.mxu0 0
        %5519 = vmatprep.subr.bf16.mxu0 0
        %5520 = vmatpush1.bf16.msra.mxu0 0
        %5521 = vmatprep.subr.bf16.mxu0 %v5501
        %5522 = vmatpush1.bf16.msra.mxu0 %v5500
        %5523 = vmatprep.subr.bf16.mxu0 0
        %5524 = vmatpush2.bf16.msra.mxu0 0
        %5525 = vmatprep.subr.bf16.mxu0 0
        %5526 = vmatpush2.bf16.msra.mxu0 0
        %5527 = vmatprep.subr.bf16.mxu0 0
        %5528 = vmatpush2.bf16.msra.mxu0 0
        %5529 = vmatprep.subr.bf16.mxu0 0
        %5530 = vmatpush2.bf16.msra.mxu0 0
        %5531 = vmatprep.subr.bf16.mxu0 0
        %5532 = vmatpush2.bf16.msra.mxu0 0
        %5533 = vmatprep.subr.bf16.mxu0 0
        %5534 = vmatpush2.bf16.msra.mxu0 0
        %5535 = vmatprep.subr.bf16.mxu0 0
        %5536 = vmatpush2.bf16.msra.mxu0 0
        %5537 = vmatprep.subr.bf16.mxu0 0
        %5538 = vmatpush2.bf16.msra.mxu0 0
        %5539 = vmatprep.mubr.bf16.mxu0 0
        %5540 = vmatmul.mubr.bf16.gmra.mxu0 %v5505
        %v5541 = vpop.f32.mrf.mxu0
        %v5542 = vadd.f32 0.0, %v5541
        %v5543 = vpop.f32.mrf.mxu0
        %v5544 = vadd.f32 0.0, %v5543
        %v5545 = vpop.f32.mrf.mxu0
        %v5546 = vadd.f32 0.0, %v5545
        %v5547 = vpop.f32.mrf.mxu0
        %v5548 = vadd.f32 0.0, %v5547
        %5549 = vdwg.mxu0
        %v5550 = vadd.f32 %v5483, %v5542
        %v5551 = vadd.f32 %v5484, %v5544
        %v5552 = vadd.f32 %v5485, %v5546
        %v5553 = vadd.f32 %v5486, %v5548
        %5554 = vst [vmem:[%s136 + $0x20] sm:$0xff] %v5550
        %5555 = vst [vmem:[%s136 + $0x28] sm:$0xff] %v5551
        %5556 = vst [vmem:[%s136 + $0x50] sm:$0xff] %v5552
        %5557 = vst [vmem:[%s136 + $0x58] sm:$0xff] %v5553
        %s5558 = sand.u32 %s81, 1
        %s5559 = scalar_lea.sflag [#allocation5], %s5558
        %s5560 = sand.u32 %s81, 1
        %s5561 = smul.addr %s5560, 96
        %s5562 = scalar_lea.vmem [#allocation4], %s5561
        // Predicated region
        $region61: #{tpu_custom_call.1} parent=27 // pred_check
          %p5563 = pneg %p91
        $region62: #{tpu_custom_call.1} parent=27 // pred_check_branch
          %5565 = sbr.rel (%p5563) target = $region64
        $region63: #{tpu_custom_call.1} parent=27 // pred_region
          %s5567 = ssub.s32 1536, 1536
          %5568 = vsyncadd %s5559, %s5567
          %s5569 = smul.addr %s22, 12
          %s5570 = smul.addr %s21, 60
          %s5571 = sadd.s32 %s5569, %s5570
          %s5572 = smul.addr %s5571, 128
          %s5573 = scalar_lea.hbm %s3, %s5572
          %s5574 = sshll.u32 %s5562, 4
          %s5575 = int_to_ptr.vmem [resolvable:$true] %s5574
          %5580 = dma.vmem_to_hbm [thread:$0]  %s5575, 1536, %s5573, %s5559, 768, 768, 48
        $region64: #{tpu_custom_call.1} parent=27 // pred_fallthru
          _
      $region28: #{tpu_custom_call.1} parent=5 // pred_fallthru
        _
      %p5581 = scmp.le.s32.totalorder 2, %s12
      // Predicated region
      $region65: #{tpu_custom_call.1} parent=5 // pred_check
        %p5582 = pneg %p5581
      $region66: #{tpu_custom_call.1} parent=5 // pred_check_branch
        %5584 = sbr.rel (%p5582) target = $region68
      $region67: #{tpu_custom_call.1} parent=5 // pred_region
        %s5585 = ssub.s32 %s12, 2
        // Predicated region
        $region69: #{tpu_custom_call.1} parent=67 // pred_check
          %p5586 = pneg %p97
        $region70: #{tpu_custom_call.1} parent=67 // pred_check_branch
          %5588 = sbr.rel (%p5586) target = $region72
        $region71: #{tpu_custom_call.1} parent=67 // pred_region
          %s5589 = sand.u32 %s82, 1
          %s5590 = scalar_lea.sflag [#allocation5], %s5589
          %s5591 = sand.u32 %s82, 1
          %s5592 = smul.addr %s5591, 96
          %s5593 = scalar_lea.vmem [#allocation4], %s5592
          %5594 = dma.done %s5590, 1536
        $region72: #{tpu_custom_call.1} parent=67 // pred_fallthru
          _
      $region68: #{tpu_custom_call.1} parent=5 // pred_fallthru
        _
    $region6: #{tpu_custom_call.1} parent=1 // loop_footer
      %s16 = sadd.s32 1, %s12
    $region7: #{tpu_custom_call.1} parent=1 // loop_footer_branch
      %11 = sbr.rel target = $region3
    $region8: #{tpu_custom_call.1} parent=1 // loop_exit
      _
    %5595 = vsyncpa [#allocation5], 1
    %s5596 = scalar_lea.sflag [#allocation5], 1
    %5597 = vsyncpa %s5596, 1
  %5598 = vsyncmov [#allocation3]
  %s5599 = vpop.sfrf %5598
  %p5600 = scmp.eq.s32.totalorder %s5599, 0
  %p5601 = pneg %p5600
  %5603 = shalt.err (%p5601)
  %s5604 = scalar_lea.sflag [#allocation3], 1
  %5605 = vsyncmov %s5604
  %s5606 = vpop.sfrf %5605
  %p5607 = scmp.eq.s32.totalorder %s5606, 0
  %p5608 = pneg %p5607
  %5610 = shalt.err (%p5608)
  %s5611 = scalar_lea.sflag [#allocation3], 2
  %5612 = vsyncmov %s5611
  %s5613 = vpop.sfrf %5612
  %p5614 = scmp.eq.s32.totalorder %s5613, 0
  %p5615 = pneg %p5614
  %5617 = shalt.err (%p5615)
  %s5618 = scalar_lea.sflag [#allocation3], 3
  %5619 = vsyncmov %s5618
  %s5620 = vpop.sfrf %5619
  %p5621 = scmp.eq.s32.totalorder %s5620, 0
  %p5622 = pneg %p5621
  %5624 = shalt.err (%p5622)

</llo_original>
